<compile_context>
chip_gen: v7x
topology: tpu7x:2x2x1
jax: 0.10.0
libtpu: 0.0.40
codegen_flags: <defaults>
</compile_context>

<pallas_src>
import functools
import math

import jax
import jax.numpy as jnp
from jax import lax
from jax.experimental import pallas as pl
from jax.experimental.pallas import tpu as pltpu

LANE = 128  # fc heads / decoder feedback padded to a full lane width


# -----------------------------------------------------------------------------
# Fused Pallas kernel: 3 encoders + autoregressive decoder in one invocation
# -----------------------------------------------------------------------------
def _fused_kernel(x_ref, wih_ref, whh_ref, b_ref, fcw_ref, fcb_ref,
                  out_ref, proj_ref, *, T, B, H, n_steps, hardtanh_limit):
    G = 4 * H  # gate lane width

    def lstm_gates(pre, c):
        i = jax.nn.sigmoid(pre[:, 0:H])
        f = jax.nn.sigmoid(pre[:, H:2 * H])
        g = jnp.tanh(pre[:, 2 * H:3 * H])
        o = jax.nn.sigmoid(pre[:, 3 * H:4 * H])
        c_new = f * c + i * g
        return o * jnp.tanh(c_new), c_new

    def run_encoder(j):
        # Hoisted input projection: ONE (T*B, LANE)x(LANE, 4H) matmul for all
        # T steps, bias folded in, completely off the serial h-recurrence.
        xj = x_ref[pl.ds(j * T * B, T * B), :]
        wih = wih_ref[pl.ds(j * LANE, LANE), :]
        bj = jnp.broadcast_to(b_ref[pl.ds(j, 1), :], (T * B, G))
        proj_ref[pl.ds(j * T * B, T * B), :] = (
            jnp.dot(xj, wih, preferred_element_type=jnp.float32) + bj)

        whh = whh_ref[pl.ds(j * H, H), :]  # (H, 4H), small -> keep as value

        def step(t, carry):
            h, c = carry
            pre = (proj_ref[pl.ds(j * T * B + t * B, B), :]
                   + jnp.dot(h, whh, preferred_element_type=jnp.float32))
            return lstm_gates(pre, c)

        h0 = jnp.zeros((B, H), jnp.float32)
        c0 = jnp.zeros((B, H), jnp.float32)
        return lax.fori_loop(0, T, step, (h0, c0), unroll=True)

    # ---- encoders (independent chains; unrolled loops overlap) ---------------
    h_vel, c_vel = run_encoder(0)     # vel encoder
    h_pose, c_pose = run_encoder(1)   # pose encoder
    hd2, cd2 = run_encoder(2)         # mask encoder

    hd = h_pose + h_vel
    cd = c_pose + c_vel

    # ---- hoisted decoder bias broadcasts --------------------------------------
    vb = jnp.broadcast_to(b_ref[pl.ds(3, 1), :], (B, G))
    mb = jnp.broadcast_to(b_ref[pl.ds(4, 1), :], (B, G))
    fvb = jnp.broadcast_to(fcb_ref[pl.ds(0, 1), :], (B, LANE))
    fmb = jnp.broadcast_to(fcb_ref[pl.ds(1, 1), :], (B, LANE))

    # decoder seeds = last time step of vel / mask (already lane-padded to 128)
    vel_inp0 = x_ref[pl.ds(0 * T * B + (T - 1) * B, B), :]
    mask_inp0 = x_ref[pl.ds(2 * T * B + (T - 1) * B, B), :]

    def dec_step(t, carry):
        hd, cd, hd2, cd2, vel_inp, mask_inp = carry
        # --- velocity chain (full 128-lane feedback, K-padded W_ih) ----------
        pre_v = (jnp.dot(vel_inp, wih_ref[pl.ds(3 * LANE, LANE), :],
                         preferred_element_type=jnp.float32)
                 + jnp.dot(hd, whh_ref[pl.ds(3 * H, H), :],
                           preferred_element_type=jnp.float32)
                 + vb)
        hd, cd = lstm_gates(pre_v, cd)
        vel_out = jnp.clip(
            jnp.dot(hd, fcw_ref[pl.ds(0, H), :],
                    preferred_element_type=jnp.float32) + fvb,
            -hardtanh_limit, hardtanh_limit)          # Hardtanh; pad lanes -> 0
        out_ref[pl.ds(t * B, B), :] = vel_out         # lane-dense (128) store
        # --- mask chain (independent recurrence) -----------------------------
        pre_m = (jnp.dot(mask_inp, wih_ref[pl.ds(4 * LANE, LANE), :],
                         preferred_element_type=jnp.float32)
                 + jnp.dot(hd2, whh_ref[pl.ds(4 * H, H), :],
                           preferred_element_type=jnp.float32)
                 + mb)
        hd2, cd2 = lstm_gates(pre_m, cd2)
        mask_out = jax.nn.sigmoid(
            jnp.dot(hd2, fcw_ref[pl.ds(H, H), :],
                    preferred_element_type=jnp.float32) + fmb)
        out_ref[pl.ds(n_steps * B + t * B, B), :] = mask_out
        # feed back the FULL 128-lane outputs -- no lane slices on the chain
        # (detach is a forward no-op).
        return hd, cd, hd2, cd2, vel_out, mask_out

    lax.fori_loop(0, n_steps, dec_step,
                  (hd, cd, hd2, cd2, vel_inp0, mask_inp0), unroll=True)


# -----------------------------------------------------------------------------
# Wrapper: single pallas_call for the whole forward pass
# -----------------------------------------------------------------------------
_VMEM = pl.BlockSpec(memory_space=pltpu.MemorySpace.VMEM)


def lstm_posetrack_forward(params, pose, vel, mask, *, n_steps, hardtanh_limit):
    B, T, d_vel = vel.shape
    d_mask = mask.shape[2]
    H = params["whh"].shape[0] // 5

    def tm_pad(x):  # (B, T, D) -> time-major (T*B, LANE), zero lane padding
        D = x.shape[-1]
        xt = jnp.transpose(x, (1, 0, 2)).reshape(T * B, D)
        return jnp.pad(xt, ((0, 0), (0, LANE - D)))

    # one packed input slab -> a single HBM->VMEM DMA for all three sequences
    x_all = jnp.concatenate([tm_pad(vel), tm_pad(pose), tm_pad(mask)], axis=0)

    kern = functools.partial(_fused_kernel, T=T, B=B, H=H, n_steps=n_steps,
                             hardtanh_limit=hardtanh_limit)
    out = pl.pallas_call(
        kern,
        out_shape=jax.ShapeDtypeStruct((2 * n_steps * B, LANE), jnp.float32),
        in_specs=[_VMEM] * 6,
        out_specs=_VMEM,
        scratch_shapes=[pltpu.VMEM((3 * T * B, 4 * H), jnp.float32)],
    )(x_all, params["wih"], params["whh"], params["b"],
      params["fc_w"], params["fc_b"])

    # (2*N*B, 128) slab -> (B, N, D_out): strip lane padding, match torch layout
    vel_out = jnp.transpose(
        out[:n_steps * B].reshape(n_steps, B, LANE)[:, :, :d_vel], (1, 0, 2))
    mask_out = jnp.transpose(
        out[n_steps * B:].reshape(n_steps, B, LANE)[:, :, :d_mask], (1, 0, 2))
    return vel_out, mask_out


# -----------------------------------------------------------------------------
# Deterministic parameter init (synthetic, PyTorch-like uniform(-1/sqrt(H), ..))
# Weights are packed once, off the hot path, into 5 stacked operands:
#   wih : (5*128, 4H)  [venc, penc, menc, vdec, mdec], K zero-padded to 128
#   whh : (5*H, 4H)
#   b   : (5, 4H)      b_ih + b_hh folded into one row per chain
#   fc_w: (2*H, 128)   [fc_vel, fc_mask], output lanes zero-padded to 128
#   fc_b: (2, 128)
# -----------------------------------------------------------------------------
def init_params(key, hidden_size):
    H = hidden_size
    k = 1.0 / math.sqrt(H)

    def u(key, shape):
        return jax.random.uniform(key, shape, jnp.float32, minval=-k, maxval=k)

    def pad_rows(w, rows=LANE):
        return jnp.pad(w, ((0, rows - w.shape[0]), (0, 0)))

    def pad_lanes(w, width=LANE):
        return jnp.pad(w, ((0, 0), (0, width - w.shape[1])))

    keys = jax.random.split(key, 19)
    venc_wih = u(keys[0], (28, 4 * H)); venc_whh = u(keys[1], (H, 4 * H)); venc_b = u(keys[2], (1, 4 * H))
    penc_wih = u(keys[3], (28, 4 * H)); penc_whh = u(keys[4], (H, 4 * H)); penc_b = u(keys[5], (1, 4 * H))
    menc_wih = u(keys[6], (14, 4 * H)); menc_whh = u(keys[7], (H, 4 * H)); menc_b = u(keys[8], (1, 4 * H))
    vdec_wih = u(keys[9], (28, 4 * H)); vdec_whh = u(keys[10], (H, 4 * H)); vdec_b = u(keys[11], (1, 4 * H))
    mdec_wih = u(keys[12], (14, 4 * H)); mdec_whh = u(keys[13], (H, 4 * H)); mdec_b = u(keys[14], (1, 4 * H))
    fc_vel_w = u(keys[15], (H, 28)); fc_vel_b = u(keys[16], (1, 28))
    fc_mask_w = u(keys[17], (H, 14)); fc_mask_b = u(keys[18], (1, 14))

    params = {
        "wih": jnp.concatenate([pad_rows(venc_wih), pad_rows(penc_wih),
                                pad_rows(menc_wih), pad_rows(vdec_wih),
                                pad_rows(mdec_wih)], axis=0),
        "whh": jnp.concatenate([venc_whh, penc_whh, menc_whh,
                                vdec_whh, mdec_whh], axis=0),
        "b": jnp.concatenate([venc_b, penc_b, menc_b, vdec_b, mdec_b], axis=0),
        "fc_w": jnp.concatenate([pad_lanes(fc_vel_w), pad_lanes(fc_mask_w)],
                                axis=0),
        "fc_b": jnp.concatenate([pad_lanes(fc_vel_b), pad_lanes(fc_mask_b)],
                                axis=0),
    }
    # TODO(synk): pose_embedding / LeakyReLU / Softmax are declared in __init__
    # but never used in forward(), so they are intentionally omitted.
    return params


# -----------------------------------------------------------------------------
# Pure-JAX reference (for correctness check) -- uses the true (unpadded) slices
# of the packed weights.
# -----------------------------------------------------------------------------
def _ref_forward(p, pose, vel, mask, n_steps, limit):
    H = p["whh"].shape[0] // 5
    d_vel = vel.shape[2]
    d_mask = mask.shape[2]

    def wih(j, K):
        return p["wih"][j * LANE:j * LANE + K, :]

    def whh(j):
        return p["whh"][j * H:(j + 1) * H, :]

    def bias(j):
        return p["b"][j:j + 1, :]

    def ref_lstm(x, j):
        Bn = x.shape[0]
        h = jnp.zeros((Bn, H), jnp.float32)
        c = jnp.zeros((Bn, H), jnp.float32)
        W, U, b = wih(j, x.shape[2]), whh(j), bias(j)
        for t in range(x.shape[1]):
            g_ = x[:, t, :] @ W + h @ U + b
            i = jax.nn.sigmoid(g_[:, :H]); f = jax.nn.sigmoid(g_[:, H:2 * H])
            g = jnp.tanh(g_[:, 2 * H:3 * H]); o = jax.nn.sigmoid(g_[:, 3 * H:4 * H])
            c = f * c + i * g
            h = o * jnp.tanh(c)
        return h, c

    hv, cv = ref_lstm(vel, 0)
    hp, cp = ref_lstm(pose, 1)
    h2, c2 = ref_lstm(mask, 2)
    hd, cd = hp + hv, cp + cv
    vi, mi = vel[:, -1, :], mask[:, -1, :]

    def cell(x, h, c, j):
        g_ = x @ wih(j, x.shape[1]) + h @ whh(j) + bias(j)
        i = jax.nn.sigmoid(g_[:, :H]); f = jax.nn.sigmoid(g_[:, H:2 * H])
        g = jnp.tanh(g_[:, 2 * H:3 * H]); o = jax.nn.sigmoid(g_[:, 3 * H:4 * H])
        c = f * c + i * g
        return o * jnp.tanh(c), c

    fcv_w = p["fc_w"][0:H, :d_vel]; fcv_b = p["fc_b"][0:1, :d_vel]
    fcm_w = p["fc_w"][H:2 * H, :d_mask]; fcm_b = p["fc_b"][1:2, :d_mask]

    vouts, mouts = [], []
    for _ in range(n_steps):
        hd, cd = cell(vi, hd, cd, 3)
        vo = jnp.clip(hd @ fcv_w + fcv_b, -limit, limit)
        vouts.append(vo); vi = vo
        h2, c2 = cell(mi, h2, c2, 4)
        mo = jax.nn.sigmoid(h2 @ fcm_w + fcm_b)
        mouts.append(mo); mi = mo
    return jnp.stack(vouts, axis=1), jnp.stack(mouts, axis=1)


# -----------------------------------------------------------------------------
if __name__ == "__main__":
    # args: hidden_size=32, output=8, skip=1, hardtanh_limit=1.0
    H = 32
    B = 2
    T = 8
    N_STEPS = 8 // 1
    LIMIT = 1.0

    key = jax.random.PRNGKey(0)
    k_params, k_pose, k_vel, k_mask = jax.random.split(key, 4)

    params = init_params(k_params, H)
    pose = jax.random.normal(k_pose, (B, T, 28), jnp.float32)
    vel = jax.random.normal(k_vel, (B, T, 28), jnp.float32)
    mask = jax.random.uniform(k_mask, (B, T, 14), jnp.float32)

    fwd = jax.jit(functools.partial(lstm_posetrack_forward,
                                    n_steps=N_STEPS, hardtanh_limit=LIMIT))
    vel_out, mask_out = fwd(params, pose, vel, mask)
    jax.block_until_ready((vel_out, mask_out))

    assert vel_out.shape == (B, N_STEPS, 28)
    assert mask_out.shape == (B, N_STEPS, 14)

    # sanity check against a pure-JAX reference
    vel_ref, mask_ref = _ref_forward(params, pose, vel, mask, N_STEPS, LIMIT)
    assert jnp.allclose(vel_out, vel_ref, atol=1e-4, rtol=1e-4)
    assert jnp.allclose(mask_out, mask_ref, atol=1e-4, rtol=1e-4)

    print("KERNEL_OK")
</pallas_src>

<mosaic_0001>
module attributes {stable_mosaic.version = 11 : i64} {
  func.func @_fused_kernel(%arg0: memref<48x128xf32, #tpu.memory_space<vmem>>, %arg1: memref<640x128xf32, #tpu.memory_space<vmem>>, %arg2: memref<160x128xf32, #tpu.memory_space<vmem>>, %arg3: memref<5x128xf32, #tpu.memory_space<vmem>>, %arg4: memref<64x128xf32, #tpu.memory_space<vmem>>, %arg5: memref<2x128xf32, #tpu.memory_space<vmem>>, %arg6: memref<32x128xf32, #tpu.memory_space<vmem>>, %arg7: memref<48x128xf32, #tpu.memory_space<vmem>>) attributes {dimension_semantics = [], scalar_prefetch = 0 : i64, scratch_operands = 1 : i64, tpu.core_type = #tpu.core_type<tc>} {
    %c0 = arith.constant 0 : index
    %c0_0 = arith.constant 0 : index
    %0 = vector.load %arg0[%c0, %c0_0] : memref<48x128xf32, #tpu.memory_space<vmem>>, vector<16x128xf32>
    %c0_1 = arith.constant 0 : index
    %c0_2 = arith.constant 0 : index
    %1 = vector.load %arg1[%c0_1, %c0_2] : memref<640x128xf32, #tpu.memory_space<vmem>>, vector<128x128xf32>
    %c0_3 = arith.constant 0 : index
    %c0_4 = arith.constant 0 : index
    %2 = vector.load %arg3[%c0_3, %c0_4] : memref<5x128xf32, #tpu.memory_space<vmem>>, vector<1x128xf32>
    %3 = vector.shape_cast %2 : vector<1x128xf32> to vector<1x128xf32>
    %4 = vector.broadcast %3 : vector<1x128xf32> to vector<16x128xf32>
    %cst = arith.constant dense<0.000000e+00> : vector<16x128xf32>
    %5 = tpu.matmul %0, %1, %cst {dimension_numbers = #tpu.dot_dimension_numbers<[1], [0], [0], [1], [0, 0, 1, 1], [], []>} : vector<16x128xf32>, vector<128x128xf32>, vector<16x128xf32> -> vector<16x128xf32>
    %6 = arith.addf %5, %4 : vector<16x128xf32>
    %c0_5 = arith.constant 0 : index
    %c0_6 = arith.constant 0 : index
    %7 = vector.load %arg7[%c0_5, %c0_6] : memref<48x128xf32, #tpu.memory_space<vmem>>, vector<16x128xf32>
    tpu.vector_store %arg7[%c0_5, %c0_6], %6 {strides = array<i32>} : memref<48x128xf32, #tpu.memory_space<vmem>>, vector<16x128xf32>,
    %c0_7 = arith.constant 0 : index
    %c0_8 = arith.constant 0 : index
    %8 = vector.load %arg2[%c0_7, %c0_8] : memref<160x128xf32, #tpu.memory_space<vmem>>, vector<32x128xf32>
    %cst_9 = arith.constant 0.000000e+00 : f32
    %9 = vector.broadcast %cst_9 : f32 to vector<2x32xf32>
    %cst_10 = arith.constant 0.000000e+00 : f32
    %10 = vector.broadcast %cst_10 : f32 to vector<2x32xf32>
    %c0_i32 = arith.constant 0 : i32
    %c2_i32 = arith.constant 2 : i32
    %11 = arith.muli %c0_i32, %c2_i32 : i32
    %c0_i32_11 = arith.constant 0 : i32
    %12 = arith.addi %c0_i32_11, %11 : i32
    %13 = arith.index_cast %12 : i32 to index
    %c0_12 = arith.constant 0 : index
    %14 = vector.load %arg7[%13, %c0_12] : memref<48x128xf32, #tpu.memory_space<vmem>>, vector<2x128xf32>
    %cst_13 = arith.constant dense<0.000000e+00> : vector<2x128xf32>
    %15 = tpu.matmul %9, %8, %cst_13 {dimension_numbers = #tpu.dot_dimension_numbers<[1], [0], [0], [1], [0, 0, 1, 1], [], []>} : vector<2x32xf32>, vector<32x128xf32>, vector<2x128xf32> -> vector<2x128xf32>
    %16 = arith.addf %14, %15 : vector<2x128xf32>
    %17 = vector.extract_strided_slice %16 {offsets = [0, 0], sizes = [2, 32], strides = [1, 1]} : vector<2x128xf32> to vector<2x32xf32>
    %18 = arith.negf %17 : vector<2x32xf32>
    %19 = math.exp %18 : vector<2x32xf32>
    %cst_14 = arith.constant 1.000000e+00 : f32
    %20 = vector.broadcast %cst_14 : f32 to vector<2x32xf32>
    %21 = arith.addf %20, %19 : vector<2x32xf32>
    %22 = arith.divf %20, %21 : vector<2x32xf32>
    %23 = vector.extract_strided_slice %16 {offsets = [0, 32], sizes = [2, 32], strides = [1, 1]} : vector<2x128xf32> to vector<2x32xf32>
    %24 = arith.negf %23 : vector<2x32xf32>
    %25 = math.exp %24 : vector<2x32xf32>
    %cst_15 = arith.constant 1.000000e+00 : f32
    %26 = vector.broadcast %cst_15 : f32 to vector<2x32xf32>
    %27 = arith.addf %26, %25 : vector<2x32xf32>
    %28 = arith.divf %26, %27 : vector<2x32xf32>
    %29 = vector.extract_strided_slice %16 {offsets = [0, 64], sizes = [2, 32], strides = [1, 1]} : vector<2x128xf32> to vector<2x32xf32>
    %30 = math.tanh %29 : vector<2x32xf32>
    %31 = vector.extract_strided_slice %16 {offsets = [0, 96], sizes = [2, 32], strides = [1, 1]} : vector<2x128xf32> to vector<2x32xf32>
    %32 = arith.negf %31 : vector<2x32xf32>
    %33 = math.exp %32 : vector<2x32xf32>
    %cst_16 = arith.constant 1.000000e+00 : f32
    %34 = vector.broadcast %cst_16 : f32 to vector<2x32xf32>
    %35 = arith.addf %34, %33 : vector<2x32xf32>
    %36 = arith.divf %34, %35 : vector<2x32xf32>
    %37 = arith.mulf %28, %10 : vector<2x32xf32>
    %38 = arith.mulf %22, %30 : vector<2x32xf32>
    %39 = arith.addf %37, %38 : vector<2x32xf32>
    %40 = math.tanh %39 : vector<2x32xf32>
    %41 = arith.mulf %36, %40 : vector<2x32xf32>
    %c1_i32 = arith.constant 1 : i32
    %c2_i32_17 = arith.constant 2 : i32
    %42 = arith.muli %c1_i32, %c2_i32_17 : i32
    %c0_i32_18 = arith.constant 0 : i32
    %43 = arith.addi %c0_i32_18, %42 : i32
    %44 = arith.index_cast %43 : i32 to index
    %c0_19 = arith.constant 0 : index
    %45 = vector.load %arg7[%44, %c0_19] : memref<48x128xf32, #tpu.memory_space<vmem>>, vector<2x128xf32>
    %cst_20 = arith.constant dense<0.000000e+00> : vector<2x128xf32>
    %46 = tpu.matmul %41, %8, %cst_20 {dimension_numbers = #tpu.dot_dimension_numbers<[1], [0], [0], [1], [0, 0, 1, 1], [], []>} : vector<2x32xf32>, vector<32x128xf32>, vector<2x128xf32> -> vector<2x128xf32>
    %47 = arith.addf %45, %46 : vector<2x128xf32>
    %48 = vector.extract_strided_slice %47 {offsets = [0, 0], sizes = [2, 32], strides = [1, 1]} : vector<2x128xf32> to vector<2x32xf32>
    %49 = arith.negf %48 : vector<2x32xf32>
    %50 = math.exp %49 : vector<2x32xf32>
    %cst_21 = arith.constant 1.000000e+00 : f32
    %51 = vector.broadcast %cst_21 : f32 to vector<2x32xf32>
    %52 = arith.addf %51, %50 : vector<2x32xf32>
    %53 = arith.divf %51, %52 : vector<2x32xf32>
    %54 = vector.extract_strided_slice %47 {offsets = [0, 32], sizes = [2, 32], strides = [1, 1]} : vector<2x128xf32> to vector<2x32xf32>
    %55 = arith.negf %54 : vector<2x32xf32>
    %56 = math.exp %55 : vector<2x32xf32>
    %cst_22 = arith.constant 1.000000e+00 : f32
    %57 = vector.broadcast %cst_22 : f32 to vector<2x32xf32>
    %58 = arith.addf %57, %56 : vector<2x32xf32>
    %59 = arith.divf %57, %58 : vector<2x32xf32>
    %60 = vector.extract_strided_slice %47 {offsets = [0, 64], sizes = [2, 32], strides = [1, 1]} : vector<2x128xf32> to vector<2x32xf32>
    %61 = math.tanh %60 : vector<2x32xf32>
    %62 = vector.extract_strided_slice %47 {offsets = [0, 96], sizes = [2, 32], strides = [1, 1]} : vector<2x128xf32> to vector<2x32xf32>
    %63 = arith.negf %62 : vector<2x32xf32>
    %64 = math.exp %63 : vector<2x32xf32>
    %cst_23 = arith.constant 1.000000e+00 : f32
    %65 = vector.broadcast %cst_23 : f32 to vector<2x32xf32>
    %66 = arith.addf %65, %64 : vector<2x32xf32>
    %67 = arith.divf %65, %66 : vector<2x32xf32>
    %68 = arith.mulf %59, %39 : vector<2x32xf32>
    %69 = arith.mulf %53, %61 : vector<2x32xf32>
    %70 = arith.addf %68, %69 : vector<2x32xf32>
    %71 = math.tanh %70 : vector<2x32xf32>
    %72 = arith.mulf %67, %71 : vector<2x32xf32>
    %c2_i32_24 = arith.constant 2 : i32
    %c2_i32_25 = arith.constant 2 : i32
    %73 = arith.muli %c2_i32_24, %c2_i32_25 : i32
    %c0_i32_26 = arith.constant 0 : i32
    %74 = arith.addi %c0_i32_26, %73 : i32
    %75 = arith.index_cast %74 : i32 to index
    %c0_27 = arith.constant 0 : index
    %76 = vector.load %arg7[%75, %c0_27] : memref<48x128xf32, #tpu.memory_space<vmem>>, vector<2x128xf32>
    %cst_28 = arith.constant dense<0.000000e+00> : vector<2x128xf32>
    %77 = tpu.matmul %72, %8, %cst_28 {dimension_numbers = #tpu.dot_dimension_numbers<[1], [0], [0], [1], [0, 0, 1, 1], [], []>} : vector<2x32xf32>, vector<32x128xf32>, vector<2x128xf32> -> vector<2x128xf32>
    %78 = arith.addf %76, %77 : vector<2x128xf32>
    %79 = vector.extract_strided_slice %78 {offsets = [0, 0], sizes = [2, 32], strides = [1, 1]} : vector<2x128xf32> to vector<2x32xf32>
    %80 = arith.negf %79 : vector<2x32xf32>
    %81 = math.exp %80 : vector<2x32xf32>
    %cst_29 = arith.constant 1.000000e+00 : f32
    %82 = vector.broadcast %cst_29 : f32 to vector<2x32xf32>
    %83 = arith.addf %82, %81 : vector<2x32xf32>
    %84 = arith.divf %82, %83 : vector<2x32xf32>
    %85 = vector.extract_strided_slice %78 {offsets = [0, 32], sizes = [2, 32], strides = [1, 1]} : vector<2x128xf32> to vector<2x32xf32>
    %86 = arith.negf %85 : vector<2x32xf32>
    %87 = math.exp %86 : vector<2x32xf32>
    %cst_30 = arith.constant 1.000000e+00 : f32
    %88 = vector.broadcast %cst_30 : f32 to vector<2x32xf32>
    %89 = arith.addf %88, %87 : vector<2x32xf32>
    %90 = arith.divf %88, %89 : vector<2x32xf32>
    %91 = vector.extract_strided_slice %78 {offsets = [0, 64], sizes = [2, 32], strides = [1, 1]} : vector<2x128xf32> to vector<2x32xf32>
    %92 = math.tanh %91 : vector<2x32xf32>
    %93 = vector.extract_strided_slice %78 {offsets = [0, 96], sizes = [2, 32], strides = [1, 1]} : vector<2x128xf32> to vector<2x32xf32>
    %94 = arith.negf %93 : vector<2x32xf32>
    %95 = math.exp %94 : vector<2x32xf32>
    %cst_31 = arith.constant 1.000000e+00 : f32
    %96 = vector.broadcast %cst_31 : f32 to vector<2x32xf32>
    %97 = arith.addf %96, %95 : vector<2x32xf32>
    %98 = arith.divf %96, %97 : vector<2x32xf32>
    %99 = arith.mulf %90, %70 : vector<2x32xf32>
    %100 = arith.mulf %84, %92 : vector<2x32xf32>
    %101 = arith.addf %99, %100 : vector<2x32xf32>
    %102 = math.tanh %101 : vector<2x32xf32>
    %103 = arith.mulf %98, %102 : vector<2x32xf32>
    %c3_i32 = arith.constant 3 : i32
    %c2_i32_32 = arith.constant 2 : i32
    %104 = arith.muli %c3_i32, %c2_i32_32 : i32
    %c0_i32_33 = arith.constant 0 : i32
    %105 = arith.addi %c0_i32_33, %104 : i32
    %106 = arith.index_cast %105 : i32 to index
    %c0_34 = arith.constant 0 : index
    %107 = vector.load %arg7[%106, %c0_34] : memref<48x128xf32, #tpu.memory_space<vmem>>, vector<2x128xf32>
    %cst_35 = arith.constant dense<0.000000e+00> : vector<2x128xf32>
    %108 = tpu.matmul %103, %8, %cst_35 {dimension_numbers = #tpu.dot_dimension_numbers<[1], [0], [0], [1], [0, 0, 1, 1], [], []>} : vector<2x32xf32>, vector<32x128xf32>, vector<2x128xf32> -> vector<2x128xf32>
    %109 = arith.addf %107, %108 : vector<2x128xf32>
    %110 = vector.extract_strided_slice %109 {offsets = [0, 0], sizes = [2, 32], strides = [1, 1]} : vector<2x128xf32> to vector<2x32xf32>
    %111 = arith.negf %110 : vector<2x32xf32>
    %112 = math.exp %111 : vector<2x32xf32>
    %cst_36 = arith.constant 1.000000e+00 : f32
    %113 = vector.broadcast %cst_36 : f32 to vector<2x32xf32>
    %114 = arith.addf %113, %112 : vector<2x32xf32>
    %115 = arith.divf %113, %114 : vector<2x32xf32>
    %116 = vector.extract_strided_slice %109 {offsets = [0, 32], sizes = [2, 32], strides = [1, 1]} : vector<2x128xf32> to vector<2x32xf32>
    %117 = arith.negf %116 : vector<2x32xf32>
    %118 = math.exp %117 : vector<2x32xf32>
    %cst_37 = arith.constant 1.000000e+00 : f32
    %119 = vector.broadcast %cst_37 : f32 to vector<2x32xf32>
    %120 = arith.addf %119, %118 : vector<2x32xf32>
    %121 = arith.divf %119, %120 : vector<2x32xf32>
    %122 = vector.extract_strided_slice %109 {offsets = [0, 64], sizes = [2, 32], strides = [1, 1]} : vector<2x128xf32> to vector<2x32xf32>
    %123 = math.tanh %122 : vector<2x32xf32>
    %124 = vector.extract_strided_slice %109 {offsets = [0, 96], sizes = [2, 32], strides = [1, 1]} : vector<2x128xf32> to vector<2x32xf32>
    %125 = arith.negf %124 : vector<2x32xf32>
    %126 = math.exp %125 : vector<2x32xf32>
    %cst_38 = arith.constant 1.000000e+00 : f32
    %127 = vector.broadcast %cst_38 : f32 to vector<2x32xf32>
    %128 = arith.addf %127, %126 : vector<2x32xf32>
    %129 = arith.divf %127, %128 : vector<2x32xf32>
    %130 = arith.mulf %121, %101 : vector<2x32xf32>
    %131 = arith.mulf %115, %123 : vector<2x32xf32>
    %132 = arith.addf %130, %131 : vector<2x32xf32>
    %133 = math.tanh %132 : vector<2x32xf32>
    %134 = arith.mulf %129, %133 : vector<2x32xf32>
    %c4_i32 = arith.constant 4 : i32
    %c2_i32_39 = arith.constant 2 : i32
    %135 = arith.muli %c4_i32, %c2_i32_39 : i32
    %c0_i32_40 = arith.constant 0 : i32
    %136 = arith.addi %c0_i32_40, %135 : i32
    %137 = arith.index_cast %136 : i32 to index
    %c0_41 = arith.constant 0 : index
    %138 = vector.load %arg7[%137, %c0_41] : memref<48x128xf32, #tpu.memory_space<vmem>>, vector<2x128xf32>
    %cst_42 = arith.constant dense<0.000000e+00> : vector<2x128xf32>
    %139 = tpu.matmul %134, %8, %cst_42 {dimension_numbers = #tpu.dot_dimension_numbers<[1], [0], [0], [1], [0, 0, 1, 1], [], []>} : vector<2x32xf32>, vector<32x128xf32>, vector<2x128xf32> -> vector<2x128xf32>
    %140 = arith.addf %138, %139 : vector<2x128xf32>
    %141 = vector.extract_strided_slice %140 {offsets = [0, 0], sizes = [2, 32], strides = [1, 1]} : vector<2x128xf32> to vector<2x32xf32>
    %142 = arith.negf %141 : vector<2x32xf32>
    %143 = math.exp %142 : vector<2x32xf32>
    %cst_43 = arith.constant 1.000000e+00 : f32
    %144 = vector.broadcast %cst_43 : f32 to vector<2x32xf32>
    %145 = arith.addf %144, %143 : vector<2x32xf32>
    %146 = arith.divf %144, %145 : vector<2x32xf32>
    %147 = vector.extract_strided_slice %140 {offsets = [0, 32], sizes = [2, 32], strides = [1, 1]} : vector<2x128xf32> to vector<2x32xf32>
    %148 = arith.negf %147 : vector<2x32xf32>
    %149 = math.exp %148 : vector<2x32xf32>
    %cst_44 = arith.constant 1.000000e+00 : f32
    %150 = vector.broadcast %cst_44 : f32 to vector<2x32xf32>
    %151 = arith.addf %150, %149 : vector<2x32xf32>
    %152 = arith.divf %150, %151 : vector<2x32xf32>
    %153 = vector.extract_strided_slice %140 {offsets = [0, 64], sizes = [2, 32], strides = [1, 1]} : vector<2x128xf32> to vector<2x32xf32>
    %154 = math.tanh %153 : vector<2x32xf32>
    %155 = vector.extract_strided_slice %140 {offsets = [0, 96], sizes = [2, 32], strides = [1, 1]} : vector<2x128xf32> to vector<2x32xf32>
    %156 = arith.negf %155 : vector<2x32xf32>
    %157 = math.exp %156 : vector<2x32xf32>
    %cst_45 = arith.constant 1.000000e+00 : f32
    %158 = vector.broadcast %cst_45 : f32 to vector<2x32xf32>
    %159 = arith.addf %158, %157 : vector<2x32xf32>
    %160 = arith.divf %158, %159 : vector<2x32xf32>
    %161 = arith.mulf %152, %132 : vector<2x32xf32>
    %162 = arith.mulf %146, %154 : vector<2x32xf32>
    %163 = arith.addf %161, %162 : vector<2x32xf32>
    %164 = math.tanh %163 : vector<2x32xf32>
    %165 = arith.mulf %160, %164 : vector<2x32xf32>
    %c5_i32 = arith.constant 5 : i32
    %c2_i32_46 = arith.constant 2 : i32
    %166 = arith.muli %c5_i32, %c2_i32_46 : i32
    %c0_i32_47 = arith.constant 0 : i32
    %167 = arith.addi %c0_i32_47, %166 : i32
    %168 = arith.index_cast %167 : i32 to index
    %c0_48 = arith.constant 0 : index
    %169 = vector.load %arg7[%168, %c0_48] : memref<48x128xf32, #tpu.memory_space<vmem>>, vector<2x128xf32>
    %cst_49 = arith.constant dense<0.000000e+00> : vector<2x128xf32>
    %170 = tpu.matmul %165, %8, %cst_49 {dimension_numbers = #tpu.dot_dimension_numbers<[1], [0], [0], [1], [0, 0, 1, 1], [], []>} : vector<2x32xf32>, vector<32x128xf32>, vector<2x128xf32> -> vector<2x128xf32>
    %171 = arith.addf %169, %170 : vector<2x128xf32>
    %172 = vector.extract_strided_slice %171 {offsets = [0, 0], sizes = [2, 32], strides = [1, 1]} : vector<2x128xf32> to vector<2x32xf32>
    %173 = arith.negf %172 : vector<2x32xf32>
    %174 = math.exp %173 : vector<2x32xf32>
    %cst_50 = arith.constant 1.000000e+00 : f32
    %175 = vector.broadcast %cst_50 : f32 to vector<2x32xf32>
    %176 = arith.addf %175, %174 : vector<2x32xf32>
    %177 = arith.divf %175, %176 : vector<2x32xf32>
    %178 = vector.extract_strided_slice %171 {offsets = [0, 32], sizes = [2, 32], strides = [1, 1]} : vector<2x128xf32> to vector<2x32xf32>
    %179 = arith.negf %178 : vector<2x32xf32>
    %180 = math.exp %179 : vector<2x32xf32>
    %cst_51 = arith.constant 1.000000e+00 : f32
    %181 = vector.broadcast %cst_51 : f32 to vector<2x32xf32>
    %182 = arith.addf %181, %180 : vector<2x32xf32>
    %183 = arith.divf %181, %182 : vector<2x32xf32>
    %184 = vector.extract_strided_slice %171 {offsets = [0, 64], sizes = [2, 32], strides = [1, 1]} : vector<2x128xf32> to vector<2x32xf32>
    %185 = math.tanh %184 : vector<2x32xf32>
    %186 = vector.extract_strided_slice %171 {offsets = [0, 96], sizes = [2, 32], strides = [1, 1]} : vector<2x128xf32> to vector<2x32xf32>
    %187 = arith.negf %186 : vector<2x32xf32>
    %188 = math.exp %187 : vector<2x32xf32>
    %cst_52 = arith.constant 1.000000e+00 : f32
    %189 = vector.broadcast %cst_52 : f32 to vector<2x32xf32>
    %190 = arith.addf %189, %188 : vector<2x32xf32>
    %191 = arith.divf %189, %190 : vector<2x32xf32>
    %192 = arith.mulf %183, %163 : vector<2x32xf32>
    %193 = arith.mulf %177, %185 : vector<2x32xf32>
    %194 = arith.addf %192, %193 : vector<2x32xf32>
    %195 = math.tanh %194 : vector<2x32xf32>
    %196 = arith.mulf %191, %195 : vector<2x32xf32>
    %c6_i32 = arith.constant 6 : i32
    %c2_i32_53 = arith.constant 2 : i32
    %197 = arith.muli %c6_i32, %c2_i32_53 : i32
    %c0_i32_54 = arith.constant 0 : i32
    %198 = arith.addi %c0_i32_54, %197 : i32
    %199 = arith.index_cast %198 : i32 to index
    %c0_55 = arith.constant 0 : index
    %200 = vector.load %arg7[%199, %c0_55] : memref<48x128xf32, #tpu.memory_space<vmem>>, vector<2x128xf32>
    %cst_56 = arith.constant dense<0.000000e+00> : vector<2x128xf32>
    %201 = tpu.matmul %196, %8, %cst_56 {dimension_numbers = #tpu.dot_dimension_numbers<[1], [0], [0], [1], [0, 0, 1, 1], [], []>} : vector<2x32xf32>, vector<32x128xf32>, vector<2x128xf32> -> vector<2x128xf32>
    %202 = arith.addf %200, %201 : vector<2x128xf32>
    %203 = vector.extract_strided_slice %202 {offsets = [0, 0], sizes = [2, 32], strides = [1, 1]} : vector<2x128xf32> to vector<2x32xf32>
    %204 = arith.negf %203 : vector<2x32xf32>
    %205 = math.exp %204 : vector<2x32xf32>
    %cst_57 = arith.constant 1.000000e+00 : f32
    %206 = vector.broadcast %cst_57 : f32 to vector<2x32xf32>
    %207 = arith.addf %206, %205 : vector<2x32xf32>
    %208 = arith.divf %206, %207 : vector<2x32xf32>
    %209 = vector.extract_strided_slice %202 {offsets = [0, 32], sizes = [2, 32], strides = [1, 1]} : vector<2x128xf32> to vector<2x32xf32>
    %210 = arith.negf %209 : vector<2x32xf32>
    %211 = math.exp %210 : vector<2x32xf32>
    %cst_58 = arith.constant 1.000000e+00 : f32
    %212 = vector.broadcast %cst_58 : f32 to vector<2x32xf32>
    %213 = arith.addf %212, %211 : vector<2x32xf32>
    %214 = arith.divf %212, %213 : vector<2x32xf32>
    %215 = vector.extract_strided_slice %202 {offsets = [0, 64], sizes = [2, 32], strides = [1, 1]} : vector<2x128xf32> to vector<2x32xf32>
    %216 = math.tanh %215 : vector<2x32xf32>
    %217 = vector.extract_strided_slice %202 {offsets = [0, 96], sizes = [2, 32], strides = [1, 1]} : vector<2x128xf32> to vector<2x32xf32>
    %218 = arith.negf %217 : vector<2x32xf32>
    %219 = math.exp %218 : vector<2x32xf32>
    %cst_59 = arith.constant 1.000000e+00 : f32
    %220 = vector.broadcast %cst_59 : f32 to vector<2x32xf32>
    %221 = arith.addf %220, %219 : vector<2x32xf32>
    %222 = arith.divf %220, %221 : vector<2x32xf32>
    %223 = arith.mulf %214, %194 : vector<2x32xf32>
    %224 = arith.mulf %208, %216 : vector<2x32xf32>
    %225 = arith.addf %223, %224 : vector<2x32xf32>
    %226 = math.tanh %225 : vector<2x32xf32>
    %227 = arith.mulf %222, %226 : vector<2x32xf32>
    %c7_i32 = arith.constant 7 : i32
    %c2_i32_60 = arith.constant 2 : i32
    %228 = arith.muli %c7_i32, %c2_i32_60 : i32
    %c0_i32_61 = arith.constant 0 : i32
    %229 = arith.addi %c0_i32_61, %228 : i32
    %230 = arith.index_cast %229 : i32 to index
    %c0_62 = arith.constant 0 : index
    %231 = vector.load %arg7[%230, %c0_62] : memref<48x128xf32, #tpu.memory_space<vmem>>, vector<2x128xf32>
    %cst_63 = arith.constant dense<0.000000e+00> : vector<2x128xf32>
    %232 = tpu.matmul %227, %8, %cst_63 {dimension_numbers = #tpu.dot_dimension_numbers<[1], [0], [0], [1], [0, 0, 1, 1], [], []>} : vector<2x32xf32>, vector<32x128xf32>, vector<2x128xf32> -> vector<2x128xf32>
    %233 = arith.addf %231, %232 : vector<2x128xf32>
    %234 = vector.extract_strided_slice %233 {offsets = [0, 0], sizes = [2, 32], strides = [1, 1]} : vector<2x128xf32> to vector<2x32xf32>
    %235 = arith.negf %234 : vector<2x32xf32>
    %236 = math.exp %235 : vector<2x32xf32>
    %cst_64 = arith.constant 1.000000e+00 : f32
    %237 = vector.broadcast %cst_64 : f32 to vector<2x32xf32>
    %238 = arith.addf %237, %236 : vector<2x32xf32>
    %239 = arith.divf %237, %238 : vector<2x32xf32>
    %240 = vector.extract_strided_slice %233 {offsets = [0, 32], sizes = [2, 32], strides = [1, 1]} : vector<2x128xf32> to vector<2x32xf32>
    %241 = arith.negf %240 : vector<2x32xf32>
    %242 = math.exp %241 : vector<2x32xf32>
    %cst_65 = arith.constant 1.000000e+00 : f32
    %243 = vector.broadcast %cst_65 : f32 to vector<2x32xf32>
    %244 = arith.addf %243, %242 : vector<2x32xf32>
    %245 = arith.divf %243, %244 : vector<2x32xf32>
    %246 = vector.extract_strided_slice %233 {offsets = [0, 64], sizes = [2, 32], strides = [1, 1]} : vector<2x128xf32> to vector<2x32xf32>
    %247 = math.tanh %246 : vector<2x32xf32>
    %248 = vector.extract_strided_slice %233 {offsets = [0, 96], sizes = [2, 32], strides = [1, 1]} : vector<2x128xf32> to vector<2x32xf32>
    %249 = arith.negf %248 : vector<2x32xf32>
    %250 = math.exp %249 : vector<2x32xf32>
    %cst_66 = arith.constant 1.000000e+00 : f32
    %251 = vector.broadcast %cst_66 : f32 to vector<2x32xf32>
    %252 = arith.addf %251, %250 : vector<2x32xf32>
    %253 = arith.divf %251, %252 : vector<2x32xf32>
    %254 = arith.mulf %245, %225 : vector<2x32xf32>
    %255 = arith.mulf %239, %247 : vector<2x32xf32>
    %256 = arith.addf %254, %255 : vector<2x32xf32>
    %257 = math.tanh %256 : vector<2x32xf32>
    %258 = arith.mulf %253, %257 : vector<2x32xf32>
    %c8_i32 = arith.constant 8 : i32
    %c16 = arith.constant 16 : index
    %c0_67 = arith.constant 0 : index
    %259 = vector.load %arg0[%c16, %c0_67] : memref<48x128xf32, #tpu.memory_space<vmem>>, vector<16x128xf32>
    %c128 = arith.constant 128 : index
    %c0_68 = arith.constant 0 : index
    %260 = vector.load %arg1[%c128, %c0_68] : memref<640x128xf32, #tpu.memory_space<vmem>>, vector<128x128xf32>
    %c1 = arith.constant 1 : index
    %c0_69 = arith.constant 0 : index
    %261 = vector.load %arg3[%c1, %c0_69] : memref<5x128xf32, #tpu.memory_space<vmem>>, vector<1x128xf32>
    %262 = vector.shape_cast %261 : vector<1x128xf32> to vector<1x128xf32>
    %263 = vector.broadcast %262 : vector<1x128xf32> to vector<16x128xf32>
    %cst_70 = arith.constant dense<0.000000e+00> : vector<16x128xf32>
    %264 = tpu.matmul %259, %260, %cst_70 {dimension_numbers = #tpu.dot_dimension_numbers<[1], [0], [0], [1], [0, 0, 1, 1], [], []>} : vector<16x128xf32>, vector<128x128xf32>, vector<16x128xf32> -> vector<16x128xf32>
    %265 = arith.addf %264, %263 : vector<16x128xf32>
    %c16_71 = arith.constant 16 : index
    %c0_72 = arith.constant 0 : index
    %266 = vector.load %arg7[%c16_71, %c0_72] : memref<48x128xf32, #tpu.memory_space<vmem>>, vector<16x128xf32>
    tpu.vector_store %arg7[%c16_71, %c0_72], %265 {strides = array<i32>} : memref<48x128xf32, #tpu.memory_space<vmem>>, vector<16x128xf32>,
    %c32 = arith.constant 32 : index
    %c0_73 = arith.constant 0 : index
    %267 = vector.load %arg2[%c32, %c0_73] : memref<160x128xf32, #tpu.memory_space<vmem>>, vector<32x128xf32>
    %cst_74 = arith.constant 0.000000e+00 : f32
    %268 = vector.broadcast %cst_74 : f32 to vector<2x32xf32>
    %cst_75 = arith.constant 0.000000e+00 : f32
    %269 = vector.broadcast %cst_75 : f32 to vector<2x32xf32>
    %c0_i32_76 = arith.constant 0 : i32
    %c2_i32_77 = arith.constant 2 : i32
    %270 = arith.muli %c0_i32_76, %c2_i32_77 : i32
    %c16_i32 = arith.constant 16 : i32
    %271 = arith.addi %c16_i32, %270 : i32
    %272 = arith.index_cast %271 : i32 to index
    %c0_78 = arith.constant 0 : index
    %273 = vector.load %arg7[%272, %c0_78] : memref<48x128xf32, #tpu.memory_space<vmem>>, vector<2x128xf32>
    %cst_79 = arith.constant dense<0.000000e+00> : vector<2x128xf32>
    %274 = tpu.matmul %268, %267, %cst_79 {dimension_numbers = #tpu.dot_dimension_numbers<[1], [0], [0], [1], [0, 0, 1, 1], [], []>} : vector<2x32xf32>, vector<32x128xf32>, vector<2x128xf32> -> vector<2x128xf32>
    %275 = arith.addf %273, %274 : vector<2x128xf32>
    %276 = vector.extract_strided_slice %275 {offsets = [0, 0], sizes = [2, 32], strides = [1, 1]} : vector<2x128xf32> to vector<2x32xf32>
    %277 = arith.negf %276 : vector<2x32xf32>
    %278 = math.exp %277 : vector<2x32xf32>
    %cst_80 = arith.constant 1.000000e+00 : f32
    %279 = vector.broadcast %cst_80 : f32 to vector<2x32xf32>
    %280 = arith.addf %279, %278 : vector<2x32xf32>
    %281 = arith.divf %279, %280 : vector<2x32xf32>
    %282 = vector.extract_strided_slice %275 {offsets = [0, 32], sizes = [2, 32], strides = [1, 1]} : vector<2x128xf32> to vector<2x32xf32>
    %283 = arith.negf %282 : vector<2x32xf32>
    %284 = math.exp %283 : vector<2x32xf32>
    %cst_81 = arith.constant 1.000000e+00 : f32
    %285 = vector.broadcast %cst_81 : f32 to vector<2x32xf32>
    %286 = arith.addf %285, %284 : vector<2x32xf32>
    %287 = arith.divf %285, %286 : vector<2x32xf32>
    %288 = vector.extract_strided_slice %275 {offsets = [0, 64], sizes = [2, 32], strides = [1, 1]} : vector<2x128xf32> to vector<2x32xf32>
    %289 = math.tanh %288 : vector<2x32xf32>
    %290 = vector.extract_strided_slice %275 {offsets = [0, 96], sizes = [2, 32], strides = [1, 1]} : vector<2x128xf32> to vector<2x32xf32>
    %291 = arith.negf %290 : vector<2x32xf32>
    %292 = math.exp %291 : vector<2x32xf32>
    %cst_82 = arith.constant 1.000000e+00 : f32
    %293 = vector.broadcast %cst_82 : f32 to vector<2x32xf32>
    %294 = arith.addf %293, %292 : vector<2x32xf32>
    %295 = arith.divf %293, %294 : vector<2x32xf32>
    %296 = arith.mulf %287, %269 : vector<2x32xf32>
    %297 = arith.mulf %281, %289 : vector<2x32xf32>
    %298 = arith.addf %296, %297 : vector<2x32xf32>
    %299 = math.tanh %298 : vector<2x32xf32>
    %300 = arith.mulf %295, %299 : vector<2x32xf32>
    %c1_i32_83 = arith.constant 1 : i32
    %c2_i32_84 = arith.constant 2 : i32
    %301 = arith.muli %c1_i32_83, %c2_i32_84 : i32
    %c16_i32_85 = arith.constant 16 : i32
    %302 = arith.addi %c16_i32_85, %301 : i32
    %303 = arith.index_cast %302 : i32 to index
    %c0_86 = arith.constant 0 : index
    %304 = vector.load %arg7[%303, %c0_86] : memref<48x128xf32, #tpu.memory_space<vmem>>, vector<2x128xf32>
    %cst_87 = arith.constant dense<0.000000e+00> : vector<2x128xf32>
    %305 = tpu.matmul %300, %267, %cst_87 {dimension_numbers = #tpu.dot_dimension_numbers<[1], [0], [0], [1], [0, 0, 1, 1], [], []>} : vector<2x32xf32>, vector<32x128xf32>, vector<2x128xf32> -> vector<2x128xf32>
    %306 = arith.addf %304, %305 : vector<2x128xf32>
    %307 = vector.extract_strided_slice %306 {offsets = [0, 0], sizes = [2, 32], strides = [1, 1]} : vector<2x128xf32> to vector<2x32xf32>
    %308 = arith.negf %307 : vector<2x32xf32>
    %309 = math.exp %308 : vector<2x32xf32>
    %cst_88 = arith.constant 1.000000e+00 : f32
    %310 = vector.broadcast %cst_88 : f32 to vector<2x32xf32>
    %311 = arith.addf %310, %309 : vector<2x32xf32>
    %312 = arith.divf %310, %311 : vector<2x32xf32>
    %313 = vector.extract_strided_slice %306 {offsets = [0, 32], sizes = [2, 32], strides = [1, 1]} : vector<2x128xf32> to vector<2x32xf32>
    %314 = arith.negf %313 : vector<2x32xf32>
    %315 = math.exp %314 : vector<2x32xf32>
    %cst_89 = arith.constant 1.000000e+00 : f32
    %316 = vector.broadcast %cst_89 : f32 to vector<2x32xf32>
    %317 = arith.addf %316, %315 : vector<2x32xf32>
    %318 = arith.divf %316, %317 : vector<2x32xf32>
    %319 = vector.extract_strided_slice %306 {offsets = [0, 64], sizes = [2, 32], strides = [1, 1]} : vector<2x128xf32> to vector<2x32xf32>
    %320 = math.tanh %319 : vector<2x32xf32>
    %321 = vector.extract_strided_slice %306 {offsets = [0, 96], sizes = [2, 32], strides = [1, 1]} : vector<2x128xf32> to vector<2x32xf32>
    %322 = arith.negf %321 : vector<2x32xf32>
    %323 = math.exp %322 : vector<2x32xf32>
    %cst_90 = arith.constant 1.000000e+00 : f32
    %324 = vector.broadcast %cst_90 : f32 to vector<2x32xf32>
    %325 = arith.addf %324, %323 : vector<2x32xf32>
    %326 = arith.divf %324, %325 : vector<2x32xf32>
    %327 = arith.mulf %318, %298 : vector<2x32xf32>
    %328 = arith.mulf %312, %320 : vector<2x32xf32>
    %329 = arith.addf %327, %328 : vector<2x32xf32>
    %330 = math.tanh %329 : vector<2x32xf32>
    %331 = arith.mulf %326, %330 : vector<2x32xf32>
    %c2_i32_91 = arith.constant 2 : i32
    %c2_i32_92 = arith.constant 2 : i32
    %332 = arith.muli %c2_i32_91, %c2_i32_92 : i32
    %c16_i32_93 = arith.constant 16 : i32
    %333 = arith.addi %c16_i32_93, %332 : i32
    %334 = arith.index_cast %333 : i32 to index
    %c0_94 = arith.constant 0 : index
    %335 = vector.load %arg7[%334, %c0_94] : memref<48x128xf32, #tpu.memory_space<vmem>>, vector<2x128xf32>
    %cst_95 = arith.constant dense<0.000000e+00> : vector<2x128xf32>
    %336 = tpu.matmul %331, %267, %cst_95 {dimension_numbers = #tpu.dot_dimension_numbers<[1], [0], [0], [1], [0, 0, 1, 1], [], []>} : vector<2x32xf32>, vector<32x128xf32>, vector<2x128xf32> -> vector<2x128xf32>
    %337 = arith.addf %335, %336 : vector<2x128xf32>
    %338 = vector.extract_strided_slice %337 {offsets = [0, 0], sizes = [2, 32], strides = [1, 1]} : vector<2x128xf32> to vector<2x32xf32>
    %339 = arith.negf %338 : vector<2x32xf32>
    %340 = math.exp %339 : vector<2x32xf32>
    %cst_96 = arith.constant 1.000000e+00 : f32
    %341 = vector.broadcast %cst_96 : f32 to vector<2x32xf32>
    %342 = arith.addf %341, %340 : vector<2x32xf32>
    %343 = arith.divf %341, %342 : vector<2x32xf32>
    %344 = vector.extract_strided_slice %337 {offsets = [0, 32], sizes = [2, 32], strides = [1, 1]} : vector<2x128xf32> to vector<2x32xf32>
    %345 = arith.negf %344 : vector<2x32xf32>
    %346 = math.exp %345 : vector<2x32xf32>
    %cst_97 = arith.constant 1.000000e+00 : f32
    %347 = vector.broadcast %cst_97 : f32 to vector<2x32xf32>
    %348 = arith.addf %347, %346 : vector<2x32xf32>
    %349 = arith.divf %347, %348 : vector<2x32xf32>
    %350 = vector.extract_strided_slice %337 {offsets = [0, 64], sizes = [2, 32], strides = [1, 1]} : vector<2x128xf32> to vector<2x32xf32>
    %351 = math.tanh %350 : vector<2x32xf32>
    %352 = vector.extract_strided_slice %337 {offsets = [0, 96], sizes = [2, 32], strides = [1, 1]} : vector<2x128xf32> to vector<2x32xf32>
    %353 = arith.negf %352 : vector<2x32xf32>
    %354 = math.exp %353 : vector<2x32xf32>
    %cst_98 = arith.constant 1.000000e+00 : f32
    %355 = vector.broadcast %cst_98 : f32 to vector<2x32xf32>
    %356 = arith.addf %355, %354 : vector<2x32xf32>
    %357 = arith.divf %355, %356 : vector<2x32xf32>
    %358 = arith.mulf %349, %329 : vector<2x32xf32>
    %359 = arith.mulf %343, %351 : vector<2x32xf32>
    %360 = arith.addf %358, %359 : vector<2x32xf32>
    %361 = math.tanh %360 : vector<2x32xf32>
    %362 = arith.mulf %357, %361 : vector<2x32xf32>
    %c3_i32_99 = arith.constant 3 : i32
    %c2_i32_100 = arith.constant 2 : i32
    %363 = arith.muli %c3_i32_99, %c2_i32_100 : i32
    %c16_i32_101 = arith.constant 16 : i32
    %364 = arith.addi %c16_i32_101, %363 : i32
    %365 = arith.index_cast %364 : i32 to index
    %c0_102 = arith.constant 0 : index
    %366 = vector.load %arg7[%365, %c0_102] : memref<48x128xf32, #tpu.memory_space<vmem>>, vector<2x128xf32>
    %cst_103 = arith.constant dense<0.000000e+00> : vector<2x128xf32>
    %367 = tpu.matmul %362, %267, %cst_103 {dimension_numbers = #tpu.dot_dimension_numbers<[1], [0], [0], [1], [0, 0, 1, 1], [], []>} : vector<2x32xf32>, vector<32x128xf32>, vector<2x128xf32> -> vector<2x128xf32>
    %368 = arith.addf %366, %367 : vector<2x128xf32>
    %369 = vector.extract_strided_slice %368 {offsets = [0, 0], sizes = [2, 32], strides = [1, 1]} : vector<2x128xf32> to vector<2x32xf32>
    %370 = arith.negf %369 : vector<2x32xf32>
    %371 = math.exp %370 : vector<2x32xf32>
    %cst_104 = arith.constant 1.000000e+00 : f32
    %372 = vector.broadcast %cst_104 : f32 to vector<2x32xf32>
    %373 = arith.addf %372, %371 : vector<2x32xf32>
    %374 = arith.divf %372, %373 : vector<2x32xf32>
    %375 = vector.extract_strided_slice %368 {offsets = [0, 32], sizes = [2, 32], strides = [1, 1]} : vector<2x128xf32> to vector<2x32xf32>
    %376 = arith.negf %375 : vector<2x32xf32>
    %377 = math.exp %376 : vector<2x32xf32>
    %cst_105 = arith.constant 1.000000e+00 : f32
    %378 = vector.broadcast %cst_105 : f32 to vector<2x32xf32>
    %379 = arith.addf %378, %377 : vector<2x32xf32>
    %380 = arith.divf %378, %379 : vector<2x32xf32>
    %381 = vector.extract_strided_slice %368 {offsets = [0, 64], sizes = [2, 32], strides = [1, 1]} : vector<2x128xf32> to vector<2x32xf32>
    %382 = math.tanh %381 : vector<2x32xf32>
    %383 = vector.extract_strided_slice %368 {offsets = [0, 96], sizes = [2, 32], strides = [1, 1]} : vector<2x128xf32> to vector<2x32xf32>
    %384 = arith.negf %383 : vector<2x32xf32>
    %385 = math.exp %384 : vector<2x32xf32>
    %cst_106 = arith.constant 1.000000e+00 : f32
    %386 = vector.broadcast %cst_106 : f32 to vector<2x32xf32>
    %387 = arith.addf %386, %385 : vector<2x32xf32>
    %388 = arith.divf %386, %387 : vector<2x32xf32>
    %389 = arith.mulf %380, %360 : vector<2x32xf32>
    %390 = arith.mulf %374, %382 : vector<2x32xf32>
    %391 = arith.addf %389, %390 : vector<2x32xf32>
    %392 = math.tanh %391 : vector<2x32xf32>
    %393 = arith.mulf %388, %392 : vector<2x32xf32>
    %c4_i32_107 = arith.constant 4 : i32
    %c2_i32_108 = arith.constant 2 : i32
    %394 = arith.muli %c4_i32_107, %c2_i32_108 : i32
    %c16_i32_109 = arith.constant 16 : i32
    %395 = arith.addi %c16_i32_109, %394 : i32
    %396 = arith.index_cast %395 : i32 to index
    %c0_110 = arith.constant 0 : index
    %397 = vector.load %arg7[%396, %c0_110] : memref<48x128xf32, #tpu.memory_space<vmem>>, vector<2x128xf32>
    %cst_111 = arith.constant dense<0.000000e+00> : vector<2x128xf32>
    %398 = tpu.matmul %393, %267, %cst_111 {dimension_numbers = #tpu.dot_dimension_numbers<[1], [0], [0], [1], [0, 0, 1, 1], [], []>} : vector<2x32xf32>, vector<32x128xf32>, vector<2x128xf32> -> vector<2x128xf32>
    %399 = arith.addf %397, %398 : vector<2x128xf32>
    %400 = vector.extract_strided_slice %399 {offsets = [0, 0], sizes = [2, 32], strides = [1, 1]} : vector<2x128xf32> to vector<2x32xf32>
    %401 = arith.negf %400 : vector<2x32xf32>
    %402 = math.exp %401 : vector<2x32xf32>
    %cst_112 = arith.constant 1.000000e+00 : f32
    %403 = vector.broadcast %cst_112 : f32 to vector<2x32xf32>
    %404 = arith.addf %403, %402 : vector<2x32xf32>
    %405 = arith.divf %403, %404 : vector<2x32xf32>
    %406 = vector.extract_strided_slice %399 {offsets = [0, 32], sizes = [2, 32], strides = [1, 1]} : vector<2x128xf32> to vector<2x32xf32>
    %407 = arith.negf %406 : vector<2x32xf32>
    %408 = math.exp %407 : vector<2x32xf32>
    %cst_113 = arith.constant 1.000000e+00 : f32
    %409 = vector.broadcast %cst_113 : f32 to vector<2x32xf32>
    %410 = arith.addf %409, %408 : vector<2x32xf32>
    %411 = arith.divf %409, %410 : vector<2x32xf32>
    %412 = vector.extract_strided_slice %399 {offsets = [0, 64], sizes = [2, 32], strides = [1, 1]} : vector<2x128xf32> to vector<2x32xf32>
    %413 = math.tanh %412 : vector<2x32xf32>
    %414 = vector.extract_strided_slice %399 {offsets = [0, 96], sizes = [2, 32], strides = [1, 1]} : vector<2x128xf32> to vector<2x32xf32>
    %415 = arith.negf %414 : vector<2x32xf32>
    %416 = math.exp %415 : vector<2x32xf32>
    %cst_114 = arith.constant 1.000000e+00 : f32
    %417 = vector.broadcast %cst_114 : f32 to vector<2x32xf32>
    %418 = arith.addf %417, %416 : vector<2x32xf32>
    %419 = arith.divf %417, %418 : vector<2x32xf32>
    %420 = arith.mulf %411, %391 : vector<2x32xf32>
    %421 = arith.mulf %405, %413 : vector<2x32xf32>
    %422 = arith.addf %420, %421 : vector<2x32xf32>
    %423 = math.tanh %422 : vector<2x32xf32>
    %424 = arith.mulf %419, %423 : vector<2x32xf32>
    %c5_i32_115 = arith.constant 5 : i32
    %c2_i32_116 = arith.constant 2 : i32
    %425 = arith.muli %c5_i32_115, %c2_i32_116 : i32
    %c16_i32_117 = arith.constant 16 : i32
    %426 = arith.addi %c16_i32_117, %425 : i32
    %427 = arith.index_cast %426 : i32 to index
    %c0_118 = arith.constant 0 : index
    %428 = vector.load %arg7[%427, %c0_118] : memref<48x128xf32, #tpu.memory_space<vmem>>, vector<2x128xf32>
    %cst_119 = arith.constant dense<0.000000e+00> : vector<2x128xf32>
    %429 = tpu.matmul %424, %267, %cst_119 {dimension_numbers = #tpu.dot_dimension_numbers<[1], [0], [0], [1], [0, 0, 1, 1], [], []>} : vector<2x32xf32>, vector<32x128xf32>, vector<2x128xf32> -> vector<2x128xf32>
    %430 = arith.addf %428, %429 : vector<2x128xf32>
    %431 = vector.extract_strided_slice %430 {offsets = [0, 0], sizes = [2, 32], strides = [1, 1]} : vector<2x128xf32> to vector<2x32xf32>
    %432 = arith.negf %431 : vector<2x32xf32>
    %433 = math.exp %432 : vector<2x32xf32>
    %cst_120 = arith.constant 1.000000e+00 : f32
    %434 = vector.broadcast %cst_120 : f32 to vector<2x32xf32>
    %435 = arith.addf %434, %433 : vector<2x32xf32>
    %436 = arith.divf %434, %435 : vector<2x32xf32>
    %437 = vector.extract_strided_slice %430 {offsets = [0, 32], sizes = [2, 32], strides = [1, 1]} : vector<2x128xf32> to vector<2x32xf32>
    %438 = arith.negf %437 : vector<2x32xf32>
    %439 = math.exp %438 : vector<2x32xf32>
    %cst_121 = arith.constant 1.000000e+00 : f32
    %440 = vector.broadcast %cst_121 : f32 to vector<2x32xf32>
    %441 = arith.addf %440, %439 : vector<2x32xf32>
    %442 = arith.divf %440, %441 : vector<2x32xf32>
    %443 = vector.extract_strided_slice %430 {offsets = [0, 64], sizes = [2, 32], strides = [1, 1]} : vector<2x128xf32> to vector<2x32xf32>
    %444 = math.tanh %443 : vector<2x32xf32>
    %445 = vector.extract_strided_slice %430 {offsets = [0, 96], sizes = [2, 32], strides = [1, 1]} : vector<2x128xf32> to vector<2x32xf32>
    %446 = arith.negf %445 : vector<2x32xf32>
    %447 = math.exp %446 : vector<2x32xf32>
    %cst_122 = arith.constant 1.000000e+00 : f32
    %448 = vector.broadcast %cst_122 : f32 to vector<2x32xf32>
    %449 = arith.addf %448, %447 : vector<2x32xf32>
    %450 = arith.divf %448, %449 : vector<2x32xf32>
    %451 = arith.mulf %442, %422 : vector<2x32xf32>
    %452 = arith.mulf %436, %444 : vector<2x32xf32>
    %453 = arith.addf %451, %452 : vector<2x32xf32>
    %454 = math.tanh %453 : vector<2x32xf32>
    %455 = arith.mulf %450, %454 : vector<2x32xf32>
    %c6_i32_123 = arith.constant 6 : i32
    %c2_i32_124 = arith.constant 2 : i32
    %456 = arith.muli %c6_i32_123, %c2_i32_124 : i32
    %c16_i32_125 = arith.constant 16 : i32
    %457 = arith.addi %c16_i32_125, %456 : i32
    %458 = arith.index_cast %457 : i32 to index
    %c0_126 = arith.constant 0 : index
    %459 = vector.load %arg7[%458, %c0_126] : memref<48x128xf32, #tpu.memory_space<vmem>>, vector<2x128xf32>
    %cst_127 = arith.constant dense<0.000000e+00> : vector<2x128xf32>
    %460 = tpu.matmul %455, %267, %cst_127 {dimension_numbers = #tpu.dot_dimension_numbers<[1], [0], [0], [1], [0, 0, 1, 1], [], []>} : vector<2x32xf32>, vector<32x128xf32>, vector<2x128xf32> -> vector<2x128xf32>
    %461 = arith.addf %459, %460 : vector<2x128xf32>
    %462 = vector.extract_strided_slice %461 {offsets = [0, 0], sizes = [2, 32], strides = [1, 1]} : vector<2x128xf32> to vector<2x32xf32>
    %463 = arith.negf %462 : vector<2x32xf32>
    %464 = math.exp %463 : vector<2x32xf32>
    %cst_128 = arith.constant 1.000000e+00 : f32
    %465 = vector.broadcast %cst_128 : f32 to vector<2x32xf32>
    %466 = arith.addf %465, %464 : vector<2x32xf32>
    %467 = arith.divf %465, %466 : vector<2x32xf32>
    %468 = vector.extract_strided_slice %461 {offsets = [0, 32], sizes = [2, 32], strides = [1, 1]} : vector<2x128xf32> to vector<2x32xf32>
    %469 = arith.negf %468 : vector<2x32xf32>
    %470 = math.exp %469 : vector<2x32xf32>
    %cst_129 = arith.constant 1.000000e+00 : f32
    %471 = vector.broadcast %cst_129 : f32 to vector<2x32xf32>
    %472 = arith.addf %471, %470 : vector<2x32xf32>
    %473 = arith.divf %471, %472 : vector<2x32xf32>
    %474 = vector.extract_strided_slice %461 {offsets = [0, 64], sizes = [2, 32], strides = [1, 1]} : vector<2x128xf32> to vector<2x32xf32>
    %475 = math.tanh %474 : vector<2x32xf32>
    %476 = vector.extract_strided_slice %461 {offsets = [0, 96], sizes = [2, 32], strides = [1, 1]} : vector<2x128xf32> to vector<2x32xf32>
    %477 = arith.negf %476 : vector<2x32xf32>
    %478 = math.exp %477 : vector<2x32xf32>
    %cst_130 = arith.constant 1.000000e+00 : f32
    %479 = vector.broadcast %cst_130 : f32 to vector<2x32xf32>
    %480 = arith.addf %479, %478 : vector<2x32xf32>
    %481 = arith.divf %479, %480 : vector<2x32xf32>
    %482 = arith.mulf %473, %453 : vector<2x32xf32>
    %483 = arith.mulf %467, %475 : vector<2x32xf32>
    %484 = arith.addf %482, %483 : vector<2x32xf32>
    %485 = math.tanh %484 : vector<2x32xf32>
    %486 = arith.mulf %481, %485 : vector<2x32xf32>
    %c7_i32_131 = arith.constant 7 : i32
    %c2_i32_132 = arith.constant 2 : i32
    %487 = arith.muli %c7_i32_131, %c2_i32_132 : i32
    %c16_i32_133 = arith.constant 16 : i32
    %488 = arith.addi %c16_i32_133, %487 : i32
    %489 = arith.index_cast %488 : i32 to index
    %c0_134 = arith.constant 0 : index
    %490 = vector.load %arg7[%489, %c0_134] : memref<48x128xf32, #tpu.memory_space<vmem>>, vector<2x128xf32>
    %cst_135 = arith.constant dense<0.000000e+00> : vector<2x128xf32>
    %491 = tpu.matmul %486, %267, %cst_135 {dimension_numbers = #tpu.dot_dimension_numbers<[1], [0], [0], [1], [0, 0, 1, 1], [], []>} : vector<2x32xf32>, vector<32x128xf32>, vector<2x128xf32> -> vector<2x128xf32>
    %492 = arith.addf %490, %491 : vector<2x128xf32>
    %493 = vector.extract_strided_slice %492 {offsets = [0, 0], sizes = [2, 32], strides = [1, 1]} : vector<2x128xf32> to vector<2x32xf32>
    %494 = arith.negf %493 : vector<2x32xf32>
    %495 = math.exp %494 : vector<2x32xf32>
    %cst_136 = arith.constant 1.000000e+00 : f32
    %496 = vector.broadcast %cst_136 : f32 to vector<2x32xf32>
    %497 = arith.addf %496, %495 : vector<2x32xf32>
    %498 = arith.divf %496, %497 : vector<2x32xf32>
    %499 = vector.extract_strided_slice %492 {offsets = [0, 32], sizes = [2, 32], strides = [1, 1]} : vector<2x128xf32> to vector<2x32xf32>
    %500 = arith.negf %499 : vector<2x32xf32>
    %501 = math.exp %500 : vector<2x32xf32>
    %cst_137 = arith.constant 1.000000e+00 : f32
    %502 = vector.broadcast %cst_137 : f32 to vector<2x32xf32>
    %503 = arith.addf %502, %501 : vector<2x32xf32>
    %504 = arith.divf %502, %503 : vector<2x32xf32>
    %505 = vector.extract_strided_slice %492 {offsets = [0, 64], sizes = [2, 32], strides = [1, 1]} : vector<2x128xf32> to vector<2x32xf32>
    %506 = math.tanh %505 : vector<2x32xf32>
    %507 = vector.extract_strided_slice %492 {offsets = [0, 96], sizes = [2, 32], strides = [1, 1]} : vector<2x128xf32> to vector<2x32xf32>
    %508 = arith.negf %507 : vector<2x32xf32>
    %509 = math.exp %508 : vector<2x32xf32>
    %cst_138 = arith.constant 1.000000e+00 : f32
    %510 = vector.broadcast %cst_138 : f32 to vector<2x32xf32>
    %511 = arith.addf %510, %509 : vector<2x32xf32>
    %512 = arith.divf %510, %511 : vector<2x32xf32>
    %513 = arith.mulf %504, %484 : vector<2x32xf32>
    %514 = arith.mulf %498, %506 : vector<2x32xf32>
    %515 = arith.addf %513, %514 : vector<2x32xf32>
    %516 = math.tanh %515 : vector<2x32xf32>
    %517 = arith.mulf %512, %516 : vector<2x32xf32>
    %c8_i32_139 = arith.constant 8 : i32
    %c32_140 = arith.constant 32 : index
    %c0_141 = arith.constant 0 : index
    %518 = vector.load %arg0[%c32_140, %c0_141] : memref<48x128xf32, #tpu.memory_space<vmem>>, vector<16x128xf32>
    %c256 = arith.constant 256 : index
    %c0_142 = arith.constant 0 : index
    %519 = vector.load %arg1[%c256, %c0_142] : memref<640x128xf32, #tpu.memory_space<vmem>>, vector<128x128xf32>
    %c2 = arith.constant 2 : index
    %c0_143 = arith.constant 0 : index
    %520 = vector.load %arg3[%c2, %c0_143] : memref<5x128xf32, #tpu.memory_space<vmem>>, vector<1x128xf32>
    %521 = vector.shape_cast %520 : vector<1x128xf32> to vector<1x128xf32>
    %522 = vector.broadcast %521 : vector<1x128xf32> to vector<16x128xf32>
    %cst_144 = arith.constant dense<0.000000e+00> : vector<16x128xf32>
    %523 = tpu.matmul %518, %519, %cst_144 {dimension_numbers = #tpu.dot_dimension_numbers<[1], [0], [0], [1], [0, 0, 1, 1], [], []>} : vector<16x128xf32>, vector<128x128xf32>, vector<16x128xf32> -> vector<16x128xf32>
    %524 = arith.addf %523, %522 : vector<16x128xf32>
    %c32_145 = arith.constant 32 : index
    %c0_146 = arith.constant 0 : index
    %525 = vector.load %arg7[%c32_145, %c0_146] : memref<48x128xf32, #tpu.memory_space<vmem>>, vector<16x128xf32>
    tpu.vector_store %arg7[%c32_145, %c0_146], %524 {strides = array<i32>} : memref<48x128xf32, #tpu.memory_space<vmem>>, vector<16x128xf32>,
    %c64 = arith.constant 64 : index
    %c0_147 = arith.constant 0 : index
    %526 = vector.load %arg2[%c64, %c0_147] : memref<160x128xf32, #tpu.memory_space<vmem>>, vector<32x128xf32>
    %cst_148 = arith.constant 0.000000e+00 : f32
    %527 = vector.broadcast %cst_148 : f32 to vector<2x32xf32>
    %cst_149 = arith.constant 0.000000e+00 : f32
    %528 = vector.broadcast %cst_149 : f32 to vector<2x32xf32>
    %c0_i32_150 = arith.constant 0 : i32
    %c2_i32_151 = arith.constant 2 : i32
    %529 = arith.muli %c0_i32_150, %c2_i32_151 : i32
    %c32_i32 = arith.constant 32 : i32
    %530 = arith.addi %c32_i32, %529 : i32
    %531 = arith.index_cast %530 : i32 to index
    %c0_152 = arith.constant 0 : index
    %532 = vector.load %arg7[%531, %c0_152] : memref<48x128xf32, #tpu.memory_space<vmem>>, vector<2x128xf32>
    %cst_153 = arith.constant dense<0.000000e+00> : vector<2x128xf32>
    %533 = tpu.matmul %527, %526, %cst_153 {dimension_numbers = #tpu.dot_dimension_numbers<[1], [0], [0], [1], [0, 0, 1, 1], [], []>} : vector<2x32xf32>, vector<32x128xf32>, vector<2x128xf32> -> vector<2x128xf32>
    %534 = arith.addf %532, %533 : vector<2x128xf32>
    %535 = vector.extract_strided_slice %534 {offsets = [0, 0], sizes = [2, 32], strides = [1, 1]} : vector<2x128xf32> to vector<2x32xf32>
    %536 = arith.negf %535 : vector<2x32xf32>
    %537 = math.exp %536 : vector<2x32xf32>
    %cst_154 = arith.constant 1.000000e+00 : f32
    %538 = vector.broadcast %cst_154 : f32 to vector<2x32xf32>
    %539 = arith.addf %538, %537 : vector<2x32xf32>
    %540 = arith.divf %538, %539 : vector<2x32xf32>
    %541 = vector.extract_strided_slice %534 {offsets = [0, 32], sizes = [2, 32], strides = [1, 1]} : vector<2x128xf32> to vector<2x32xf32>
    %542 = arith.negf %541 : vector<2x32xf32>
    %543 = math.exp %542 : vector<2x32xf32>
    %cst_155 = arith.constant 1.000000e+00 : f32
    %544 = vector.broadcast %cst_155 : f32 to vector<2x32xf32>
    %545 = arith.addf %544, %543 : vector<2x32xf32>
    %546 = arith.divf %544, %545 : vector<2x32xf32>
    %547 = vector.extract_strided_slice %534 {offsets = [0, 64], sizes = [2, 32], strides = [1, 1]} : vector<2x128xf32> to vector<2x32xf32>
    %548 = math.tanh %547 : vector<2x32xf32>
    %549 = vector.extract_strided_slice %534 {offsets = [0, 96], sizes = [2, 32], strides = [1, 1]} : vector<2x128xf32> to vector<2x32xf32>
    %550 = arith.negf %549 : vector<2x32xf32>
    %551 = math.exp %550 : vector<2x32xf32>
    %cst_156 = arith.constant 1.000000e+00 : f32
    %552 = vector.broadcast %cst_156 : f32 to vector<2x32xf32>
    %553 = arith.addf %552, %551 : vector<2x32xf32>
    %554 = arith.divf %552, %553 : vector<2x32xf32>
    %555 = arith.mulf %546, %528 : vector<2x32xf32>
    %556 = arith.mulf %540, %548 : vector<2x32xf32>
    %557 = arith.addf %555, %556 : vector<2x32xf32>
    %558 = math.tanh %557 : vector<2x32xf32>
    %559 = arith.mulf %554, %558 : vector<2x32xf32>
    %c1_i32_157 = arith.constant 1 : i32
    %c2_i32_158 = arith.constant 2 : i32
    %560 = arith.muli %c1_i32_157, %c2_i32_158 : i32
    %c32_i32_159 = arith.constant 32 : i32
    %561 = arith.addi %c32_i32_159, %560 : i32
    %562 = arith.index_cast %561 : i32 to index
    %c0_160 = arith.constant 0 : index
    %563 = vector.load %arg7[%562, %c0_160] : memref<48x128xf32, #tpu.memory_space<vmem>>, vector<2x128xf32>
    %cst_161 = arith.constant dense<0.000000e+00> : vector<2x128xf32>
    %564 = tpu.matmul %559, %526, %cst_161 {dimension_numbers = #tpu.dot_dimension_numbers<[1], [0], [0], [1], [0, 0, 1, 1], [], []>} : vector<2x32xf32>, vector<32x128xf32>, vector<2x128xf32> -> vector<2x128xf32>
    %565 = arith.addf %563, %564 : vector<2x128xf32>
    %566 = vector.extract_strided_slice %565 {offsets = [0, 0], sizes = [2, 32], strides = [1, 1]} : vector<2x128xf32> to vector<2x32xf32>
    %567 = arith.negf %566 : vector<2x32xf32>
    %568 = math.exp %567 : vector<2x32xf32>
    %cst_162 = arith.constant 1.000000e+00 : f32
    %569 = vector.broadcast %cst_162 : f32 to vector<2x32xf32>
    %570 = arith.addf %569, %568 : vector<2x32xf32>
    %571 = arith.divf %569, %570 : vector<2x32xf32>
    %572 = vector.extract_strided_slice %565 {offsets = [0, 32], sizes = [2, 32], strides = [1, 1]} : vector<2x128xf32> to vector<2x32xf32>
    %573 = arith.negf %572 : vector<2x32xf32>
    %574 = math.exp %573 : vector<2x32xf32>
    %cst_163 = arith.constant 1.000000e+00 : f32
    %575 = vector.broadcast %cst_163 : f32 to vector<2x32xf32>
    %576 = arith.addf %575, %574 : vector<2x32xf32>
    %577 = arith.divf %575, %576 : vector<2x32xf32>
    %578 = vector.extract_strided_slice %565 {offsets = [0, 64], sizes = [2, 32], strides = [1, 1]} : vector<2x128xf32> to vector<2x32xf32>
    %579 = math.tanh %578 : vector<2x32xf32>
    %580 = vector.extract_strided_slice %565 {offsets = [0, 96], sizes = [2, 32], strides = [1, 1]} : vector<2x128xf32> to vector<2x32xf32>
    %581 = arith.negf %580 : vector<2x32xf32>
    %582 = math.exp %581 : vector<2x32xf32>
    %cst_164 = arith.constant 1.000000e+00 : f32
    %583 = vector.broadcast %cst_164 : f32 to vector<2x32xf32>
    %584 = arith.addf %583, %582 : vector<2x32xf32>
    %585 = arith.divf %583, %584 : vector<2x32xf32>
    %586 = arith.mulf %577, %557 : vector<2x32xf32>
    %587 = arith.mulf %571, %579 : vector<2x32xf32>
    %588 = arith.addf %586, %587 : vector<2x32xf32>
    %589 = math.tanh %588 : vector<2x32xf32>
    %590 = arith.mulf %585, %589 : vector<2x32xf32>
    %c2_i32_165 = arith.constant 2 : i32
    %c2_i32_166 = arith.constant 2 : i32
    %591 = arith.muli %c2_i32_165, %c2_i32_166 : i32
    %c32_i32_167 = arith.constant 32 : i32
    %592 = arith.addi %c32_i32_167, %591 : i32
    %593 = arith.index_cast %592 : i32 to index
    %c0_168 = arith.constant 0 : index
    %594 = vector.load %arg7[%593, %c0_168] : memref<48x128xf32, #tpu.memory_space<vmem>>, vector<2x128xf32>
    %cst_169 = arith.constant dense<0.000000e+00> : vector<2x128xf32>
    %595 = tpu.matmul %590, %526, %cst_169 {dimension_numbers = #tpu.dot_dimension_numbers<[1], [0], [0], [1], [0, 0, 1, 1], [], []>} : vector<2x32xf32>, vector<32x128xf32>, vector<2x128xf32> -> vector<2x128xf32>
    %596 = arith.addf %594, %595 : vector<2x128xf32>
    %597 = vector.extract_strided_slice %596 {offsets = [0, 0], sizes = [2, 32], strides = [1, 1]} : vector<2x128xf32> to vector<2x32xf32>
    %598 = arith.negf %597 : vector<2x32xf32>
    %599 = math.exp %598 : vector<2x32xf32>
    %cst_170 = arith.constant 1.000000e+00 : f32
    %600 = vector.broadcast %cst_170 : f32 to vector<2x32xf32>
    %601 = arith.addf %600, %599 : vector<2x32xf32>
    %602 = arith.divf %600, %601 : vector<2x32xf32>
    %603 = vector.extract_strided_slice %596 {offsets = [0, 32], sizes = [2, 32], strides = [1, 1]} : vector<2x128xf32> to vector<2x32xf32>
    %604 = arith.negf %603 : vector<2x32xf32>
    %605 = math.exp %604 : vector<2x32xf32>
    %cst_171 = arith.constant 1.000000e+00 : f32
    %606 = vector.broadcast %cst_171 : f32 to vector<2x32xf32>
    %607 = arith.addf %606, %605 : vector<2x32xf32>
    %608 = arith.divf %606, %607 : vector<2x32xf32>
    %609 = vector.extract_strided_slice %596 {offsets = [0, 64], sizes = [2, 32], strides = [1, 1]} : vector<2x128xf32> to vector<2x32xf32>
    %610 = math.tanh %609 : vector<2x32xf32>
    %611 = vector.extract_strided_slice %596 {offsets = [0, 96], sizes = [2, 32], strides = [1, 1]} : vector<2x128xf32> to vector<2x32xf32>
    %612 = arith.negf %611 : vector<2x32xf32>
    %613 = math.exp %612 : vector<2x32xf32>
    %cst_172 = arith.constant 1.000000e+00 : f32
    %614 = vector.broadcast %cst_172 : f32 to vector<2x32xf32>
    %615 = arith.addf %614, %613 : vector<2x32xf32>
    %616 = arith.divf %614, %615 : vector<2x32xf32>
    %617 = arith.mulf %608, %588 : vector<2x32xf32>
    %618 = arith.mulf %602, %610 : vector<2x32xf32>
    %619 = arith.addf %617, %618 : vector<2x32xf32>
    %620 = math.tanh %619 : vector<2x32xf32>
    %621 = arith.mulf %616, %620 : vector<2x32xf32>
    %c3_i32_173 = arith.constant 3 : i32
    %c2_i32_174 = arith.constant 2 : i32
    %622 = arith.muli %c3_i32_173, %c2_i32_174 : i32
    %c32_i32_175 = arith.constant 32 : i32
    %623 = arith.addi %c32_i32_175, %622 : i32
    %624 = arith.index_cast %623 : i32 to index
    %c0_176 = arith.constant 0 : index
    %625 = vector.load %arg7[%624, %c0_176] : memref<48x128xf32, #tpu.memory_space<vmem>>, vector<2x128xf32>
    %cst_177 = arith.constant dense<0.000000e+00> : vector<2x128xf32>
    %626 = tpu.matmul %621, %526, %cst_177 {dimension_numbers = #tpu.dot_dimension_numbers<[1], [0], [0], [1], [0, 0, 1, 1], [], []>} : vector<2x32xf32>, vector<32x128xf32>, vector<2x128xf32> -> vector<2x128xf32>
    %627 = arith.addf %625, %626 : vector<2x128xf32>
    %628 = vector.extract_strided_slice %627 {offsets = [0, 0], sizes = [2, 32], strides = [1, 1]} : vector<2x128xf32> to vector<2x32xf32>
    %629 = arith.negf %628 : vector<2x32xf32>
    %630 = math.exp %629 : vector<2x32xf32>
    %cst_178 = arith.constant 1.000000e+00 : f32
    %631 = vector.broadcast %cst_178 : f32 to vector<2x32xf32>
    %632 = arith.addf %631, %630 : vector<2x32xf32>
    %633 = arith.divf %631, %632 : vector<2x32xf32>
    %634 = vector.extract_strided_slice %627 {offsets = [0, 32], sizes = [2, 32], strides = [1, 1]} : vector<2x128xf32> to vector<2x32xf32>
    %635 = arith.negf %634 : vector<2x32xf32>
    %636 = math.exp %635 : vector<2x32xf32>
    %cst_179 = arith.constant 1.000000e+00 : f32
    %637 = vector.broadcast %cst_179 : f32 to vector<2x32xf32>
    %638 = arith.addf %637, %636 : vector<2x32xf32>
    %639 = arith.divf %637, %638 : vector<2x32xf32>
    %640 = vector.extract_strided_slice %627 {offsets = [0, 64], sizes = [2, 32], strides = [1, 1]} : vector<2x128xf32> to vector<2x32xf32>
    %641 = math.tanh %640 : vector<2x32xf32>
    %642 = vector.extract_strided_slice %627 {offsets = [0, 96], sizes = [2, 32], strides = [1, 1]} : vector<2x128xf32> to vector<2x32xf32>
    %643 = arith.negf %642 : vector<2x32xf32>
    %644 = math.exp %643 : vector<2x32xf32>
    %cst_180 = arith.constant 1.000000e+00 : f32
    %645 = vector.broadcast %cst_180 : f32 to vector<2x32xf32>
    %646 = arith.addf %645, %644 : vector<2x32xf32>
    %647 = arith.divf %645, %646 : vector<2x32xf32>
    %648 = arith.mulf %639, %619 : vector<2x32xf32>
    %649 = arith.mulf %633, %641 : vector<2x32xf32>
    %650 = arith.addf %648, %649 : vector<2x32xf32>
    %651 = math.tanh %650 : vector<2x32xf32>
    %652 = arith.mulf %647, %651 : vector<2x32xf32>
    %c4_i32_181 = arith.constant 4 : i32
    %c2_i32_182 = arith.constant 2 : i32
    %653 = arith.muli %c4_i32_181, %c2_i32_182 : i32
    %c32_i32_183 = arith.constant 32 : i32
    %654 = arith.addi %c32_i32_183, %653 : i32
    %655 = arith.index_cast %654 : i32 to index
    %c0_184 = arith.constant 0 : index
    %656 = vector.load %arg7[%655, %c0_184] : memref<48x128xf32, #tpu.memory_space<vmem>>, vector<2x128xf32>
    %cst_185 = arith.constant dense<0.000000e+00> : vector<2x128xf32>
    %657 = tpu.matmul %652, %526, %cst_185 {dimension_numbers = #tpu.dot_dimension_numbers<[1], [0], [0], [1], [0, 0, 1, 1], [], []>} : vector<2x32xf32>, vector<32x128xf32>, vector<2x128xf32> -> vector<2x128xf32>
    %658 = arith.addf %656, %657 : vector<2x128xf32>
    %659 = vector.extract_strided_slice %658 {offsets = [0, 0], sizes = [2, 32], strides = [1, 1]} : vector<2x128xf32> to vector<2x32xf32>
    %660 = arith.negf %659 : vector<2x32xf32>
    %661 = math.exp %660 : vector<2x32xf32>
    %cst_186 = arith.constant 1.000000e+00 : f32
    %662 = vector.broadcast %cst_186 : f32 to vector<2x32xf32>
    %663 = arith.addf %662, %661 : vector<2x32xf32>
    %664 = arith.divf %662, %663 : vector<2x32xf32>
    %665 = vector.extract_strided_slice %658 {offsets = [0, 32], sizes = [2, 32], strides = [1, 1]} : vector<2x128xf32> to vector<2x32xf32>
    %666 = arith.negf %665 : vector<2x32xf32>
    %667 = math.exp %666 : vector<2x32xf32>
    %cst_187 = arith.constant 1.000000e+00 : f32
    %668 = vector.broadcast %cst_187 : f32 to vector<2x32xf32>
    %669 = arith.addf %668, %667 : vector<2x32xf32>
    %670 = arith.divf %668, %669 : vector<2x32xf32>
    %671 = vector.extract_strided_slice %658 {offsets = [0, 64], sizes = [2, 32], strides = [1, 1]} : vector<2x128xf32> to vector<2x32xf32>
    %672 = math.tanh %671 : vector<2x32xf32>
    %673 = vector.extract_strided_slice %658 {offsets = [0, 96], sizes = [2, 32], strides = [1, 1]} : vector<2x128xf32> to vector<2x32xf32>
    %674 = arith.negf %673 : vector<2x32xf32>
    %675 = math.exp %674 : vector<2x32xf32>
    %cst_188 = arith.constant 1.000000e+00 : f32
    %676 = vector.broadcast %cst_188 : f32 to vector<2x32xf32>
    %677 = arith.addf %676, %675 : vector<2x32xf32>
    %678 = arith.divf %676, %677 : vector<2x32xf32>
    %679 = arith.mulf %670, %650 : vector<2x32xf32>
    %680 = arith.mulf %664, %672 : vector<2x32xf32>
    %681 = arith.addf %679, %680 : vector<2x32xf32>
    %682 = math.tanh %681 : vector<2x32xf32>
    %683 = arith.mulf %678, %682 : vector<2x32xf32>
    %c5_i32_189 = arith.constant 5 : i32
    %c2_i32_190 = arith.constant 2 : i32
    %684 = arith.muli %c5_i32_189, %c2_i32_190 : i32
    %c32_i32_191 = arith.constant 32 : i32
    %685 = arith.addi %c32_i32_191, %684 : i32
    %686 = arith.index_cast %685 : i32 to index
    %c0_192 = arith.constant 0 : index
    %687 = vector.load %arg7[%686, %c0_192] : memref<48x128xf32, #tpu.memory_space<vmem>>, vector<2x128xf32>
    %cst_193 = arith.constant dense<0.000000e+00> : vector<2x128xf32>
    %688 = tpu.matmul %683, %526, %cst_193 {dimension_numbers = #tpu.dot_dimension_numbers<[1], [0], [0], [1], [0, 0, 1, 1], [], []>} : vector<2x32xf32>, vector<32x128xf32>, vector<2x128xf32> -> vector<2x128xf32>
    %689 = arith.addf %687, %688 : vector<2x128xf32>
    %690 = vector.extract_strided_slice %689 {offsets = [0, 0], sizes = [2, 32], strides = [1, 1]} : vector<2x128xf32> to vector<2x32xf32>
    %691 = arith.negf %690 : vector<2x32xf32>
    %692 = math.exp %691 : vector<2x32xf32>
    %cst_194 = arith.constant 1.000000e+00 : f32
    %693 = vector.broadcast %cst_194 : f32 to vector<2x32xf32>
    %694 = arith.addf %693, %692 : vector<2x32xf32>
    %695 = arith.divf %693, %694 : vector<2x32xf32>
    %696 = vector.extract_strided_slice %689 {offsets = [0, 32], sizes = [2, 32], strides = [1, 1]} : vector<2x128xf32> to vector<2x32xf32>
    %697 = arith.negf %696 : vector<2x32xf32>
    %698 = math.exp %697 : vector<2x32xf32>
    %cst_195 = arith.constant 1.000000e+00 : f32
    %699 = vector.broadcast %cst_195 : f32 to vector<2x32xf32>
    %700 = arith.addf %699, %698 : vector<2x32xf32>
    %701 = arith.divf %699, %700 : vector<2x32xf32>
    %702 = vector.extract_strided_slice %689 {offsets = [0, 64], sizes = [2, 32], strides = [1, 1]} : vector<2x128xf32> to vector<2x32xf32>
    %703 = math.tanh %702 : vector<2x32xf32>
    %704 = vector.extract_strided_slice %689 {offsets = [0, 96], sizes = [2, 32], strides = [1, 1]} : vector<2x128xf32> to vector<2x32xf32>
    %705 = arith.negf %704 : vector<2x32xf32>
    %706 = math.exp %705 : vector<2x32xf32>
    %cst_196 = arith.constant 1.000000e+00 : f32
    %707 = vector.broadcast %cst_196 : f32 to vector<2x32xf32>
    %708 = arith.addf %707, %706 : vector<2x32xf32>
    %709 = arith.divf %707, %708 : vector<2x32xf32>
    %710 = arith.mulf %701, %681 : vector<2x32xf32>
    %711 = arith.mulf %695, %703 : vector<2x32xf32>
    %712 = arith.addf %710, %711 : vector<2x32xf32>
    %713 = math.tanh %712 : vector<2x32xf32>
    %714 = arith.mulf %709, %713 : vector<2x32xf32>
    %c6_i32_197 = arith.constant 6 : i32
    %c2_i32_198 = arith.constant 2 : i32
    %715 = arith.muli %c6_i32_197, %c2_i32_198 : i32
    %c32_i32_199 = arith.constant 32 : i32
    %716 = arith.addi %c32_i32_199, %715 : i32
    %717 = arith.index_cast %716 : i32 to index
    %c0_200 = arith.constant 0 : index
    %718 = vector.load %arg7[%717, %c0_200] : memref<48x128xf32, #tpu.memory_space<vmem>>, vector<2x128xf32>
    %cst_201 = arith.constant dense<0.000000e+00> : vector<2x128xf32>
    %719 = tpu.matmul %714, %526, %cst_201 {dimension_numbers = #tpu.dot_dimension_numbers<[1], [0], [0], [1], [0, 0, 1, 1], [], []>} : vector<2x32xf32>, vector<32x128xf32>, vector<2x128xf32> -> vector<2x128xf32>
    %720 = arith.addf %718, %719 : vector<2x128xf32>
    %721 = vector.extract_strided_slice %720 {offsets = [0, 0], sizes = [2, 32], strides = [1, 1]} : vector<2x128xf32> to vector<2x32xf32>
    %722 = arith.negf %721 : vector<2x32xf32>
    %723 = math.exp %722 : vector<2x32xf32>
    %cst_202 = arith.constant 1.000000e+00 : f32
    %724 = vector.broadcast %cst_202 : f32 to vector<2x32xf32>
    %725 = arith.addf %724, %723 : vector<2x32xf32>
    %726 = arith.divf %724, %725 : vector<2x32xf32>
    %727 = vector.extract_strided_slice %720 {offsets = [0, 32], sizes = [2, 32], strides = [1, 1]} : vector<2x128xf32> to vector<2x32xf32>
    %728 = arith.negf %727 : vector<2x32xf32>
    %729 = math.exp %728 : vector<2x32xf32>
    %cst_203 = arith.constant 1.000000e+00 : f32
    %730 = vector.broadcast %cst_203 : f32 to vector<2x32xf32>
    %731 = arith.addf %730, %729 : vector<2x32xf32>
    %732 = arith.divf %730, %731 : vector<2x32xf32>
    %733 = vector.extract_strided_slice %720 {offsets = [0, 64], sizes = [2, 32], strides = [1, 1]} : vector<2x128xf32> to vector<2x32xf32>
    %734 = math.tanh %733 : vector<2x32xf32>
    %735 = vector.extract_strided_slice %720 {offsets = [0, 96], sizes = [2, 32], strides = [1, 1]} : vector<2x128xf32> to vector<2x32xf32>
    %736 = arith.negf %735 : vector<2x32xf32>
    %737 = math.exp %736 : vector<2x32xf32>
    %cst_204 = arith.constant 1.000000e+00 : f32
    %738 = vector.broadcast %cst_204 : f32 to vector<2x32xf32>
    %739 = arith.addf %738, %737 : vector<2x32xf32>
    %740 = arith.divf %738, %739 : vector<2x32xf32>
    %741 = arith.mulf %732, %712 : vector<2x32xf32>
    %742 = arith.mulf %726, %734 : vector<2x32xf32>
    %743 = arith.addf %741, %742 : vector<2x32xf32>
    %744 = math.tanh %743 : vector<2x32xf32>
    %745 = arith.mulf %740, %744 : vector<2x32xf32>
    %c7_i32_205 = arith.constant 7 : i32
    %c2_i32_206 = arith.constant 2 : i32
    %746 = arith.muli %c7_i32_205, %c2_i32_206 : i32
    %c32_i32_207 = arith.constant 32 : i32
    %747 = arith.addi %c32_i32_207, %746 : i32
    %748 = arith.index_cast %747 : i32 to index
    %c0_208 = arith.constant 0 : index
    %749 = vector.load %arg7[%748, %c0_208] : memref<48x128xf32, #tpu.memory_space<vmem>>, vector<2x128xf32>
    %cst_209 = arith.constant dense<0.000000e+00> : vector<2x128xf32>
    %750 = tpu.matmul %745, %526, %cst_209 {dimension_numbers = #tpu.dot_dimension_numbers<[1], [0], [0], [1], [0, 0, 1, 1], [], []>} : vector<2x32xf32>, vector<32x128xf32>, vector<2x128xf32> -> vector<2x128xf32>
    %751 = arith.addf %749, %750 : vector<2x128xf32>
    %752 = vector.extract_strided_slice %751 {offsets = [0, 0], sizes = [2, 32], strides = [1, 1]} : vector<2x128xf32> to vector<2x32xf32>
    %753 = arith.negf %752 : vector<2x32xf32>
    %754 = math.exp %753 : vector<2x32xf32>
    %cst_210 = arith.constant 1.000000e+00 : f32
    %755 = vector.broadcast %cst_210 : f32 to vector<2x32xf32>
    %756 = arith.addf %755, %754 : vector<2x32xf32>
    %757 = arith.divf %755, %756 : vector<2x32xf32>
    %758 = vector.extract_strided_slice %751 {offsets = [0, 32], sizes = [2, 32], strides = [1, 1]} : vector<2x128xf32> to vector<2x32xf32>
    %759 = arith.negf %758 : vector<2x32xf32>
    %760 = math.exp %759 : vector<2x32xf32>
    %cst_211 = arith.constant 1.000000e+00 : f32
    %761 = vector.broadcast %cst_211 : f32 to vector<2x32xf32>
    %762 = arith.addf %761, %760 : vector<2x32xf32>
    %763 = arith.divf %761, %762 : vector<2x32xf32>
    %764 = vector.extract_strided_slice %751 {offsets = [0, 64], sizes = [2, 32], strides = [1, 1]} : vector<2x128xf32> to vector<2x32xf32>
    %765 = math.tanh %764 : vector<2x32xf32>
    %766 = vector.extract_strided_slice %751 {offsets = [0, 96], sizes = [2, 32], strides = [1, 1]} : vector<2x128xf32> to vector<2x32xf32>
    %767 = arith.negf %766 : vector<2x32xf32>
    %768 = math.exp %767 : vector<2x32xf32>
    %cst_212 = arith.constant 1.000000e+00 : f32
    %769 = vector.broadcast %cst_212 : f32 to vector<2x32xf32>
    %770 = arith.addf %769, %768 : vector<2x32xf32>
    %771 = arith.divf %769, %770 : vector<2x32xf32>
    %772 = arith.mulf %763, %743 : vector<2x32xf32>
    %773 = arith.mulf %757, %765 : vector<2x32xf32>
    %774 = arith.addf %772, %773 : vector<2x32xf32>
    %775 = math.tanh %774 : vector<2x32xf32>
    %776 = arith.mulf %771, %775 : vector<2x32xf32>
    %c8_i32_213 = arith.constant 8 : i32
    %777 = arith.addf %517, %258 : vector<2x32xf32>
    %778 = arith.addf %515, %256 : vector<2x32xf32>
    %c3 = arith.constant 3 : index
    %c0_214 = arith.constant 0 : index
    %779 = vector.load %arg3[%c3, %c0_214] : memref<5x128xf32, #tpu.memory_space<vmem>>, vector<1x128xf32>
    %780 = vector.shape_cast %779 : vector<1x128xf32> to vector<1x128xf32>
    %781 = vector.broadcast %780 : vector<1x128xf32> to vector<2x128xf32>
    %c4 = arith.constant 4 : index
    %c0_215 = arith.constant 0 : index
    %782 = vector.load %arg3[%c4, %c0_215] : memref<5x128xf32, #tpu.memory_space<vmem>>, vector<1x128xf32>
    %783 = vector.shape_cast %782 : vector<1x128xf32> to vector<1x128xf32>
    %784 = vector.broadcast %783 : vector<1x128xf32> to vector<2x128xf32>
    %c0_216 = arith.constant 0 : index
    %c0_217 = arith.constant 0 : index
    %785 = vector.load %arg5[%c0_216, %c0_217] : memref<2x128xf32, #tpu.memory_space<vmem>>, vector<1x128xf32>
    %786 = vector.shape_cast %785 : vector<1x128xf32> to vector<1x128xf32>
    %787 = vector.broadcast %786 : vector<1x128xf32> to vector<2x128xf32>
    %c1_218 = arith.constant 1 : index
    %c0_219 = arith.constant 0 : index
    %788 = vector.load %arg5[%c1_218, %c0_219] : memref<2x128xf32, #tpu.memory_space<vmem>>, vector<1x128xf32>
    %789 = vector.shape_cast %788 : vector<1x128xf32> to vector<1x128xf32>
    %790 = vector.broadcast %789 : vector<1x128xf32> to vector<2x128xf32>
    %c14 = arith.constant 14 : index
    %c0_220 = arith.constant 0 : index
    %791 = vector.load %arg0[%c14, %c0_220] : memref<48x128xf32, #tpu.memory_space<vmem>>, vector<2x128xf32>
    %c46 = arith.constant 46 : index
    %c0_221 = arith.constant 0 : index
    %792 = vector.load %arg0[%c46, %c0_221] : memref<48x128xf32, #tpu.memory_space<vmem>>, vector<2x128xf32>
    %c0_i32_222 = arith.constant 0 : i32
    %c384 = arith.constant 384 : index
    %c0_223 = arith.constant 0 : index
    %793 = vector.load %arg1[%c384, %c0_223] : memref<640x128xf32, #tpu.memory_space<vmem>>, vector<128x128xf32>
    %cst_224 = arith.constant dense<0.000000e+00> : vector<2x128xf32>
    %794 = tpu.matmul %791, %793, %cst_224 {dimension_numbers = #tpu.dot_dimension_numbers<[1], [0], [0], [1], [0, 0, 1, 1], [], []>} : vector<2x128xf32>, vector<128x128xf32>, vector<2x128xf32> -> vector<2x128xf32>
    %c96 = arith.constant 96 : index
    %c0_225 = arith.constant 0 : index
    %795 = vector.load %arg2[%c96, %c0_225] : memref<160x128xf32, #tpu.memory_space<vmem>>, vector<32x128xf32>
    %cst_226 = arith.constant dense<0.000000e+00> : vector<2x128xf32>
    %796 = tpu.matmul %777, %795, %cst_226 {dimension_numbers = #tpu.dot_dimension_numbers<[1], [0], [0], [1], [0, 0, 1, 1], [], []>} : vector<2x32xf32>, vector<32x128xf32>, vector<2x128xf32> -> vector<2x128xf32>
    %797 = arith.addf %794, %796 : vector<2x128xf32>
    %798 = arith.addf %797, %781 : vector<2x128xf32>
    %799 = vector.extract_strided_slice %798 {offsets = [0, 0], sizes = [2, 32], strides = [1, 1]} : vector<2x128xf32> to vector<2x32xf32>
    %800 = arith.negf %799 : vector<2x32xf32>
    %801 = math.exp %800 : vector<2x32xf32>
    %cst_227 = arith.constant 1.000000e+00 : f32
    %802 = vector.broadcast %cst_227 : f32 to vector<2x32xf32>
    %803 = arith.addf %802, %801 : vector<2x32xf32>
    %804 = arith.divf %802, %803 : vector<2x32xf32>
    %805 = vector.extract_strided_slice %798 {offsets = [0, 32], sizes = [2, 32], strides = [1, 1]} : vector<2x128xf32> to vector<2x32xf32>
    %806 = arith.negf %805 : vector<2x32xf32>
    %807 = math.exp %806 : vector<2x32xf32>
    %cst_228 = arith.constant 1.000000e+00 : f32
    %808 = vector.broadcast %cst_228 : f32 to vector<2x32xf32>
    %809 = arith.addf %808, %807 : vector<2x32xf32>
    %810 = arith.divf %808, %809 : vector<2x32xf32>
    %811 = vector.extract_strided_slice %798 {offsets = [0, 64], sizes = [2, 32], strides = [1, 1]} : vector<2x128xf32> to vector<2x32xf32>
    %812 = math.tanh %811 : vector<2x32xf32>
    %813 = vector.extract_strided_slice %798 {offsets = [0, 96], sizes = [2, 32], strides = [1, 1]} : vector<2x128xf32> to vector<2x32xf32>
    %814 = arith.negf %813 : vector<2x32xf32>
    %815 = math.exp %814 : vector<2x32xf32>
    %cst_229 = arith.constant 1.000000e+00 : f32
    %816 = vector.broadcast %cst_229 : f32 to vector<2x32xf32>
    %817 = arith.addf %816, %815 : vector<2x32xf32>
    %818 = arith.divf %816, %817 : vector<2x32xf32>
    %819 = arith.mulf %810, %778 : vector<2x32xf32>
    %820 = arith.mulf %804, %812 : vector<2x32xf32>
    %821 = arith.addf %819, %820 : vector<2x32xf32>
    %822 = math.tanh %821 : vector<2x32xf32>
    %823 = arith.mulf %818, %822 : vector<2x32xf32>
    %c0_230 = arith.constant 0 : index
    %c0_231 = arith.constant 0 : index
    %824 = vector.load %arg4[%c0_230, %c0_231] : memref<64x128xf32, #tpu.memory_space<vmem>>, vector<32x128xf32>
    %cst_232 = arith.constant dense<0.000000e+00> : vector<2x128xf32>
    %825 = tpu.matmul %823, %824, %cst_232 {dimension_numbers = #tpu.dot_dimension_numbers<[1], [0], [0], [1], [0, 0, 1, 1], [], []>} : vector<2x32xf32>, vector<32x128xf32>, vector<2x128xf32> -> vector<2x128xf32>
    %826 = arith.addf %825, %787 : vector<2x128xf32>
    %cst_233 = arith.constant -1.000000e+00 : f32
    %cst_234 = arith.constant 1.000000e+00 : f32
    %827 = vector.broadcast %cst_233 : f32 to vector<2x128xf32>
    %828 = arith.maximumf %827, %826 : vector<2x128xf32>
    %829 = vector.broadcast %cst_234 : f32 to vector<2x128xf32>
    %830 = arith.minimumf %829, %828 : vector<2x128xf32>
    %c2_i32_235 = arith.constant 2 : i32
    %831 = arith.muli %c0_i32_222, %c2_i32_235 : i32
    %832 = arith.index_cast %831 : i32 to index
    %c0_236 = arith.constant 0 : index
    %833 = vector.load %arg6[%832, %c0_236] : memref<32x128xf32, #tpu.memory_space<vmem>>, vector<2x128xf32>
    tpu.vector_store %arg6[%832, %c0_236], %830 {strides = array<i32>} : memref<32x128xf32, #tpu.memory_space<vmem>>, vector<2x128xf32>,
    %c512 = arith.constant 512 : index
    %c0_237 = arith.constant 0 : index
    %834 = vector.load %arg1[%c512, %c0_237] : memref<640x128xf32, #tpu.memory_space<vmem>>, vector<128x128xf32>
    %cst_238 = arith.constant dense<0.000000e+00> : vector<2x128xf32>
    %835 = tpu.matmul %792, %834, %cst_238 {dimension_numbers = #tpu.dot_dimension_numbers<[1], [0], [0], [1], [0, 0, 1, 1], [], []>} : vector<2x128xf32>, vector<128x128xf32>, vector<2x128xf32> -> vector<2x128xf32>
    %c128_239 = arith.constant 128 : index
    %c0_240 = arith.constant 0 : index
    %836 = vector.load %arg2[%c128_239, %c0_240] : memref<160x128xf32, #tpu.memory_space<vmem>>, vector<32x128xf32>
    %cst_241 = arith.constant dense<0.000000e+00> : vector<2x128xf32>
    %837 = tpu.matmul %776, %836, %cst_241 {dimension_numbers = #tpu.dot_dimension_numbers<[1], [0], [0], [1], [0, 0, 1, 1], [], []>} : vector<2x32xf32>, vector<32x128xf32>, vector<2x128xf32> -> vector<2x128xf32>
    %838 = arith.addf %835, %837 : vector<2x128xf32>
    %839 = arith.addf %838, %784 : vector<2x128xf32>
    %840 = vector.extract_strided_slice %839 {offsets = [0, 0], sizes = [2, 32], strides = [1, 1]} : vector<2x128xf32> to vector<2x32xf32>
    %841 = arith.negf %840 : vector<2x32xf32>
    %842 = math.exp %841 : vector<2x32xf32>
    %cst_242 = arith.constant 1.000000e+00 : f32
    %843 = vector.broadcast %cst_242 : f32 to vector<2x32xf32>
    %844 = arith.addf %843, %842 : vector<2x32xf32>
    %845 = arith.divf %843, %844 : vector<2x32xf32>
    %846 = vector.extract_strided_slice %839 {offsets = [0, 32], sizes = [2, 32], strides = [1, 1]} : vector<2x128xf32> to vector<2x32xf32>
    %847 = arith.negf %846 : vector<2x32xf32>
    %848 = math.exp %847 : vector<2x32xf32>
    %cst_243 = arith.constant 1.000000e+00 : f32
    %849 = vector.broadcast %cst_243 : f32 to vector<2x32xf32>
    %850 = arith.addf %849, %848 : vector<2x32xf32>
    %851 = arith.divf %849, %850 : vector<2x32xf32>
    %852 = vector.extract_strided_slice %839 {offsets = [0, 64], sizes = [2, 32], strides = [1, 1]} : vector<2x128xf32> to vector<2x32xf32>
    %853 = math.tanh %852 : vector<2x32xf32>
    %854 = vector.extract_strided_slice %839 {offsets = [0, 96], sizes = [2, 32], strides = [1, 1]} : vector<2x128xf32> to vector<2x32xf32>
    %855 = arith.negf %854 : vector<2x32xf32>
    %856 = math.exp %855 : vector<2x32xf32>
    %cst_244 = arith.constant 1.000000e+00 : f32
    %857 = vector.broadcast %cst_244 : f32 to vector<2x32xf32>
    %858 = arith.addf %857, %856 : vector<2x32xf32>
    %859 = arith.divf %857, %858 : vector<2x32xf32>
    %860 = arith.mulf %851, %774 : vector<2x32xf32>
    %861 = arith.mulf %845, %853 : vector<2x32xf32>
    %862 = arith.addf %860, %861 : vector<2x32xf32>
    %863 = math.tanh %862 : vector<2x32xf32>
    %864 = arith.mulf %859, %863 : vector<2x32xf32>
    %c32_245 = arith.constant 32 : index
    %c0_246 = arith.constant 0 : index
    %865 = vector.load %arg4[%c32_245, %c0_246] : memref<64x128xf32, #tpu.memory_space<vmem>>, vector<32x128xf32>
    %cst_247 = arith.constant dense<0.000000e+00> : vector<2x128xf32>
    %866 = tpu.matmul %864, %865, %cst_247 {dimension_numbers = #tpu.dot_dimension_numbers<[1], [0], [0], [1], [0, 0, 1, 1], [], []>} : vector<2x32xf32>, vector<32x128xf32>, vector<2x128xf32> -> vector<2x128xf32>
    %867 = arith.addf %866, %790 : vector<2x128xf32>
    %868 = arith.negf %867 : vector<2x128xf32>
    %869 = math.exp %868 : vector<2x128xf32>
    %cst_248 = arith.constant 1.000000e+00 : f32
    %870 = vector.broadcast %cst_248 : f32 to vector<2x128xf32>
    %871 = arith.addf %870, %869 : vector<2x128xf32>
    %872 = arith.divf %870, %871 : vector<2x128xf32>
    %c2_i32_249 = arith.constant 2 : i32
    %873 = arith.muli %c0_i32_222, %c2_i32_249 : i32
    %c16_i32_250 = arith.constant 16 : i32
    %874 = arith.addi %c16_i32_250, %873 : i32
    %875 = arith.index_cast %874 : i32 to index
    %c0_251 = arith.constant 0 : index
    %876 = vector.load %arg6[%875, %c0_251] : memref<32x128xf32, #tpu.memory_space<vmem>>, vector<2x128xf32>
    tpu.vector_store %arg6[%875, %c0_251], %872 {strides = array<i32>} : memref<32x128xf32, #tpu.memory_space<vmem>>, vector<2x128xf32>,
    %c1_i32_252 = arith.constant 1 : i32
    %c384_253 = arith.constant 384 : index
    %c0_254 = arith.constant 0 : index
    %877 = vector.load %arg1[%c384_253, %c0_254] : memref<640x128xf32, #tpu.memory_space<vmem>>, vector<128x128xf32>
    %cst_255 = arith.constant dense<0.000000e+00> : vector<2x128xf32>
    %878 = tpu.matmul %830, %877, %cst_255 {dimension_numbers = #tpu.dot_dimension_numbers<[1], [0], [0], [1], [0, 0, 1, 1], [], []>} : vector<2x128xf32>, vector<128x128xf32>, vector<2x128xf32> -> vector<2x128xf32>
    %c96_256 = arith.constant 96 : index
    %c0_257 = arith.constant 0 : index
    %879 = vector.load %arg2[%c96_256, %c0_257] : memref<160x128xf32, #tpu.memory_space<vmem>>, vector<32x128xf32>
    %cst_258 = arith.constant dense<0.000000e+00> : vector<2x128xf32>
    %880 = tpu.matmul %823, %879, %cst_258 {dimension_numbers = #tpu.dot_dimension_numbers<[1], [0], [0], [1], [0, 0, 1, 1], [], []>} : vector<2x32xf32>, vector<32x128xf32>, vector<2x128xf32> -> vector<2x128xf32>
    %881 = arith.addf %878, %880 : vector<2x128xf32>
    %882 = arith.addf %881, %781 : vector<2x128xf32>
    %883 = vector.extract_strided_slice %882 {offsets = [0, 0], sizes = [2, 32], strides = [1, 1]} : vector<2x128xf32> to vector<2x32xf32>
    %884 = arith.negf %883 : vector<2x32xf32>
    %885 = math.exp %884 : vector<2x32xf32>
    %cst_259 = arith.constant 1.000000e+00 : f32
    %886 = vector.broadcast %cst_259 : f32 to vector<2x32xf32>
    %887 = arith.addf %886, %885 : vector<2x32xf32>
    %888 = arith.divf %886, %887 : vector<2x32xf32>
    %889 = vector.extract_strided_slice %882 {offsets = [0, 32], sizes = [2, 32], strides = [1, 1]} : vector<2x128xf32> to vector<2x32xf32>
    %890 = arith.negf %889 : vector<2x32xf32>
    %891 = math.exp %890 : vector<2x32xf32>
    %cst_260 = arith.constant 1.000000e+00 : f32
    %892 = vector.broadcast %cst_260 : f32 to vector<2x32xf32>
    %893 = arith.addf %892, %891 : vector<2x32xf32>
    %894 = arith.divf %892, %893 : vector<2x32xf32>
    %895 = vector.extract_strided_slice %882 {offsets = [0, 64], sizes = [2, 32], strides = [1, 1]} : vector<2x128xf32> to vector<2x32xf32>
    %896 = math.tanh %895 : vector<2x32xf32>
    %897 = vector.extract_strided_slice %882 {offsets = [0, 96], sizes = [2, 32], strides = [1, 1]} : vector<2x128xf32> to vector<2x32xf32>
    %898 = arith.negf %897 : vector<2x32xf32>
    %899 = math.exp %898 : vector<2x32xf32>
    %cst_261 = arith.constant 1.000000e+00 : f32
    %900 = vector.broadcast %cst_261 : f32 to vector<2x32xf32>
    %901 = arith.addf %900, %899 : vector<2x32xf32>
    %902 = arith.divf %900, %901 : vector<2x32xf32>
    %903 = arith.mulf %894, %821 : vector<2x32xf32>
    %904 = arith.mulf %888, %896 : vector<2x32xf32>
    %905 = arith.addf %903, %904 : vector<2x32xf32>
    %906 = math.tanh %905 : vector<2x32xf32>
    %907 = arith.mulf %902, %906 : vector<2x32xf32>
    %c0_262 = arith.constant 0 : index
    %c0_263 = arith.constant 0 : index
    %908 = vector.load %arg4[%c0_262, %c0_263] : memref<64x128xf32, #tpu.memory_space<vmem>>, vector<32x128xf32>
    %cst_264 = arith.constant dense<0.000000e+00> : vector<2x128xf32>
    %909 = tpu.matmul %907, %908, %cst_264 {dimension_numbers = #tpu.dot_dimension_numbers<[1], [0], [0], [1], [0, 0, 1, 1], [], []>} : vector<2x32xf32>, vector<32x128xf32>, vector<2x128xf32> -> vector<2x128xf32>
    %910 = arith.addf %909, %787 : vector<2x128xf32>
    %cst_265 = arith.constant -1.000000e+00 : f32
    %cst_266 = arith.constant 1.000000e+00 : f32
    %911 = vector.broadcast %cst_265 : f32 to vector<2x128xf32>
    %912 = arith.maximumf %911, %910 : vector<2x128xf32>
    %913 = vector.broadcast %cst_266 : f32 to vector<2x128xf32>
    %914 = arith.minimumf %913, %912 : vector<2x128xf32>
    %c2_i32_267 = arith.constant 2 : i32
    %915 = arith.muli %c1_i32_252, %c2_i32_267 : i32
    %916 = arith.index_cast %915 : i32 to index
    %c0_268 = arith.constant 0 : index
    %917 = vector.load %arg6[%916, %c0_268] : memref<32x128xf32, #tpu.memory_space<vmem>>, vector<2x128xf32>
    tpu.vector_store %arg6[%916, %c0_268], %914 {strides = array<i32>} : memref<32x128xf32, #tpu.memory_space<vmem>>, vector<2x128xf32>,
    %c512_269 = arith.constant 512 : index
    %c0_270 = arith.constant 0 : index
    %918 = vector.load %arg1[%c512_269, %c0_270] : memref<640x128xf32, #tpu.memory_space<vmem>>, vector<128x128xf32>
    %cst_271 = arith.constant dense<0.000000e+00> : vector<2x128xf32>
    %919 = tpu.matmul %872, %918, %cst_271 {dimension_numbers = #tpu.dot_dimension_numbers<[1], [0], [0], [1], [0, 0, 1, 1], [], []>} : vector<2x128xf32>, vector<128x128xf32>, vector<2x128xf32> -> vector<2x128xf32>
    %c128_272 = arith.constant 128 : index
    %c0_273 = arith.constant 0 : index
    %920 = vector.load %arg2[%c128_272, %c0_273] : memref<160x128xf32, #tpu.memory_space<vmem>>, vector<32x128xf32>
    %cst_274 = arith.constant dense<0.000000e+00> : vector<2x128xf32>
    %921 = tpu.matmul %864, %920, %cst_274 {dimension_numbers = #tpu.dot_dimension_numbers<[1], [0], [0], [1], [0, 0, 1, 1], [], []>} : vector<2x32xf32>, vector<32x128xf32>, vector<2x128xf32> -> vector<2x128xf32>
    %922 = arith.addf %919, %921 : vector<2x128xf32>
    %923 = arith.addf %922, %784 : vector<2x128xf32>
    %924 = vector.extract_strided_slice %923 {offsets = [0, 0], sizes = [2, 32], strides = [1, 1]} : vector<2x128xf32> to vector<2x32xf32>
    %925 = arith.negf %924 : vector<2x32xf32>
    %926 = math.exp %925 : vector<2x32xf32>
    %cst_275 = arith.constant 1.000000e+00 : f32
    %927 = vector.broadcast %cst_275 : f32 to vector<2x32xf32>
    %928 = arith.addf %927, %926 : vector<2x32xf32>
    %929 = arith.divf %927, %928 : vector<2x32xf32>
    %930 = vector.extract_strided_slice %923 {offsets = [0, 32], sizes = [2, 32], strides = [1, 1]} : vector<2x128xf32> to vector<2x32xf32>
    %931 = arith.negf %930 : vector<2x32xf32>
    %932 = math.exp %931 : vector<2x32xf32>
    %cst_276 = arith.constant 1.000000e+00 : f32
    %933 = vector.broadcast %cst_276 : f32 to vector<2x32xf32>
    %934 = arith.addf %933, %932 : vector<2x32xf32>
    %935 = arith.divf %933, %934 : vector<2x32xf32>
    %936 = vector.extract_strided_slice %923 {offsets = [0, 64], sizes = [2, 32], strides = [1, 1]} : vector<2x128xf32> to vector<2x32xf32>
    %937 = math.tanh %936 : vector<2x32xf32>
    %938 = vector.extract_strided_slice %923 {offsets = [0, 96], sizes = [2, 32], strides = [1, 1]} : vector<2x128xf32> to vector<2x32xf32>
    %939 = arith.negf %938 : vector<2x32xf32>
    %940 = math.exp %939 : vector<2x32xf32>
    %cst_277 = arith.constant 1.000000e+00 : f32
    %941 = vector.broadcast %cst_277 : f32 to vector<2x32xf32>
    %942 = arith.addf %941, %940 : vector<2x32xf32>
    %943 = arith.divf %941, %942 : vector<2x32xf32>
    %944 = arith.mulf %935, %862 : vector<2x32xf32>
    %945 = arith.mulf %929, %937 : vector<2x32xf32>
    %946 = arith.addf %944, %945 : vector<2x32xf32>
    %947 = math.tanh %946 : vector<2x32xf32>
    %948 = arith.mulf %943, %947 : vector<2x32xf32>
    %c32_278 = arith.constant 32 : index
    %c0_279 = arith.constant 0 : index
    %949 = vector.load %arg4[%c32_278, %c0_279] : memref<64x128xf32, #tpu.memory_space<vmem>>, vector<32x128xf32>
    %cst_280 = arith.constant dense<0.000000e+00> : vector<2x128xf32>
    %950 = tpu.matmul %948, %949, %cst_280 {dimension_numbers = #tpu.dot_dimension_numbers<[1], [0], [0], [1], [0, 0, 1, 1], [], []>} : vector<2x32xf32>, vector<32x128xf32>, vector<2x128xf32> -> vector<2x128xf32>
    %951 = arith.addf %950, %790 : vector<2x128xf32>
    %952 = arith.negf %951 : vector<2x128xf32>
    %953 = math.exp %952 : vector<2x128xf32>
    %cst_281 = arith.constant 1.000000e+00 : f32
    %954 = vector.broadcast %cst_281 : f32 to vector<2x128xf32>
    %955 = arith.addf %954, %953 : vector<2x128xf32>
    %956 = arith.divf %954, %955 : vector<2x128xf32>
    %c2_i32_282 = arith.constant 2 : i32
    %957 = arith.muli %c1_i32_252, %c2_i32_282 : i32
    %c16_i32_283 = arith.constant 16 : i32
    %958 = arith.addi %c16_i32_283, %957 : i32
    %959 = arith.index_cast %958 : i32 to index
    %c0_284 = arith.constant 0 : index
    %960 = vector.load %arg6[%959, %c0_284] : memref<32x128xf32, #tpu.memory_space<vmem>>, vector<2x128xf32>
    tpu.vector_store %arg6[%959, %c0_284], %956 {strides = array<i32>} : memref<32x128xf32, #tpu.memory_space<vmem>>, vector<2x128xf32>,
    %c2_i32_285 = arith.constant 2 : i32
    %c384_286 = arith.constant 384 : index
    %c0_287 = arith.constant 0 : index
    %961 = vector.load %arg1[%c384_286, %c0_287] : memref<640x128xf32, #tpu.memory_space<vmem>>, vector<128x128xf32>
    %cst_288 = arith.constant dense<0.000000e+00> : vector<2x128xf32>
    %962 = tpu.matmul %914, %961, %cst_288 {dimension_numbers = #tpu.dot_dimension_numbers<[1], [0], [0], [1], [0, 0, 1, 1], [], []>} : vector<2x128xf32>, vector<128x128xf32>, vector<2x128xf32> -> vector<2x128xf32>
    %c96_289 = arith.constant 96 : index
    %c0_290 = arith.constant 0 : index
    %963 = vector.load %arg2[%c96_289, %c0_290] : memref<160x128xf32, #tpu.memory_space<vmem>>, vector<32x128xf32>
    %cst_291 = arith.constant dense<0.000000e+00> : vector<2x128xf32>
    %964 = tpu.matmul %907, %963, %cst_291 {dimension_numbers = #tpu.dot_dimension_numbers<[1], [0], [0], [1], [0, 0, 1, 1], [], []>} : vector<2x32xf32>, vector<32x128xf32>, vector<2x128xf32> -> vector<2x128xf32>
    %965 = arith.addf %962, %964 : vector<2x128xf32>
    %966 = arith.addf %965, %781 : vector<2x128xf32>
    %967 = vector.extract_strided_slice %966 {offsets = [0, 0], sizes = [2, 32], strides = [1, 1]} : vector<2x128xf32> to vector<2x32xf32>
    %968 = arith.negf %967 : vector<2x32xf32>
    %969 = math.exp %968 : vector<2x32xf32>
    %cst_292 = arith.constant 1.000000e+00 : f32
    %970 = vector.broadcast %cst_292 : f32 to vector<2x32xf32>
    %971 = arith.addf %970, %969 : vector<2x32xf32>
    %972 = arith.divf %970, %971 : vector<2x32xf32>
    %973 = vector.extract_strided_slice %966 {offsets = [0, 32], sizes = [2, 32], strides = [1, 1]} : vector<2x128xf32> to vector<2x32xf32>
    %974 = arith.negf %973 : vector<2x32xf32>
    %975 = math.exp %974 : vector<2x32xf32>
    %cst_293 = arith.constant 1.000000e+00 : f32
    %976 = vector.broadcast %cst_293 : f32 to vector<2x32xf32>
    %977 = arith.addf %976, %975 : vector<2x32xf32>
    %978 = arith.divf %976, %977 : vector<2x32xf32>
    %979 = vector.extract_strided_slice %966 {offsets = [0, 64], sizes = [2, 32], strides = [1, 1]} : vector<2x128xf32> to vector<2x32xf32>
    %980 = math.tanh %979 : vector<2x32xf32>
    %981 = vector.extract_strided_slice %966 {offsets = [0, 96], sizes = [2, 32], strides = [1, 1]} : vector<2x128xf32> to vector<2x32xf32>
    %982 = arith.negf %981 : vector<2x32xf32>
    %983 = math.exp %982 : vector<2x32xf32>
    %cst_294 = arith.constant 1.000000e+00 : f32
    %984 = vector.broadcast %cst_294 : f32 to vector<2x32xf32>
    %985 = arith.addf %984, %983 : vector<2x32xf32>
    %986 = arith.divf %984, %985 : vector<2x32xf32>
    %987 = arith.mulf %978, %905 : vector<2x32xf32>
    %988 = arith.mulf %972, %980 : vector<2x32xf32>
    %989 = arith.addf %987, %988 : vector<2x32xf32>
    %990 = math.tanh %989 : vector<2x32xf32>
    %991 = arith.mulf %986, %990 : vector<2x32xf32>
    %c0_295 = arith.constant 0 : index
    %c0_296 = arith.constant 0 : index
    %992 = vector.load %arg4[%c0_295, %c0_296] : memref<64x128xf32, #tpu.memory_space<vmem>>, vector<32x128xf32>
    %cst_297 = arith.constant dense<0.000000e+00> : vector<2x128xf32>
    %993 = tpu.matmul %991, %992, %cst_297 {dimension_numbers = #tpu.dot_dimension_numbers<[1], [0], [0], [1], [0, 0, 1, 1], [], []>} : vector<2x32xf32>, vector<32x128xf32>, vector<2x128xf32> -> vector<2x128xf32>
    %994 = arith.addf %993, %787 : vector<2x128xf32>
    %cst_298 = arith.constant -1.000000e+00 : f32
    %cst_299 = arith.constant 1.000000e+00 : f32
    %995 = vector.broadcast %cst_298 : f32 to vector<2x128xf32>
    %996 = arith.maximumf %995, %994 : vector<2x128xf32>
    %997 = vector.broadcast %cst_299 : f32 to vector<2x128xf32>
    %998 = arith.minimumf %997, %996 : vector<2x128xf32>
    %c2_i32_300 = arith.constant 2 : i32
    %999 = arith.muli %c2_i32_285, %c2_i32_300 : i32
    %1000 = arith.index_cast %999 : i32 to index
    %c0_301 = arith.constant 0 : index
    %1001 = vector.load %arg6[%1000, %c0_301] : memref<32x128xf32, #tpu.memory_space<vmem>>, vector<2x128xf32>
    tpu.vector_store %arg6[%1000, %c0_301], %998 {strides = array<i32>} : memref<32x128xf32, #tpu.memory_space<vmem>>, vector<2x128xf32>,
    %c512_302 = arith.constant 512 : index
    %c0_303 = arith.constant 0 : index
    %1002 = vector.load %arg1[%c512_302, %c0_303] : memref<640x128xf32, #tpu.memory_space<vmem>>, vector<128x128xf32>
    %cst_304 = arith.constant dense<0.000000e+00> : vector<2x128xf32>
    %1003 = tpu.matmul %956, %1002, %cst_304 {dimension_numbers = #tpu.dot_dimension_numbers<[1], [0], [0], [1], [0, 0, 1, 1], [], []>} : vector<2x128xf32>, vector<128x128xf32>, vector<2x128xf32> -> vector<2x128xf32>
    %c128_305 = arith.constant 128 : index
    %c0_306 = arith.constant 0 : index
    %1004 = vector.load %arg2[%c128_305, %c0_306] : memref<160x128xf32, #tpu.memory_space<vmem>>, vector<32x128xf32>
    %cst_307 = arith.constant dense<0.000000e+00> : vector<2x128xf32>
    %1005 = tpu.matmul %948, %1004, %cst_307 {dimension_numbers = #tpu.dot_dimension_numbers<[1], [0], [0], [1], [0, 0, 1, 1], [], []>} : vector<2x32xf32>, vector<32x128xf32>, vector<2x128xf32> -> vector<2x128xf32>
    %1006 = arith.addf %1003, %1005 : vector<2x128xf32>
    %1007 = arith.addf %1006, %784 : vector<2x128xf32>
    %1008 = vector.extract_strided_slice %1007 {offsets = [0, 0], sizes = [2, 32], strides = [1, 1]} : vector<2x128xf32> to vector<2x32xf32>
    %1009 = arith.negf %1008 : vector<2x32xf32>
    %1010 = math.exp %1009 : vector<2x32xf32>
    %cst_308 = arith.constant 1.000000e+00 : f32
    %1011 = vector.broadcast %cst_308 : f32 to vector<2x32xf32>
    %1012 = arith.addf %1011, %1010 : vector<2x32xf32>
    %1013 = arith.divf %1011, %1012 : vector<2x32xf32>
    %1014 = vector.extract_strided_slice %1007 {offsets = [0, 32], sizes = [2, 32], strides = [1, 1]} : vector<2x128xf32> to vector<2x32xf32>
    %1015 = arith.negf %1014 : vector<2x32xf32>
    %1016 = math.exp %1015 : vector<2x32xf32>
    %cst_309 = arith.constant 1.000000e+00 : f32
    %1017 = vector.broadcast %cst_309 : f32 to vector<2x32xf32>
    %1018 = arith.addf %1017, %1016 : vector<2x32xf32>
    %1019 = arith.divf %1017, %1018 : vector<2x32xf32>
    %1020 = vector.extract_strided_slice %1007 {offsets = [0, 64], sizes = [2, 32], strides = [1, 1]} : vector<2x128xf32> to vector<2x32xf32>
    %1021 = math.tanh %1020 : vector<2x32xf32>
    %1022 = vector.extract_strided_slice %1007 {offsets = [0, 96], sizes = [2, 32], strides = [1, 1]} : vector<2x128xf32> to vector<2x32xf32>
    %1023 = arith.negf %1022 : vector<2x32xf32>
    %1024 = math.exp %1023 : vector<2x32xf32>
    %cst_310 = arith.constant 1.000000e+00 : f32
    %1025 = vector.broadcast %cst_310 : f32 to vector<2x32xf32>
    %1026 = arith.addf %1025, %1024 : vector<2x32xf32>
    %1027 = arith.divf %1025, %1026 : vector<2x32xf32>
    %1028 = arith.mulf %1019, %946 : vector<2x32xf32>
    %1029 = arith.mulf %1013, %1021 : vector<2x32xf32>
    %1030 = arith.addf %1028, %1029 : vector<2x32xf32>
    %1031 = math.tanh %1030 : vector<2x32xf32>
    %1032 = arith.mulf %1027, %1031 : vector<2x32xf32>
    %c32_311 = arith.constant 32 : index
    %c0_312 = arith.constant 0 : index
    %1033 = vector.load %arg4[%c32_311, %c0_312] : memref<64x128xf32, #tpu.memory_space<vmem>>, vector<32x128xf32>
    %cst_313 = arith.constant dense<0.000000e+00> : vector<2x128xf32>
    %1034 = tpu.matmul %1032, %1033, %cst_313 {dimension_numbers = #tpu.dot_dimension_numbers<[1], [0], [0], [1], [0, 0, 1, 1], [], []>} : vector<2x32xf32>, vector<32x128xf32>, vector<2x128xf32> -> vector<2x128xf32>
    %1035 = arith.addf %1034, %790 : vector<2x128xf32>
    %1036 = arith.negf %1035 : vector<2x128xf32>
    %1037 = math.exp %1036 : vector<2x128xf32>
    %cst_314 = arith.constant 1.000000e+00 : f32
    %1038 = vector.broadcast %cst_314 : f32 to vector<2x128xf32>
    %1039 = arith.addf %1038, %1037 : vector<2x128xf32>
    %1040 = arith.divf %1038, %1039 : vector<2x128xf32>
    %c2_i32_315 = arith.constant 2 : i32
    %1041 = arith.muli %c2_i32_285, %c2_i32_315 : i32
    %c16_i32_316 = arith.constant 16 : i32
    %1042 = arith.addi %c16_i32_316, %1041 : i32
    %1043 = arith.index_cast %1042 : i32 to index
    %c0_317 = arith.constant 0 : index
    %1044 = vector.load %arg6[%1043, %c0_317] : memref<32x128xf32, #tpu.memory_space<vmem>>, vector<2x128xf32>
    tpu.vector_store %arg6[%1043, %c0_317], %1040 {strides = array<i32>} : memref<32x128xf32, #tpu.memory_space<vmem>>, vector<2x128xf32>,
    %c3_i32_318 = arith.constant 3 : i32
    %c384_319 = arith.constant 384 : index
    %c0_320 = arith.constant 0 : index
    %1045 = vector.load %arg1[%c384_319, %c0_320] : memref<640x128xf32, #tpu.memory_space<vmem>>, vector<128x128xf32>
    %cst_321 = arith.constant dense<0.000000e+00> : vector<2x128xf32>
    %1046 = tpu.matmul %998, %1045, %cst_321 {dimension_numbers = #tpu.dot_dimension_numbers<[1], [0], [0], [1], [0, 0, 1, 1], [], []>} : vector<2x128xf32>, vector<128x128xf32>, vector<2x128xf32> -> vector<2x128xf32>
    %c96_322 = arith.constant 96 : index
    %c0_323 = arith.constant 0 : index
    %1047 = vector.load %arg2[%c96_322, %c0_323] : memref<160x128xf32, #tpu.memory_space<vmem>>, vector<32x128xf32>
    %cst_324 = arith.constant dense<0.000000e+00> : vector<2x128xf32>
    %1048 = tpu.matmul %991, %1047, %cst_324 {dimension_numbers = #tpu.dot_dimension_numbers<[1], [0], [0], [1], [0, 0, 1, 1], [], []>} : vector<2x32xf32>, vector<32x128xf32>, vector<2x128xf32> -> vector<2x128xf32>
    %1049 = arith.addf %1046, %1048 : vector<2x128xf32>
    %1050 = arith.addf %1049, %781 : vector<2x128xf32>
    %1051 = vector.extract_strided_slice %1050 {offsets = [0, 0], sizes = [2, 32], strides = [1, 1]} : vector<2x128xf32> to vector<2x32xf32>
    %1052 = arith.negf %1051 : vector<2x32xf32>
    %1053 = math.exp %1052 : vector<2x32xf32>
    %cst_325 = arith.constant 1.000000e+00 : f32
    %1054 = vector.broadcast %cst_325 : f32 to vector<2x32xf32>
    %1055 = arith.addf %1054, %1053 : vector<2x32xf32>
    %1056 = arith.divf %1054, %1055 : vector<2x32xf32>
    %1057 = vector.extract_strided_slice %1050 {offsets = [0, 32], sizes = [2, 32], strides = [1, 1]} : vector<2x128xf32> to vector<2x32xf32>
    %1058 = arith.negf %1057 : vector<2x32xf32>
    %1059 = math.exp %1058 : vector<2x32xf32>
    %cst_326 = arith.constant 1.000000e+00 : f32
    %1060 = vector.broadcast %cst_326 : f32 to vector<2x32xf32>
    %1061 = arith.addf %1060, %1059 : vector<2x32xf32>
    %1062 = arith.divf %1060, %1061 : vector<2x32xf32>
    %1063 = vector.extract_strided_slice %1050 {offsets = [0, 64], sizes = [2, 32], strides = [1, 1]} : vector<2x128xf32> to vector<2x32xf32>
    %1064 = math.tanh %1063 : vector<2x32xf32>
    %1065 = vector.extract_strided_slice %1050 {offsets = [0, 96], sizes = [2, 32], strides = [1, 1]} : vector<2x128xf32> to vector<2x32xf32>
    %1066 = arith.negf %1065 : vector<2x32xf32>
    %1067 = math.exp %1066 : vector<2x32xf32>
    %cst_327 = arith.constant 1.000000e+00 : f32
    %1068 = vector.broadcast %cst_327 : f32 to vector<2x32xf32>
    %1069 = arith.addf %1068, %1067 : vector<2x32xf32>
    %1070 = arith.divf %1068, %1069 : vector<2x32xf32>
    %1071 = arith.mulf %1062, %989 : vector<2x32xf32>
    %1072 = arith.mulf %1056, %1064 : vector<2x32xf32>
    %1073 = arith.addf %1071, %1072 : vector<2x32xf32>
    %1074 = math.tanh %1073 : vector<2x32xf32>
    %1075 = arith.mulf %1070, %1074 : vector<2x32xf32>
    %c0_328 = arith.constant 0 : index
    %c0_329 = arith.constant 0 : index
    %1076 = vector.load %arg4[%c0_328, %c0_329] : memref<64x128xf32, #tpu.memory_space<vmem>>, vector<32x128xf32>
    %cst_330 = arith.constant dense<0.000000e+00> : vector<2x128xf32>
    %1077 = tpu.matmul %1075, %1076, %cst_330 {dimension_numbers = #tpu.dot_dimension_numbers<[1], [0], [0], [1], [0, 0, 1, 1], [], []>} : vector<2x32xf32>, vector<32x128xf32>, vector<2x128xf32> -> vector<2x128xf32>
    %1078 = arith.addf %1077, %787 : vector<2x128xf32>
    %cst_331 = arith.constant -1.000000e+00 : f32
    %cst_332 = arith.constant 1.000000e+00 : f32
    %1079 = vector.broadcast %cst_331 : f32 to vector<2x128xf32>
    %1080 = arith.maximumf %1079, %1078 : vector<2x128xf32>
    %1081 = vector.broadcast %cst_332 : f32 to vector<2x128xf32>
    %1082 = arith.minimumf %1081, %1080 : vector<2x128xf32>
    %c2_i32_333 = arith.constant 2 : i32
    %1083 = arith.muli %c3_i32_318, %c2_i32_333 : i32
    %1084 = arith.index_cast %1083 : i32 to index
    %c0_334 = arith.constant 0 : index
    %1085 = vector.load %arg6[%1084, %c0_334] : memref<32x128xf32, #tpu.memory_space<vmem>>, vector<2x128xf32>
    tpu.vector_store %arg6[%1084, %c0_334], %1082 {strides = array<i32>} : memref<32x128xf32, #tpu.memory_space<vmem>>, vector<2x128xf32>,
    %c512_335 = arith.constant 512 : index
    %c0_336 = arith.constant 0 : index
    %1086 = vector.load %arg1[%c512_335, %c0_336] : memref<640x128xf32, #tpu.memory_space<vmem>>, vector<128x128xf32>
    %cst_337 = arith.constant dense<0.000000e+00> : vector<2x128xf32>
    %1087 = tpu.matmul %1040, %1086, %cst_337 {dimension_numbers = #tpu.dot_dimension_numbers<[1], [0], [0], [1], [0, 0, 1, 1], [], []>} : vector<2x128xf32>, vector<128x128xf32>, vector<2x128xf32> -> vector<2x128xf32>
    %c128_338 = arith.constant 128 : index
    %c0_339 = arith.constant 0 : index
    %1088 = vector.load %arg2[%c128_338, %c0_339] : memref<160x128xf32, #tpu.memory_space<vmem>>, vector<32x128xf32>
    %cst_340 = arith.constant dense<0.000000e+00> : vector<2x128xf32>
    %1089 = tpu.matmul %1032, %1088, %cst_340 {dimension_numbers = #tpu.dot_dimension_numbers<[1], [0], [0], [1], [0, 0, 1, 1], [], []>} : vector<2x32xf32>, vector<32x128xf32>, vector<2x128xf32> -> vector<2x128xf32>
    %1090 = arith.addf %1087, %1089 : vector<2x128xf32>
    %1091 = arith.addf %1090, %784 : vector<2x128xf32>
    %1092 = vector.extract_strided_slice %1091 {offsets = [0, 0], sizes = [2, 32], strides = [1, 1]} : vector<2x128xf32> to vector<2x32xf32>
    %1093 = arith.negf %1092 : vector<2x32xf32>
    %1094 = math.exp %1093 : vector<2x32xf32>
    %cst_341 = arith.constant 1.000000e+00 : f32
    %1095 = vector.broadcast %cst_341 : f32 to vector<2x32xf32>
    %1096 = arith.addf %1095, %1094 : vector<2x32xf32>
    %1097 = arith.divf %1095, %1096 : vector<2x32xf32>
    %1098 = vector.extract_strided_slice %1091 {offsets = [0, 32], sizes = [2, 32], strides = [1, 1]} : vector<2x128xf32> to vector<2x32xf32>
    %1099 = arith.negf %1098 : vector<2x32xf32>
    %1100 = math.exp %1099 : vector<2x32xf32>
    %cst_342 = arith.constant 1.000000e+00 : f32
    %1101 = vector.broadcast %cst_342 : f32 to vector<2x32xf32>
    %1102 = arith.addf %1101, %1100 : vector<2x32xf32>
    %1103 = arith.divf %1101, %1102 : vector<2x32xf32>
    %1104 = vector.extract_strided_slice %1091 {offsets = [0, 64], sizes = [2, 32], strides = [1, 1]} : vector<2x128xf32> to vector<2x32xf32>
    %1105 = math.tanh %1104 : vector<2x32xf32>
    %1106 = vector.extract_strided_slice %1091 {offsets = [0, 96], sizes = [2, 32], strides = [1, 1]} : vector<2x128xf32> to vector<2x32xf32>
    %1107 = arith.negf %1106 : vector<2x32xf32>
    %1108 = math.exp %1107 : vector<2x32xf32>
    %cst_343 = arith.constant 1.000000e+00 : f32
    %1109 = vector.broadcast %cst_343 : f32 to vector<2x32xf32>
    %1110 = arith.addf %1109, %1108 : vector<2x32xf32>
    %1111 = arith.divf %1109, %1110 : vector<2x32xf32>
    %1112 = arith.mulf %1103, %1030 : vector<2x32xf32>
    %1113 = arith.mulf %1097, %1105 : vector<2x32xf32>
    %1114 = arith.addf %1112, %1113 : vector<2x32xf32>
    %1115 = math.tanh %1114 : vector<2x32xf32>
    %1116 = arith.mulf %1111, %1115 : vector<2x32xf32>
    %c32_344 = arith.constant 32 : index
    %c0_345 = arith.constant 0 : index
    %1117 = vector.load %arg4[%c32_344, %c0_345] : memref<64x128xf32, #tpu.memory_space<vmem>>, vector<32x128xf32>
    %cst_346 = arith.constant dense<0.000000e+00> : vector<2x128xf32>
    %1118 = tpu.matmul %1116, %1117, %cst_346 {dimension_numbers = #tpu.dot_dimension_numbers<[1], [0], [0], [1], [0, 0, 1, 1], [], []>} : vector<2x32xf32>, vector<32x128xf32>, vector<2x128xf32> -> vector<2x128xf32>
    %1119 = arith.addf %1118, %790 : vector<2x128xf32>
    %1120 = arith.negf %1119 : vector<2x128xf32>
    %1121 = math.exp %1120 : vector<2x128xf32>
    %cst_347 = arith.constant 1.000000e+00 : f32
    %1122 = vector.broadcast %cst_347 : f32 to vector<2x128xf32>
    %1123 = arith.addf %1122, %1121 : vector<2x128xf32>
    %1124 = arith.divf %1122, %1123 : vector<2x128xf32>
    %c2_i32_348 = arith.constant 2 : i32
    %1125 = arith.muli %c3_i32_318, %c2_i32_348 : i32
    %c16_i32_349 = arith.constant 16 : i32
    %1126 = arith.addi %c16_i32_349, %1125 : i32
    %1127 = arith.index_cast %1126 : i32 to index
    %c0_350 = arith.constant 0 : index
    %1128 = vector.load %arg6[%1127, %c0_350] : memref<32x128xf32, #tpu.memory_space<vmem>>, vector<2x128xf32>
    tpu.vector_store %arg6[%1127, %c0_350], %1124 {strides = array<i32>} : memref<32x128xf32, #tpu.memory_space<vmem>>, vector<2x128xf32>,
    %c4_i32_351 = arith.constant 4 : i32
    %c384_352 = arith.constant 384 : index
    %c0_353 = arith.constant 0 : index
    %1129 = vector.load %arg1[%c384_352, %c0_353] : memref<640x128xf32, #tpu.memory_space<vmem>>, vector<128x128xf32>
    %cst_354 = arith.constant dense<0.000000e+00> : vector<2x128xf32>
    %1130 = tpu.matmul %1082, %1129, %cst_354 {dimension_numbers = #tpu.dot_dimension_numbers<[1], [0], [0], [1], [0, 0, 1, 1], [], []>} : vector<2x128xf32>, vector<128x128xf32>, vector<2x128xf32> -> vector<2x128xf32>
    %c96_355 = arith.constant 96 : index
    %c0_356 = arith.constant 0 : index
    %1131 = vector.load %arg2[%c96_355, %c0_356] : memref<160x128xf32, #tpu.memory_space<vmem>>, vector<32x128xf32>
    %cst_357 = arith.constant dense<0.000000e+00> : vector<2x128xf32>
    %1132 = tpu.matmul %1075, %1131, %cst_357 {dimension_numbers = #tpu.dot_dimension_numbers<[1], [0], [0], [1], [0, 0, 1, 1], [], []>} : vector<2x32xf32>, vector<32x128xf32>, vector<2x128xf32> -> vector<2x128xf32>
    %1133 = arith.addf %1130, %1132 : vector<2x128xf32>
    %1134 = arith.addf %1133, %781 : vector<2x128xf32>
    %1135 = vector.extract_strided_slice %1134 {offsets = [0, 0], sizes = [2, 32], strides = [1, 1]} : vector<2x128xf32> to vector<2x32xf32>
    %1136 = arith.negf %1135 : vector<2x32xf32>
    %1137 = math.exp %1136 : vector<2x32xf32>
    %cst_358 = arith.constant 1.000000e+00 : f32
    %1138 = vector.broadcast %cst_358 : f32 to vector<2x32xf32>
    %1139 = arith.addf %1138, %1137 : vector<2x32xf32>
    %1140 = arith.divf %1138, %1139 : vector<2x32xf32>
    %1141 = vector.extract_strided_slice %1134 {offsets = [0, 32], sizes = [2, 32], strides = [1, 1]} : vector<2x128xf32> to vector<2x32xf32>
    %1142 = arith.negf %1141 : vector<2x32xf32>
    %1143 = math.exp %1142 : vector<2x32xf32>
    %cst_359 = arith.constant 1.000000e+00 : f32
    %1144 = vector.broadcast %cst_359 : f32 to vector<2x32xf32>
    %1145 = arith.addf %1144, %1143 : vector<2x32xf32>
    %1146 = arith.divf %1144, %1145 : vector<2x32xf32>
    %1147 = vector.extract_strided_slice %1134 {offsets = [0, 64], sizes = [2, 32], strides = [1, 1]} : vector<2x128xf32> to vector<2x32xf32>
    %1148 = math.tanh %1147 : vector<2x32xf32>
    %1149 = vector.extract_strided_slice %1134 {offsets = [0, 96], sizes = [2, 32], strides = [1, 1]} : vector<2x128xf32> to vector<2x32xf32>
    %1150 = arith.negf %1149 : vector<2x32xf32>
    %1151 = math.exp %1150 : vector<2x32xf32>
    %cst_360 = arith.constant 1.000000e+00 : f32
    %1152 = vector.broadcast %cst_360 : f32 to vector<2x32xf32>
    %1153 = arith.addf %1152, %1151 : vector<2x32xf32>
    %1154 = arith.divf %1152, %1153 : vector<2x32xf32>
    %1155 = arith.mulf %1146, %1073 : vector<2x32xf32>
    %1156 = arith.mulf %1140, %1148 : vector<2x32xf32>
    %1157 = arith.addf %1155, %1156 : vector<2x32xf32>
    %1158 = math.tanh %1157 : vector<2x32xf32>
    %1159 = arith.mulf %1154, %1158 : vector<2x32xf32>
    %c0_361 = arith.constant 0 : index
    %c0_362 = arith.constant 0 : index
    %1160 = vector.load %arg4[%c0_361, %c0_362] : memref<64x128xf32, #tpu.memory_space<vmem>>, vector<32x128xf32>
    %cst_363 = arith.constant dense<0.000000e+00> : vector<2x128xf32>
    %1161 = tpu.matmul %1159, %1160, %cst_363 {dimension_numbers = #tpu.dot_dimension_numbers<[1], [0], [0], [1], [0, 0, 1, 1], [], []>} : vector<2x32xf32>, vector<32x128xf32>, vector<2x128xf32> -> vector<2x128xf32>
    %1162 = arith.addf %1161, %787 : vector<2x128xf32>
    %cst_364 = arith.constant -1.000000e+00 : f32
    %cst_365 = arith.constant 1.000000e+00 : f32
    %1163 = vector.broadcast %cst_364 : f32 to vector<2x128xf32>
    %1164 = arith.maximumf %1163, %1162 : vector<2x128xf32>
    %1165 = vector.broadcast %cst_365 : f32 to vector<2x128xf32>
    %1166 = arith.minimumf %1165, %1164 : vector<2x128xf32>
    %c2_i32_366 = arith.constant 2 : i32
    %1167 = arith.muli %c4_i32_351, %c2_i32_366 : i32
    %1168 = arith.index_cast %1167 : i32 to index
    %c0_367 = arith.constant 0 : index
    %1169 = vector.load %arg6[%1168, %c0_367] : memref<32x128xf32, #tpu.memory_space<vmem>>, vector<2x128xf32>
    tpu.vector_store %arg6[%1168, %c0_367], %1166 {strides = array<i32>} : memref<32x128xf32, #tpu.memory_space<vmem>>, vector<2x128xf32>,
    %c512_368 = arith.constant 512 : index
    %c0_369 = arith.constant 0 : index
    %1170 = vector.load %arg1[%c512_368, %c0_369] : memref<640x128xf32, #tpu.memory_space<vmem>>, vector<128x128xf32>
    %cst_370 = arith.constant dense<0.000000e+00> : vector<2x128xf32>
    %1171 = tpu.matmul %1124, %1170, %cst_370 {dimension_numbers = #tpu.dot_dimension_numbers<[1], [0], [0], [1], [0, 0, 1, 1], [], []>} : vector<2x128xf32>, vector<128x128xf32>, vector<2x128xf32> -> vector<2x128xf32>
    %c128_371 = arith.constant 128 : index
    %c0_372 = arith.constant 0 : index
    %1172 = vector.load %arg2[%c128_371, %c0_372] : memref<160x128xf32, #tpu.memory_space<vmem>>, vector<32x128xf32>
    %cst_373 = arith.constant dense<0.000000e+00> : vector<2x128xf32>
    %1173 = tpu.matmul %1116, %1172, %cst_373 {dimension_numbers = #tpu.dot_dimension_numbers<[1], [0], [0], [1], [0, 0, 1, 1], [], []>} : vector<2x32xf32>, vector<32x128xf32>, vector<2x128xf32> -> vector<2x128xf32>
    %1174 = arith.addf %1171, %1173 : vector<2x128xf32>
    %1175 = arith.addf %1174, %784 : vector<2x128xf32>
    %1176 = vector.extract_strided_slice %1175 {offsets = [0, 0], sizes = [2, 32], strides = [1, 1]} : vector<2x128xf32> to vector<2x32xf32>
    %1177 = arith.negf %1176 : vector<2x32xf32>
    %1178 = math.exp %1177 : vector<2x32xf32>
    %cst_374 = arith.constant 1.000000e+00 : f32
    %1179 = vector.broadcast %cst_374 : f32 to vector<2x32xf32>
    %1180 = arith.addf %1179, %1178 : vector<2x32xf32>
    %1181 = arith.divf %1179, %1180 : vector<2x32xf32>
    %1182 = vector.extract_strided_slice %1175 {offsets = [0, 32], sizes = [2, 32], strides = [1, 1]} : vector<2x128xf32> to vector<2x32xf32>
    %1183 = arith.negf %1182 : vector<2x32xf32>
    %1184 = math.exp %1183 : vector<2x32xf32>
    %cst_375 = arith.constant 1.000000e+00 : f32
    %1185 = vector.broadcast %cst_375 : f32 to vector<2x32xf32>
    %1186 = arith.addf %1185, %1184 : vector<2x32xf32>
    %1187 = arith.divf %1185, %1186 : vector<2x32xf32>
    %1188 = vector.extract_strided_slice %1175 {offsets = [0, 64], sizes = [2, 32], strides = [1, 1]} : vector<2x128xf32> to vector<2x32xf32>
    %1189 = math.tanh %1188 : vector<2x32xf32>
    %1190 = vector.extract_strided_slice %1175 {offsets = [0, 96], sizes = [2, 32], strides = [1, 1]} : vector<2x128xf32> to vector<2x32xf32>
    %1191 = arith.negf %1190 : vector<2x32xf32>
    %1192 = math.exp %1191 : vector<2x32xf32>
    %cst_376 = arith.constant 1.000000e+00 : f32
    %1193 = vector.broadcast %cst_376 : f32 to vector<2x32xf32>
    %1194 = arith.addf %1193, %1192 : vector<2x32xf32>
    %1195 = arith.divf %1193, %1194 : vector<2x32xf32>
    %1196 = arith.mulf %1187, %1114 : vector<2x32xf32>
    %1197 = arith.mulf %1181, %1189 : vector<2x32xf32>
    %1198 = arith.addf %1196, %1197 : vector<2x32xf32>
    %1199 = math.tanh %1198 : vector<2x32xf32>
    %1200 = arith.mulf %1195, %1199 : vector<2x32xf32>
    %c32_377 = arith.constant 32 : index
    %c0_378 = arith.constant 0 : index
    %1201 = vector.load %arg4[%c32_377, %c0_378] : memref<64x128xf32, #tpu.memory_space<vmem>>, vector<32x128xf32>
    %cst_379 = arith.constant dense<0.000000e+00> : vector<2x128xf32>
    %1202 = tpu.matmul %1200, %1201, %cst_379 {dimension_numbers = #tpu.dot_dimension_numbers<[1], [0], [0], [1], [0, 0, 1, 1], [], []>} : vector<2x32xf32>, vector<32x128xf32>, vector<2x128xf32> -> vector<2x128xf32>
    %1203 = arith.addf %1202, %790 : vector<2x128xf32>
    %1204 = arith.negf %1203 : vector<2x128xf32>
    %1205 = math.exp %1204 : vector<2x128xf32>
    %cst_380 = arith.constant 1.000000e+00 : f32
    %1206 = vector.broadcast %cst_380 : f32 to vector<2x128xf32>
    %1207 = arith.addf %1206, %1205 : vector<2x128xf32>
    %1208 = arith.divf %1206, %1207 : vector<2x128xf32>
    %c2_i32_381 = arith.constant 2 : i32
    %1209 = arith.muli %c4_i32_351, %c2_i32_381 : i32
    %c16_i32_382 = arith.constant 16 : i32
    %1210 = arith.addi %c16_i32_382, %1209 : i32
    %1211 = arith.index_cast %1210 : i32 to index
    %c0_383 = arith.constant 0 : index
    %1212 = vector.load %arg6[%1211, %c0_383] : memref<32x128xf32, #tpu.memory_space<vmem>>, vector<2x128xf32>
    tpu.vector_store %arg6[%1211, %c0_383], %1208 {strides = array<i32>} : memref<32x128xf32, #tpu.memory_space<vmem>>, vector<2x128xf32>,
    %c5_i32_384 = arith.constant 5 : i32
    %c384_385 = arith.constant 384 : index
    %c0_386 = arith.constant 0 : index
    %1213 = vector.load %arg1[%c384_385, %c0_386] : memref<640x128xf32, #tpu.memory_space<vmem>>, vector<128x128xf32>
    %cst_387 = arith.constant dense<0.000000e+00> : vector<2x128xf32>
    %1214 = tpu.matmul %1166, %1213, %cst_387 {dimension_numbers = #tpu.dot_dimension_numbers<[1], [0], [0], [1], [0, 0, 1, 1], [], []>} : vector<2x128xf32>, vector<128x128xf32>, vector<2x128xf32> -> vector<2x128xf32>
    %c96_388 = arith.constant 96 : index
    %c0_389 = arith.constant 0 : index
    %1215 = vector.load %arg2[%c96_388, %c0_389] : memref<160x128xf32, #tpu.memory_space<vmem>>, vector<32x128xf32>
    %cst_390 = arith.constant dense<0.000000e+00> : vector<2x128xf32>
    %1216 = tpu.matmul %1159, %1215, %cst_390 {dimension_numbers = #tpu.dot_dimension_numbers<[1], [0], [0], [1], [0, 0, 1, 1], [], []>} : vector<2x32xf32>, vector<32x128xf32>, vector<2x128xf32> -> vector<2x128xf32>
    %1217 = arith.addf %1214, %1216 : vector<2x128xf32>
    %1218 = arith.addf %1217, %781 : vector<2x128xf32>
    %1219 = vector.extract_strided_slice %1218 {offsets = [0, 0], sizes = [2, 32], strides = [1, 1]} : vector<2x128xf32> to vector<2x32xf32>
    %1220 = arith.negf %1219 : vector<2x32xf32>
    %1221 = math.exp %1220 : vector<2x32xf32>
    %cst_391 = arith.constant 1.000000e+00 : f32
    %1222 = vector.broadcast %cst_391 : f32 to vector<2x32xf32>
    %1223 = arith.addf %1222, %1221 : vector<2x32xf32>
    %1224 = arith.divf %1222, %1223 : vector<2x32xf32>
    %1225 = vector.extract_strided_slice %1218 {offsets = [0, 32], sizes = [2, 32], strides = [1, 1]} : vector<2x128xf32> to vector<2x32xf32>
    %1226 = arith.negf %1225 : vector<2x32xf32>
    %1227 = math.exp %1226 : vector<2x32xf32>
    %cst_392 = arith.constant 1.000000e+00 : f32
    %1228 = vector.broadcast %cst_392 : f32 to vector<2x32xf32>
    %1229 = arith.addf %1228, %1227 : vector<2x32xf32>
    %1230 = arith.divf %1228, %1229 : vector<2x32xf32>
    %1231 = vector.extract_strided_slice %1218 {offsets = [0, 64], sizes = [2, 32], strides = [1, 1]} : vector<2x128xf32> to vector<2x32xf32>
    %1232 = math.tanh %1231 : vector<2x32xf32>
    %1233 = vector.extract_strided_slice %1218 {offsets = [0, 96], sizes = [2, 32], strides = [1, 1]} : vector<2x128xf32> to vector<2x32xf32>
    %1234 = arith.negf %1233 : vector<2x32xf32>
    %1235 = math.exp %1234 : vector<2x32xf32>
    %cst_393 = arith.constant 1.000000e+00 : f32
    %1236 = vector.broadcast %cst_393 : f32 to vector<2x32xf32>
    %1237 = arith.addf %1236, %1235 : vector<2x32xf32>
    %1238 = arith.divf %1236, %1237 : vector<2x32xf32>
    %1239 = arith.mulf %1230, %1157 : vector<2x32xf32>
    %1240 = arith.mulf %1224, %1232 : vector<2x32xf32>
    %1241 = arith.addf %1239, %1240 : vector<2x32xf32>
    %1242 = math.tanh %1241 : vector<2x32xf32>
    %1243 = arith.mulf %1238, %1242 : vector<2x32xf32>
    %c0_394 = arith.constant 0 : index
    %c0_395 = arith.constant 0 : index
    %1244 = vector.load %arg4[%c0_394, %c0_395] : memref<64x128xf32, #tpu.memory_space<vmem>>, vector<32x128xf32>
    %cst_396 = arith.constant dense<0.000000e+00> : vector<2x128xf32>
    %1245 = tpu.matmul %1243, %1244, %cst_396 {dimension_numbers = #tpu.dot_dimension_numbers<[1], [0], [0], [1], [0, 0, 1, 1], [], []>} : vector<2x32xf32>, vector<32x128xf32>, vector<2x128xf32> -> vector<2x128xf32>
    %1246 = arith.addf %1245, %787 : vector<2x128xf32>
    %cst_397 = arith.constant -1.000000e+00 : f32
    %cst_398 = arith.constant 1.000000e+00 : f32
    %1247 = vector.broadcast %cst_397 : f32 to vector<2x128xf32>
    %1248 = arith.maximumf %1247, %1246 : vector<2x128xf32>
    %1249 = vector.broadcast %cst_398 : f32 to vector<2x128xf32>
    %1250 = arith.minimumf %1249, %1248 : vector<2x128xf32>
    %c2_i32_399 = arith.constant 2 : i32
    %1251 = arith.muli %c5_i32_384, %c2_i32_399 : i32
    %1252 = arith.index_cast %1251 : i32 to index
    %c0_400 = arith.constant 0 : index
    %1253 = vector.load %arg6[%1252, %c0_400] : memref<32x128xf32, #tpu.memory_space<vmem>>, vector<2x128xf32>
    tpu.vector_store %arg6[%1252, %c0_400], %1250 {strides = array<i32>} : memref<32x128xf32, #tpu.memory_space<vmem>>, vector<2x128xf32>,
    %c512_401 = arith.constant 512 : index
    %c0_402 = arith.constant 0 : index
    %1254 = vector.load %arg1[%c512_401, %c0_402] : memref<640x128xf32, #tpu.memory_space<vmem>>, vector<128x128xf32>
    %cst_403 = arith.constant dense<0.000000e+00> : vector<2x128xf32>
    %1255 = tpu.matmul %1208, %1254, %cst_403 {dimension_numbers = #tpu.dot_dimension_numbers<[1], [0], [0], [1], [0, 0, 1, 1], [], []>} : vector<2x128xf32>, vector<128x128xf32>, vector<2x128xf32> -> vector<2x128xf32>
    %c128_404 = arith.constant 128 : index
    %c0_405 = arith.constant 0 : index
    %1256 = vector.load %arg2[%c128_404, %c0_405] : memref<160x128xf32, #tpu.memory_space<vmem>>, vector<32x128xf32>
    %cst_406 = arith.constant dense<0.000000e+00> : vector<2x128xf32>
    %1257 = tpu.matmul %1200, %1256, %cst_406 {dimension_numbers = #tpu.dot_dimension_numbers<[1], [0], [0], [1], [0, 0, 1, 1], [], []>} : vector<2x32xf32>, vector<32x128xf32>, vector<2x128xf32> -> vector<2x128xf32>
    %1258 = arith.addf %1255, %1257 : vector<2x128xf32>
    %1259 = arith.addf %1258, %784 : vector<2x128xf32>
    %1260 = vector.extract_strided_slice %1259 {offsets = [0, 0], sizes = [2, 32], strides = [1, 1]} : vector<2x128xf32> to vector<2x32xf32>
    %1261 = arith.negf %1260 : vector<2x32xf32>
    %1262 = math.exp %1261 : vector<2x32xf32>
    %cst_407 = arith.constant 1.000000e+00 : f32
    %1263 = vector.broadcast %cst_407 : f32 to vector<2x32xf32>
    %1264 = arith.addf %1263, %1262 : vector<2x32xf32>
    %1265 = arith.divf %1263, %1264 : vector<2x32xf32>
    %1266 = vector.extract_strided_slice %1259 {offsets = [0, 32], sizes = [2, 32], strides = [1, 1]} : vector<2x128xf32> to vector<2x32xf32>
    %1267 = arith.negf %1266 : vector<2x32xf32>
    %1268 = math.exp %1267 : vector<2x32xf32>
    %cst_408 = arith.constant 1.000000e+00 : f32
    %1269 = vector.broadcast %cst_408 : f32 to vector<2x32xf32>
    %1270 = arith.addf %1269, %1268 : vector<2x32xf32>
    %1271 = arith.divf %1269, %1270 : vector<2x32xf32>
    %1272 = vector.extract_strided_slice %1259 {offsets = [0, 64], sizes = [2, 32], strides = [1, 1]} : vector<2x128xf32> to vector<2x32xf32>
    %1273 = math.tanh %1272 : vector<2x32xf32>
    %1274 = vector.extract_strided_slice %1259 {offsets = [0, 96], sizes = [2, 32], strides = [1, 1]} : vector<2x128xf32> to vector<2x32xf32>
    %1275 = arith.negf %1274 : vector<2x32xf32>
    %1276 = math.exp %1275 : vector<2x32xf32>
    %cst_409 = arith.constant 1.000000e+00 : f32
    %1277 = vector.broadcast %cst_409 : f32 to vector<2x32xf32>
    %1278 = arith.addf %1277, %1276 : vector<2x32xf32>
    %1279 = arith.divf %1277, %1278 : vector<2x32xf32>
    %1280 = arith.mulf %1271, %1198 : vector<2x32xf32>
    %1281 = arith.mulf %1265, %1273 : vector<2x32xf32>
    %1282 = arith.addf %1280, %1281 : vector<2x32xf32>
    %1283 = math.tanh %1282 : vector<2x32xf32>
    %1284 = arith.mulf %1279, %1283 : vector<2x32xf32>
    %c32_410 = arith.constant 32 : index
    %c0_411 = arith.constant 0 : index
    %1285 = vector.load %arg4[%c32_410, %c0_411] : memref<64x128xf32, #tpu.memory_space<vmem>>, vector<32x128xf32>
    %cst_412 = arith.constant dense<0.000000e+00> : vector<2x128xf32>
    %1286 = tpu.matmul %1284, %1285, %cst_412 {dimension_numbers = #tpu.dot_dimension_numbers<[1], [0], [0], [1], [0, 0, 1, 1], [], []>} : vector<2x32xf32>, vector<32x128xf32>, vector<2x128xf32> -> vector<2x128xf32>
    %1287 = arith.addf %1286, %790 : vector<2x128xf32>
    %1288 = arith.negf %1287 : vector<2x128xf32>
    %1289 = math.exp %1288 : vector<2x128xf32>
    %cst_413 = arith.constant 1.000000e+00 : f32
    %1290 = vector.broadcast %cst_413 : f32 to vector<2x128xf32>
    %1291 = arith.addf %1290, %1289 : vector<2x128xf32>
    %1292 = arith.divf %1290, %1291 : vector<2x128xf32>
    %c2_i32_414 = arith.constant 2 : i32
    %1293 = arith.muli %c5_i32_384, %c2_i32_414 : i32
    %c16_i32_415 = arith.constant 16 : i32
    %1294 = arith.addi %c16_i32_415, %1293 : i32
    %1295 = arith.index_cast %1294 : i32 to index
    %c0_416 = arith.constant 0 : index
    %1296 = vector.load %arg6[%1295, %c0_416] : memref<32x128xf32, #tpu.memory_space<vmem>>, vector<2x128xf32>
    tpu.vector_store %arg6[%1295, %c0_416], %1292 {strides = array<i32>} : memref<32x128xf32, #tpu.memory_space<vmem>>, vector<2x128xf32>,
    %c6_i32_417 = arith.constant 6 : i32
    %c384_418 = arith.constant 384 : index
    %c0_419 = arith.constant 0 : index
    %1297 = vector.load %arg1[%c384_418, %c0_419] : memref<640x128xf32, #tpu.memory_space<vmem>>, vector<128x128xf32>
    %cst_420 = arith.constant dense<0.000000e+00> : vector<2x128xf32>
    %1298 = tpu.matmul %1250, %1297, %cst_420 {dimension_numbers = #tpu.dot_dimension_numbers<[1], [0], [0], [1], [0, 0, 1, 1], [], []>} : vector<2x128xf32>, vector<128x128xf32>, vector<2x128xf32> -> vector<2x128xf32>
    %c96_421 = arith.constant 96 : index
    %c0_422 = arith.constant 0 : index
    %1299 = vector.load %arg2[%c96_421, %c0_422] : memref<160x128xf32, #tpu.memory_space<vmem>>, vector<32x128xf32>
    %cst_423 = arith.constant dense<0.000000e+00> : vector<2x128xf32>
    %1300 = tpu.matmul %1243, %1299, %cst_423 {dimension_numbers = #tpu.dot_dimension_numbers<[1], [0], [0], [1], [0, 0, 1, 1], [], []>} : vector<2x32xf32>, vector<32x128xf32>, vector<2x128xf32> -> vector<2x128xf32>
    %1301 = arith.addf %1298, %1300 : vector<2x128xf32>
    %1302 = arith.addf %1301, %781 : vector<2x128xf32>
    %1303 = vector.extract_strided_slice %1302 {offsets = [0, 0], sizes = [2, 32], strides = [1, 1]} : vector<2x128xf32> to vector<2x32xf32>
    %1304 = arith.negf %1303 : vector<2x32xf32>
    %1305 = math.exp %1304 : vector<2x32xf32>
    %cst_424 = arith.constant 1.000000e+00 : f32
    %1306 = vector.broadcast %cst_424 : f32 to vector<2x32xf32>
    %1307 = arith.addf %1306, %1305 : vector<2x32xf32>
    %1308 = arith.divf %1306, %1307 : vector<2x32xf32>
    %1309 = vector.extract_strided_slice %1302 {offsets = [0, 32], sizes = [2, 32], strides = [1, 1]} : vector<2x128xf32> to vector<2x32xf32>
    %1310 = arith.negf %1309 : vector<2x32xf32>
    %1311 = math.exp %1310 : vector<2x32xf32>
    %cst_425 = arith.constant 1.000000e+00 : f32
    %1312 = vector.broadcast %cst_425 : f32 to vector<2x32xf32>
    %1313 = arith.addf %1312, %1311 : vector<2x32xf32>
    %1314 = arith.divf %1312, %1313 : vector<2x32xf32>
    %1315 = vector.extract_strided_slice %1302 {offsets = [0, 64], sizes = [2, 32], strides = [1, 1]} : vector<2x128xf32> to vector<2x32xf32>
    %1316 = math.tanh %1315 : vector<2x32xf32>
    %1317 = vector.extract_strided_slice %1302 {offsets = [0, 96], sizes = [2, 32], strides = [1, 1]} : vector<2x128xf32> to vector<2x32xf32>
    %1318 = arith.negf %1317 : vector<2x32xf32>
    %1319 = math.exp %1318 : vector<2x32xf32>
    %cst_426 = arith.constant 1.000000e+00 : f32
    %1320 = vector.broadcast %cst_426 : f32 to vector<2x32xf32>
    %1321 = arith.addf %1320, %1319 : vector<2x32xf32>
    %1322 = arith.divf %1320, %1321 : vector<2x32xf32>
    %1323 = arith.mulf %1314, %1241 : vector<2x32xf32>
    %1324 = arith.mulf %1308, %1316 : vector<2x32xf32>
    %1325 = arith.addf %1323, %1324 : vector<2x32xf32>
    %1326 = math.tanh %1325 : vector<2x32xf32>
    %1327 = arith.mulf %1322, %1326 : vector<2x32xf32>
    %c0_427 = arith.constant 0 : index
    %c0_428 = arith.constant 0 : index
    %1328 = vector.load %arg4[%c0_427, %c0_428] : memref<64x128xf32, #tpu.memory_space<vmem>>, vector<32x128xf32>
    %cst_429 = arith.constant dense<0.000000e+00> : vector<2x128xf32>
    %1329 = tpu.matmul %1327, %1328, %cst_429 {dimension_numbers = #tpu.dot_dimension_numbers<[1], [0], [0], [1], [0, 0, 1, 1], [], []>} : vector<2x32xf32>, vector<32x128xf32>, vector<2x128xf32> -> vector<2x128xf32>
    %1330 = arith.addf %1329, %787 : vector<2x128xf32>
    %cst_430 = arith.constant -1.000000e+00 : f32
    %cst_431 = arith.constant 1.000000e+00 : f32
    %1331 = vector.broadcast %cst_430 : f32 to vector<2x128xf32>
    %1332 = arith.maximumf %1331, %1330 : vector<2x128xf32>
    %1333 = vector.broadcast %cst_431 : f32 to vector<2x128xf32>
    %1334 = arith.minimumf %1333, %1332 : vector<2x128xf32>
    %c2_i32_432 = arith.constant 2 : i32
    %1335 = arith.muli %c6_i32_417, %c2_i32_432 : i32
    %1336 = arith.index_cast %1335 : i32 to index
    %c0_433 = arith.constant 0 : index
    %1337 = vector.load %arg6[%1336, %c0_433] : memref<32x128xf32, #tpu.memory_space<vmem>>, vector<2x128xf32>
    tpu.vector_store %arg6[%1336, %c0_433], %1334 {strides = array<i32>} : memref<32x128xf32, #tpu.memory_space<vmem>>, vector<2x128xf32>,
    %c512_434 = arith.constant 512 : index
    %c0_435 = arith.constant 0 : index
    %1338 = vector.load %arg1[%c512_434, %c0_435] : memref<640x128xf32, #tpu.memory_space<vmem>>, vector<128x128xf32>
    %cst_436 = arith.constant dense<0.000000e+00> : vector<2x128xf32>
    %1339 = tpu.matmul %1292, %1338, %cst_436 {dimension_numbers = #tpu.dot_dimension_numbers<[1], [0], [0], [1], [0, 0, 1, 1], [], []>} : vector<2x128xf32>, vector<128x128xf32>, vector<2x128xf32> -> vector<2x128xf32>
    %c128_437 = arith.constant 128 : index
    %c0_438 = arith.constant 0 : index
    %1340 = vector.load %arg2[%c128_437, %c0_438] : memref<160x128xf32, #tpu.memory_space<vmem>>, vector<32x128xf32>
    %cst_439 = arith.constant dense<0.000000e+00> : vector<2x128xf32>
    %1341 = tpu.matmul %1284, %1340, %cst_439 {dimension_numbers = #tpu.dot_dimension_numbers<[1], [0], [0], [1], [0, 0, 1, 1], [], []>} : vector<2x32xf32>, vector<32x128xf32>, vector<2x128xf32> -> vector<2x128xf32>
    %1342 = arith.addf %1339, %1341 : vector<2x128xf32>
    %1343 = arith.addf %1342, %784 : vector<2x128xf32>
    %1344 = vector.extract_strided_slice %1343 {offsets = [0, 0], sizes = [2, 32], strides = [1, 1]} : vector<2x128xf32> to vector<2x32xf32>
    %1345 = arith.negf %1344 : vector<2x32xf32>
    %1346 = math.exp %1345 : vector<2x32xf32>
    %cst_440 = arith.constant 1.000000e+00 : f32
    %1347 = vector.broadcast %cst_440 : f32 to vector<2x32xf32>
    %1348 = arith.addf %1347, %1346 : vector<2x32xf32>
    %1349 = arith.divf %1347, %1348 : vector<2x32xf32>
    %1350 = vector.extract_strided_slice %1343 {offsets = [0, 32], sizes = [2, 32], strides = [1, 1]} : vector<2x128xf32> to vector<2x32xf32>
    %1351 = arith.negf %1350 : vector<2x32xf32>
    %1352 = math.exp %1351 : vector<2x32xf32>
    %cst_441 = arith.constant 1.000000e+00 : f32
    %1353 = vector.broadcast %cst_441 : f32 to vector<2x32xf32>
    %1354 = arith.addf %1353, %1352 : vector<2x32xf32>
    %1355 = arith.divf %1353, %1354 : vector<2x32xf32>
    %1356 = vector.extract_strided_slice %1343 {offsets = [0, 64], sizes = [2, 32], strides = [1, 1]} : vector<2x128xf32> to vector<2x32xf32>
    %1357 = math.tanh %1356 : vector<2x32xf32>
    %1358 = vector.extract_strided_slice %1343 {offsets = [0, 96], sizes = [2, 32], strides = [1, 1]} : vector<2x128xf32> to vector<2x32xf32>
    %1359 = arith.negf %1358 : vector<2x32xf32>
    %1360 = math.exp %1359 : vector<2x32xf32>
    %cst_442 = arith.constant 1.000000e+00 : f32
    %1361 = vector.broadcast %cst_442 : f32 to vector<2x32xf32>
    %1362 = arith.addf %1361, %1360 : vector<2x32xf32>
    %1363 = arith.divf %1361, %1362 : vector<2x32xf32>
    %1364 = arith.mulf %1355, %1282 : vector<2x32xf32>
    %1365 = arith.mulf %1349, %1357 : vector<2x32xf32>
    %1366 = arith.addf %1364, %1365 : vector<2x32xf32>
    %1367 = math.tanh %1366 : vector<2x32xf32>
    %1368 = arith.mulf %1363, %1367 : vector<2x32xf32>
    %c32_443 = arith.constant 32 : index
    %c0_444 = arith.constant 0 : index
    %1369 = vector.load %arg4[%c32_443, %c0_444] : memref<64x128xf32, #tpu.memory_space<vmem>>, vector<32x128xf32>
    %cst_445 = arith.constant dense<0.000000e+00> : vector<2x128xf32>
    %1370 = tpu.matmul %1368, %1369, %cst_445 {dimension_numbers = #tpu.dot_dimension_numbers<[1], [0], [0], [1], [0, 0, 1, 1], [], []>} : vector<2x32xf32>, vector<32x128xf32>, vector<2x128xf32> -> vector<2x128xf32>
    %1371 = arith.addf %1370, %790 : vector<2x128xf32>
    %1372 = arith.negf %1371 : vector<2x128xf32>
    %1373 = math.exp %1372 : vector<2x128xf32>
    %cst_446 = arith.constant 1.000000e+00 : f32
    %1374 = vector.broadcast %cst_446 : f32 to vector<2x128xf32>
    %1375 = arith.addf %1374, %1373 : vector<2x128xf32>
    %1376 = arith.divf %1374, %1375 : vector<2x128xf32>
    %c2_i32_447 = arith.constant 2 : i32
    %1377 = arith.muli %c6_i32_417, %c2_i32_447 : i32
    %c16_i32_448 = arith.constant 16 : i32
    %1378 = arith.addi %c16_i32_448, %1377 : i32
    %1379 = arith.index_cast %1378 : i32 to index
    %c0_449 = arith.constant 0 : index
    %1380 = vector.load %arg6[%1379, %c0_449] : memref<32x128xf32, #tpu.memory_space<vmem>>, vector<2x128xf32>
    tpu.vector_store %arg6[%1379, %c0_449], %1376 {strides = array<i32>} : memref<32x128xf32, #tpu.memory_space<vmem>>, vector<2x128xf32>,
    %c7_i32_450 = arith.constant 7 : i32
    %c384_451 = arith.constant 384 : index
    %c0_452 = arith.constant 0 : index
    %1381 = vector.load %arg1[%c384_451, %c0_452] : memref<640x128xf32, #tpu.memory_space<vmem>>, vector<128x128xf32>
    %cst_453 = arith.constant dense<0.000000e+00> : vector<2x128xf32>
    %1382 = tpu.matmul %1334, %1381, %cst_453 {dimension_numbers = #tpu.dot_dimension_numbers<[1], [0], [0], [1], [0, 0, 1, 1], [], []>} : vector<2x128xf32>, vector<128x128xf32>, vector<2x128xf32> -> vector<2x128xf32>
    %c96_454 = arith.constant 96 : index
    %c0_455 = arith.constant 0 : index
    %1383 = vector.load %arg2[%c96_454, %c0_455] : memref<160x128xf32, #tpu.memory_space<vmem>>, vector<32x128xf32>
    %cst_456 = arith.constant dense<0.000000e+00> : vector<2x128xf32>
    %1384 = tpu.matmul %1327, %1383, %cst_456 {dimension_numbers = #tpu.dot_dimension_numbers<[1], [0], [0], [1], [0, 0, 1, 1], [], []>} : vector<2x32xf32>, vector<32x128xf32>, vector<2x128xf32> -> vector<2x128xf32>
    %1385 = arith.addf %1382, %1384 : vector<2x128xf32>
    %1386 = arith.addf %1385, %781 : vector<2x128xf32>
    %1387 = vector.extract_strided_slice %1386 {offsets = [0, 0], sizes = [2, 32], strides = [1, 1]} : vector<2x128xf32> to vector<2x32xf32>
    %1388 = arith.negf %1387 : vector<2x32xf32>
    %1389 = math.exp %1388 : vector<2x32xf32>
    %cst_457 = arith.constant 1.000000e+00 : f32
    %1390 = vector.broadcast %cst_457 : f32 to vector<2x32xf32>
    %1391 = arith.addf %1390, %1389 : vector<2x32xf32>
    %1392 = arith.divf %1390, %1391 : vector<2x32xf32>
    %1393 = vector.extract_strided_slice %1386 {offsets = [0, 32], sizes = [2, 32], strides = [1, 1]} : vector<2x128xf32> to vector<2x32xf32>
    %1394 = arith.negf %1393 : vector<2x32xf32>
    %1395 = math.exp %1394 : vector<2x32xf32>
    %cst_458 = arith.constant 1.000000e+00 : f32
    %1396 = vector.broadcast %cst_458 : f32 to vector<2x32xf32>
    %1397 = arith.addf %1396, %1395 : vector<2x32xf32>
    %1398 = arith.divf %1396, %1397 : vector<2x32xf32>
    %1399 = vector.extract_strided_slice %1386 {offsets = [0, 64], sizes = [2, 32], strides = [1, 1]} : vector<2x128xf32> to vector<2x32xf32>
    %1400 = math.tanh %1399 : vector<2x32xf32>
    %1401 = vector.extract_strided_slice %1386 {offsets = [0, 96], sizes = [2, 32], strides = [1, 1]} : vector<2x128xf32> to vector<2x32xf32>
    %1402 = arith.negf %1401 : vector<2x32xf32>
    %1403 = math.exp %1402 : vector<2x32xf32>
    %cst_459 = arith.constant 1.000000e+00 : f32
    %1404 = vector.broadcast %cst_459 : f32 to vector<2x32xf32>
    %1405 = arith.addf %1404, %1403 : vector<2x32xf32>
    %1406 = arith.divf %1404, %1405 : vector<2x32xf32>
    %1407 = arith.mulf %1398, %1325 : vector<2x32xf32>
    %1408 = arith.mulf %1392, %1400 : vector<2x32xf32>
    %1409 = arith.addf %1407, %1408 : vector<2x32xf32>
    %1410 = math.tanh %1409 : vector<2x32xf32>
    %1411 = arith.mulf %1406, %1410 : vector<2x32xf32>
    %c0_460 = arith.constant 0 : index
    %c0_461 = arith.constant 0 : index
    %1412 = vector.load %arg4[%c0_460, %c0_461] : memref<64x128xf32, #tpu.memory_space<vmem>>, vector<32x128xf32>
    %cst_462 = arith.constant dense<0.000000e+00> : vector<2x128xf32>
    %1413 = tpu.matmul %1411, %1412, %cst_462 {dimension_numbers = #tpu.dot_dimension_numbers<[1], [0], [0], [1], [0, 0, 1, 1], [], []>} : vector<2x32xf32>, vector<32x128xf32>, vector<2x128xf32> -> vector<2x128xf32>
    %1414 = arith.addf %1413, %787 : vector<2x128xf32>
    %cst_463 = arith.constant -1.000000e+00 : f32
    %cst_464 = arith.constant 1.000000e+00 : f32
    %1415 = vector.broadcast %cst_463 : f32 to vector<2x128xf32>
    %1416 = arith.maximumf %1415, %1414 : vector<2x128xf32>
    %1417 = vector.broadcast %cst_464 : f32 to vector<2x128xf32>
    %1418 = arith.minimumf %1417, %1416 : vector<2x128xf32>
    %c2_i32_465 = arith.constant 2 : i32
    %1419 = arith.muli %c7_i32_450, %c2_i32_465 : i32
    %1420 = arith.index_cast %1419 : i32 to index
    %c0_466 = arith.constant 0 : index
    %1421 = vector.load %arg6[%1420, %c0_466] : memref<32x128xf32, #tpu.memory_space<vmem>>, vector<2x128xf32>
    tpu.vector_store %arg6[%1420, %c0_466], %1418 {strides = array<i32>} : memref<32x128xf32, #tpu.memory_space<vmem>>, vector<2x128xf32>,
    %c512_467 = arith.constant 512 : index
    %c0_468 = arith.constant 0 : index
    %1422 = vector.load %arg1[%c512_467, %c0_468] : memref<640x128xf32, #tpu.memory_space<vmem>>, vector<128x128xf32>
    %cst_469 = arith.constant dense<0.000000e+00> : vector<2x128xf32>
    %1423 = tpu.matmul %1376, %1422, %cst_469 {dimension_numbers = #tpu.dot_dimension_numbers<[1], [0], [0], [1], [0, 0, 1, 1], [], []>} : vector<2x128xf32>, vector<128x128xf32>, vector<2x128xf32> -> vector<2x128xf32>
    %c128_470 = arith.constant 128 : index
    %c0_471 = arith.constant 0 : index
    %1424 = vector.load %arg2[%c128_470, %c0_471] : memref<160x128xf32, #tpu.memory_space<vmem>>, vector<32x128xf32>
    %cst_472 = arith.constant dense<0.000000e+00> : vector<2x128xf32>
    %1425 = tpu.matmul %1368, %1424, %cst_472 {dimension_numbers = #tpu.dot_dimension_numbers<[1], [0], [0], [1], [0, 0, 1, 1], [], []>} : vector<2x32xf32>, vector<32x128xf32>, vector<2x128xf32> -> vector<2x128xf32>
    %1426 = arith.addf %1423, %1425 : vector<2x128xf32>
    %1427 = arith.addf %1426, %784 : vector<2x128xf32>
    %1428 = vector.extract_strided_slice %1427 {offsets = [0, 0], sizes = [2, 32], strides = [1, 1]} : vector<2x128xf32> to vector<2x32xf32>
    %1429 = arith.negf %1428 : vector<2x32xf32>
    %1430 = math.exp %1429 : vector<2x32xf32>
    %cst_473 = arith.constant 1.000000e+00 : f32
    %1431 = vector.broadcast %cst_473 : f32 to vector<2x32xf32>
    %1432 = arith.addf %1431, %1430 : vector<2x32xf32>
    %1433 = arith.divf %1431, %1432 : vector<2x32xf32>
    %1434 = vector.extract_strided_slice %1427 {offsets = [0, 32], sizes = [2, 32], strides = [1, 1]} : vector<2x128xf32> to vector<2x32xf32>
    %1435 = arith.negf %1434 : vector<2x32xf32>
    %1436 = math.exp %1435 : vector<2x32xf32>
    %cst_474 = arith.constant 1.000000e+00 : f32
    %1437 = vector.broadcast %cst_474 : f32 to vector<2x32xf32>
    %1438 = arith.addf %1437, %1436 : vector<2x32xf32>
    %1439 = arith.divf %1437, %1438 : vector<2x32xf32>
    %1440 = vector.extract_strided_slice %1427 {offsets = [0, 64], sizes = [2, 32], strides = [1, 1]} : vector<2x128xf32> to vector<2x32xf32>
    %1441 = math.tanh %1440 : vector<2x32xf32>
    %1442 = vector.extract_strided_slice %1427 {offsets = [0, 96], sizes = [2, 32], strides = [1, 1]} : vector<2x128xf32> to vector<2x32xf32>
    %1443 = arith.negf %1442 : vector<2x32xf32>
    %1444 = math.exp %1443 : vector<2x32xf32>
    %cst_475 = arith.constant 1.000000e+00 : f32
    %1445 = vector.broadcast %cst_475 : f32 to vector<2x32xf32>
    %1446 = arith.addf %1445, %1444 : vector<2x32xf32>
    %1447 = arith.divf %1445, %1446 : vector<2x32xf32>
    %1448 = arith.mulf %1439, %1366 : vector<2x32xf32>
    %1449 = arith.mulf %1433, %1441 : vector<2x32xf32>
    %1450 = arith.addf %1448, %1449 : vector<2x32xf32>
    %1451 = math.tanh %1450 : vector<2x32xf32>
    %1452 = arith.mulf %1447, %1451 : vector<2x32xf32>
    %c32_476 = arith.constant 32 : index
    %c0_477 = arith.constant 0 : index
    %1453 = vector.load %arg4[%c32_476, %c0_477] : memref<64x128xf32, #tpu.memory_space<vmem>>, vector<32x128xf32>
    %cst_478 = arith.constant dense<0.000000e+00> : vector<2x128xf32>
    %1454 = tpu.matmul %1452, %1453, %cst_478 {dimension_numbers = #tpu.dot_dimension_numbers<[1], [0], [0], [1], [0, 0, 1, 1], [], []>} : vector<2x32xf32>, vector<32x128xf32>, vector<2x128xf32> -> vector<2x128xf32>
    %1455 = arith.addf %1454, %790 : vector<2x128xf32>
    %1456 = arith.negf %1455 : vector<2x128xf32>
    %1457 = math.exp %1456 : vector<2x128xf32>
    %cst_479 = arith.constant 1.000000e+00 : f32
    %1458 = vector.broadcast %cst_479 : f32 to vector<2x128xf32>
    %1459 = arith.addf %1458, %1457 : vector<2x128xf32>
    %1460 = arith.divf %1458, %1459 : vector<2x128xf32>
    %c2_i32_480 = arith.constant 2 : i32
    %1461 = arith.muli %c7_i32_450, %c2_i32_480 : i32
    %c16_i32_481 = arith.constant 16 : i32
    %1462 = arith.addi %c16_i32_481, %1461 : i32
    %1463 = arith.index_cast %1462 : i32 to index
    %c0_482 = arith.constant 0 : index
    %1464 = vector.load %arg6[%1463, %c0_482] : memref<32x128xf32, #tpu.memory_space<vmem>>, vector<2x128xf32>
    tpu.vector_store %arg6[%1463, %c0_482], %1460 {strides = array<i32>} : memref<32x128xf32, #tpu.memory_space<vmem>>, vector<2x128xf32>,
    %c8_i32_483 = arith.constant 8 : i32
    return
  }
}

</mosaic_0001>

<llo_original>
// kernel: lstm_posetrack_forward.1
$region0: #{lstm_posetrack_forward.1}
  #allocation0 [shape = 'u32[]', space=smem, size = 0x4, offset = 0x4, fixed_abs, tag = 'smem constant byte address 0x4 - core index']
  #allocation1 [shape = 'u32[144,128]{1,0:T(1,128)}', space=vmem, size = 0x12000, scoped, tag = 'internal scratch']
  #allocation2 [shape = 'f32[48,128]{1,0:T(8,128)}', space=vmem, size = 0x6000, scoped, tag = 'scratch operand']
  %s0 = inlined_call_operand.vmem [shape: f32[48,128], index: 0, kind: input, shape index: {}]
  %s1 = inlined_call_operand.hbm [shape: f32[640,128], index: 1, kind: input, shape index: {}]
  %s2 = inlined_call_operand.vmem [shape: f32[160,128], index: 2, kind: input, shape index: {}]
  %s3 = inlined_call_operand.hbm [shape: f32[5,128], index: 3, kind: input, shape index: {}]
  %s4 = inlined_call_operand.vmem [shape: f32[64,128], index: 4, kind: input, shape index: {}]
  %s5 = inlined_call_operand.hbm [shape: f32[2,128], index: 5, kind: input, shape index: {}]
  %s6 = inlined_call_operand.vmem [shape: f32[32,128], index: 6, kind: output, shape index: {}]
  %s7 = sld [smem:[#allocation0]]
  $region46: #{lstm_posetrack_forward.1} parent=0
    _
  %s9 = ssub.s32 1, %s7
  %s10 = scalar_select 0, %s9, %s7
  $region1: #{lstm_posetrack_forward.1} parent=0
    #allocation3 [shape = 'u8[327680]{0}', space=vmem, size = 0x50000, scoped, tag = 'input window, operand 1, single buffered']
    #allocation4 [shape = 's32[1]{0}', space=sflag, size = 0x4, scoped, tag = 'scoped memory for lstm_posetrack_forward.1']
    #allocation5 [shape = 'u8[4096]{0}', space=vmem, size = 0x1000, scoped, tag = 'input window, operand 3, single buffered']
    #allocation6 [shape = 's32[1]{0}', space=sflag, size = 0x4, scoped, tag = 'scoped memory for lstm_posetrack_forward.1']
    #allocation7 [shape = 'u8[1024]{0}', space=vmem, size = 0x400, scoped, tag = 'input window, operand 5, single buffered']
    %11 = vsyncpa [#allocation4], 0
    %12 = vsyncpa [#allocation6], 0
    // Predicated region
    $region2: #{lstm_posetrack_forward.1} parent=1 // pred_check
      _
    $region3: #{lstm_posetrack_forward.1} parent=1 // pred_check_branch
      %14 = sbr.rel (0) target = $region5
    $region4: #{lstm_posetrack_forward.1} parent=1 // pred_region
      _
    $region5: #{lstm_posetrack_forward.1} parent=1 // pred_fallthru
      _
    // Predicated region
    $region6: #{lstm_posetrack_forward.1} parent=1 // pred_check
      _
    $region7: #{lstm_posetrack_forward.1} parent=1 // pred_check_branch
      %16 = sbr.rel (0) target = $region9
    $region8: #{lstm_posetrack_forward.1} parent=1 // pred_region
      %s18 = ssub.s32 10240, 10240
      %19 = vsyncadd [#allocation4], %s18
      %s20 = sshll.u32 [#allocation3], 4
      %s21 = int_to_ptr.vmem [resolvable:$true] %s20
      %26 = dma.hbm_to_vmem [thread:$0]  %s1, 10240, %s21, [#allocation4], 128, 128, 8
    $region9: #{lstm_posetrack_forward.1} parent=1 // pred_fallthru
      _
    // Predicated region
    $region10: #{lstm_posetrack_forward.1} parent=1 // pred_check
      _
    $region11: #{lstm_posetrack_forward.1} parent=1 // pred_check_branch
      %28 = sbr.rel (0) target = $region13
    $region12: #{lstm_posetrack_forward.1} parent=1 // pred_region
      _
    $region13: #{lstm_posetrack_forward.1} parent=1 // pred_fallthru
      _
    // Predicated region
    $region14: #{lstm_posetrack_forward.1} parent=1 // pred_check
      _
    $region15: #{lstm_posetrack_forward.1} parent=1 // pred_check_branch
      %30 = sbr.rel (0) target = $region17
    $region16: #{lstm_posetrack_forward.1} parent=1 // pred_region
      %s32 = ssub.s32 128, 128
      %33 = vsyncadd [#allocation6], %s32
      %s35 = sshll.u32 [#allocation5], 4
      %s36 = int_to_ptr.vmem [resolvable:$true] %s35
      %38 = dma.hbm_to_vmem [thread:$0]  %s3, 128, %s36, [#allocation6]
    $region17: #{lstm_posetrack_forward.1} parent=1 // pred_fallthru
      _
    // Predicated region
    $region18: #{lstm_posetrack_forward.1} parent=1 // pred_check
      _
    $region19: #{lstm_posetrack_forward.1} parent=1 // pred_check_branch
      %40 = sbr.rel (0) target = $region21
    $region20: #{lstm_posetrack_forward.1} parent=1 // pred_region
      _
    $region21: #{lstm_posetrack_forward.1} parent=1 // pred_fallthru
      _
    // Predicated region
    $region22: #{lstm_posetrack_forward.1} parent=1 // pred_check
      _
    $region23: #{lstm_posetrack_forward.1} parent=1 // pred_check_branch
      %42 = sbr.rel (0) target = $region25
    $region24: #{lstm_posetrack_forward.1} parent=1 // pred_region
      %s44 = ssub.s32 32, 32
      %45 = vsyncadd [#allocation6], %s44
      %s47 = sshll.u32 [#allocation7], 4
      %s48 = int_to_ptr.vmem [resolvable:$true] %s47
      %50 = dma.hbm_to_vmem [thread:$0]  %s5, 32, %s48, [#allocation6]
    $region25: #{lstm_posetrack_forward.1} parent=1 // pred_fallthru
      _
    // Predicated region
    $region26: #{lstm_posetrack_forward.1} parent=1 // pred_check
      _
    $region27: #{lstm_posetrack_forward.1} parent=1 // pred_check_branch
      %52 = sbr.rel (0) target = $region29
    $region28: #{lstm_posetrack_forward.1} parent=1 // pred_region
      %53 = dma.done [#allocation4], 10240
    $region29: #{lstm_posetrack_forward.1} parent=1 // pred_fallthru
      _
    // Predicated region
    $region30: #{lstm_posetrack_forward.1} parent=1 // pred_check
      _
    $region31: #{lstm_posetrack_forward.1} parent=1 // pred_check_branch
      %55 = sbr.rel (0) target = $region33
    $region32: #{lstm_posetrack_forward.1} parent=1 // pred_region
      %56 = dma.done [#allocation6], 128
    $region33: #{lstm_posetrack_forward.1} parent=1 // pred_fallthru
      _
    // Predicated region
    $region34: #{lstm_posetrack_forward.1} parent=1 // pred_check
      _
    $region35: #{lstm_posetrack_forward.1} parent=1 // pred_check_branch
      %58 = sbr.rel (0) target = $region37
    $region36: #{lstm_posetrack_forward.1} parent=1 // pred_region
      %59 = dma.done [#allocation6], 32
    $region37: #{lstm_posetrack_forward.1} parent=1 // pred_fallthru
      _
    %v60 = vld [vmem:[%s0] sm:$0xff]
    %v61 = vld [vmem:[%s0 + $0x8] sm:$0xff]
    %v62 = vld [vmem:[#allocation3] sm:$0xff]
    %v63 = vld [vmem:[#allocation3 + $0x8] sm:$0xff]
    %v64 = vld [vmem:[#allocation3 + $0x10] sm:$0xff]
    %v65 = vld [vmem:[#allocation3 + $0x18] sm:$0xff]
    %v66 = vld [vmem:[#allocation3 + $0x20] sm:$0xff]
    %v67 = vld [vmem:[#allocation3 + $0x28] sm:$0xff]
    %v68 = vld [vmem:[#allocation3 + $0x30] sm:$0xff]
    %v69 = vld [vmem:[#allocation3 + $0x38] sm:$0xff]
    %v70 = vld [vmem:[#allocation3 + $0x40] sm:$0xff]
    %v71 = vld [vmem:[#allocation3 + $0x48] sm:$0xff]
    %v72 = vld [vmem:[#allocation3 + $0x50] sm:$0xff]
    %v73 = vld [vmem:[#allocation3 + $0x58] sm:$0xff]
    %v74 = vld [vmem:[#allocation3 + $0x60] sm:$0xff]
    %v75 = vld [vmem:[#allocation3 + $0x68] sm:$0xff]
    %v76 = vld [vmem:[#allocation3 + $0x70] sm:$0xff]
    %v77 = vld [vmem:[#allocation3 + $0x78] sm:$0xff]
    %v78 = vld [vmem:[#allocation5] sm:$0x1]
    %v79 = vlaneseq
    %v80 = vshrl.u32 %v79, 7
    %v81 = vsub.s32 0, %v80
    %v82 = vrot.slane %v78, %v81
    %83 = vmatprep.subr.mxu0 0.0
    %84 = vmatpush1.msra.mxu0 %v62
    %85 = vmatprep.subr.mxu0 0.0
    %86 = vmatpush1.msra.mxu0 %v63
    %87 = vmatprep.subr.mxu0 0.0
    %88 = vmatpush1.msra.mxu0 %v64
    %89 = vmatprep.subr.mxu0 0.0
    %90 = vmatpush1.msra.mxu0 %v65
    %91 = vmatprep.subr.mxu0 0.0
    %92 = vmatpush1.msra.mxu0 %v66
    %93 = vmatprep.subr.mxu0 0.0
    %94 = vmatpush1.msra.mxu0 %v67
    %95 = vmatprep.subr.mxu0 0.0
    %96 = vmatpush1.msra.mxu0 %v68
    %97 = vmatprep.subr.mxu0 0.0
    %98 = vmatpush1.msra.mxu0 %v69
    %99 = vmatprep.subr.mxu0 0.0
    %100 = vmatpush1.msra.mxu0 %v70
    %101 = vmatprep.subr.mxu0 0.0
    %102 = vmatpush1.msra.mxu0 %v71
    %103 = vmatprep.subr.mxu0 0.0
    %104 = vmatpush1.msra.mxu0 %v72
    %105 = vmatprep.subr.mxu0 0.0
    %106 = vmatpush1.msra.mxu0 %v73
    %107 = vmatprep.subr.mxu0 0.0
    %108 = vmatpush1.msra.mxu0 %v74
    %109 = vmatprep.subr.mxu0 0.0
    %110 = vmatpush1.msra.mxu0 %v75
    %111 = vmatprep.subr.mxu0 0.0
    %112 = vmatpush1.msra.mxu0 %v76
    %113 = vmatprep.subr.mxu0 0.0
    %114 = vmatpush1.msra.mxu0 %v77
    %115 = vmatprep.subr.mxu0 0.0
    %116 = vmatpush1.msra.mxu0 0.0
    %117 = vmatprep.subr.mxu0 0.0
    %118 = vmatpush1.msra.mxu0 0.0
    %119 = vmatprep.subr.mxu0 0.0
    %120 = vmatpush1.msra.mxu0 0.0
    %121 = vmatprep.subr.mxu0 0.0
    %122 = vmatpush1.msra.mxu0 0.0
    %123 = vmatprep.subr.mxu0 0.0
    %124 = vmatpush1.msra.mxu0 0.0
    %125 = vmatprep.subr.mxu0 0.0
    %126 = vmatpush1.msra.mxu0 0.0
    %127 = vmatprep.subr.mxu0 0.0
    %128 = vmatpush1.msra.mxu0 0.0
    %129 = vmatprep.subr.mxu0 0.0
    %130 = vmatpush1.msra.mxu0 0.0
    %131 = vmatprep.subr.mxu0 0.0
    %132 = vmatpush1.msra.mxu0 0.0
    %133 = vmatprep.subr.mxu0 0.0
    %134 = vmatpush1.msra.mxu0 0.0
    %135 = vmatprep.subr.mxu0 0.0
    %136 = vmatpush1.msra.mxu0 0.0
    %137 = vmatprep.subr.mxu0 0.0
    %138 = vmatpush1.msra.mxu0 0.0
    %139 = vmatprep.subr.mxu0 0.0
    %140 = vmatpush1.msra.mxu0 0.0
    %141 = vmatprep.subr.mxu0 0.0
    %142 = vmatpush1.msra.mxu0 0.0
    %143 = vmatprep.subr.mxu0 0.0
    %144 = vmatpush1.msra.mxu0 0.0
    %145 = vmatprep.subr.mxu0 0.0
    %146 = vmatpush1.msra.mxu0 0.0
    %147 = vmatprep.mubr.f32.mxu0 0.0
    %148 = vmatmul.mubr.f32.gmra.mrb[0].mxu0 %v60
    %v149 = vpop.f32.mrb[0].mxu0
    %v150 = vadd.f32 %v82, %v149
    %v151 = vpop.f32.mrb[0].mxu0
    %152 = vmatprep.mubr.f32.mxu0 0.0
    %153 = vmatmul.mubr.f32.gmra.mrb[0].mxu0 %v61
    %v154 = vpop.f32.mrb[0].mxu0
    %v155 = vadd.f32 %v82, %v154
    %v156 = vpop.f32.mrb[0].mxu0
    %157 = vdwg.mxu0
    %158 = vst [vmem:[#allocation2] sm:$0xff] %v150
    %159 = vst [vmem:[#allocation2 + $0x8] sm:$0xff] %v155
    %v160 = vld [vmem:[%s2] sm:$0xff]
    %v161 = vld [vmem:[%s2 + $0x8] sm:$0xff]
    %v162 = vld [vmem:[%s2 + $0x10] sm:$0xff]
    %v163 = vld [vmem:[%s2 + $0x18] sm:$0xff]
    %v164 = vld [vmem:[#allocation2] sm:$0x3]
    %vm165 = vcmask 261120
    %v167 = vsel %vm165, 0.0, 0
    %169 = vmatprep.subr.mxu0 0.0
    %170 = vmatpush1.msra.mxu0 %v160
    %171 = vmatprep.subr.mxu0 0.0
    %172 = vmatpush1.msra.mxu0 %v161
    %173 = vmatprep.subr.mxu0 0.0
    %174 = vmatpush1.msra.mxu0 %v162
    %175 = vmatprep.subr.mxu0 0.0
    %176 = vmatpush1.msra.mxu0 %v163
    %177 = vmatprep.subr.mxu0 0.0
    %178 = vmatpush1.msra.mxu0 0.0
    %179 = vmatprep.subr.mxu0 0.0
    %180 = vmatpush1.msra.mxu0 0.0
    %181 = vmatprep.subr.mxu0 0.0
    %182 = vmatpush1.msra.mxu0 0.0
    %183 = vmatprep.subr.mxu0 0.0
    %184 = vmatpush1.msra.mxu0 0.0
    %185 = vmatprep.subr.mxu0 0.0
    %186 = vmatpush1.msra.mxu0 0.0
    %187 = vmatprep.subr.mxu0 0.0
    %188 = vmatpush1.msra.mxu0 0.0
    %189 = vmatprep.subr.mxu0 0.0
    %190 = vmatpush1.msra.mxu0 0.0
    %191 = vmatprep.subr.mxu0 0.0
    %192 = vmatpush1.msra.mxu0 0.0
    %193 = vmatprep.subr.mxu0 0.0
    %194 = vmatpush1.msra.mxu0 0.0
    %195 = vmatprep.subr.mxu0 0.0
    %196 = vmatpush1.msra.mxu0 0.0
    %197 = vmatprep.subr.mxu0 0.0
    %198 = vmatpush1.msra.mxu0 0.0
    %199 = vmatprep.subr.mxu0 0.0
    %200 = vmatpush1.msra.mxu0 0.0
    %201 = vmatprep.subr.mxu0 0.0
    %202 = vmatpush1.msra.mxu0 0.0
    %203 = vmatprep.subr.mxu0 0.0
    %204 = vmatpush1.msra.mxu0 0.0
    %205 = vmatprep.subr.mxu0 0.0
    %206 = vmatpush1.msra.mxu0 0.0
    %207 = vmatprep.subr.mxu0 0.0
    %208 = vmatpush1.msra.mxu0 0.0
    %209 = vmatprep.subr.mxu0 0.0
    %210 = vmatpush1.msra.mxu0 0.0
    %211 = vmatprep.subr.mxu0 0.0
    %212 = vmatpush1.msra.mxu0 0.0
    %213 = vmatprep.subr.mxu0 0.0
    %214 = vmatpush1.msra.mxu0 0.0
    %215 = vmatprep.subr.mxu0 0.0
    %216 = vmatpush1.msra.mxu0 0.0
    %217 = vmatprep.subr.mxu0 0.0
    %218 = vmatpush1.msra.mxu0 0.0
    %219 = vmatprep.subr.mxu0 0.0
    %220 = vmatpush1.msra.mxu0 0.0
    %221 = vmatprep.subr.mxu0 0.0
    %222 = vmatpush1.msra.mxu0 0.0
    %223 = vmatprep.subr.mxu0 0.0
    %224 = vmatpush1.msra.mxu0 0.0
    %225 = vmatprep.subr.mxu0 0.0
    %226 = vmatpush1.msra.mxu0 0.0
    %227 = vmatprep.subr.mxu0 0.0
    %228 = vmatpush1.msra.mxu0 0.0
    %229 = vmatprep.subr.mxu0 0.0
    %230 = vmatpush1.msra.mxu0 0.0
    %231 = vmatprep.subr.mxu0 0.0
    %232 = vmatpush1.msra.mxu0 0.0
    %233 = vmatprep.mubr.f32.mxu0 0.0
    %234 = vmatmul.mubr.f32.gmra.mrb[0].mxu0 %v167
    %v235 = vpop.f32.mrb[0].mxu0
    %v236 = vadd.f32 0.0, %v235
    %v237 = vpop.f32.mrb[0].mxu0
    %238 = vdwg.mxu0
    %v239 = vadd.f32 %v164, %v236
    %v240 = vxor.u32 %v239, 2147483648
    %v241 = vmul.f32 %v240, 1.442695
    %v242 = vpow.pop %v241
    %v243 = vadd.f32 %v242, 1.0
    %v244 = vrcp.pop %v243
    %v245 = vmul.f32 1.0, %v244
    %v246 = vtanh.pop %v239
    %v247 = vmul.f32 %v245, 0.0
    %249 = vrot.lane.b32.xlu0 %v246, 64
    %v250 = vpop.permute.xlu0 %249
    %v252 = vmul.f32 %v245, %v250
    %254 = vrot.lane.b32.xlu0 %v252, 32
    %v255 = vpop.permute.xlu0 %254
    %v257 = vadd.f32 %v247, %v255
    %v258 = vtanh.pop %v257
    %260 = vrot.lane.b32.xlu0 %v258, 64
    %v261 = vpop.permute.xlu0 %260
    %v263 = vmul.f32 %v245, %v261
    %v264 = vld [vmem:[#allocation2 + $0x2] sm:$0x3]
    %266 = vrot.lane.b32.xlu0 %v263, 32
    %v267 = vpop.permute.xlu0 %266
    %v268 = vsel %vm165, %v267, 0
    %270 = vmatprep.subr.mxu0 0.0
    %271 = vmatpush1.msra.mxu0 %v160
    %272 = vmatprep.subr.mxu0 0.0
    %273 = vmatpush1.msra.mxu0 %v161
    %274 = vmatprep.subr.mxu0 0.0
    %275 = vmatpush1.msra.mxu0 %v162
    %276 = vmatprep.subr.mxu0 0.0
    %277 = vmatpush1.msra.mxu0 %v163
    %278 = vmatprep.subr.mxu0 0.0
    %279 = vmatpush1.msra.mxu0 0.0
    %280 = vmatprep.subr.mxu0 0.0
    %281 = vmatpush1.msra.mxu0 0.0
    %282 = vmatprep.subr.mxu0 0.0
    %283 = vmatpush1.msra.mxu0 0.0
    %284 = vmatprep.subr.mxu0 0.0
    %285 = vmatpush1.msra.mxu0 0.0
    %286 = vmatprep.subr.mxu0 0.0
    %287 = vmatpush1.msra.mxu0 0.0
    %288 = vmatprep.subr.mxu0 0.0
    %289 = vmatpush1.msra.mxu0 0.0
    %290 = vmatprep.subr.mxu0 0.0
    %291 = vmatpush1.msra.mxu0 0.0
    %292 = vmatprep.subr.mxu0 0.0
    %293 = vmatpush1.msra.mxu0 0.0
    %294 = vmatprep.subr.mxu0 0.0
    %295 = vmatpush1.msra.mxu0 0.0
    %296 = vmatprep.subr.mxu0 0.0
    %297 = vmatpush1.msra.mxu0 0.0
    %298 = vmatprep.subr.mxu0 0.0
    %299 = vmatpush1.msra.mxu0 0.0
    %300 = vmatprep.subr.mxu0 0.0
    %301 = vmatpush1.msra.mxu0 0.0
    %302 = vmatprep.subr.mxu0 0.0
    %303 = vmatpush1.msra.mxu0 0.0
    %304 = vmatprep.subr.mxu0 0.0
    %305 = vmatpush1.msra.mxu0 0.0
    %306 = vmatprep.subr.mxu0 0.0
    %307 = vmatpush1.msra.mxu0 0.0
    %308 = vmatprep.subr.mxu0 0.0
    %309 = vmatpush1.msra.mxu0 0.0
    %310 = vmatprep.subr.mxu0 0.0
    %311 = vmatpush1.msra.mxu0 0.0
    %312 = vmatprep.subr.mxu0 0.0
    %313 = vmatpush1.msra.mxu0 0.0
    %314 = vmatprep.subr.mxu0 0.0
    %315 = vmatpush1.msra.mxu0 0.0
    %316 = vmatprep.subr.mxu0 0.0
    %317 = vmatpush1.msra.mxu0 0.0
    %318 = vmatprep.subr.mxu0 0.0
    %319 = vmatpush1.msra.mxu0 0.0
    %320 = vmatprep.subr.mxu0 0.0
    %321 = vmatpush1.msra.mxu0 0.0
    %322 = vmatprep.subr.mxu0 0.0
    %323 = vmatpush1.msra.mxu0 0.0
    %324 = vmatprep.subr.mxu0 0.0
    %325 = vmatpush1.msra.mxu0 0.0
    %326 = vmatprep.subr.mxu0 0.0
    %327 = vmatpush1.msra.mxu0 0.0
    %328 = vmatprep.subr.mxu0 0.0
    %329 = vmatpush1.msra.mxu0 0.0
    %330 = vmatprep.subr.mxu0 0.0
    %331 = vmatpush1.msra.mxu0 0.0
    %332 = vmatprep.subr.mxu0 0.0
    %333 = vmatpush1.msra.mxu0 0.0
    %334 = vmatprep.mubr.f32.mxu0 0.0
    %335 = vmatmul.mubr.f32.gmra.mrb[0].mxu0 %v268
    %v336 = vpop.f32.mrb[0].mxu0
    %v337 = vadd.f32 0.0, %v336
    %v338 = vpop.f32.mrb[0].mxu0
    %339 = vdwg.mxu0
    %v340 = vadd.f32 %v264, %v337
    %v341 = vxor.u32 %v340, 2147483648
    %v342 = vmul.f32 %v341, 1.442695
    %v343 = vpow.pop %v342
    %v344 = vadd.f32 %v343, 1.0
    %v345 = vrcp.pop %v344
    %v346 = vmul.f32 1.0, %v345
    %v347 = vtanh.pop %v340
    %v348 = vmul.f32 %v346, %v257
    %350 = vrot.lane.b32.xlu0 %v347, 64
    %v351 = vpop.permute.xlu0 %350
    %v353 = vmul.f32 %v346, %v351
    %355 = vrot.lane.b32.xlu0 %v353, 32
    %v356 = vpop.permute.xlu0 %355
    %v358 = vadd.f32 %v348, %v356
    %v359 = vtanh.pop %v358
    %361 = vrot.lane.b32.xlu0 %v359, 64
    %v362 = vpop.permute.xlu0 %361
    %v364 = vmul.f32 %v346, %v362
    %v365 = vld [vmem:[#allocation2 + $0x4] sm:$0x3]
    %367 = vrot.lane.b32.xlu0 %v364, 32
    %v368 = vpop.permute.xlu0 %367
    %v369 = vsel %vm165, %v368, 0
    %371 = vmatprep.subr.mxu0 0.0
    %372 = vmatpush1.msra.mxu0 %v160
    %373 = vmatprep.subr.mxu0 0.0
    %374 = vmatpush1.msra.mxu0 %v161
    %375 = vmatprep.subr.mxu0 0.0
    %376 = vmatpush1.msra.mxu0 %v162
    %377 = vmatprep.subr.mxu0 0.0
    %378 = vmatpush1.msra.mxu0 %v163
    %379 = vmatprep.subr.mxu0 0.0
    %380 = vmatpush1.msra.mxu0 0.0
    %381 = vmatprep.subr.mxu0 0.0
    %382 = vmatpush1.msra.mxu0 0.0
    %383 = vmatprep.subr.mxu0 0.0
    %384 = vmatpush1.msra.mxu0 0.0
    %385 = vmatprep.subr.mxu0 0.0
    %386 = vmatpush1.msra.mxu0 0.0
    %387 = vmatprep.subr.mxu0 0.0
    %388 = vmatpush1.msra.mxu0 0.0
    %389 = vmatprep.subr.mxu0 0.0
    %390 = vmatpush1.msra.mxu0 0.0
    %391 = vmatprep.subr.mxu0 0.0
    %392 = vmatpush1.msra.mxu0 0.0
    %393 = vmatprep.subr.mxu0 0.0
    %394 = vmatpush1.msra.mxu0 0.0
    %395 = vmatprep.subr.mxu0 0.0
    %396 = vmatpush1.msra.mxu0 0.0
    %397 = vmatprep.subr.mxu0 0.0
    %398 = vmatpush1.msra.mxu0 0.0
    %399 = vmatprep.subr.mxu0 0.0
    %400 = vmatpush1.msra.mxu0 0.0
    %401 = vmatprep.subr.mxu0 0.0
    %402 = vmatpush1.msra.mxu0 0.0
    %403 = vmatprep.subr.mxu0 0.0
    %404 = vmatpush1.msra.mxu0 0.0
    %405 = vmatprep.subr.mxu0 0.0
    %406 = vmatpush1.msra.mxu0 0.0
    %407 = vmatprep.subr.mxu0 0.0
    %408 = vmatpush1.msra.mxu0 0.0
    %409 = vmatprep.subr.mxu0 0.0
    %410 = vmatpush1.msra.mxu0 0.0
    %411 = vmatprep.subr.mxu0 0.0
    %412 = vmatpush1.msra.mxu0 0.0
    %413 = vmatprep.subr.mxu0 0.0
    %414 = vmatpush1.msra.mxu0 0.0
    %415 = vmatprep.subr.mxu0 0.0
    %416 = vmatpush1.msra.mxu0 0.0
    %417 = vmatprep.subr.mxu0 0.0
    %418 = vmatpush1.msra.mxu0 0.0
    %419 = vmatprep.subr.mxu0 0.0
    %420 = vmatpush1.msra.mxu0 0.0
    %421 = vmatprep.subr.mxu0 0.0
    %422 = vmatpush1.msra.mxu0 0.0
    %423 = vmatprep.subr.mxu0 0.0
    %424 = vmatpush1.msra.mxu0 0.0
    %425 = vmatprep.subr.mxu0 0.0
    %426 = vmatpush1.msra.mxu0 0.0
    %427 = vmatprep.subr.mxu0 0.0
    %428 = vmatpush1.msra.mxu0 0.0
    %429 = vmatprep.subr.mxu0 0.0
    %430 = vmatpush1.msra.mxu0 0.0
    %431 = vmatprep.subr.mxu0 0.0
    %432 = vmatpush1.msra.mxu0 0.0
    %433 = vmatprep.subr.mxu0 0.0
    %434 = vmatpush1.msra.mxu0 0.0
    %435 = vmatprep.mubr.f32.mxu0 0.0
    %436 = vmatmul.mubr.f32.gmra.mrb[0].mxu0 %v369
    %v437 = vpop.f32.mrb[0].mxu0
    %v438 = vadd.f32 0.0, %v437
    %v439 = vpop.f32.mrb[0].mxu0
    %440 = vdwg.mxu0
    %v441 = vadd.f32 %v365, %v438
    %v442 = vxor.u32 %v441, 2147483648
    %v443 = vmul.f32 %v442, 1.442695
    %v444 = vpow.pop %v443
    %v445 = vadd.f32 %v444, 1.0
    %v446 = vrcp.pop %v445
    %v447 = vmul.f32 1.0, %v446
    %v448 = vtanh.pop %v441
    %v449 = vmul.f32 %v447, %v358
    %451 = vrot.lane.b32.xlu0 %v448, 64
    %v452 = vpop.permute.xlu0 %451
    %v454 = vmul.f32 %v447, %v452
    %456 = vrot.lane.b32.xlu0 %v454, 32
    %v457 = vpop.permute.xlu0 %456
    %v459 = vadd.f32 %v449, %v457
    %v460 = vtanh.pop %v459
    %462 = vrot.lane.b32.xlu0 %v460, 64
    %v463 = vpop.permute.xlu0 %462
    %v465 = vmul.f32 %v447, %v463
    %v466 = vld [vmem:[#allocation2 + $0x6] sm:$0x3]
    %468 = vrot.lane.b32.xlu0 %v465, 32
    %v469 = vpop.permute.xlu0 %468
    %v470 = vsel %vm165, %v469, 0
    %472 = vmatprep.subr.mxu0 0.0
    %473 = vmatpush1.msra.mxu0 %v160
    %474 = vmatprep.subr.mxu0 0.0
    %475 = vmatpush1.msra.mxu0 %v161
    %476 = vmatprep.subr.mxu0 0.0
    %477 = vmatpush1.msra.mxu0 %v162
    %478 = vmatprep.subr.mxu0 0.0
    %479 = vmatpush1.msra.mxu0 %v163
    %480 = vmatprep.subr.mxu0 0.0
    %481 = vmatpush1.msra.mxu0 0.0
    %482 = vmatprep.subr.mxu0 0.0
    %483 = vmatpush1.msra.mxu0 0.0
    %484 = vmatprep.subr.mxu0 0.0
    %485 = vmatpush1.msra.mxu0 0.0
    %486 = vmatprep.subr.mxu0 0.0
    %487 = vmatpush1.msra.mxu0 0.0
    %488 = vmatprep.subr.mxu0 0.0
    %489 = vmatpush1.msra.mxu0 0.0
    %490 = vmatprep.subr.mxu0 0.0
    %491 = vmatpush1.msra.mxu0 0.0
    %492 = vmatprep.subr.mxu0 0.0
    %493 = vmatpush1.msra.mxu0 0.0
    %494 = vmatprep.subr.mxu0 0.0
    %495 = vmatpush1.msra.mxu0 0.0
    %496 = vmatprep.subr.mxu0 0.0
    %497 = vmatpush1.msra.mxu0 0.0
    %498 = vmatprep.subr.mxu0 0.0
    %499 = vmatpush1.msra.mxu0 0.0
    %500 = vmatprep.subr.mxu0 0.0
    %501 = vmatpush1.msra.mxu0 0.0
    %502 = vmatprep.subr.mxu0 0.0
    %503 = vmatpush1.msra.mxu0 0.0
    %504 = vmatprep.subr.mxu0 0.0
    %505 = vmatpush1.msra.mxu0 0.0
    %506 = vmatprep.subr.mxu0 0.0
    %507 = vmatpush1.msra.mxu0 0.0
    %508 = vmatprep.subr.mxu0 0.0
    %509 = vmatpush1.msra.mxu0 0.0
    %510 = vmatprep.subr.mxu0 0.0
    %511 = vmatpush1.msra.mxu0 0.0
    %512 = vmatprep.subr.mxu0 0.0
    %513 = vmatpush1.msra.mxu0 0.0
    %514 = vmatprep.subr.mxu0 0.0
    %515 = vmatpush1.msra.mxu0 0.0
    %516 = vmatprep.subr.mxu0 0.0
    %517 = vmatpush1.msra.mxu0 0.0
    %518 = vmatprep.subr.mxu0 0.0
    %519 = vmatpush1.msra.mxu0 0.0
    %520 = vmatprep.subr.mxu0 0.0
    %521 = vmatpush1.msra.mxu0 0.0
    %522 = vmatprep.subr.mxu0 0.0
    %523 = vmatpush1.msra.mxu0 0.0
    %524 = vmatprep.subr.mxu0 0.0
    %525 = vmatpush1.msra.mxu0 0.0
    %526 = vmatprep.subr.mxu0 0.0
    %527 = vmatpush1.msra.mxu0 0.0
    %528 = vmatprep.subr.mxu0 0.0
    %529 = vmatpush1.msra.mxu0 0.0
    %530 = vmatprep.subr.mxu0 0.0
    %531 = vmatpush1.msra.mxu0 0.0
    %532 = vmatprep.subr.mxu0 0.0
    %533 = vmatpush1.msra.mxu0 0.0
    %534 = vmatprep.subr.mxu0 0.0
    %535 = vmatpush1.msra.mxu0 0.0
    %536 = vmatprep.mubr.f32.mxu0 0.0
    %537 = vmatmul.mubr.f32.gmra.mrb[0].mxu0 %v470
    %v538 = vpop.f32.mrb[0].mxu0
    %v539 = vadd.f32 0.0, %v538
    %v540 = vpop.f32.mrb[0].mxu0
    %541 = vdwg.mxu0
    %v542 = vadd.f32 %v466, %v539
    %v543 = vxor.u32 %v542, 2147483648
    %v544 = vmul.f32 %v543, 1.442695
    %v545 = vpow.pop %v544
    %v546 = vadd.f32 %v545, 1.0
    %v547 = vrcp.pop %v546
    %v548 = vmul.f32 1.0, %v547
    %v549 = vtanh.pop %v542
    %v550 = vmul.f32 %v548, %v459
    %552 = vrot.lane.b32.xlu0 %v549, 64
    %v553 = vpop.permute.xlu0 %552
    %v555 = vmul.f32 %v548, %v553
    %557 = vrot.lane.b32.xlu0 %v555, 32
    %v558 = vpop.permute.xlu0 %557
    %v560 = vadd.f32 %v550, %v558
    %v561 = vtanh.pop %v560
    %563 = vrot.lane.b32.xlu0 %v561, 64
    %v564 = vpop.permute.xlu0 %563
    %v566 = vmul.f32 %v548, %v564
    %v567 = vld [vmem:[#allocation2 + $0x8] sm:$0x3]
    %569 = vrot.lane.b32.xlu0 %v566, 32
    %v570 = vpop.permute.xlu0 %569
    %v571 = vsel %vm165, %v570, 0
    %573 = vmatprep.subr.mxu0 0.0
    %574 = vmatpush1.msra.mxu0 %v160
    %575 = vmatprep.subr.mxu0 0.0
    %576 = vmatpush1.msra.mxu0 %v161
    %577 = vmatprep.subr.mxu0 0.0
    %578 = vmatpush1.msra.mxu0 %v162
    %579 = vmatprep.subr.mxu0 0.0
    %580 = vmatpush1.msra.mxu0 %v163
    %581 = vmatprep.subr.mxu0 0.0
    %582 = vmatpush1.msra.mxu0 0.0
    %583 = vmatprep.subr.mxu0 0.0
    %584 = vmatpush1.msra.mxu0 0.0
    %585 = vmatprep.subr.mxu0 0.0
    %586 = vmatpush1.msra.mxu0 0.0
    %587 = vmatprep.subr.mxu0 0.0
    %588 = vmatpush1.msra.mxu0 0.0
    %589 = vmatprep.subr.mxu0 0.0
    %590 = vmatpush1.msra.mxu0 0.0
    %591 = vmatprep.subr.mxu0 0.0
    %592 = vmatpush1.msra.mxu0 0.0
    %593 = vmatprep.subr.mxu0 0.0
    %594 = vmatpush1.msra.mxu0 0.0
    %595 = vmatprep.subr.mxu0 0.0
    %596 = vmatpush1.msra.mxu0 0.0
    %597 = vmatprep.subr.mxu0 0.0
    %598 = vmatpush1.msra.mxu0 0.0
    %599 = vmatprep.subr.mxu0 0.0
    %600 = vmatpush1.msra.mxu0 0.0
    %601 = vmatprep.subr.mxu0 0.0
    %602 = vmatpush1.msra.mxu0 0.0
    %603 = vmatprep.subr.mxu0 0.0
    %604 = vmatpush1.msra.mxu0 0.0
    %605 = vmatprep.subr.mxu0 0.0
    %606 = vmatpush1.msra.mxu0 0.0
    %607 = vmatprep.subr.mxu0 0.0
    %608 = vmatpush1.msra.mxu0 0.0
    %609 = vmatprep.subr.mxu0 0.0
    %610 = vmatpush1.msra.mxu0 0.0
    %611 = vmatprep.subr.mxu0 0.0
    %612 = vmatpush1.msra.mxu0 0.0
    %613 = vmatprep.subr.mxu0 0.0
    %614 = vmatpush1.msra.mxu0 0.0
    %615 = vmatprep.subr.mxu0 0.0
    %616 = vmatpush1.msra.mxu0 0.0
    %617 = vmatprep.subr.mxu0 0.0
    %618 = vmatpush1.msra.mxu0 0.0
    %619 = vmatprep.subr.mxu0 0.0
    %620 = vmatpush1.msra.mxu0 0.0
    %621 = vmatprep.subr.mxu0 0.0
    %622 = vmatpush1.msra.mxu0 0.0
    %623 = vmatprep.subr.mxu0 0.0
    %624 = vmatpush1.msra.mxu0 0.0
    %625 = vmatprep.subr.mxu0 0.0
    %626 = vmatpush1.msra.mxu0 0.0
    %627 = vmatprep.subr.mxu0 0.0
    %628 = vmatpush1.msra.mxu0 0.0
    %629 = vmatprep.subr.mxu0 0.0
    %630 = vmatpush1.msra.mxu0 0.0
    %631 = vmatprep.subr.mxu0 0.0
    %632 = vmatpush1.msra.mxu0 0.0
    %633 = vmatprep.subr.mxu0 0.0
    %634 = vmatpush1.msra.mxu0 0.0
    %635 = vmatprep.subr.mxu0 0.0
    %636 = vmatpush1.msra.mxu0 0.0
    %637 = vmatprep.mubr.f32.mxu0 0.0
    %638 = vmatmul.mubr.f32.gmra.mrb[0].mxu0 %v571
    %v639 = vpop.f32.mrb[0].mxu0
    %v640 = vadd.f32 0.0, %v639
    %v641 = vpop.f32.mrb[0].mxu0
    %642 = vdwg.mxu0
    %v643 = vadd.f32 %v567, %v640
    %v644 = vxor.u32 %v643, 2147483648
    %v645 = vmul.f32 %v644, 1.442695
    %v646 = vpow.pop %v645
    %v647 = vadd.f32 %v646, 1.0
    %v648 = vrcp.pop %v647
    %v649 = vmul.f32 1.0, %v648
    %v650 = vtanh.pop %v643
    %v651 = vmul.f32 %v649, %v560
    %653 = vrot.lane.b32.xlu0 %v650, 64
    %v654 = vpop.permute.xlu0 %653
    %v656 = vmul.f32 %v649, %v654
    %658 = vrot.lane.b32.xlu0 %v656, 32
    %v659 = vpop.permute.xlu0 %658
    %v661 = vadd.f32 %v651, %v659
    %v662 = vtanh.pop %v661
    %664 = vrot.lane.b32.xlu0 %v662, 64
    %v665 = vpop.permute.xlu0 %664
    %v667 = vmul.f32 %v649, %v665
    %v668 = vld [vmem:[#allocation2 + $0xa] sm:$0x3]
    %670 = vrot.lane.b32.xlu0 %v667, 32
    %v671 = vpop.permute.xlu0 %670
    %v672 = vsel %vm165, %v671, 0
    %674 = vmatprep.subr.mxu0 0.0
    %675 = vmatpush1.msra.mxu0 %v160
    %676 = vmatprep.subr.mxu0 0.0
    %677 = vmatpush1.msra.mxu0 %v161
    %678 = vmatprep.subr.mxu0 0.0
    %679 = vmatpush1.msra.mxu0 %v162
    %680 = vmatprep.subr.mxu0 0.0
    %681 = vmatpush1.msra.mxu0 %v163
    %682 = vmatprep.subr.mxu0 0.0
    %683 = vmatpush1.msra.mxu0 0.0
    %684 = vmatprep.subr.mxu0 0.0
    %685 = vmatpush1.msra.mxu0 0.0
    %686 = vmatprep.subr.mxu0 0.0
    %687 = vmatpush1.msra.mxu0 0.0
    %688 = vmatprep.subr.mxu0 0.0
    %689 = vmatpush1.msra.mxu0 0.0
    %690 = vmatprep.subr.mxu0 0.0
    %691 = vmatpush1.msra.mxu0 0.0
    %692 = vmatprep.subr.mxu0 0.0
    %693 = vmatpush1.msra.mxu0 0.0
    %694 = vmatprep.subr.mxu0 0.0
    %695 = vmatpush1.msra.mxu0 0.0
    %696 = vmatprep.subr.mxu0 0.0
    %697 = vmatpush1.msra.mxu0 0.0
    %698 = vmatprep.subr.mxu0 0.0
    %699 = vmatpush1.msra.mxu0 0.0
    %700 = vmatprep.subr.mxu0 0.0
    %701 = vmatpush1.msra.mxu0 0.0
    %702 = vmatprep.subr.mxu0 0.0
    %703 = vmatpush1.msra.mxu0 0.0
    %704 = vmatprep.subr.mxu0 0.0
    %705 = vmatpush1.msra.mxu0 0.0
    %706 = vmatprep.subr.mxu0 0.0
    %707 = vmatpush1.msra.mxu0 0.0
    %708 = vmatprep.subr.mxu0 0.0
    %709 = vmatpush1.msra.mxu0 0.0
    %710 = vmatprep.subr.mxu0 0.0
    %711 = vmatpush1.msra.mxu0 0.0
    %712 = vmatprep.subr.mxu0 0.0
    %713 = vmatpush1.msra.mxu0 0.0
    %714 = vmatprep.subr.mxu0 0.0
    %715 = vmatpush1.msra.mxu0 0.0
    %716 = vmatprep.subr.mxu0 0.0
    %717 = vmatpush1.msra.mxu0 0.0
    %718 = vmatprep.subr.mxu0 0.0
    %719 = vmatpush1.msra.mxu0 0.0
    %720 = vmatprep.subr.mxu0 0.0
    %721 = vmatpush1.msra.mxu0 0.0
    %722 = vmatprep.subr.mxu0 0.0
    %723 = vmatpush1.msra.mxu0 0.0
    %724 = vmatprep.subr.mxu0 0.0
    %725 = vmatpush1.msra.mxu0 0.0
    %726 = vmatprep.subr.mxu0 0.0
    %727 = vmatpush1.msra.mxu0 0.0
    %728 = vmatprep.subr.mxu0 0.0
    %729 = vmatpush1.msra.mxu0 0.0
    %730 = vmatprep.subr.mxu0 0.0
    %731 = vmatpush1.msra.mxu0 0.0
    %732 = vmatprep.subr.mxu0 0.0
    %733 = vmatpush1.msra.mxu0 0.0
    %734 = vmatprep.subr.mxu0 0.0
    %735 = vmatpush1.msra.mxu0 0.0
    %736 = vmatprep.subr.mxu0 0.0
    %737 = vmatpush1.msra.mxu0 0.0
    %738 = vmatprep.mubr.f32.mxu0 0.0
    %739 = vmatmul.mubr.f32.gmra.mrb[0].mxu0 %v672
    %v740 = vpop.f32.mrb[0].mxu0
    %v741 = vadd.f32 0.0, %v740
    %v742 = vpop.f32.mrb[0].mxu0
    %743 = vdwg.mxu0
    %v744 = vadd.f32 %v668, %v741
    %v745 = vxor.u32 %v744, 2147483648
    %v746 = vmul.f32 %v745, 1.442695
    %v747 = vpow.pop %v746
    %v748 = vadd.f32 %v747, 1.0
    %v749 = vrcp.pop %v748
    %v750 = vmul.f32 1.0, %v749
    %v751 = vtanh.pop %v744
    %v752 = vmul.f32 %v750, %v661
    %754 = vrot.lane.b32.xlu0 %v751, 64
    %v755 = vpop.permute.xlu0 %754
    %v757 = vmul.f32 %v750, %v755
    %759 = vrot.lane.b32.xlu0 %v757, 32
    %v760 = vpop.permute.xlu0 %759
    %v762 = vadd.f32 %v752, %v760
    %v763 = vtanh.pop %v762
    %765 = vrot.lane.b32.xlu0 %v763, 64
    %v766 = vpop.permute.xlu0 %765
    %v768 = vmul.f32 %v750, %v766
    %v769 = vld [vmem:[#allocation2 + $0xc] sm:$0x3]
    %771 = vrot.lane.b32.xlu0 %v768, 32
    %v772 = vpop.permute.xlu0 %771
    %v773 = vsel %vm165, %v772, 0
    %775 = vmatprep.subr.mxu0 0.0
    %776 = vmatpush1.msra.mxu0 %v160
    %777 = vmatprep.subr.mxu0 0.0
    %778 = vmatpush1.msra.mxu0 %v161
    %779 = vmatprep.subr.mxu0 0.0
    %780 = vmatpush1.msra.mxu0 %v162
    %781 = vmatprep.subr.mxu0 0.0
    %782 = vmatpush1.msra.mxu0 %v163
    %783 = vmatprep.subr.mxu0 0.0
    %784 = vmatpush1.msra.mxu0 0.0
    %785 = vmatprep.subr.mxu0 0.0
    %786 = vmatpush1.msra.mxu0 0.0
    %787 = vmatprep.subr.mxu0 0.0
    %788 = vmatpush1.msra.mxu0 0.0
    %789 = vmatprep.subr.mxu0 0.0
    %790 = vmatpush1.msra.mxu0 0.0
    %791 = vmatprep.subr.mxu0 0.0
    %792 = vmatpush1.msra.mxu0 0.0
    %793 = vmatprep.subr.mxu0 0.0
    %794 = vmatpush1.msra.mxu0 0.0
    %795 = vmatprep.subr.mxu0 0.0
    %796 = vmatpush1.msra.mxu0 0.0
    %797 = vmatprep.subr.mxu0 0.0
    %798 = vmatpush1.msra.mxu0 0.0
    %799 = vmatprep.subr.mxu0 0.0
    %800 = vmatpush1.msra.mxu0 0.0
    %801 = vmatprep.subr.mxu0 0.0
    %802 = vmatpush1.msra.mxu0 0.0
    %803 = vmatprep.subr.mxu0 0.0
    %804 = vmatpush1.msra.mxu0 0.0
    %805 = vmatprep.subr.mxu0 0.0
    %806 = vmatpush1.msra.mxu0 0.0
    %807 = vmatprep.subr.mxu0 0.0
    %808 = vmatpush1.msra.mxu0 0.0
    %809 = vmatprep.subr.mxu0 0.0
    %810 = vmatpush1.msra.mxu0 0.0
    %811 = vmatprep.subr.mxu0 0.0
    %812 = vmatpush1.msra.mxu0 0.0
    %813 = vmatprep.subr.mxu0 0.0
    %814 = vmatpush1.msra.mxu0 0.0
    %815 = vmatprep.subr.mxu0 0.0
    %816 = vmatpush1.msra.mxu0 0.0
    %817 = vmatprep.subr.mxu0 0.0
    %818 = vmatpush1.msra.mxu0 0.0
    %819 = vmatprep.subr.mxu0 0.0
    %820 = vmatpush1.msra.mxu0 0.0
    %821 = vmatprep.subr.mxu0 0.0
    %822 = vmatpush1.msra.mxu0 0.0
    %823 = vmatprep.subr.mxu0 0.0
    %824 = vmatpush1.msra.mxu0 0.0
    %825 = vmatprep.subr.mxu0 0.0
    %826 = vmatpush1.msra.mxu0 0.0
    %827 = vmatprep.subr.mxu0 0.0
    %828 = vmatpush1.msra.mxu0 0.0
    %829 = vmatprep.subr.mxu0 0.0
    %830 = vmatpush1.msra.mxu0 0.0
    %831 = vmatprep.subr.mxu0 0.0
    %832 = vmatpush1.msra.mxu0 0.0
    %833 = vmatprep.subr.mxu0 0.0
    %834 = vmatpush1.msra.mxu0 0.0
    %835 = vmatprep.subr.mxu0 0.0
    %836 = vmatpush1.msra.mxu0 0.0
    %837 = vmatprep.subr.mxu0 0.0
    %838 = vmatpush1.msra.mxu0 0.0
    %839 = vmatprep.mubr.f32.mxu0 0.0
    %840 = vmatmul.mubr.f32.gmra.mrb[0].mxu0 %v773
    %v841 = vpop.f32.mrb[0].mxu0
    %v842 = vadd.f32 0.0, %v841
    %v843 = vpop.f32.mrb[0].mxu0
    %844 = vdwg.mxu0
    %v845 = vadd.f32 %v769, %v842
    %v846 = vxor.u32 %v845, 2147483648
    %v847 = vmul.f32 %v846, 1.442695
    %v848 = vpow.pop %v847
    %v849 = vadd.f32 %v848, 1.0
    %v850 = vrcp.pop %v849
    %v851 = vmul.f32 1.0, %v850
    %v852 = vtanh.pop %v845
    %v853 = vmul.f32 %v851, %v762
    %855 = vrot.lane.b32.xlu0 %v852, 64
    %v856 = vpop.permute.xlu0 %855
    %v858 = vmul.f32 %v851, %v856
    %860 = vrot.lane.b32.xlu0 %v858, 32
    %v861 = vpop.permute.xlu0 %860
    %v863 = vadd.f32 %v853, %v861
    %v864 = vtanh.pop %v863
    %866 = vrot.lane.b32.xlu0 %v864, 64
    %v867 = vpop.permute.xlu0 %866
    %v869 = vmul.f32 %v851, %v867
    %v870 = vld [vmem:[#allocation2 + $0xe] sm:$0x3]
    %872 = vrot.lane.b32.xlu0 %v869, 32
    %v873 = vpop.permute.xlu0 %872
    %v874 = vsel %vm165, %v873, 0
    %876 = vmatprep.subr.mxu0 0.0
    %877 = vmatpush1.msra.mxu0 %v160
    %878 = vmatprep.subr.mxu0 0.0
    %879 = vmatpush1.msra.mxu0 %v161
    %880 = vmatprep.subr.mxu0 0.0
    %881 = vmatpush1.msra.mxu0 %v162
    %882 = vmatprep.subr.mxu0 0.0
    %883 = vmatpush1.msra.mxu0 %v163
    %884 = vmatprep.subr.mxu0 0.0
    %885 = vmatpush1.msra.mxu0 0.0
    %886 = vmatprep.subr.mxu0 0.0
    %887 = vmatpush1.msra.mxu0 0.0
    %888 = vmatprep.subr.mxu0 0.0
    %889 = vmatpush1.msra.mxu0 0.0
    %890 = vmatprep.subr.mxu0 0.0
    %891 = vmatpush1.msra.mxu0 0.0
    %892 = vmatprep.subr.mxu0 0.0
    %893 = vmatpush1.msra.mxu0 0.0
    %894 = vmatprep.subr.mxu0 0.0
    %895 = vmatpush1.msra.mxu0 0.0
    %896 = vmatprep.subr.mxu0 0.0
    %897 = vmatpush1.msra.mxu0 0.0
    %898 = vmatprep.subr.mxu0 0.0
    %899 = vmatpush1.msra.mxu0 0.0
    %900 = vmatprep.subr.mxu0 0.0
    %901 = vmatpush1.msra.mxu0 0.0
    %902 = vmatprep.subr.mxu0 0.0
    %903 = vmatpush1.msra.mxu0 0.0
    %904 = vmatprep.subr.mxu0 0.0
    %905 = vmatpush1.msra.mxu0 0.0
    %906 = vmatprep.subr.mxu0 0.0
    %907 = vmatpush1.msra.mxu0 0.0
    %908 = vmatprep.subr.mxu0 0.0
    %909 = vmatpush1.msra.mxu0 0.0
    %910 = vmatprep.subr.mxu0 0.0
    %911 = vmatpush1.msra.mxu0 0.0
    %912 = vmatprep.subr.mxu0 0.0
    %913 = vmatpush1.msra.mxu0 0.0
    %914 = vmatprep.subr.mxu0 0.0
    %915 = vmatpush1.msra.mxu0 0.0
    %916 = vmatprep.subr.mxu0 0.0
    %917 = vmatpush1.msra.mxu0 0.0
    %918 = vmatprep.subr.mxu0 0.0
    %919 = vmatpush1.msra.mxu0 0.0
    %920 = vmatprep.subr.mxu0 0.0
    %921 = vmatpush1.msra.mxu0 0.0
    %922 = vmatprep.subr.mxu0 0.0
    %923 = vmatpush1.msra.mxu0 0.0
    %924 = vmatprep.subr.mxu0 0.0
    %925 = vmatpush1.msra.mxu0 0.0
    %926 = vmatprep.subr.mxu0 0.0
    %927 = vmatpush1.msra.mxu0 0.0
    %928 = vmatprep.subr.mxu0 0.0
    %929 = vmatpush1.msra.mxu0 0.0
    %930 = vmatprep.subr.mxu0 0.0
    %931 = vmatpush1.msra.mxu0 0.0
    %932 = vmatprep.subr.mxu0 0.0
    %933 = vmatpush1.msra.mxu0 0.0
    %934 = vmatprep.subr.mxu0 0.0
    %935 = vmatpush1.msra.mxu0 0.0
    %936 = vmatprep.subr.mxu0 0.0
    %937 = vmatpush1.msra.mxu0 0.0
    %938 = vmatprep.subr.mxu0 0.0
    %939 = vmatpush1.msra.mxu0 0.0
    %940 = vmatprep.mubr.f32.mxu0 0.0
    %941 = vmatmul.mubr.f32.gmra.mrb[0].mxu0 %v874
    %v942 = vpop.f32.mrb[0].mxu0
    %v943 = vadd.f32 0.0, %v942
    %v944 = vpop.f32.mrb[0].mxu0
    %945 = vdwg.mxu0
    %v946 = vadd.f32 %v870, %v943
    %v947 = vxor.u32 %v946, 2147483648
    %v948 = vmul.f32 %v947, 1.442695
    %v949 = vpow.pop %v948
    %v950 = vadd.f32 %v949, 1.0
    %v951 = vrcp.pop %v950
    %v952 = vmul.f32 1.0, %v951
    %v953 = vtanh.pop %v946
    %v954 = vmul.f32 %v952, %v863
    %956 = vrot.lane.b32.xlu0 %v953, 64
    %v957 = vpop.permute.xlu0 %956
    %v959 = vmul.f32 %v952, %v957
    %961 = vrot.lane.b32.xlu0 %v959, 32
    %v962 = vpop.permute.xlu0 %961
    %v964 = vadd.f32 %v954, %v962
    %v965 = vtanh.pop %v964
    %967 = vrot.lane.b32.xlu0 %v965, 64
    %v968 = vpop.permute.xlu0 %967
    %v970 = vmul.f32 %v952, %v968
    %v971 = vld [vmem:[%s0 + $0x10] sm:$0xff]
    %v972 = vld [vmem:[%s0 + $0x18] sm:$0xff]
    %v973 = vld [vmem:[#allocation3 + $0x80] sm:$0xff]
    %v974 = vld [vmem:[#allocation3 + $0x88] sm:$0xff]
    %v975 = vld [vmem:[#allocation3 + $0x90] sm:$0xff]
    %v976 = vld [vmem:[#allocation3 + $0x98] sm:$0xff]
    %v977 = vld [vmem:[#allocation3 + $0xa0] sm:$0xff]
    %v978 = vld [vmem:[#allocation3 + $0xa8] sm:$0xff]
    %v979 = vld [vmem:[#allocation3 + $0xb0] sm:$0xff]
    %v980 = vld [vmem:[#allocation3 + $0xb8] sm:$0xff]
    %v981 = vld [vmem:[#allocation3 + $0xc0] sm:$0xff]
    %v982 = vld [vmem:[#allocation3 + $0xc8] sm:$0xff]
    %v983 = vld [vmem:[#allocation3 + $0xd0] sm:$0xff]
    %v984 = vld [vmem:[#allocation3 + $0xd8] sm:$0xff]
    %v985 = vld [vmem:[#allocation3 + $0xe0] sm:$0xff]
    %v986 = vld [vmem:[#allocation3 + $0xe8] sm:$0xff]
    %v987 = vld [vmem:[#allocation3 + $0xf0] sm:$0xff]
    %v988 = vld [vmem:[#allocation3 + $0xf8] sm:$0xff]
    %v989 = vld [vmem:[#allocation5 + $0x1] sm:$0x1]
    %v990 = vlaneseq
    %v991 = vshrl.u32 %v990, 7
    %v992 = vsub.s32 0, %v991
    %v993 = vrot.slane %v989, %v992
    %994 = vmatprep.subr.mxu0 0.0
    %995 = vmatpush1.msra.mxu0 %v973
    %996 = vmatprep.subr.mxu0 0.0
    %997 = vmatpush1.msra.mxu0 %v974
    %998 = vmatprep.subr.mxu0 0.0
    %999 = vmatpush1.msra.mxu0 %v975
    %1000 = vmatprep.subr.mxu0 0.0
    %1001 = vmatpush1.msra.mxu0 %v976
    %1002 = vmatprep.subr.mxu0 0.0
    %1003 = vmatpush1.msra.mxu0 %v977
    %1004 = vmatprep.subr.mxu0 0.0
    %1005 = vmatpush1.msra.mxu0 %v978
    %1006 = vmatprep.subr.mxu0 0.0
    %1007 = vmatpush1.msra.mxu0 %v979
    %1008 = vmatprep.subr.mxu0 0.0
    %1009 = vmatpush1.msra.mxu0 %v980
    %1010 = vmatprep.subr.mxu0 0.0
    %1011 = vmatpush1.msra.mxu0 %v981
    %1012 = vmatprep.subr.mxu0 0.0
    %1013 = vmatpush1.msra.mxu0 %v982
    %1014 = vmatprep.subr.mxu0 0.0
    %1015 = vmatpush1.msra.mxu0 %v983
    %1016 = vmatprep.subr.mxu0 0.0
    %1017 = vmatpush1.msra.mxu0 %v984
    %1018 = vmatprep.subr.mxu0 0.0
    %1019 = vmatpush1.msra.mxu0 %v985
    %1020 = vmatprep.subr.mxu0 0.0
    %1021 = vmatpush1.msra.mxu0 %v986
    %1022 = vmatprep.subr.mxu0 0.0
    %1023 = vmatpush1.msra.mxu0 %v987
    %1024 = vmatprep.subr.mxu0 0.0
    %1025 = vmatpush1.msra.mxu0 %v988
    %1026 = vmatprep.subr.mxu0 0.0
    %1027 = vmatpush1.msra.mxu0 0.0
    %1028 = vmatprep.subr.mxu0 0.0
    %1029 = vmatpush1.msra.mxu0 0.0
    %1030 = vmatprep.subr.mxu0 0.0
    %1031 = vmatpush1.msra.mxu0 0.0
    %1032 = vmatprep.subr.mxu0 0.0
    %1033 = vmatpush1.msra.mxu0 0.0
    %1034 = vmatprep.subr.mxu0 0.0
    %1035 = vmatpush1.msra.mxu0 0.0
    %1036 = vmatprep.subr.mxu0 0.0
    %1037 = vmatpush1.msra.mxu0 0.0
    %1038 = vmatprep.subr.mxu0 0.0
    %1039 = vmatpush1.msra.mxu0 0.0
    %1040 = vmatprep.subr.mxu0 0.0
    %1041 = vmatpush1.msra.mxu0 0.0
    %1042 = vmatprep.subr.mxu0 0.0
    %1043 = vmatpush1.msra.mxu0 0.0
    %1044 = vmatprep.subr.mxu0 0.0
    %1045 = vmatpush1.msra.mxu0 0.0
    %1046 = vmatprep.subr.mxu0 0.0
    %1047 = vmatpush1.msra.mxu0 0.0
    %1048 = vmatprep.subr.mxu0 0.0
    %1049 = vmatpush1.msra.mxu0 0.0
    %1050 = vmatprep.subr.mxu0 0.0
    %1051 = vmatpush1.msra.mxu0 0.0
    %1052 = vmatprep.subr.mxu0 0.0
    %1053 = vmatpush1.msra.mxu0 0.0
    %1054 = vmatprep.subr.mxu0 0.0
    %1055 = vmatpush1.msra.mxu0 0.0
    %1056 = vmatprep.subr.mxu0 0.0
    %1057 = vmatpush1.msra.mxu0 0.0
    %1058 = vmatprep.mubr.f32.mxu0 0.0
    %1059 = vmatmul.mubr.f32.gmra.mrb[0].mxu0 %v971
    %v1060 = vpop.f32.mrb[0].mxu0
    %v1061 = vadd.f32 %v993, %v1060
    %v1062 = vpop.f32.mrb[0].mxu0
    %1063 = vmatprep.mubr.f32.mxu0 0.0
    %1064 = vmatmul.mubr.f32.gmra.mrb[0].mxu0 %v972
    %v1065 = vpop.f32.mrb[0].mxu0
    %v1066 = vadd.f32 %v993, %v1065
    %v1067 = vpop.f32.mrb[0].mxu0
    %1068 = vdwg.mxu0
    %1069 = vst [vmem:[#allocation2 + $0x10] sm:$0xff] %v1061
    %1070 = vst [vmem:[#allocation2 + $0x18] sm:$0xff] %v1066
    %v1071 = vld [vmem:[%s2 + $0x20] sm:$0xff]
    %v1072 = vld [vmem:[%s2 + $0x28] sm:$0xff]
    %v1073 = vld [vmem:[%s2 + $0x30] sm:$0xff]
    %v1074 = vld [vmem:[%s2 + $0x38] sm:$0xff]
    %v1075 = vld [vmem:[#allocation2 + $0x10] sm:$0x3]
    %1076 = vmatprep.subr.mxu0 0.0
    %1077 = vmatpush1.msra.mxu0 %v1071
    %1078 = vmatprep.subr.mxu0 0.0
    %1079 = vmatpush1.msra.mxu0 %v1072
    %1080 = vmatprep.subr.mxu0 0.0
    %1081 = vmatpush1.msra.mxu0 %v1073
    %1082 = vmatprep.subr.mxu0 0.0
    %1083 = vmatpush1.msra.mxu0 %v1074
    %1084 = vmatprep.subr.mxu0 0.0
    %1085 = vmatpush1.msra.mxu0 0.0
    %1086 = vmatprep.subr.mxu0 0.0
    %1087 = vmatpush1.msra.mxu0 0.0
    %1088 = vmatprep.subr.mxu0 0.0
    %1089 = vmatpush1.msra.mxu0 0.0
    %1090 = vmatprep.subr.mxu0 0.0
    %1091 = vmatpush1.msra.mxu0 0.0
    %1092 = vmatprep.subr.mxu0 0.0
    %1093 = vmatpush1.msra.mxu0 0.0
    %1094 = vmatprep.subr.mxu0 0.0
    %1095 = vmatpush1.msra.mxu0 0.0
    %1096 = vmatprep.subr.mxu0 0.0
    %1097 = vmatpush1.msra.mxu0 0.0
    %1098 = vmatprep.subr.mxu0 0.0
    %1099 = vmatpush1.msra.mxu0 0.0
    %1100 = vmatprep.subr.mxu0 0.0
    %1101 = vmatpush1.msra.mxu0 0.0
    %1102 = vmatprep.subr.mxu0 0.0
    %1103 = vmatpush1.msra.mxu0 0.0
    %1104 = vmatprep.subr.mxu0 0.0
    %1105 = vmatpush1.msra.mxu0 0.0
    %1106 = vmatprep.subr.mxu0 0.0
    %1107 = vmatpush1.msra.mxu0 0.0
    %1108 = vmatprep.subr.mxu0 0.0
    %1109 = vmatpush1.msra.mxu0 0.0
    %1110 = vmatprep.subr.mxu0 0.0
    %1111 = vmatpush1.msra.mxu0 0.0
    %1112 = vmatprep.subr.mxu0 0.0
    %1113 = vmatpush1.msra.mxu0 0.0
    %1114 = vmatprep.subr.mxu0 0.0
    %1115 = vmatpush1.msra.mxu0 0.0
    %1116 = vmatprep.subr.mxu0 0.0
    %1117 = vmatpush1.msra.mxu0 0.0
    %1118 = vmatprep.subr.mxu0 0.0
    %1119 = vmatpush1.msra.mxu0 0.0
    %1120 = vmatprep.subr.mxu0 0.0
    %1121 = vmatpush1.msra.mxu0 0.0
    %1122 = vmatprep.subr.mxu0 0.0
    %1123 = vmatpush1.msra.mxu0 0.0
    %1124 = vmatprep.subr.mxu0 0.0
    %1125 = vmatpush1.msra.mxu0 0.0
    %1126 = vmatprep.subr.mxu0 0.0
    %1127 = vmatpush1.msra.mxu0 0.0
    %1128 = vmatprep.subr.mxu0 0.0
    %1129 = vmatpush1.msra.mxu0 0.0
    %1130 = vmatprep.subr.mxu0 0.0
    %1131 = vmatpush1.msra.mxu0 0.0
    %1132 = vmatprep.subr.mxu0 0.0
    %1133 = vmatpush1.msra.mxu0 0.0
    %1134 = vmatprep.subr.mxu0 0.0
    %1135 = vmatpush1.msra.mxu0 0.0
    %1136 = vmatprep.subr.mxu0 0.0
    %1137 = vmatpush1.msra.mxu0 0.0
    %1138 = vmatprep.subr.mxu0 0.0
    %1139 = vmatpush1.msra.mxu0 0.0
    %1140 = vmatprep.mubr.f32.mxu0 0.0
    %1141 = vmatmul.mubr.f32.gmra.mrb[0].mxu0 %v167
    %v1142 = vpop.f32.mrb[0].mxu0
    %v1143 = vadd.f32 0.0, %v1142
    %v1144 = vpop.f32.mrb[0].mxu0
    %1145 = vdwg.mxu0
    %v1146 = vadd.f32 %v1075, %v1143
    %v1147 = vxor.u32 %v1146, 2147483648
    %v1148 = vmul.f32 %v1147, 1.442695
    %v1149 = vpow.pop %v1148
    %v1150 = vadd.f32 %v1149, 1.0
    %v1151 = vrcp.pop %v1150
    %v1152 = vmul.f32 1.0, %v1151
    %v1153 = vtanh.pop %v1146
    %v1154 = vmul.f32 %v1152, 0.0
    %1156 = vrot.lane.b32.xlu0 %v1153, 64
    %v1157 = vpop.permute.xlu0 %1156
    %v1159 = vmul.f32 %v1152, %v1157
    %1161 = vrot.lane.b32.xlu0 %v1159, 32
    %v1162 = vpop.permute.xlu0 %1161
    %v1164 = vadd.f32 %v1154, %v1162
    %v1165 = vtanh.pop %v1164
    %1167 = vrot.lane.b32.xlu0 %v1165, 64
    %v1168 = vpop.permute.xlu0 %1167
    %v1170 = vmul.f32 %v1152, %v1168
    %v1171 = vld [vmem:[#allocation2 + $0x12] sm:$0x3]
    %1173 = vrot.lane.b32.xlu0 %v1170, 32
    %v1174 = vpop.permute.xlu0 %1173
    %v1175 = vsel %vm165, %v1174, 0
    %1177 = vmatprep.subr.mxu0 0.0
    %1178 = vmatpush1.msra.mxu0 %v1071
    %1179 = vmatprep.subr.mxu0 0.0
    %1180 = vmatpush1.msra.mxu0 %v1072
    %1181 = vmatprep.subr.mxu0 0.0
    %1182 = vmatpush1.msra.mxu0 %v1073
    %1183 = vmatprep.subr.mxu0 0.0
    %1184 = vmatpush1.msra.mxu0 %v1074
    %1185 = vmatprep.subr.mxu0 0.0
    %1186 = vmatpush1.msra.mxu0 0.0
    %1187 = vmatprep.subr.mxu0 0.0
    %1188 = vmatpush1.msra.mxu0 0.0
    %1189 = vmatprep.subr.mxu0 0.0
    %1190 = vmatpush1.msra.mxu0 0.0
    %1191 = vmatprep.subr.mxu0 0.0
    %1192 = vmatpush1.msra.mxu0 0.0
    %1193 = vmatprep.subr.mxu0 0.0
    %1194 = vmatpush1.msra.mxu0 0.0
    %1195 = vmatprep.subr.mxu0 0.0
    %1196 = vmatpush1.msra.mxu0 0.0
    %1197 = vmatprep.subr.mxu0 0.0
    %1198 = vmatpush1.msra.mxu0 0.0
    %1199 = vmatprep.subr.mxu0 0.0
    %1200 = vmatpush1.msra.mxu0 0.0
    %1201 = vmatprep.subr.mxu0 0.0
    %1202 = vmatpush1.msra.mxu0 0.0
    %1203 = vmatprep.subr.mxu0 0.0
    %1204 = vmatpush1.msra.mxu0 0.0
    %1205 = vmatprep.subr.mxu0 0.0
    %1206 = vmatpush1.msra.mxu0 0.0
    %1207 = vmatprep.subr.mxu0 0.0
    %1208 = vmatpush1.msra.mxu0 0.0
    %1209 = vmatprep.subr.mxu0 0.0
    %1210 = vmatpush1.msra.mxu0 0.0
    %1211 = vmatprep.subr.mxu0 0.0
    %1212 = vmatpush1.msra.mxu0 0.0
    %1213 = vmatprep.subr.mxu0 0.0
    %1214 = vmatpush1.msra.mxu0 0.0
    %1215 = vmatprep.subr.mxu0 0.0
    %1216 = vmatpush1.msra.mxu0 0.0
    %1217 = vmatprep.subr.mxu0 0.0
    %1218 = vmatpush1.msra.mxu0 0.0
    %1219 = vmatprep.subr.mxu0 0.0
    %1220 = vmatpush1.msra.mxu0 0.0
    %1221 = vmatprep.subr.mxu0 0.0
    %1222 = vmatpush1.msra.mxu0 0.0
    %1223 = vmatprep.subr.mxu0 0.0
    %1224 = vmatpush1.msra.mxu0 0.0
    %1225 = vmatprep.subr.mxu0 0.0
    %1226 = vmatpush1.msra.mxu0 0.0
    %1227 = vmatprep.subr.mxu0 0.0
    %1228 = vmatpush1.msra.mxu0 0.0
    %1229 = vmatprep.subr.mxu0 0.0
    %1230 = vmatpush1.msra.mxu0 0.0
    %1231 = vmatprep.subr.mxu0 0.0
    %1232 = vmatpush1.msra.mxu0 0.0
    %1233 = vmatprep.subr.mxu0 0.0
    %1234 = vmatpush1.msra.mxu0 0.0
    %1235 = vmatprep.subr.mxu0 0.0
    %1236 = vmatpush1.msra.mxu0 0.0
    %1237 = vmatprep.subr.mxu0 0.0
    %1238 = vmatpush1.msra.mxu0 0.0
    %1239 = vmatprep.subr.mxu0 0.0
    %1240 = vmatpush1.msra.mxu0 0.0
    %1241 = vmatprep.mubr.f32.mxu0 0.0
    %1242 = vmatmul.mubr.f32.gmra.mrb[0].mxu0 %v1175
    %v1243 = vpop.f32.mrb[0].mxu0
    %v1244 = vadd.f32 0.0, %v1243
    %v1245 = vpop.f32.mrb[0].mxu0
    %1246 = vdwg.mxu0
    %v1247 = vadd.f32 %v1171, %v1244
    %v1248 = vxor.u32 %v1247, 2147483648
    %v1249 = vmul.f32 %v1248, 1.442695
    %v1250 = vpow.pop %v1249
    %v1251 = vadd.f32 %v1250, 1.0
    %v1252 = vrcp.pop %v1251
    %v1253 = vmul.f32 1.0, %v1252
    %v1254 = vtanh.pop %v1247
    %v1255 = vmul.f32 %v1253, %v1164
    %1257 = vrot.lane.b32.xlu0 %v1254, 64
    %v1258 = vpop.permute.xlu0 %1257
    %v1260 = vmul.f32 %v1253, %v1258
    %1262 = vrot.lane.b32.xlu0 %v1260, 32
    %v1263 = vpop.permute.xlu0 %1262
    %v1265 = vadd.f32 %v1255, %v1263
    %v1266 = vtanh.pop %v1265
    %1268 = vrot.lane.b32.xlu0 %v1266, 64
    %v1269 = vpop.permute.xlu0 %1268
    %v1271 = vmul.f32 %v1253, %v1269
    %v1272 = vld [vmem:[#allocation2 + $0x14] sm:$0x3]
    %1274 = vrot.lane.b32.xlu0 %v1271, 32
    %v1275 = vpop.permute.xlu0 %1274
    %v1276 = vsel %vm165, %v1275, 0
    %1278 = vmatprep.subr.mxu0 0.0
    %1279 = vmatpush1.msra.mxu0 %v1071
    %1280 = vmatprep.subr.mxu0 0.0
    %1281 = vmatpush1.msra.mxu0 %v1072
    %1282 = vmatprep.subr.mxu0 0.0
    %1283 = vmatpush1.msra.mxu0 %v1073
    %1284 = vmatprep.subr.mxu0 0.0
    %1285 = vmatpush1.msra.mxu0 %v1074
    %1286 = vmatprep.subr.mxu0 0.0
    %1287 = vmatpush1.msra.mxu0 0.0
    %1288 = vmatprep.subr.mxu0 0.0
    %1289 = vmatpush1.msra.mxu0 0.0
    %1290 = vmatprep.subr.mxu0 0.0
    %1291 = vmatpush1.msra.mxu0 0.0
    %1292 = vmatprep.subr.mxu0 0.0
    %1293 = vmatpush1.msra.mxu0 0.0
    %1294 = vmatprep.subr.mxu0 0.0
    %1295 = vmatpush1.msra.mxu0 0.0
    %1296 = vmatprep.subr.mxu0 0.0
    %1297 = vmatpush1.msra.mxu0 0.0
    %1298 = vmatprep.subr.mxu0 0.0
    %1299 = vmatpush1.msra.mxu0 0.0
    %1300 = vmatprep.subr.mxu0 0.0
    %1301 = vmatpush1.msra.mxu0 0.0
    %1302 = vmatprep.subr.mxu0 0.0
    %1303 = vmatpush1.msra.mxu0 0.0
    %1304 = vmatprep.subr.mxu0 0.0
    %1305 = vmatpush1.msra.mxu0 0.0
    %1306 = vmatprep.subr.mxu0 0.0
    %1307 = vmatpush1.msra.mxu0 0.0
    %1308 = vmatprep.subr.mxu0 0.0
    %1309 = vmatpush1.msra.mxu0 0.0
    %1310 = vmatprep.subr.mxu0 0.0
    %1311 = vmatpush1.msra.mxu0 0.0
    %1312 = vmatprep.subr.mxu0 0.0
    %1313 = vmatpush1.msra.mxu0 0.0
    %1314 = vmatprep.subr.mxu0 0.0
    %1315 = vmatpush1.msra.mxu0 0.0
    %1316 = vmatprep.subr.mxu0 0.0
    %1317 = vmatpush1.msra.mxu0 0.0
    %1318 = vmatprep.subr.mxu0 0.0
    %1319 = vmatpush1.msra.mxu0 0.0
    %1320 = vmatprep.subr.mxu0 0.0
    %1321 = vmatpush1.msra.mxu0 0.0
    %1322 = vmatprep.subr.mxu0 0.0
    %1323 = vmatpush1.msra.mxu0 0.0
    %1324 = vmatprep.subr.mxu0 0.0
    %1325 = vmatpush1.msra.mxu0 0.0
    %1326 = vmatprep.subr.mxu0 0.0
    %1327 = vmatpush1.msra.mxu0 0.0
    %1328 = vmatprep.subr.mxu0 0.0
    %1329 = vmatpush1.msra.mxu0 0.0
    %1330 = vmatprep.subr.mxu0 0.0
    %1331 = vmatpush1.msra.mxu0 0.0
    %1332 = vmatprep.subr.mxu0 0.0
    %1333 = vmatpush1.msra.mxu0 0.0
    %1334 = vmatprep.subr.mxu0 0.0
    %1335 = vmatpush1.msra.mxu0 0.0
    %1336 = vmatprep.subr.mxu0 0.0
    %1337 = vmatpush1.msra.mxu0 0.0
    %1338 = vmatprep.subr.mxu0 0.0
    %1339 = vmatpush1.msra.mxu0 0.0
    %1340 = vmatprep.subr.mxu0 0.0
    %1341 = vmatpush1.msra.mxu0 0.0
    %1342 = vmatprep.mubr.f32.mxu0 0.0
    %1343 = vmatmul.mubr.f32.gmra.mrb[0].mxu0 %v1276
    %v1344 = vpop.f32.mrb[0].mxu0
    %v1345 = vadd.f32 0.0, %v1344
    %v1346 = vpop.f32.mrb[0].mxu0
    %1347 = vdwg.mxu0
    %v1348 = vadd.f32 %v1272, %v1345
    %v1349 = vxor.u32 %v1348, 2147483648
    %v1350 = vmul.f32 %v1349, 1.442695
    %v1351 = vpow.pop %v1350
    %v1352 = vadd.f32 %v1351, 1.0
    %v1353 = vrcp.pop %v1352
    %v1354 = vmul.f32 1.0, %v1353
    %v1355 = vtanh.pop %v1348
    %v1356 = vmul.f32 %v1354, %v1265
    %1358 = vrot.lane.b32.xlu0 %v1355, 64
    %v1359 = vpop.permute.xlu0 %1358
    %v1361 = vmul.f32 %v1354, %v1359
    %1363 = vrot.lane.b32.xlu0 %v1361, 32
    %v1364 = vpop.permute.xlu0 %1363
    %v1366 = vadd.f32 %v1356, %v1364
    %v1367 = vtanh.pop %v1366
    %1369 = vrot.lane.b32.xlu0 %v1367, 64
    %v1370 = vpop.permute.xlu0 %1369
    %v1372 = vmul.f32 %v1354, %v1370
    %v1373 = vld [vmem:[#allocation2 + $0x16] sm:$0x3]
    %1375 = vrot.lane.b32.xlu0 %v1372, 32
    %v1376 = vpop.permute.xlu0 %1375
    %v1377 = vsel %vm165, %v1376, 0
    %1379 = vmatprep.subr.mxu0 0.0
    %1380 = vmatpush1.msra.mxu0 %v1071
    %1381 = vmatprep.subr.mxu0 0.0
    %1382 = vmatpush1.msra.mxu0 %v1072
    %1383 = vmatprep.subr.mxu0 0.0
    %1384 = vmatpush1.msra.mxu0 %v1073
    %1385 = vmatprep.subr.mxu0 0.0
    %1386 = vmatpush1.msra.mxu0 %v1074
    %1387 = vmatprep.subr.mxu0 0.0
    %1388 = vmatpush1.msra.mxu0 0.0
    %1389 = vmatprep.subr.mxu0 0.0
    %1390 = vmatpush1.msra.mxu0 0.0
    %1391 = vmatprep.subr.mxu0 0.0
    %1392 = vmatpush1.msra.mxu0 0.0
    %1393 = vmatprep.subr.mxu0 0.0
    %1394 = vmatpush1.msra.mxu0 0.0
    %1395 = vmatprep.subr.mxu0 0.0
    %1396 = vmatpush1.msra.mxu0 0.0
    %1397 = vmatprep.subr.mxu0 0.0
    %1398 = vmatpush1.msra.mxu0 0.0
    %1399 = vmatprep.subr.mxu0 0.0
    %1400 = vmatpush1.msra.mxu0 0.0
    %1401 = vmatprep.subr.mxu0 0.0
    %1402 = vmatpush1.msra.mxu0 0.0
    %1403 = vmatprep.subr.mxu0 0.0
    %1404 = vmatpush1.msra.mxu0 0.0
    %1405 = vmatprep.subr.mxu0 0.0
    %1406 = vmatpush1.msra.mxu0 0.0
    %1407 = vmatprep.subr.mxu0 0.0
    %1408 = vmatpush1.msra.mxu0 0.0
    %1409 = vmatprep.subr.mxu0 0.0
    %1410 = vmatpush1.msra.mxu0 0.0
    %1411 = vmatprep.subr.mxu0 0.0
    %1412 = vmatpush1.msra.mxu0 0.0
    %1413 = vmatprep.subr.mxu0 0.0
    %1414 = vmatpush1.msra.mxu0 0.0
    %1415 = vmatprep.subr.mxu0 0.0
    %1416 = vmatpush1.msra.mxu0 0.0
    %1417 = vmatprep.subr.mxu0 0.0
    %1418 = vmatpush1.msra.mxu0 0.0
    %1419 = vmatprep.subr.mxu0 0.0
    %1420 = vmatpush1.msra.mxu0 0.0
    %1421 = vmatprep.subr.mxu0 0.0
    %1422 = vmatpush1.msra.mxu0 0.0
    %1423 = vmatprep.subr.mxu0 0.0
    %1424 = vmatpush1.msra.mxu0 0.0
    %1425 = vmatprep.subr.mxu0 0.0
    %1426 = vmatpush1.msra.mxu0 0.0
    %1427 = vmatprep.subr.mxu0 0.0
    %1428 = vmatpush1.msra.mxu0 0.0
    %1429 = vmatprep.subr.mxu0 0.0
    %1430 = vmatpush1.msra.mxu0 0.0
    %1431 = vmatprep.subr.mxu0 0.0
    %1432 = vmatpush1.msra.mxu0 0.0
    %1433 = vmatprep.subr.mxu0 0.0
    %1434 = vmatpush1.msra.mxu0 0.0
    %1435 = vmatprep.subr.mxu0 0.0
    %1436 = vmatpush1.msra.mxu0 0.0
    %1437 = vmatprep.subr.mxu0 0.0
    %1438 = vmatpush1.msra.mxu0 0.0
    %1439 = vmatprep.subr.mxu0 0.0
    %1440 = vmatpush1.msra.mxu0 0.0
    %1441 = vmatprep.subr.mxu0 0.0
    %1442 = vmatpush1.msra.mxu0 0.0
    %1443 = vmatprep.mubr.f32.mxu0 0.0
    %1444 = vmatmul.mubr.f32.gmra.mrb[0].mxu0 %v1377
    %v1445 = vpop.f32.mrb[0].mxu0
    %v1446 = vadd.f32 0.0, %v1445
    %v1447 = vpop.f32.mrb[0].mxu0
    %1448 = vdwg.mxu0
    %v1449 = vadd.f32 %v1373, %v1446
    %v1450 = vxor.u32 %v1449, 2147483648
    %v1451 = vmul.f32 %v1450, 1.442695
    %v1452 = vpow.pop %v1451
    %v1453 = vadd.f32 %v1452, 1.0
    %v1454 = vrcp.pop %v1453
    %v1455 = vmul.f32 1.0, %v1454
    %v1456 = vtanh.pop %v1449
    %v1457 = vmul.f32 %v1455, %v1366
    %1459 = vrot.lane.b32.xlu0 %v1456, 64
    %v1460 = vpop.permute.xlu0 %1459
    %v1462 = vmul.f32 %v1455, %v1460
    %1464 = vrot.lane.b32.xlu0 %v1462, 32
    %v1465 = vpop.permute.xlu0 %1464
    %v1467 = vadd.f32 %v1457, %v1465
    %v1468 = vtanh.pop %v1467
    %1470 = vrot.lane.b32.xlu0 %v1468, 64
    %v1471 = vpop.permute.xlu0 %1470
    %v1473 = vmul.f32 %v1455, %v1471
    %v1474 = vld [vmem:[#allocation2 + $0x18] sm:$0x3]
    %1476 = vrot.lane.b32.xlu0 %v1473, 32
    %v1477 = vpop.permute.xlu0 %1476
    %v1478 = vsel %vm165, %v1477, 0
    %1480 = vmatprep.subr.mxu0 0.0
    %1481 = vmatpush1.msra.mxu0 %v1071
    %1482 = vmatprep.subr.mxu0 0.0
    %1483 = vmatpush1.msra.mxu0 %v1072
    %1484 = vmatprep.subr.mxu0 0.0
    %1485 = vmatpush1.msra.mxu0 %v1073
    %1486 = vmatprep.subr.mxu0 0.0
    %1487 = vmatpush1.msra.mxu0 %v1074
    %1488 = vmatprep.subr.mxu0 0.0
    %1489 = vmatpush1.msra.mxu0 0.0
    %1490 = vmatprep.subr.mxu0 0.0
    %1491 = vmatpush1.msra.mxu0 0.0
    %1492 = vmatprep.subr.mxu0 0.0
    %1493 = vmatpush1.msra.mxu0 0.0
    %1494 = vmatprep.subr.mxu0 0.0
    %1495 = vmatpush1.msra.mxu0 0.0
    %1496 = vmatprep.subr.mxu0 0.0
    %1497 = vmatpush1.msra.mxu0 0.0
    %1498 = vmatprep.subr.mxu0 0.0
    %1499 = vmatpush1.msra.mxu0 0.0
    %1500 = vmatprep.subr.mxu0 0.0
    %1501 = vmatpush1.msra.mxu0 0.0
    %1502 = vmatprep.subr.mxu0 0.0
    %1503 = vmatpush1.msra.mxu0 0.0
    %1504 = vmatprep.subr.mxu0 0.0
    %1505 = vmatpush1.msra.mxu0 0.0
    %1506 = vmatprep.subr.mxu0 0.0
    %1507 = vmatpush1.msra.mxu0 0.0
    %1508 = vmatprep.subr.mxu0 0.0
    %1509 = vmatpush1.msra.mxu0 0.0
    %1510 = vmatprep.subr.mxu0 0.0
    %1511 = vmatpush1.msra.mxu0 0.0
    %1512 = vmatprep.subr.mxu0 0.0
    %1513 = vmatpush1.msra.mxu0 0.0
    %1514 = vmatprep.subr.mxu0 0.0
    %1515 = vmatpush1.msra.mxu0 0.0
    %1516 = vmatprep.subr.mxu0 0.0
    %1517 = vmatpush1.msra.mxu0 0.0
    %1518 = vmatprep.subr.mxu0 0.0
    %1519 = vmatpush1.msra.mxu0 0.0
    %1520 = vmatprep.subr.mxu0 0.0
    %1521 = vmatpush1.msra.mxu0 0.0
    %1522 = vmatprep.subr.mxu0 0.0
    %1523 = vmatpush1.msra.mxu0 0.0
    %1524 = vmatprep.subr.mxu0 0.0
    %1525 = vmatpush1.msra.mxu0 0.0
    %1526 = vmatprep.subr.mxu0 0.0
    %1527 = vmatpush1.msra.mxu0 0.0
    %1528 = vmatprep.subr.mxu0 0.0
    %1529 = vmatpush1.msra.mxu0 0.0
    %1530 = vmatprep.subr.mxu0 0.0
    %1531 = vmatpush1.msra.mxu0 0.0
    %1532 = vmatprep.subr.mxu0 0.0
    %1533 = vmatpush1.msra.mxu0 0.0
    %1534 = vmatprep.subr.mxu0 0.0
    %1535 = vmatpush1.msra.mxu0 0.0
    %1536 = vmatprep.subr.mxu0 0.0
    %1537 = vmatpush1.msra.mxu0 0.0
    %1538 = vmatprep.subr.mxu0 0.0
    %1539 = vmatpush1.msra.mxu0 0.0
    %1540 = vmatprep.subr.mxu0 0.0
    %1541 = vmatpush1.msra.mxu0 0.0
    %1542 = vmatprep.subr.mxu0 0.0
    %1543 = vmatpush1.msra.mxu0 0.0
    %1544 = vmatprep.mubr.f32.mxu0 0.0
    %1545 = vmatmul.mubr.f32.gmra.mrb[0].mxu0 %v1478
    %v1546 = vpop.f32.mrb[0].mxu0
    %v1547 = vadd.f32 0.0, %v1546
    %v1548 = vpop.f32.mrb[0].mxu0
    %1549 = vdwg.mxu0
    %v1550 = vadd.f32 %v1474, %v1547
    %v1551 = vxor.u32 %v1550, 2147483648
    %v1552 = vmul.f32 %v1551, 1.442695
    %v1553 = vpow.pop %v1552
    %v1554 = vadd.f32 %v1553, 1.0
    %v1555 = vrcp.pop %v1554
    %v1556 = vmul.f32 1.0, %v1555
    %v1557 = vtanh.pop %v1550
    %v1558 = vmul.f32 %v1556, %v1467
    %1560 = vrot.lane.b32.xlu0 %v1557, 64
    %v1561 = vpop.permute.xlu0 %1560
    %v1563 = vmul.f32 %v1556, %v1561
    %1565 = vrot.lane.b32.xlu0 %v1563, 32
    %v1566 = vpop.permute.xlu0 %1565
    %v1568 = vadd.f32 %v1558, %v1566
    %v1569 = vtanh.pop %v1568
    %1571 = vrot.lane.b32.xlu0 %v1569, 64
    %v1572 = vpop.permute.xlu0 %1571
    %v1574 = vmul.f32 %v1556, %v1572
    %v1575 = vld [vmem:[#allocation2 + $0x1a] sm:$0x3]
    %1577 = vrot.lane.b32.xlu0 %v1574, 32
    %v1578 = vpop.permute.xlu0 %1577
    %v1579 = vsel %vm165, %v1578, 0
    %1581 = vmatprep.subr.mxu0 0.0
    %1582 = vmatpush1.msra.mxu0 %v1071
    %1583 = vmatprep.subr.mxu0 0.0
    %1584 = vmatpush1.msra.mxu0 %v1072
    %1585 = vmatprep.subr.mxu0 0.0
    %1586 = vmatpush1.msra.mxu0 %v1073
    %1587 = vmatprep.subr.mxu0 0.0
    %1588 = vmatpush1.msra.mxu0 %v1074
    %1589 = vmatprep.subr.mxu0 0.0
    %1590 = vmatpush1.msra.mxu0 0.0
    %1591 = vmatprep.subr.mxu0 0.0
    %1592 = vmatpush1.msra.mxu0 0.0
    %1593 = vmatprep.subr.mxu0 0.0
    %1594 = vmatpush1.msra.mxu0 0.0
    %1595 = vmatprep.subr.mxu0 0.0
    %1596 = vmatpush1.msra.mxu0 0.0
    %1597 = vmatprep.subr.mxu0 0.0
    %1598 = vmatpush1.msra.mxu0 0.0
    %1599 = vmatprep.subr.mxu0 0.0
    %1600 = vmatpush1.msra.mxu0 0.0
    %1601 = vmatprep.subr.mxu0 0.0
    %1602 = vmatpush1.msra.mxu0 0.0
    %1603 = vmatprep.subr.mxu0 0.0
    %1604 = vmatpush1.msra.mxu0 0.0
    %1605 = vmatprep.subr.mxu0 0.0
    %1606 = vmatpush1.msra.mxu0 0.0
    %1607 = vmatprep.subr.mxu0 0.0
    %1608 = vmatpush1.msra.mxu0 0.0
    %1609 = vmatprep.subr.mxu0 0.0
    %1610 = vmatpush1.msra.mxu0 0.0
    %1611 = vmatprep.subr.mxu0 0.0
    %1612 = vmatpush1.msra.mxu0 0.0
    %1613 = vmatprep.subr.mxu0 0.0
    %1614 = vmatpush1.msra.mxu0 0.0
    %1615 = vmatprep.subr.mxu0 0.0
    %1616 = vmatpush1.msra.mxu0 0.0
    %1617 = vmatprep.subr.mxu0 0.0
    %1618 = vmatpush1.msra.mxu0 0.0
    %1619 = vmatprep.subr.mxu0 0.0
    %1620 = vmatpush1.msra.mxu0 0.0
    %1621 = vmatprep.subr.mxu0 0.0
    %1622 = vmatpush1.msra.mxu0 0.0
    %1623 = vmatprep.subr.mxu0 0.0
    %1624 = vmatpush1.msra.mxu0 0.0
    %1625 = vmatprep.subr.mxu0 0.0
    %1626 = vmatpush1.msra.mxu0 0.0
    %1627 = vmatprep.subr.mxu0 0.0
    %1628 = vmatpush1.msra.mxu0 0.0
    %1629 = vmatprep.subr.mxu0 0.0
    %1630 = vmatpush1.msra.mxu0 0.0
    %1631 = vmatprep.subr.mxu0 0.0
    %1632 = vmatpush1.msra.mxu0 0.0
    %1633 = vmatprep.subr.mxu0 0.0
    %1634 = vmatpush1.msra.mxu0 0.0
    %1635 = vmatprep.subr.mxu0 0.0
    %1636 = vmatpush1.msra.mxu0 0.0
    %1637 = vmatprep.subr.mxu0 0.0
    %1638 = vmatpush1.msra.mxu0 0.0
    %1639 = vmatprep.subr.mxu0 0.0
    %1640 = vmatpush1.msra.mxu0 0.0
    %1641 = vmatprep.subr.mxu0 0.0
    %1642 = vmatpush1.msra.mxu0 0.0
    %1643 = vmatprep.subr.mxu0 0.0
    %1644 = vmatpush1.msra.mxu0 0.0
    %1645 = vmatprep.mubr.f32.mxu0 0.0
    %1646 = vmatmul.mubr.f32.gmra.mrb[0].mxu0 %v1579
    %v1647 = vpop.f32.mrb[0].mxu0
    %v1648 = vadd.f32 0.0, %v1647
    %v1649 = vpop.f32.mrb[0].mxu0
    %1650 = vdwg.mxu0
    %v1651 = vadd.f32 %v1575, %v1648
    %v1652 = vxor.u32 %v1651, 2147483648
    %v1653 = vmul.f32 %v1652, 1.442695
    %v1654 = vpow.pop %v1653
    %v1655 = vadd.f32 %v1654, 1.0
    %v1656 = vrcp.pop %v1655
    %v1657 = vmul.f32 1.0, %v1656
    %v1658 = vtanh.pop %v1651
    %v1659 = vmul.f32 %v1657, %v1568
    %1661 = vrot.lane.b32.xlu0 %v1658, 64
    %v1662 = vpop.permute.xlu0 %1661
    %v1664 = vmul.f32 %v1657, %v1662
    %1666 = vrot.lane.b32.xlu0 %v1664, 32
    %v1667 = vpop.permute.xlu0 %1666
    %v1669 = vadd.f32 %v1659, %v1667
    %v1670 = vtanh.pop %v1669
    %1672 = vrot.lane.b32.xlu0 %v1670, 64
    %v1673 = vpop.permute.xlu0 %1672
    %v1675 = vmul.f32 %v1657, %v1673
    %v1676 = vld [vmem:[#allocation2 + $0x1c] sm:$0x3]
    %1678 = vrot.lane.b32.xlu0 %v1675, 32
    %v1679 = vpop.permute.xlu0 %1678
    %v1680 = vsel %vm165, %v1679, 0
    %1682 = vmatprep.subr.mxu0 0.0
    %1683 = vmatpush1.msra.mxu0 %v1071
    %1684 = vmatprep.subr.mxu0 0.0
    %1685 = vmatpush1.msra.mxu0 %v1072
    %1686 = vmatprep.subr.mxu0 0.0
    %1687 = vmatpush1.msra.mxu0 %v1073
    %1688 = vmatprep.subr.mxu0 0.0
    %1689 = vmatpush1.msra.mxu0 %v1074
    %1690 = vmatprep.subr.mxu0 0.0
    %1691 = vmatpush1.msra.mxu0 0.0
    %1692 = vmatprep.subr.mxu0 0.0
    %1693 = vmatpush1.msra.mxu0 0.0
    %1694 = vmatprep.subr.mxu0 0.0
    %1695 = vmatpush1.msra.mxu0 0.0
    %1696 = vmatprep.subr.mxu0 0.0
    %1697 = vmatpush1.msra.mxu0 0.0
    %1698 = vmatprep.subr.mxu0 0.0
    %1699 = vmatpush1.msra.mxu0 0.0
    %1700 = vmatprep.subr.mxu0 0.0
    %1701 = vmatpush1.msra.mxu0 0.0
    %1702 = vmatprep.subr.mxu0 0.0
    %1703 = vmatpush1.msra.mxu0 0.0
    %1704 = vmatprep.subr.mxu0 0.0
    %1705 = vmatpush1.msra.mxu0 0.0
    %1706 = vmatprep.subr.mxu0 0.0
    %1707 = vmatpush1.msra.mxu0 0.0
    %1708 = vmatprep.subr.mxu0 0.0
    %1709 = vmatpush1.msra.mxu0 0.0
    %1710 = vmatprep.subr.mxu0 0.0
    %1711 = vmatpush1.msra.mxu0 0.0
    %1712 = vmatprep.subr.mxu0 0.0
    %1713 = vmatpush1.msra.mxu0 0.0
    %1714 = vmatprep.subr.mxu0 0.0
    %1715 = vmatpush1.msra.mxu0 0.0
    %1716 = vmatprep.subr.mxu0 0.0
    %1717 = vmatpush1.msra.mxu0 0.0
    %1718 = vmatprep.subr.mxu0 0.0
    %1719 = vmatpush1.msra.mxu0 0.0
    %1720 = vmatprep.subr.mxu0 0.0
    %1721 = vmatpush1.msra.mxu0 0.0
    %1722 = vmatprep.subr.mxu0 0.0
    %1723 = vmatpush1.msra.mxu0 0.0
    %1724 = vmatprep.subr.mxu0 0.0
    %1725 = vmatpush1.msra.mxu0 0.0
    %1726 = vmatprep.subr.mxu0 0.0
    %1727 = vmatpush1.msra.mxu0 0.0
    %1728 = vmatprep.subr.mxu0 0.0
    %1729 = vmatpush1.msra.mxu0 0.0
    %1730 = vmatprep.subr.mxu0 0.0
    %1731 = vmatpush1.msra.mxu0 0.0
    %1732 = vmatprep.subr.mxu0 0.0
    %1733 = vmatpush1.msra.mxu0 0.0
    %1734 = vmatprep.subr.mxu0 0.0
    %1735 = vmatpush1.msra.mxu0 0.0
    %1736 = vmatprep.subr.mxu0 0.0
    %1737 = vmatpush1.msra.mxu0 0.0
    %1738 = vmatprep.subr.mxu0 0.0
    %1739 = vmatpush1.msra.mxu0 0.0
    %1740 = vmatprep.subr.mxu0 0.0
    %1741 = vmatpush1.msra.mxu0 0.0
    %1742 = vmatprep.subr.mxu0 0.0
    %1743 = vmatpush1.msra.mxu0 0.0
    %1744 = vmatprep.subr.mxu0 0.0
    %1745 = vmatpush1.msra.mxu0 0.0
    %1746 = vmatprep.mubr.f32.mxu0 0.0
    %1747 = vmatmul.mubr.f32.gmra.mrb[0].mxu0 %v1680
    %v1748 = vpop.f32.mrb[0].mxu0
    %v1749 = vadd.f32 0.0, %v1748
    %v1750 = vpop.f32.mrb[0].mxu0
    %1751 = vdwg.mxu0
    %v1752 = vadd.f32 %v1676, %v1749
    %v1753 = vxor.u32 %v1752, 2147483648
    %v1754 = vmul.f32 %v1753, 1.442695
    %v1755 = vpow.pop %v1754
    %v1756 = vadd.f32 %v1755, 1.0
    %v1757 = vrcp.pop %v1756
    %v1758 = vmul.f32 1.0, %v1757
    %v1759 = vtanh.pop %v1752
    %v1760 = vmul.f32 %v1758, %v1669
    %1762 = vrot.lane.b32.xlu0 %v1759, 64
    %v1763 = vpop.permute.xlu0 %1762
    %v1765 = vmul.f32 %v1758, %v1763
    %1767 = vrot.lane.b32.xlu0 %v1765, 32
    %v1768 = vpop.permute.xlu0 %1767
    %v1770 = vadd.f32 %v1760, %v1768
    %v1771 = vtanh.pop %v1770
    %1773 = vrot.lane.b32.xlu0 %v1771, 64
    %v1774 = vpop.permute.xlu0 %1773
    %v1776 = vmul.f32 %v1758, %v1774
    %v1777 = vld [vmem:[#allocation2 + $0x1e] sm:$0x3]
    %1779 = vrot.lane.b32.xlu0 %v1776, 32
    %v1780 = vpop.permute.xlu0 %1779
    %v1781 = vsel %vm165, %v1780, 0
    %1783 = vmatprep.subr.mxu0 0.0
    %1784 = vmatpush1.msra.mxu0 %v1071
    %1785 = vmatprep.subr.mxu0 0.0
    %1786 = vmatpush1.msra.mxu0 %v1072
    %1787 = vmatprep.subr.mxu0 0.0
    %1788 = vmatpush1.msra.mxu0 %v1073
    %1789 = vmatprep.subr.mxu0 0.0
    %1790 = vmatpush1.msra.mxu0 %v1074
    %1791 = vmatprep.subr.mxu0 0.0
    %1792 = vmatpush1.msra.mxu0 0.0
    %1793 = vmatprep.subr.mxu0 0.0
    %1794 = vmatpush1.msra.mxu0 0.0
    %1795 = vmatprep.subr.mxu0 0.0
    %1796 = vmatpush1.msra.mxu0 0.0
    %1797 = vmatprep.subr.mxu0 0.0
    %1798 = vmatpush1.msra.mxu0 0.0
    %1799 = vmatprep.subr.mxu0 0.0
    %1800 = vmatpush1.msra.mxu0 0.0
    %1801 = vmatprep.subr.mxu0 0.0
    %1802 = vmatpush1.msra.mxu0 0.0
    %1803 = vmatprep.subr.mxu0 0.0
    %1804 = vmatpush1.msra.mxu0 0.0
    %1805 = vmatprep.subr.mxu0 0.0
    %1806 = vmatpush1.msra.mxu0 0.0
    %1807 = vmatprep.subr.mxu0 0.0
    %1808 = vmatpush1.msra.mxu0 0.0
    %1809 = vmatprep.subr.mxu0 0.0
    %1810 = vmatpush1.msra.mxu0 0.0
    %1811 = vmatprep.subr.mxu0 0.0
    %1812 = vmatpush1.msra.mxu0 0.0
    %1813 = vmatprep.subr.mxu0 0.0
    %1814 = vmatpush1.msra.mxu0 0.0
    %1815 = vmatprep.subr.mxu0 0.0
    %1816 = vmatpush1.msra.mxu0 0.0
    %1817 = vmatprep.subr.mxu0 0.0
    %1818 = vmatpush1.msra.mxu0 0.0
    %1819 = vmatprep.subr.mxu0 0.0
    %1820 = vmatpush1.msra.mxu0 0.0
    %1821 = vmatprep.subr.mxu0 0.0
    %1822 = vmatpush1.msra.mxu0 0.0
    %1823 = vmatprep.subr.mxu0 0.0
    %1824 = vmatpush1.msra.mxu0 0.0
    %1825 = vmatprep.subr.mxu0 0.0
    %1826 = vmatpush1.msra.mxu0 0.0
    %1827 = vmatprep.subr.mxu0 0.0
    %1828 = vmatpush1.msra.mxu0 0.0
    %1829 = vmatprep.subr.mxu0 0.0
    %1830 = vmatpush1.msra.mxu0 0.0
    %1831 = vmatprep.subr.mxu0 0.0
    %1832 = vmatpush1.msra.mxu0 0.0
    %1833 = vmatprep.subr.mxu0 0.0
    %1834 = vmatpush1.msra.mxu0 0.0
    %1835 = vmatprep.subr.mxu0 0.0
    %1836 = vmatpush1.msra.mxu0 0.0
    %1837 = vmatprep.subr.mxu0 0.0
    %1838 = vmatpush1.msra.mxu0 0.0
    %1839 = vmatprep.subr.mxu0 0.0
    %1840 = vmatpush1.msra.mxu0 0.0
    %1841 = vmatprep.subr.mxu0 0.0
    %1842 = vmatpush1.msra.mxu0 0.0
    %1843 = vmatprep.subr.mxu0 0.0
    %1844 = vmatpush1.msra.mxu0 0.0
    %1845 = vmatprep.subr.mxu0 0.0
    %1846 = vmatpush1.msra.mxu0 0.0
    %1847 = vmatprep.mubr.f32.mxu0 0.0
    %1848 = vmatmul.mubr.f32.gmra.mrb[0].mxu0 %v1781
    %v1849 = vpop.f32.mrb[0].mxu0
    %v1850 = vadd.f32 0.0, %v1849
    %v1851 = vpop.f32.mrb[0].mxu0
    %1852 = vdwg.mxu0
    %v1853 = vadd.f32 %v1777, %v1850
    %v1854 = vxor.u32 %v1853, 2147483648
    %v1855 = vmul.f32 %v1854, 1.442695
    %v1856 = vpow.pop %v1855
    %v1857 = vadd.f32 %v1856, 1.0
    %v1858 = vrcp.pop %v1857
    %v1859 = vmul.f32 1.0, %v1858
    %v1860 = vtanh.pop %v1853
    %v1861 = vmul.f32 %v1859, %v1770
    %1863 = vrot.lane.b32.xlu0 %v1860, 64
    %v1864 = vpop.permute.xlu0 %1863
    %v1866 = vmul.f32 %v1859, %v1864
    %1868 = vrot.lane.b32.xlu0 %v1866, 32
    %v1869 = vpop.permute.xlu0 %1868
    %v1871 = vadd.f32 %v1861, %v1869
    %v1872 = vtanh.pop %v1871
    %1874 = vrot.lane.b32.xlu0 %v1872, 64
    %v1875 = vpop.permute.xlu0 %1874
    %v1877 = vmul.f32 %v1859, %v1875
    %v1878 = vld [vmem:[%s0 + $0x20] sm:$0xff]
    %v1879 = vld [vmem:[%s0 + $0x28] sm:$0xff]
    %v1880 = vld [vmem:[#allocation3 + $0x100] sm:$0xff]
    %v1881 = vld [vmem:[#allocation3 + $0x108] sm:$0xff]
    %v1882 = vld [vmem:[#allocation3 + $0x110] sm:$0xff]
    %v1883 = vld [vmem:[#allocation3 + $0x118] sm:$0xff]
    %v1884 = vld [vmem:[#allocation3 + $0x120] sm:$0xff]
    %v1885 = vld [vmem:[#allocation3 + $0x128] sm:$0xff]
    %v1886 = vld [vmem:[#allocation3 + $0x130] sm:$0xff]
    %v1887 = vld [vmem:[#allocation3 + $0x138] sm:$0xff]
    %v1888 = vld [vmem:[#allocation3 + $0x140] sm:$0xff]
    %v1889 = vld [vmem:[#allocation3 + $0x148] sm:$0xff]
    %v1890 = vld [vmem:[#allocation3 + $0x150] sm:$0xff]
    %v1891 = vld [vmem:[#allocation3 + $0x158] sm:$0xff]
    %v1892 = vld [vmem:[#allocation3 + $0x160] sm:$0xff]
    %v1893 = vld [vmem:[#allocation3 + $0x168] sm:$0xff]
    %v1894 = vld [vmem:[#allocation3 + $0x170] sm:$0xff]
    %v1895 = vld [vmem:[#allocation3 + $0x178] sm:$0xff]
    %v1896 = vld [vmem:[#allocation5 + $0x2] sm:$0x1]
    %v1897 = vlaneseq
    %v1898 = vshrl.u32 %v1897, 7
    %v1899 = vsub.s32 0, %v1898
    %v1900 = vrot.slane %v1896, %v1899
    %1901 = vmatprep.subr.mxu0 0.0
    %1902 = vmatpush1.msra.mxu0 %v1880
    %1903 = vmatprep.subr.mxu0 0.0
    %1904 = vmatpush1.msra.mxu0 %v1881
    %1905 = vmatprep.subr.mxu0 0.0
    %1906 = vmatpush1.msra.mxu0 %v1882
    %1907 = vmatprep.subr.mxu0 0.0
    %1908 = vmatpush1.msra.mxu0 %v1883
    %1909 = vmatprep.subr.mxu0 0.0
    %1910 = vmatpush1.msra.mxu0 %v1884
    %1911 = vmatprep.subr.mxu0 0.0
    %1912 = vmatpush1.msra.mxu0 %v1885
    %1913 = vmatprep.subr.mxu0 0.0
    %1914 = vmatpush1.msra.mxu0 %v1886
    %1915 = vmatprep.subr.mxu0 0.0
    %1916 = vmatpush1.msra.mxu0 %v1887
    %1917 = vmatprep.subr.mxu0 0.0
    %1918 = vmatpush1.msra.mxu0 %v1888
    %1919 = vmatprep.subr.mxu0 0.0
    %1920 = vmatpush1.msra.mxu0 %v1889
    %1921 = vmatprep.subr.mxu0 0.0
    %1922 = vmatpush1.msra.mxu0 %v1890
    %1923 = vmatprep.subr.mxu0 0.0
    %1924 = vmatpush1.msra.mxu0 %v1891
    %1925 = vmatprep.subr.mxu0 0.0
    %1926 = vmatpush1.msra.mxu0 %v1892
    %1927 = vmatprep.subr.mxu0 0.0
    %1928 = vmatpush1.msra.mxu0 %v1893
    %1929 = vmatprep.subr.mxu0 0.0
    %1930 = vmatpush1.msra.mxu0 %v1894
    %1931 = vmatprep.subr.mxu0 0.0
    %1932 = vmatpush1.msra.mxu0 %v1895
    %1933 = vmatprep.subr.mxu0 0.0
    %1934 = vmatpush1.msra.mxu0 0.0
    %1935 = vmatprep.subr.mxu0 0.0
    %1936 = vmatpush1.msra.mxu0 0.0
    %1937 = vmatprep.subr.mxu0 0.0
    %1938 = vmatpush1.msra.mxu0 0.0
    %1939 = vmatprep.subr.mxu0 0.0
    %1940 = vmatpush1.msra.mxu0 0.0
    %1941 = vmatprep.subr.mxu0 0.0
    %1942 = vmatpush1.msra.mxu0 0.0
    %1943 = vmatprep.subr.mxu0 0.0
    %1944 = vmatpush1.msra.mxu0 0.0
    %1945 = vmatprep.subr.mxu0 0.0
    %1946 = vmatpush1.msra.mxu0 0.0
    %1947 = vmatprep.subr.mxu0 0.0
    %1948 = vmatpush1.msra.mxu0 0.0
    %1949 = vmatprep.subr.mxu0 0.0
    %1950 = vmatpush1.msra.mxu0 0.0
    %1951 = vmatprep.subr.mxu0 0.0
    %1952 = vmatpush1.msra.mxu0 0.0
    %1953 = vmatprep.subr.mxu0 0.0
    %1954 = vmatpush1.msra.mxu0 0.0
    %1955 = vmatprep.subr.mxu0 0.0
    %1956 = vmatpush1.msra.mxu0 0.0
    %1957 = vmatprep.subr.mxu0 0.0
    %1958 = vmatpush1.msra.mxu0 0.0
    %1959 = vmatprep.subr.mxu0 0.0
    %1960 = vmatpush1.msra.mxu0 0.0
    %1961 = vmatprep.subr.mxu0 0.0
    %1962 = vmatpush1.msra.mxu0 0.0
    %1963 = vmatprep.subr.mxu0 0.0
    %1964 = vmatpush1.msra.mxu0 0.0
    %1965 = vmatprep.mubr.f32.mxu0 0.0
    %1966 = vmatmul.mubr.f32.gmra.mrb[0].mxu0 %v1878
    %v1967 = vpop.f32.mrb[0].mxu0
    %v1968 = vadd.f32 %v1900, %v1967
    %v1969 = vpop.f32.mrb[0].mxu0
    %1970 = vmatprep.mubr.f32.mxu0 0.0
    %1971 = vmatmul.mubr.f32.gmra.mrb[0].mxu0 %v1879
    %v1972 = vpop.f32.mrb[0].mxu0
    %v1973 = vadd.f32 %v1900, %v1972
    %v1974 = vpop.f32.mrb[0].mxu0
    %1975 = vdwg.mxu0
    %1976 = vst [vmem:[#allocation2 + $0x20] sm:$0xff] %v1968
    %1977 = vst [vmem:[#allocation2 + $0x28] sm:$0xff] %v1973
    %v1978 = vld [vmem:[%s2 + $0x40] sm:$0xff]
    %v1979 = vld [vmem:[%s2 + $0x48] sm:$0xff]
    %v1980 = vld [vmem:[%s2 + $0x50] sm:$0xff]
    %v1981 = vld [vmem:[%s2 + $0x58] sm:$0xff]
    %v1982 = vld [vmem:[#allocation2 + $0x20] sm:$0x3]
    %1983 = vmatprep.subr.mxu0 0.0
    %1984 = vmatpush1.msra.mxu0 %v1978
    %1985 = vmatprep.subr.mxu0 0.0
    %1986 = vmatpush1.msra.mxu0 %v1979
    %1987 = vmatprep.subr.mxu0 0.0
    %1988 = vmatpush1.msra.mxu0 %v1980
    %1989 = vmatprep.subr.mxu0 0.0
    %1990 = vmatpush1.msra.mxu0 %v1981
    %1991 = vmatprep.subr.mxu0 0.0
    %1992 = vmatpush1.msra.mxu0 0.0
    %1993 = vmatprep.subr.mxu0 0.0
    %1994 = vmatpush1.msra.mxu0 0.0
    %1995 = vmatprep.subr.mxu0 0.0
    %1996 = vmatpush1.msra.mxu0 0.0
    %1997 = vmatprep.subr.mxu0 0.0
    %1998 = vmatpush1.msra.mxu0 0.0
    %1999 = vmatprep.subr.mxu0 0.0
    %2000 = vmatpush1.msra.mxu0 0.0
    %2001 = vmatprep.subr.mxu0 0.0
    %2002 = vmatpush1.msra.mxu0 0.0
    %2003 = vmatprep.subr.mxu0 0.0
    %2004 = vmatpush1.msra.mxu0 0.0
    %2005 = vmatprep.subr.mxu0 0.0
    %2006 = vmatpush1.msra.mxu0 0.0
    %2007 = vmatprep.subr.mxu0 0.0
    %2008 = vmatpush1.msra.mxu0 0.0
    %2009 = vmatprep.subr.mxu0 0.0
    %2010 = vmatpush1.msra.mxu0 0.0
    %2011 = vmatprep.subr.mxu0 0.0
    %2012 = vmatpush1.msra.mxu0 0.0
    %2013 = vmatprep.subr.mxu0 0.0
    %2014 = vmatpush1.msra.mxu0 0.0
    %2015 = vmatprep.subr.mxu0 0.0
    %2016 = vmatpush1.msra.mxu0 0.0
    %2017 = vmatprep.subr.mxu0 0.0
    %2018 = vmatpush1.msra.mxu0 0.0
    %2019 = vmatprep.subr.mxu0 0.0
    %2020 = vmatpush1.msra.mxu0 0.0
    %2021 = vmatprep.subr.mxu0 0.0
    %2022 = vmatpush1.msra.mxu0 0.0
    %2023 = vmatprep.subr.mxu0 0.0
    %2024 = vmatpush1.msra.mxu0 0.0
    %2025 = vmatprep.subr.mxu0 0.0
    %2026 = vmatpush1.msra.mxu0 0.0
    %2027 = vmatprep.subr.mxu0 0.0
    %2028 = vmatpush1.msra.mxu0 0.0
    %2029 = vmatprep.subr.mxu0 0.0
    %2030 = vmatpush1.msra.mxu0 0.0
    %2031 = vmatprep.subr.mxu0 0.0
    %2032 = vmatpush1.msra.mxu0 0.0
    %2033 = vmatprep.subr.mxu0 0.0
    %2034 = vmatpush1.msra.mxu0 0.0
    %2035 = vmatprep.subr.mxu0 0.0
    %2036 = vmatpush1.msra.mxu0 0.0
    %2037 = vmatprep.subr.mxu0 0.0
    %2038 = vmatpush1.msra.mxu0 0.0
    %2039 = vmatprep.subr.mxu0 0.0
    %2040 = vmatpush1.msra.mxu0 0.0
    %2041 = vmatprep.subr.mxu0 0.0
    %2042 = vmatpush1.msra.mxu0 0.0
    %2043 = vmatprep.subr.mxu0 0.0
    %2044 = vmatpush1.msra.mxu0 0.0
    %2045 = vmatprep.subr.mxu0 0.0
    %2046 = vmatpush1.msra.mxu0 0.0
    %2047 = vmatprep.mubr.f32.mxu0 0.0
    %2048 = vmatmul.mubr.f32.gmra.mrb[0].mxu0 %v167
    %v2049 = vpop.f32.mrb[0].mxu0
    %v2050 = vadd.f32 0.0, %v2049
    %v2051 = vpop.f32.mrb[0].mxu0
    %2052 = vdwg.mxu0
    %v2053 = vadd.f32 %v1982, %v2050
    %v2054 = vxor.u32 %v2053, 2147483648
    %v2055 = vmul.f32 %v2054, 1.442695
    %v2056 = vpow.pop %v2055
    %v2057 = vadd.f32 %v2056, 1.0
    %v2058 = vrcp.pop %v2057
    %v2059 = vmul.f32 1.0, %v2058
    %v2060 = vtanh.pop %v2053
    %v2061 = vmul.f32 %v2059, 0.0
    %2063 = vrot.lane.b32.xlu0 %v2060, 64
    %v2064 = vpop.permute.xlu0 %2063
    %v2066 = vmul.f32 %v2059, %v2064
    %2068 = vrot.lane.b32.xlu0 %v2066, 32
    %v2069 = vpop.permute.xlu0 %2068
    %v2071 = vadd.f32 %v2061, %v2069
    %v2072 = vtanh.pop %v2071
    %2074 = vrot.lane.b32.xlu0 %v2072, 64
    %v2075 = vpop.permute.xlu0 %2074
    %v2077 = vmul.f32 %v2059, %v2075
    %v2078 = vld [vmem:[#allocation2 + $0x22] sm:$0x3]
    %2080 = vrot.lane.b32.xlu0 %v2077, 32
    %v2081 = vpop.permute.xlu0 %2080
    %v2082 = vsel %vm165, %v2081, 0
    %2084 = vmatprep.subr.mxu0 0.0
    %2085 = vmatpush1.msra.mxu0 %v1978
    %2086 = vmatprep.subr.mxu0 0.0
    %2087 = vmatpush1.msra.mxu0 %v1979
    %2088 = vmatprep.subr.mxu0 0.0
    %2089 = vmatpush1.msra.mxu0 %v1980
    %2090 = vmatprep.subr.mxu0 0.0
    %2091 = vmatpush1.msra.mxu0 %v1981
    %2092 = vmatprep.subr.mxu0 0.0
    %2093 = vmatpush1.msra.mxu0 0.0
    %2094 = vmatprep.subr.mxu0 0.0
    %2095 = vmatpush1.msra.mxu0 0.0
    %2096 = vmatprep.subr.mxu0 0.0
    %2097 = vmatpush1.msra.mxu0 0.0
    %2098 = vmatprep.subr.mxu0 0.0
    %2099 = vmatpush1.msra.mxu0 0.0
    %2100 = vmatprep.subr.mxu0 0.0
    %2101 = vmatpush1.msra.mxu0 0.0
    %2102 = vmatprep.subr.mxu0 0.0
    %2103 = vmatpush1.msra.mxu0 0.0
    %2104 = vmatprep.subr.mxu0 0.0
    %2105 = vmatpush1.msra.mxu0 0.0
    %2106 = vmatprep.subr.mxu0 0.0
    %2107 = vmatpush1.msra.mxu0 0.0
    %2108 = vmatprep.subr.mxu0 0.0
    %2109 = vmatpush1.msra.mxu0 0.0
    %2110 = vmatprep.subr.mxu0 0.0
    %2111 = vmatpush1.msra.mxu0 0.0
    %2112 = vmatprep.subr.mxu0 0.0
    %2113 = vmatpush1.msra.mxu0 0.0
    %2114 = vmatprep.subr.mxu0 0.0
    %2115 = vmatpush1.msra.mxu0 0.0
    %2116 = vmatprep.subr.mxu0 0.0
    %2117 = vmatpush1.msra.mxu0 0.0
    %2118 = vmatprep.subr.mxu0 0.0
    %2119 = vmatpush1.msra.mxu0 0.0
    %2120 = vmatprep.subr.mxu0 0.0
    %2121 = vmatpush1.msra.mxu0 0.0
    %2122 = vmatprep.subr.mxu0 0.0
    %2123 = vmatpush1.msra.mxu0 0.0
    %2124 = vmatprep.subr.mxu0 0.0
    %2125 = vmatpush1.msra.mxu0 0.0
    %2126 = vmatprep.subr.mxu0 0.0
    %2127 = vmatpush1.msra.mxu0 0.0
    %2128 = vmatprep.subr.mxu0 0.0
    %2129 = vmatpush1.msra.mxu0 0.0
    %2130 = vmatprep.subr.mxu0 0.0
    %2131 = vmatpush1.msra.mxu0 0.0
    %2132 = vmatprep.subr.mxu0 0.0
    %2133 = vmatpush1.msra.mxu0 0.0
    %2134 = vmatprep.subr.mxu0 0.0
    %2135 = vmatpush1.msra.mxu0 0.0
    %2136 = vmatprep.subr.mxu0 0.0
    %2137 = vmatpush1.msra.mxu0 0.0
    %2138 = vmatprep.subr.mxu0 0.0
    %2139 = vmatpush1.msra.mxu0 0.0
    %2140 = vmatprep.subr.mxu0 0.0
    %2141 = vmatpush1.msra.mxu0 0.0
    %2142 = vmatprep.subr.mxu0 0.0
    %2143 = vmatpush1.msra.mxu0 0.0
    %2144 = vmatprep.subr.mxu0 0.0
    %2145 = vmatpush1.msra.mxu0 0.0
    %2146 = vmatprep.subr.mxu0 0.0
    %2147 = vmatpush1.msra.mxu0 0.0
    %2148 = vmatprep.mubr.f32.mxu0 0.0
    %2149 = vmatmul.mubr.f32.gmra.mrb[0].mxu0 %v2082
    %v2150 = vpop.f32.mrb[0].mxu0
    %v2151 = vadd.f32 0.0, %v2150
    %v2152 = vpop.f32.mrb[0].mxu0
    %2153 = vdwg.mxu0
    %v2154 = vadd.f32 %v2078, %v2151
    %v2155 = vxor.u32 %v2154, 2147483648
    %v2156 = vmul.f32 %v2155, 1.442695
    %v2157 = vpow.pop %v2156
    %v2158 = vadd.f32 %v2157, 1.0
    %v2159 = vrcp.pop %v2158
    %v2160 = vmul.f32 1.0, %v2159
    %v2161 = vtanh.pop %v2154
    %v2162 = vmul.f32 %v2160, %v2071
    %2164 = vrot.lane.b32.xlu0 %v2161, 64
    %v2165 = vpop.permute.xlu0 %2164
    %v2167 = vmul.f32 %v2160, %v2165
    %2169 = vrot.lane.b32.xlu0 %v2167, 32
    %v2170 = vpop.permute.xlu0 %2169
    %v2172 = vadd.f32 %v2162, %v2170
    %v2173 = vtanh.pop %v2172
    %2175 = vrot.lane.b32.xlu0 %v2173, 64
    %v2176 = vpop.permute.xlu0 %2175
    %v2178 = vmul.f32 %v2160, %v2176
    %v2179 = vld [vmem:[#allocation2 + $0x24] sm:$0x3]
    %2181 = vrot.lane.b32.xlu0 %v2178, 32
    %v2182 = vpop.permute.xlu0 %2181
    %v2183 = vsel %vm165, %v2182, 0
    %2185 = vmatprep.subr.mxu0 0.0
    %2186 = vmatpush1.msra.mxu0 %v1978
    %2187 = vmatprep.subr.mxu0 0.0
    %2188 = vmatpush1.msra.mxu0 %v1979
    %2189 = vmatprep.subr.mxu0 0.0
    %2190 = vmatpush1.msra.mxu0 %v1980
    %2191 = vmatprep.subr.mxu0 0.0
    %2192 = vmatpush1.msra.mxu0 %v1981
    %2193 = vmatprep.subr.mxu0 0.0
    %2194 = vmatpush1.msra.mxu0 0.0
    %2195 = vmatprep.subr.mxu0 0.0
    %2196 = vmatpush1.msra.mxu0 0.0
    %2197 = vmatprep.subr.mxu0 0.0
    %2198 = vmatpush1.msra.mxu0 0.0
    %2199 = vmatprep.subr.mxu0 0.0
    %2200 = vmatpush1.msra.mxu0 0.0
    %2201 = vmatprep.subr.mxu0 0.0
    %2202 = vmatpush1.msra.mxu0 0.0
    %2203 = vmatprep.subr.mxu0 0.0
    %2204 = vmatpush1.msra.mxu0 0.0
    %2205 = vmatprep.subr.mxu0 0.0
    %2206 = vmatpush1.msra.mxu0 0.0
    %2207 = vmatprep.subr.mxu0 0.0
    %2208 = vmatpush1.msra.mxu0 0.0
    %2209 = vmatprep.subr.mxu0 0.0
    %2210 = vmatpush1.msra.mxu0 0.0
    %2211 = vmatprep.subr.mxu0 0.0
    %2212 = vmatpush1.msra.mxu0 0.0
    %2213 = vmatprep.subr.mxu0 0.0
    %2214 = vmatpush1.msra.mxu0 0.0
    %2215 = vmatprep.subr.mxu0 0.0
    %2216 = vmatpush1.msra.mxu0 0.0
    %2217 = vmatprep.subr.mxu0 0.0
    %2218 = vmatpush1.msra.mxu0 0.0
    %2219 = vmatprep.subr.mxu0 0.0
    %2220 = vmatpush1.msra.mxu0 0.0
    %2221 = vmatprep.subr.mxu0 0.0
    %2222 = vmatpush1.msra.mxu0 0.0
    %2223 = vmatprep.subr.mxu0 0.0
    %2224 = vmatpush1.msra.mxu0 0.0
    %2225 = vmatprep.subr.mxu0 0.0
    %2226 = vmatpush1.msra.mxu0 0.0
    %2227 = vmatprep.subr.mxu0 0.0
    %2228 = vmatpush1.msra.mxu0 0.0
    %2229 = vmatprep.subr.mxu0 0.0
    %2230 = vmatpush1.msra.mxu0 0.0
    %2231 = vmatprep.subr.mxu0 0.0
    %2232 = vmatpush1.msra.mxu0 0.0
    %2233 = vmatprep.subr.mxu0 0.0
    %2234 = vmatpush1.msra.mxu0 0.0
    %2235 = vmatprep.subr.mxu0 0.0
    %2236 = vmatpush1.msra.mxu0 0.0
    %2237 = vmatprep.subr.mxu0 0.0
    %2238 = vmatpush1.msra.mxu0 0.0
    %2239 = vmatprep.subr.mxu0 0.0
    %2240 = vmatpush1.msra.mxu0 0.0
    %2241 = vmatprep.subr.mxu0 0.0
    %2242 = vmatpush1.msra.mxu0 0.0
    %2243 = vmatprep.subr.mxu0 0.0
    %2244 = vmatpush1.msra.mxu0 0.0
    %2245 = vmatprep.subr.mxu0 0.0
    %2246 = vmatpush1.msra.mxu0 0.0
    %2247 = vmatprep.subr.mxu0 0.0
    %2248 = vmatpush1.msra.mxu0 0.0
    %2249 = vmatprep.mubr.f32.mxu0 0.0
    %2250 = vmatmul.mubr.f32.gmra.mrb[0].mxu0 %v2183
    %v2251 = vpop.f32.mrb[0].mxu0
    %v2252 = vadd.f32 0.0, %v2251
    %v2253 = vpop.f32.mrb[0].mxu0
    %2254 = vdwg.mxu0
    %v2255 = vadd.f32 %v2179, %v2252
    %v2256 = vxor.u32 %v2255, 2147483648
    %v2257 = vmul.f32 %v2256, 1.442695
    %v2258 = vpow.pop %v2257
    %v2259 = vadd.f32 %v2258, 1.0
    %v2260 = vrcp.pop %v2259
    %v2261 = vmul.f32 1.0, %v2260
    %v2262 = vtanh.pop %v2255
    %v2263 = vmul.f32 %v2261, %v2172
    %2265 = vrot.lane.b32.xlu0 %v2262, 64
    %v2266 = vpop.permute.xlu0 %2265
    %v2268 = vmul.f32 %v2261, %v2266
    %2270 = vrot.lane.b32.xlu0 %v2268, 32
    %v2271 = vpop.permute.xlu0 %2270
    %v2273 = vadd.f32 %v2263, %v2271
    %v2274 = vtanh.pop %v2273
    %2276 = vrot.lane.b32.xlu0 %v2274, 64
    %v2277 = vpop.permute.xlu0 %2276
    %v2279 = vmul.f32 %v2261, %v2277
    %v2280 = vld [vmem:[#allocation2 + $0x26] sm:$0x3]
    %2282 = vrot.lane.b32.xlu0 %v2279, 32
    %v2283 = vpop.permute.xlu0 %2282
    %v2284 = vsel %vm165, %v2283, 0
    %2286 = vmatprep.subr.mxu0 0.0
    %2287 = vmatpush1.msra.mxu0 %v1978
    %2288 = vmatprep.subr.mxu0 0.0
    %2289 = vmatpush1.msra.mxu0 %v1979
    %2290 = vmatprep.subr.mxu0 0.0
    %2291 = vmatpush1.msra.mxu0 %v1980
    %2292 = vmatprep.subr.mxu0 0.0
    %2293 = vmatpush1.msra.mxu0 %v1981
    %2294 = vmatprep.subr.mxu0 0.0
    %2295 = vmatpush1.msra.mxu0 0.0
    %2296 = vmatprep.subr.mxu0 0.0
    %2297 = vmatpush1.msra.mxu0 0.0
    %2298 = vmatprep.subr.mxu0 0.0
    %2299 = vmatpush1.msra.mxu0 0.0
    %2300 = vmatprep.subr.mxu0 0.0
    %2301 = vmatpush1.msra.mxu0 0.0
    %2302 = vmatprep.subr.mxu0 0.0
    %2303 = vmatpush1.msra.mxu0 0.0
    %2304 = vmatprep.subr.mxu0 0.0
    %2305 = vmatpush1.msra.mxu0 0.0
    %2306 = vmatprep.subr.mxu0 0.0
    %2307 = vmatpush1.msra.mxu0 0.0
    %2308 = vmatprep.subr.mxu0 0.0
    %2309 = vmatpush1.msra.mxu0 0.0
    %2310 = vmatprep.subr.mxu0 0.0
    %2311 = vmatpush1.msra.mxu0 0.0
    %2312 = vmatprep.subr.mxu0 0.0
    %2313 = vmatpush1.msra.mxu0 0.0
    %2314 = vmatprep.subr.mxu0 0.0
    %2315 = vmatpush1.msra.mxu0 0.0
    %2316 = vmatprep.subr.mxu0 0.0
    %2317 = vmatpush1.msra.mxu0 0.0
    %2318 = vmatprep.subr.mxu0 0.0
    %2319 = vmatpush1.msra.mxu0 0.0
    %2320 = vmatprep.subr.mxu0 0.0
    %2321 = vmatpush1.msra.mxu0 0.0
    %2322 = vmatprep.subr.mxu0 0.0
    %2323 = vmatpush1.msra.mxu0 0.0
    %2324 = vmatprep.subr.mxu0 0.0
    %2325 = vmatpush1.msra.mxu0 0.0
    %2326 = vmatprep.subr.mxu0 0.0
    %2327 = vmatpush1.msra.mxu0 0.0
    %2328 = vmatprep.subr.mxu0 0.0
    %2329 = vmatpush1.msra.mxu0 0.0
    %2330 = vmatprep.subr.mxu0 0.0
    %2331 = vmatpush1.msra.mxu0 0.0
    %2332 = vmatprep.subr.mxu0 0.0
    %2333 = vmatpush1.msra.mxu0 0.0
    %2334 = vmatprep.subr.mxu0 0.0
    %2335 = vmatpush1.msra.mxu0 0.0
    %2336 = vmatprep.subr.mxu0 0.0
    %2337 = vmatpush1.msra.mxu0 0.0
    %2338 = vmatprep.subr.mxu0 0.0
    %2339 = vmatpush1.msra.mxu0 0.0
    %2340 = vmatprep.subr.mxu0 0.0
    %2341 = vmatpush1.msra.mxu0 0.0
    %2342 = vmatprep.subr.mxu0 0.0
    %2343 = vmatpush1.msra.mxu0 0.0
    %2344 = vmatprep.subr.mxu0 0.0
    %2345 = vmatpush1.msra.mxu0 0.0
    %2346 = vmatprep.subr.mxu0 0.0
    %2347 = vmatpush1.msra.mxu0 0.0
    %2348 = vmatprep.subr.mxu0 0.0
    %2349 = vmatpush1.msra.mxu0 0.0
    %2350 = vmatprep.mubr.f32.mxu0 0.0
    %2351 = vmatmul.mubr.f32.gmra.mrb[0].mxu0 %v2284
    %v2352 = vpop.f32.mrb[0].mxu0
    %v2353 = vadd.f32 0.0, %v2352
    %v2354 = vpop.f32.mrb[0].mxu0
    %2355 = vdwg.mxu0
    %v2356 = vadd.f32 %v2280, %v2353
    %v2357 = vxor.u32 %v2356, 2147483648
    %v2358 = vmul.f32 %v2357, 1.442695
    %v2359 = vpow.pop %v2358
    %v2360 = vadd.f32 %v2359, 1.0
    %v2361 = vrcp.pop %v2360
    %v2362 = vmul.f32 1.0, %v2361
    %v2363 = vtanh.pop %v2356
    %v2364 = vmul.f32 %v2362, %v2273
    %2366 = vrot.lane.b32.xlu0 %v2363, 64
    %v2367 = vpop.permute.xlu0 %2366
    %v2369 = vmul.f32 %v2362, %v2367
    %2371 = vrot.lane.b32.xlu0 %v2369, 32
    %v2372 = vpop.permute.xlu0 %2371
    %v2374 = vadd.f32 %v2364, %v2372
    %v2375 = vtanh.pop %v2374
    %2377 = vrot.lane.b32.xlu0 %v2375, 64
    %v2378 = vpop.permute.xlu0 %2377
    %v2380 = vmul.f32 %v2362, %v2378
    %v2381 = vld [vmem:[#allocation2 + $0x28] sm:$0x3]
    %2383 = vrot.lane.b32.xlu0 %v2380, 32
    %v2384 = vpop.permute.xlu0 %2383
    %v2385 = vsel %vm165, %v2384, 0
    %2387 = vmatprep.subr.mxu0 0.0
    %2388 = vmatpush1.msra.mxu0 %v1978
    %2389 = vmatprep.subr.mxu0 0.0
    %2390 = vmatpush1.msra.mxu0 %v1979
    %2391 = vmatprep.subr.mxu0 0.0
    %2392 = vmatpush1.msra.mxu0 %v1980
    %2393 = vmatprep.subr.mxu0 0.0
    %2394 = vmatpush1.msra.mxu0 %v1981
    %2395 = vmatprep.subr.mxu0 0.0
    %2396 = vmatpush1.msra.mxu0 0.0
    %2397 = vmatprep.subr.mxu0 0.0
    %2398 = vmatpush1.msra.mxu0 0.0
    %2399 = vmatprep.subr.mxu0 0.0
    %2400 = vmatpush1.msra.mxu0 0.0
    %2401 = vmatprep.subr.mxu0 0.0
    %2402 = vmatpush1.msra.mxu0 0.0
    %2403 = vmatprep.subr.mxu0 0.0
    %2404 = vmatpush1.msra.mxu0 0.0
    %2405 = vmatprep.subr.mxu0 0.0
    %2406 = vmatpush1.msra.mxu0 0.0
    %2407 = vmatprep.subr.mxu0 0.0
    %2408 = vmatpush1.msra.mxu0 0.0
    %2409 = vmatprep.subr.mxu0 0.0
    %2410 = vmatpush1.msra.mxu0 0.0
    %2411 = vmatprep.subr.mxu0 0.0
    %2412 = vmatpush1.msra.mxu0 0.0
    %2413 = vmatprep.subr.mxu0 0.0
    %2414 = vmatpush1.msra.mxu0 0.0
    %2415 = vmatprep.subr.mxu0 0.0
    %2416 = vmatpush1.msra.mxu0 0.0
    %2417 = vmatprep.subr.mxu0 0.0
    %2418 = vmatpush1.msra.mxu0 0.0
    %2419 = vmatprep.subr.mxu0 0.0
    %2420 = vmatpush1.msra.mxu0 0.0
    %2421 = vmatprep.subr.mxu0 0.0
    %2422 = vmatpush1.msra.mxu0 0.0
    %2423 = vmatprep.subr.mxu0 0.0
    %2424 = vmatpush1.msra.mxu0 0.0
    %2425 = vmatprep.subr.mxu0 0.0
    %2426 = vmatpush1.msra.mxu0 0.0
    %2427 = vmatprep.subr.mxu0 0.0
    %2428 = vmatpush1.msra.mxu0 0.0
    %2429 = vmatprep.subr.mxu0 0.0
    %2430 = vmatpush1.msra.mxu0 0.0
    %2431 = vmatprep.subr.mxu0 0.0
    %2432 = vmatpush1.msra.mxu0 0.0
    %2433 = vmatprep.subr.mxu0 0.0
    %2434 = vmatpush1.msra.mxu0 0.0
    %2435 = vmatprep.subr.mxu0 0.0
    %2436 = vmatpush1.msra.mxu0 0.0
    %2437 = vmatprep.subr.mxu0 0.0
    %2438 = vmatpush1.msra.mxu0 0.0
    %2439 = vmatprep.subr.mxu0 0.0
    %2440 = vmatpush1.msra.mxu0 0.0
    %2441 = vmatprep.subr.mxu0 0.0
    %2442 = vmatpush1.msra.mxu0 0.0
    %2443 = vmatprep.subr.mxu0 0.0
    %2444 = vmatpush1.msra.mxu0 0.0
    %2445 = vmatprep.subr.mxu0 0.0
    %2446 = vmatpush1.msra.mxu0 0.0
    %2447 = vmatprep.subr.mxu0 0.0
    %2448 = vmatpush1.msra.mxu0 0.0
    %2449 = vmatprep.subr.mxu0 0.0
    %2450 = vmatpush1.msra.mxu0 0.0
    %2451 = vmatprep.mubr.f32.mxu0 0.0
    %2452 = vmatmul.mubr.f32.gmra.mrb[0].mxu0 %v2385
    %v2453 = vpop.f32.mrb[0].mxu0
    %v2454 = vadd.f32 0.0, %v2453
    %v2455 = vpop.f32.mrb[0].mxu0
    %2456 = vdwg.mxu0
    %v2457 = vadd.f32 %v2381, %v2454
    %v2458 = vxor.u32 %v2457, 2147483648
    %v2459 = vmul.f32 %v2458, 1.442695
    %v2460 = vpow.pop %v2459
    %v2461 = vadd.f32 %v2460, 1.0
    %v2462 = vrcp.pop %v2461
    %v2463 = vmul.f32 1.0, %v2462
    %v2464 = vtanh.pop %v2457
    %v2465 = vmul.f32 %v2463, %v2374
    %2467 = vrot.lane.b32.xlu0 %v2464, 64
    %v2468 = vpop.permute.xlu0 %2467
    %v2470 = vmul.f32 %v2463, %v2468
    %2472 = vrot.lane.b32.xlu0 %v2470, 32
    %v2473 = vpop.permute.xlu0 %2472
    %v2475 = vadd.f32 %v2465, %v2473
    %v2476 = vtanh.pop %v2475
    %2478 = vrot.lane.b32.xlu0 %v2476, 64
    %v2479 = vpop.permute.xlu0 %2478
    %v2481 = vmul.f32 %v2463, %v2479
    %v2482 = vld [vmem:[#allocation2 + $0x2a] sm:$0x3]
    %2484 = vrot.lane.b32.xlu0 %v2481, 32
    %v2485 = vpop.permute.xlu0 %2484
    %v2486 = vsel %vm165, %v2485, 0
    %2488 = vmatprep.subr.mxu0 0.0
    %2489 = vmatpush1.msra.mxu0 %v1978
    %2490 = vmatprep.subr.mxu0 0.0
    %2491 = vmatpush1.msra.mxu0 %v1979
    %2492 = vmatprep.subr.mxu0 0.0
    %2493 = vmatpush1.msra.mxu0 %v1980
    %2494 = vmatprep.subr.mxu0 0.0
    %2495 = vmatpush1.msra.mxu0 %v1981
    %2496 = vmatprep.subr.mxu0 0.0
    %2497 = vmatpush1.msra.mxu0 0.0
    %2498 = vmatprep.subr.mxu0 0.0
    %2499 = vmatpush1.msra.mxu0 0.0
    %2500 = vmatprep.subr.mxu0 0.0
    %2501 = vmatpush1.msra.mxu0 0.0
    %2502 = vmatprep.subr.mxu0 0.0
    %2503 = vmatpush1.msra.mxu0 0.0
    %2504 = vmatprep.subr.mxu0 0.0
    %2505 = vmatpush1.msra.mxu0 0.0
    %2506 = vmatprep.subr.mxu0 0.0
    %2507 = vmatpush1.msra.mxu0 0.0
    %2508 = vmatprep.subr.mxu0 0.0
    %2509 = vmatpush1.msra.mxu0 0.0
    %2510 = vmatprep.subr.mxu0 0.0
    %2511 = vmatpush1.msra.mxu0 0.0
    %2512 = vmatprep.subr.mxu0 0.0
    %2513 = vmatpush1.msra.mxu0 0.0
    %2514 = vmatprep.subr.mxu0 0.0
    %2515 = vmatpush1.msra.mxu0 0.0
    %2516 = vmatprep.subr.mxu0 0.0
    %2517 = vmatpush1.msra.mxu0 0.0
    %2518 = vmatprep.subr.mxu0 0.0
    %2519 = vmatpush1.msra.mxu0 0.0
    %2520 = vmatprep.subr.mxu0 0.0
    %2521 = vmatpush1.msra.mxu0 0.0
    %2522 = vmatprep.subr.mxu0 0.0
    %2523 = vmatpush1.msra.mxu0 0.0
    %2524 = vmatprep.subr.mxu0 0.0
    %2525 = vmatpush1.msra.mxu0 0.0
    %2526 = vmatprep.subr.mxu0 0.0
    %2527 = vmatpush1.msra.mxu0 0.0
    %2528 = vmatprep.subr.mxu0 0.0
    %2529 = vmatpush1.msra.mxu0 0.0
    %2530 = vmatprep.subr.mxu0 0.0
    %2531 = vmatpush1.msra.mxu0 0.0
    %2532 = vmatprep.subr.mxu0 0.0
    %2533 = vmatpush1.msra.mxu0 0.0
    %2534 = vmatprep.subr.mxu0 0.0
    %2535 = vmatpush1.msra.mxu0 0.0
    %2536 = vmatprep.subr.mxu0 0.0
    %2537 = vmatpush1.msra.mxu0 0.0
    %2538 = vmatprep.subr.mxu0 0.0
    %2539 = vmatpush1.msra.mxu0 0.0
    %2540 = vmatprep.subr.mxu0 0.0
    %2541 = vmatpush1.msra.mxu0 0.0
    %2542 = vmatprep.subr.mxu0 0.0
    %2543 = vmatpush1.msra.mxu0 0.0
    %2544 = vmatprep.subr.mxu0 0.0
    %2545 = vmatpush1.msra.mxu0 0.0
    %2546 = vmatprep.subr.mxu0 0.0
    %2547 = vmatpush1.msra.mxu0 0.0
    %2548 = vmatprep.subr.mxu0 0.0
    %2549 = vmatpush1.msra.mxu0 0.0
    %2550 = vmatprep.subr.mxu0 0.0
    %2551 = vmatpush1.msra.mxu0 0.0
    %2552 = vmatprep.mubr.f32.mxu0 0.0
    %2553 = vmatmul.mubr.f32.gmra.mrb[0].mxu0 %v2486
    %v2554 = vpop.f32.mrb[0].mxu0
    %v2555 = vadd.f32 0.0, %v2554
    %v2556 = vpop.f32.mrb[0].mxu0
    %2557 = vdwg.mxu0
    %v2558 = vadd.f32 %v2482, %v2555
    %v2559 = vxor.u32 %v2558, 2147483648
    %v2560 = vmul.f32 %v2559, 1.442695
    %v2561 = vpow.pop %v2560
    %v2562 = vadd.f32 %v2561, 1.0
    %v2563 = vrcp.pop %v2562
    %v2564 = vmul.f32 1.0, %v2563
    %v2565 = vtanh.pop %v2558
    %v2566 = vmul.f32 %v2564, %v2475
    %2568 = vrot.lane.b32.xlu0 %v2565, 64
    %v2569 = vpop.permute.xlu0 %2568
    %v2571 = vmul.f32 %v2564, %v2569
    %2573 = vrot.lane.b32.xlu0 %v2571, 32
    %v2574 = vpop.permute.xlu0 %2573
    %v2576 = vadd.f32 %v2566, %v2574
    %v2577 = vtanh.pop %v2576
    %2579 = vrot.lane.b32.xlu0 %v2577, 64
    %v2580 = vpop.permute.xlu0 %2579
    %v2582 = vmul.f32 %v2564, %v2580
    %v2583 = vld [vmem:[#allocation2 + $0x2c] sm:$0x3]
    %2585 = vrot.lane.b32.xlu0 %v2582, 32
    %v2586 = vpop.permute.xlu0 %2585
    %v2587 = vsel %vm165, %v2586, 0
    %2589 = vmatprep.subr.mxu0 0.0
    %2590 = vmatpush1.msra.mxu0 %v1978
    %2591 = vmatprep.subr.mxu0 0.0
    %2592 = vmatpush1.msra.mxu0 %v1979
    %2593 = vmatprep.subr.mxu0 0.0
    %2594 = vmatpush1.msra.mxu0 %v1980
    %2595 = vmatprep.subr.mxu0 0.0
    %2596 = vmatpush1.msra.mxu0 %v1981
    %2597 = vmatprep.subr.mxu0 0.0
    %2598 = vmatpush1.msra.mxu0 0.0
    %2599 = vmatprep.subr.mxu0 0.0
    %2600 = vmatpush1.msra.mxu0 0.0
    %2601 = vmatprep.subr.mxu0 0.0
    %2602 = vmatpush1.msra.mxu0 0.0
    %2603 = vmatprep.subr.mxu0 0.0
    %2604 = vmatpush1.msra.mxu0 0.0
    %2605 = vmatprep.subr.mxu0 0.0
    %2606 = vmatpush1.msra.mxu0 0.0
    %2607 = vmatprep.subr.mxu0 0.0
    %2608 = vmatpush1.msra.mxu0 0.0
    %2609 = vmatprep.subr.mxu0 0.0
    %2610 = vmatpush1.msra.mxu0 0.0
    %2611 = vmatprep.subr.mxu0 0.0
    %2612 = vmatpush1.msra.mxu0 0.0
    %2613 = vmatprep.subr.mxu0 0.0
    %2614 = vmatpush1.msra.mxu0 0.0
    %2615 = vmatprep.subr.mxu0 0.0
    %2616 = vmatpush1.msra.mxu0 0.0
    %2617 = vmatprep.subr.mxu0 0.0
    %2618 = vmatpush1.msra.mxu0 0.0
    %2619 = vmatprep.subr.mxu0 0.0
    %2620 = vmatpush1.msra.mxu0 0.0
    %2621 = vmatprep.subr.mxu0 0.0
    %2622 = vmatpush1.msra.mxu0 0.0
    %2623 = vmatprep.subr.mxu0 0.0
    %2624 = vmatpush1.msra.mxu0 0.0
    %2625 = vmatprep.subr.mxu0 0.0
    %2626 = vmatpush1.msra.mxu0 0.0
    %2627 = vmatprep.subr.mxu0 0.0
    %2628 = vmatpush1.msra.mxu0 0.0
    %2629 = vmatprep.subr.mxu0 0.0
    %2630 = vmatpush1.msra.mxu0 0.0
    %2631 = vmatprep.subr.mxu0 0.0
    %2632 = vmatpush1.msra.mxu0 0.0
    %2633 = vmatprep.subr.mxu0 0.0
    %2634 = vmatpush1.msra.mxu0 0.0
    %2635 = vmatprep.subr.mxu0 0.0
    %2636 = vmatpush1.msra.mxu0 0.0
    %2637 = vmatprep.subr.mxu0 0.0
    %2638 = vmatpush1.msra.mxu0 0.0
    %2639 = vmatprep.subr.mxu0 0.0
    %2640 = vmatpush1.msra.mxu0 0.0
    %2641 = vmatprep.subr.mxu0 0.0
    %2642 = vmatpush1.msra.mxu0 0.0
    %2643 = vmatprep.subr.mxu0 0.0
    %2644 = vmatpush1.msra.mxu0 0.0
    %2645 = vmatprep.subr.mxu0 0.0
    %2646 = vmatpush1.msra.mxu0 0.0
    %2647 = vmatprep.subr.mxu0 0.0
    %2648 = vmatpush1.msra.mxu0 0.0
    %2649 = vmatprep.subr.mxu0 0.0
    %2650 = vmatpush1.msra.mxu0 0.0
    %2651 = vmatprep.subr.mxu0 0.0
    %2652 = vmatpush1.msra.mxu0 0.0
    %2653 = vmatprep.mubr.f32.mxu0 0.0
    %2654 = vmatmul.mubr.f32.gmra.mrb[0].mxu0 %v2587
    %v2655 = vpop.f32.mrb[0].mxu0
    %v2656 = vadd.f32 0.0, %v2655
    %v2657 = vpop.f32.mrb[0].mxu0
    %2658 = vdwg.mxu0
    %v2659 = vadd.f32 %v2583, %v2656
    %v2660 = vxor.u32 %v2659, 2147483648
    %v2661 = vmul.f32 %v2660, 1.442695
    %v2662 = vpow.pop %v2661
    %v2663 = vadd.f32 %v2662, 1.0
    %v2664 = vrcp.pop %v2663
    %v2665 = vmul.f32 1.0, %v2664
    %v2666 = vtanh.pop %v2659
    %v2667 = vmul.f32 %v2665, %v2576
    %2669 = vrot.lane.b32.xlu0 %v2666, 64
    %v2670 = vpop.permute.xlu0 %2669
    %v2672 = vmul.f32 %v2665, %v2670
    %2674 = vrot.lane.b32.xlu0 %v2672, 32
    %v2675 = vpop.permute.xlu0 %2674
    %v2677 = vadd.f32 %v2667, %v2675
    %v2678 = vtanh.pop %v2677
    %2680 = vrot.lane.b32.xlu0 %v2678, 64
    %v2681 = vpop.permute.xlu0 %2680
    %v2683 = vmul.f32 %v2665, %v2681
    %v2684 = vld [vmem:[#allocation2 + $0x2e] sm:$0x3]
    %2686 = vrot.lane.b32.xlu0 %v2683, 32
    %v2687 = vpop.permute.xlu0 %2686
    %v2688 = vsel %vm165, %v2687, 0
    %2690 = vmatprep.subr.mxu0 0.0
    %2691 = vmatpush1.msra.mxu0 %v1978
    %2692 = vmatprep.subr.mxu0 0.0
    %2693 = vmatpush1.msra.mxu0 %v1979
    %2694 = vmatprep.subr.mxu0 0.0
    %2695 = vmatpush1.msra.mxu0 %v1980
    %2696 = vmatprep.subr.mxu0 0.0
    %2697 = vmatpush1.msra.mxu0 %v1981
    %2698 = vmatprep.subr.mxu0 0.0
    %2699 = vmatpush1.msra.mxu0 0.0
    %2700 = vmatprep.subr.mxu0 0.0
    %2701 = vmatpush1.msra.mxu0 0.0
    %2702 = vmatprep.subr.mxu0 0.0
    %2703 = vmatpush1.msra.mxu0 0.0
    %2704 = vmatprep.subr.mxu0 0.0
    %2705 = vmatpush1.msra.mxu0 0.0
    %2706 = vmatprep.subr.mxu0 0.0
    %2707 = vmatpush1.msra.mxu0 0.0
    %2708 = vmatprep.subr.mxu0 0.0
    %2709 = vmatpush1.msra.mxu0 0.0
    %2710 = vmatprep.subr.mxu0 0.0
    %2711 = vmatpush1.msra.mxu0 0.0
    %2712 = vmatprep.subr.mxu0 0.0
    %2713 = vmatpush1.msra.mxu0 0.0
    %2714 = vmatprep.subr.mxu0 0.0
    %2715 = vmatpush1.msra.mxu0 0.0
    %2716 = vmatprep.subr.mxu0 0.0
    %2717 = vmatpush1.msra.mxu0 0.0
    %2718 = vmatprep.subr.mxu0 0.0
    %2719 = vmatpush1.msra.mxu0 0.0
    %2720 = vmatprep.subr.mxu0 0.0
    %2721 = vmatpush1.msra.mxu0 0.0
    %2722 = vmatprep.subr.mxu0 0.0
    %2723 = vmatpush1.msra.mxu0 0.0
    %2724 = vmatprep.subr.mxu0 0.0
    %2725 = vmatpush1.msra.mxu0 0.0
    %2726 = vmatprep.subr.mxu0 0.0
    %2727 = vmatpush1.msra.mxu0 0.0
    %2728 = vmatprep.subr.mxu0 0.0
    %2729 = vmatpush1.msra.mxu0 0.0
    %2730 = vmatprep.subr.mxu0 0.0
    %2731 = vmatpush1.msra.mxu0 0.0
    %2732 = vmatprep.subr.mxu0 0.0
    %2733 = vmatpush1.msra.mxu0 0.0
    %2734 = vmatprep.subr.mxu0 0.0
    %2735 = vmatpush1.msra.mxu0 0.0
    %2736 = vmatprep.subr.mxu0 0.0
    %2737 = vmatpush1.msra.mxu0 0.0
    %2738 = vmatprep.subr.mxu0 0.0
    %2739 = vmatpush1.msra.mxu0 0.0
    %2740 = vmatprep.subr.mxu0 0.0
    %2741 = vmatpush1.msra.mxu0 0.0
    %2742 = vmatprep.subr.mxu0 0.0
    %2743 = vmatpush1.msra.mxu0 0.0
    %2744 = vmatprep.subr.mxu0 0.0
    %2745 = vmatpush1.msra.mxu0 0.0
    %2746 = vmatprep.subr.mxu0 0.0
    %2747 = vmatpush1.msra.mxu0 0.0
    %2748 = vmatprep.subr.mxu0 0.0
    %2749 = vmatpush1.msra.mxu0 0.0
    %2750 = vmatprep.subr.mxu0 0.0
    %2751 = vmatpush1.msra.mxu0 0.0
    %2752 = vmatprep.subr.mxu0 0.0
    %2753 = vmatpush1.msra.mxu0 0.0
    %2754 = vmatprep.mubr.f32.mxu0 0.0
    %2755 = vmatmul.mubr.f32.gmra.mrb[0].mxu0 %v2688
    %v2756 = vpop.f32.mrb[0].mxu0
    %v2757 = vadd.f32 0.0, %v2756
    %v2758 = vpop.f32.mrb[0].mxu0
    %2759 = vdwg.mxu0
    %v2760 = vadd.f32 %v2684, %v2757
    %v2761 = vxor.u32 %v2760, 2147483648
    %v2762 = vmul.f32 %v2761, 1.442695
    %v2763 = vpow.pop %v2762
    %v2764 = vadd.f32 %v2763, 1.0
    %v2765 = vrcp.pop %v2764
    %v2766 = vmul.f32 1.0, %v2765
    %v2767 = vtanh.pop %v2760
    %v2768 = vmul.f32 %v2766, %v2677
    %2770 = vrot.lane.b32.xlu0 %v2767, 64
    %v2771 = vpop.permute.xlu0 %2770
    %v2773 = vmul.f32 %v2766, %v2771
    %2775 = vrot.lane.b32.xlu0 %v2773, 32
    %v2776 = vpop.permute.xlu0 %2775
    %v2778 = vadd.f32 %v2768, %v2776
    %v2779 = vtanh.pop %v2778
    %2781 = vrot.lane.b32.xlu0 %v2779, 64
    %v2782 = vpop.permute.xlu0 %2781
    %v2784 = vmul.f32 %v2766, %v2782
    %v2785 = vadd.f32 %v1877, %v970
    %v2786 = vadd.f32 %v1871, %v964
    %v2787 = vld [vmem:[#allocation5 + $0x3] sm:$0x1]
    %v2788 = vlaneseq
    %v2789 = vshrl.u32 %v2788, 7
    %v2790 = vsub.s32 0, %v2789
    %v2791 = vrot.slane %v2787, %v2790
    %v2792 = vld [vmem:[#allocation5 + $0x4] sm:$0x1]
    %v2793 = vlaneseq
    %v2794 = vshrl.u32 %v2793, 7
    %v2795 = vsub.s32 0, %v2794
    %v2796 = vrot.slane %v2792, %v2795
    %v2797 = vld [vmem:[#allocation7] sm:$0x1]
    %v2798 = vlaneseq
    %v2799 = vshrl.u32 %v2798, 7
    %v2800 = vsub.s32 0, %v2799
    %v2801 = vrot.slane %v2797, %v2800
    %v2802 = vld [vmem:[#allocation7 + $0x1] sm:$0x1]
    %v2803 = vlaneseq
    %v2804 = vshrl.u32 %v2803, 7
    %v2805 = vsub.s32 0, %v2804
    %v2806 = vrot.slane %v2802, %v2805
    %v2807 = vld [vmem:[%s0 + $0xe] sm:$0x3]
    %v2808 = vld [vmem:[%s0 + $0x2e] sm:$0x3]
    %v2809 = vld [vmem:[#allocation3 + $0x180] sm:$0xff]
    %v2810 = vld [vmem:[#allocation3 + $0x188] sm:$0xff]
    %v2811 = vld [vmem:[#allocation3 + $0x190] sm:$0xff]
    %v2812 = vld [vmem:[#allocation3 + $0x198] sm:$0xff]
    %v2813 = vld [vmem:[#allocation3 + $0x1a0] sm:$0xff]
    %v2814 = vld [vmem:[#allocation3 + $0x1a8] sm:$0xff]
    %v2815 = vld [vmem:[#allocation3 + $0x1b0] sm:$0xff]
    %v2816 = vld [vmem:[#allocation3 + $0x1b8] sm:$0xff]
    %v2817 = vld [vmem:[#allocation3 + $0x1c0] sm:$0xff]
    %v2818 = vld [vmem:[#allocation3 + $0x1c8] sm:$0xff]
    %v2819 = vld [vmem:[#allocation3 + $0x1d0] sm:$0xff]
    %v2820 = vld [vmem:[#allocation3 + $0x1d8] sm:$0xff]
    %v2821 = vld [vmem:[#allocation3 + $0x1e0] sm:$0xff]
    %v2822 = vld [vmem:[#allocation3 + $0x1e8] sm:$0xff]
    %v2823 = vld [vmem:[#allocation3 + $0x1f0] sm:$0xff]
    %v2824 = vld [vmem:[#allocation3 + $0x1f8] sm:$0xff]
    %v2825 = vld [vmem:[%s2 + $0x60] sm:$0xff]
    %v2826 = vld [vmem:[%s2 + $0x68] sm:$0xff]
    %v2827 = vld [vmem:[%s2 + $0x70] sm:$0xff]
    %v2828 = vld [vmem:[%s2 + $0x78] sm:$0xff]
    %2830 = vrot.lane.b32.xlu0 %v2785, 32
    %v2831 = vpop.permute.xlu0 %2830
    %v2832 = vsel %vm165, %v2831, 0
    %2834 = vmatprep.subr.mxu0 0.0
    %2835 = vmatpush1.msra.mxu0 %v2825
    %2836 = vmatprep.subr.mxu0 0.0
    %2837 = vmatpush1.msra.mxu0 %v2826
    %2838 = vmatprep.subr.mxu0 0.0
    %2839 = vmatpush1.msra.mxu0 %v2827
    %2840 = vmatprep.subr.mxu0 0.0
    %2841 = vmatpush1.msra.mxu0 %v2828
    %2842 = vmatprep.subr.mxu0 0.0
    %2843 = vmatpush1.msra.mxu0 0.0
    %2844 = vmatprep.subr.mxu0 0.0
    %2845 = vmatpush1.msra.mxu0 0.0
    %2846 = vmatprep.subr.mxu0 0.0
    %2847 = vmatpush1.msra.mxu0 0.0
    %2848 = vmatprep.subr.mxu0 0.0
    %2849 = vmatpush1.msra.mxu0 0.0
    %2850 = vmatprep.subr.mxu0 0.0
    %2851 = vmatpush1.msra.mxu0 0.0
    %2852 = vmatprep.subr.mxu0 0.0
    %2853 = vmatpush1.msra.mxu0 0.0
    %2854 = vmatprep.subr.mxu0 0.0
    %2855 = vmatpush1.msra.mxu0 0.0
    %2856 = vmatprep.subr.mxu0 0.0
    %2857 = vmatpush1.msra.mxu0 0.0
    %2858 = vmatprep.subr.mxu0 0.0
    %2859 = vmatpush1.msra.mxu0 0.0
    %2860 = vmatprep.subr.mxu0 0.0
    %2861 = vmatpush1.msra.mxu0 0.0
    %2862 = vmatprep.subr.mxu0 0.0
    %2863 = vmatpush1.msra.mxu0 0.0
    %2864 = vmatprep.subr.mxu0 0.0
    %2865 = vmatpush1.msra.mxu0 0.0
    %2866 = vmatprep.subr.mxu0 0.0
    %2867 = vmatpush1.msra.mxu0 0.0
    %2868 = vmatprep.subr.mxu0 0.0
    %2869 = vmatpush1.msra.mxu0 0.0
    %2870 = vmatprep.subr.mxu0 0.0
    %2871 = vmatpush1.msra.mxu0 0.0
    %2872 = vmatprep.subr.mxu0 0.0
    %2873 = vmatpush1.msra.mxu0 0.0
    %2874 = vmatprep.subr.mxu0 0.0
    %2875 = vmatpush1.msra.mxu0 0.0
    %2876 = vmatprep.subr.mxu0 0.0
    %2877 = vmatpush1.msra.mxu0 0.0
    %2878 = vmatprep.subr.mxu0 0.0
    %2879 = vmatpush1.msra.mxu0 0.0
    %2880 = vmatprep.subr.mxu0 0.0
    %2881 = vmatpush1.msra.mxu0 0.0
    %2882 = vmatprep.subr.mxu0 0.0
    %2883 = vmatpush1.msra.mxu0 0.0
    %2884 = vmatprep.subr.mxu0 0.0
    %2885 = vmatpush1.msra.mxu0 0.0
    %2886 = vmatprep.subr.mxu0 0.0
    %2887 = vmatpush1.msra.mxu0 0.0
    %2888 = vmatprep.subr.mxu0 0.0
    %2889 = vmatpush1.msra.mxu0 0.0
    %2890 = vmatprep.subr.mxu0 0.0
    %2891 = vmatpush1.msra.mxu0 0.0
    %2892 = vmatprep.subr.mxu0 0.0
    %2893 = vmatpush1.msra.mxu0 0.0
    %2894 = vmatprep.subr.mxu0 0.0
    %2895 = vmatpush1.msra.mxu0 0.0
    %2896 = vmatprep.subr.mxu0 0.0
    %2897 = vmatpush1.msra.mxu0 0.0
    %2898 = vmatprep.mubr.f32.mxu0 0.0
    %2899 = vmatmul.mubr.f32.gmra.mrb[0].mxu0 %v2832
    %v2900 = vpop.f32.mrb[0].mxu0
    %v2901 = vadd.f32 0.0, %v2900
    %v2902 = vpop.f32.mrb[0].mxu0
    %2903 = vdwg.mxu0
    %2904 = vmatprep.subr.mxu0 0.0
    %2905 = vmatpush1.msra.mxu0 %v2809
    %2906 = vmatprep.subr.mxu0 0.0
    %2907 = vmatpush1.msra.mxu0 %v2810
    %2908 = vmatprep.subr.mxu0 0.0
    %2909 = vmatpush1.msra.mxu0 %v2811
    %2910 = vmatprep.subr.mxu0 0.0
    %2911 = vmatpush1.msra.mxu0 %v2812
    %2912 = vmatprep.subr.mxu0 0.0
    %2913 = vmatpush1.msra.mxu0 %v2813
    %2914 = vmatprep.subr.mxu0 0.0
    %2915 = vmatpush1.msra.mxu0 %v2814
    %2916 = vmatprep.subr.mxu0 0.0
    %2917 = vmatpush1.msra.mxu0 %v2815
    %2918 = vmatprep.subr.mxu0 0.0
    %2919 = vmatpush1.msra.mxu0 %v2816
    %2920 = vmatprep.subr.mxu0 0.0
    %2921 = vmatpush1.msra.mxu0 %v2817
    %2922 = vmatprep.subr.mxu0 0.0
    %2923 = vmatpush1.msra.mxu0 %v2818
    %2924 = vmatprep.subr.mxu0 0.0
    %2925 = vmatpush1.msra.mxu0 %v2819
    %2926 = vmatprep.subr.mxu0 0.0
    %2927 = vmatpush1.msra.mxu0 %v2820
    %2928 = vmatprep.subr.mxu0 0.0
    %2929 = vmatpush1.msra.mxu0 %v2821
    %2930 = vmatprep.subr.mxu0 0.0
    %2931 = vmatpush1.msra.mxu0 %v2822
    %2932 = vmatprep.subr.mxu0 0.0
    %2933 = vmatpush1.msra.mxu0 %v2823
    %2934 = vmatprep.subr.mxu0 0.0
    %2935 = vmatpush1.msra.mxu0 %v2824
    %2936 = vmatprep.subr.mxu0 0.0
    %2937 = vmatpush1.msra.mxu0 0.0
    %2938 = vmatprep.subr.mxu0 0.0
    %2939 = vmatpush1.msra.mxu0 0.0
    %2940 = vmatprep.subr.mxu0 0.0
    %2941 = vmatpush1.msra.mxu0 0.0
    %2942 = vmatprep.subr.mxu0 0.0
    %2943 = vmatpush1.msra.mxu0 0.0
    %2944 = vmatprep.subr.mxu0 0.0
    %2945 = vmatpush1.msra.mxu0 0.0
    %2946 = vmatprep.subr.mxu0 0.0
    %2947 = vmatpush1.msra.mxu0 0.0
    %2948 = vmatprep.subr.mxu0 0.0
    %2949 = vmatpush1.msra.mxu0 0.0
    %2950 = vmatprep.subr.mxu0 0.0
    %2951 = vmatpush1.msra.mxu0 0.0
    %2952 = vmatprep.subr.mxu0 0.0
    %2953 = vmatpush1.msra.mxu0 0.0
    %2954 = vmatprep.subr.mxu0 0.0
    %2955 = vmatpush1.msra.mxu0 0.0
    %2956 = vmatprep.subr.mxu0 0.0
    %2957 = vmatpush1.msra.mxu0 0.0
    %2958 = vmatprep.subr.mxu0 0.0
    %2959 = vmatpush1.msra.mxu0 0.0
    %2960 = vmatprep.subr.mxu0 0.0
    %2961 = vmatpush1.msra.mxu0 0.0
    %2962 = vmatprep.subr.mxu0 0.0
    %2963 = vmatpush1.msra.mxu0 0.0
    %2964 = vmatprep.subr.mxu0 0.0
    %2965 = vmatpush1.msra.mxu0 0.0
    %2966 = vmatprep.subr.mxu0 0.0
    %2967 = vmatpush1.msra.mxu0 0.0
    %2968 = vmatprep.mubr.f32.mxu0 0.0
    %2969 = vmatmul.mubr.f32.gmra.mrb[0].mxu0 %v2807
    %v2970 = vpop.f32.mrb[0].mxu0
    %v2971 = vadd.f32 %v2901, %v2970
    %v2972 = vpop.f32.mrb[0].mxu0
    %2973 = vdwg.mxu0
    %v2974 = vadd.f32 %v2971, %v2791
    %v2975 = vxor.u32 %v2974, 2147483648
    %v2976 = vmul.f32 %v2975, 1.442695
    %v2977 = vpow.pop %v2976
    %v2978 = vadd.f32 %v2977, 1.0
    %v2979 = vrcp.pop %v2978
    %v2980 = vmul.f32 1.0, %v2979
    %v2981 = vtanh.pop %v2974
    %v2982 = vmul.f32 %v2980, %v2786
    %2984 = vrot.lane.b32.xlu0 %v2981, 64
    %v2985 = vpop.permute.xlu0 %2984
    %v2987 = vmul.f32 %v2980, %v2985
    %2989 = vrot.lane.b32.xlu0 %v2987, 32
    %v2990 = vpop.permute.xlu0 %2989
    %v2992 = vadd.f32 %v2982, %v2990
    %v2993 = vtanh.pop %v2992
    %2995 = vrot.lane.b32.xlu0 %v2993, 64
    %v2996 = vpop.permute.xlu0 %2995
    %v2998 = vmul.f32 %v2980, %v2996
    %v2999 = vld [vmem:[%s4] sm:$0xff]
    %v3000 = vld [vmem:[%s4 + $0x8] sm:$0xff]
    %v3001 = vld [vmem:[%s4 + $0x10] sm:$0xff]
    %v3002 = vld [vmem:[%s4 + $0x18] sm:$0xff]
    %3004 = vrot.lane.b32.xlu0 %v2998, 32
    %v3005 = vpop.permute.xlu0 %3004
    %v3006 = vsel %vm165, %v3005, 0
    %3008 = vmatprep.subr.mxu0 0.0
    %3009 = vmatpush1.msra.mxu0 %v2999
    %3010 = vmatprep.subr.mxu0 0.0
    %3011 = vmatpush1.msra.mxu0 %v3000
    %3012 = vmatprep.subr.mxu0 0.0
    %3013 = vmatpush1.msra.mxu0 %v3001
    %3014 = vmatprep.subr.mxu0 0.0
    %3015 = vmatpush1.msra.mxu0 %v3002
    %3016 = vmatprep.subr.mxu0 0.0
    %3017 = vmatpush1.msra.mxu0 0.0
    %3018 = vmatprep.subr.mxu0 0.0
    %3019 = vmatpush1.msra.mxu0 0.0
    %3020 = vmatprep.subr.mxu0 0.0
    %3021 = vmatpush1.msra.mxu0 0.0
    %3022 = vmatprep.subr.mxu0 0.0
    %3023 = vmatpush1.msra.mxu0 0.0
    %3024 = vmatprep.subr.mxu0 0.0
    %3025 = vmatpush1.msra.mxu0 0.0
    %3026 = vmatprep.subr.mxu0 0.0
    %3027 = vmatpush1.msra.mxu0 0.0
    %3028 = vmatprep.subr.mxu0 0.0
    %3029 = vmatpush1.msra.mxu0 0.0
    %3030 = vmatprep.subr.mxu0 0.0
    %3031 = vmatpush1.msra.mxu0 0.0
    %3032 = vmatprep.subr.mxu0 0.0
    %3033 = vmatpush1.msra.mxu0 0.0
    %3034 = vmatprep.subr.mxu0 0.0
    %3035 = vmatpush1.msra.mxu0 0.0
    %3036 = vmatprep.subr.mxu0 0.0
    %3037 = vmatpush1.msra.mxu0 0.0
    %3038 = vmatprep.subr.mxu0 0.0
    %3039 = vmatpush1.msra.mxu0 0.0
    %3040 = vmatprep.subr.mxu0 0.0
    %3041 = vmatpush1.msra.mxu0 0.0
    %3042 = vmatprep.subr.mxu0 0.0
    %3043 = vmatpush1.msra.mxu0 0.0
    %3044 = vmatprep.subr.mxu0 0.0
    %3045 = vmatpush1.msra.mxu0 0.0
    %3046 = vmatprep.subr.mxu0 0.0
    %3047 = vmatpush1.msra.mxu0 0.0
    %3048 = vmatprep.subr.mxu0 0.0
    %3049 = vmatpush1.msra.mxu0 0.0
    %3050 = vmatprep.subr.mxu0 0.0
    %3051 = vmatpush1.msra.mxu0 0.0
    %3052 = vmatprep.subr.mxu0 0.0
    %3053 = vmatpush1.msra.mxu0 0.0
    %3054 = vmatprep.subr.mxu0 0.0
    %3055 = vmatpush1.msra.mxu0 0.0
    %3056 = vmatprep.subr.mxu0 0.0
    %3057 = vmatpush1.msra.mxu0 0.0
    %3058 = vmatprep.subr.mxu0 0.0
    %3059 = vmatpush1.msra.mxu0 0.0
    %3060 = vmatprep.subr.mxu0 0.0
    %3061 = vmatpush1.msra.mxu0 0.0
    %3062 = vmatprep.subr.mxu0 0.0
    %3063 = vmatpush1.msra.mxu0 0.0
    %3064 = vmatprep.subr.mxu0 0.0
    %3065 = vmatpush1.msra.mxu0 0.0
    %3066 = vmatprep.subr.mxu0 0.0
    %3067 = vmatpush1.msra.mxu0 0.0
    %3068 = vmatprep.subr.mxu0 0.0
    %3069 = vmatpush1.msra.mxu0 0.0
    %3070 = vmatprep.subr.mxu0 0.0
    %3071 = vmatpush1.msra.mxu0 0.0
    %3072 = vmatprep.mubr.f32.mxu0 0.0
    %3073 = vmatmul.mubr.f32.gmra.mrb[0].mxu0 %v3006
    %v3074 = vpop.f32.mrb[0].mxu0
    %v3075 = vadd.f32 %v2801, %v3074
    %v3076 = vpop.f32.mrb[0].mxu0
    %3077 = vdwg.mxu0
    %v3078 = vmax.f32 %v3075, -1.0
    %v3079 = vmin.f32 %v3078, 1.0
    %3080 = vst [vmem:[%s6] sm:$0x3] %v3079
    %v3081 = vld [vmem:[#allocation3 + $0x200] sm:$0xff]
    %v3082 = vld [vmem:[#allocation3 + $0x208] sm:$0xff]
    %v3083 = vld [vmem:[#allocation3 + $0x210] sm:$0xff]
    %v3084 = vld [vmem:[#allocation3 + $0x218] sm:$0xff]
    %v3085 = vld [vmem:[#allocation3 + $0x220] sm:$0xff]
    %v3086 = vld [vmem:[#allocation3 + $0x228] sm:$0xff]
    %v3087 = vld [vmem:[#allocation3 + $0x230] sm:$0xff]
    %v3088 = vld [vmem:[#allocation3 + $0x238] sm:$0xff]
    %v3089 = vld [vmem:[#allocation3 + $0x240] sm:$0xff]
    %v3090 = vld [vmem:[#allocation3 + $0x248] sm:$0xff]
    %v3091 = vld [vmem:[#allocation3 + $0x250] sm:$0xff]
    %v3092 = vld [vmem:[#allocation3 + $0x258] sm:$0xff]
    %v3093 = vld [vmem:[#allocation3 + $0x260] sm:$0xff]
    %v3094 = vld [vmem:[#allocation3 + $0x268] sm:$0xff]
    %v3095 = vld [vmem:[#allocation3 + $0x270] sm:$0xff]
    %v3096 = vld [vmem:[#allocation3 + $0x278] sm:$0xff]
    %v3097 = vld [vmem:[%s2 + $0x80] sm:$0xff]
    %v3098 = vld [vmem:[%s2 + $0x88] sm:$0xff]
    %v3099 = vld [vmem:[%s2 + $0x90] sm:$0xff]
    %v3100 = vld [vmem:[%s2 + $0x98] sm:$0xff]
    %3102 = vrot.lane.b32.xlu0 %v2784, 32
    %v3103 = vpop.permute.xlu0 %3102
    %v3104 = vsel %vm165, %v3103, 0
    %3106 = vmatprep.subr.mxu0 0.0
    %3107 = vmatpush1.msra.mxu0 %v3097
    %3108 = vmatprep.subr.mxu0 0.0
    %3109 = vmatpush1.msra.mxu0 %v3098
    %3110 = vmatprep.subr.mxu0 0.0
    %3111 = vmatpush1.msra.mxu0 %v3099
    %3112 = vmatprep.subr.mxu0 0.0
    %3113 = vmatpush1.msra.mxu0 %v3100
    %3114 = vmatprep.subr.mxu0 0.0
    %3115 = vmatpush1.msra.mxu0 0.0
    %3116 = vmatprep.subr.mxu0 0.0
    %3117 = vmatpush1.msra.mxu0 0.0
    %3118 = vmatprep.subr.mxu0 0.0
    %3119 = vmatpush1.msra.mxu0 0.0
    %3120 = vmatprep.subr.mxu0 0.0
    %3121 = vmatpush1.msra.mxu0 0.0
    %3122 = vmatprep.subr.mxu0 0.0
    %3123 = vmatpush1.msra.mxu0 0.0
    %3124 = vmatprep.subr.mxu0 0.0
    %3125 = vmatpush1.msra.mxu0 0.0
    %3126 = vmatprep.subr.mxu0 0.0
    %3127 = vmatpush1.msra.mxu0 0.0
    %3128 = vmatprep.subr.mxu0 0.0
    %3129 = vmatpush1.msra.mxu0 0.0
    %3130 = vmatprep.subr.mxu0 0.0
    %3131 = vmatpush1.msra.mxu0 0.0
    %3132 = vmatprep.subr.mxu0 0.0
    %3133 = vmatpush1.msra.mxu0 0.0
    %3134 = vmatprep.subr.mxu0 0.0
    %3135 = vmatpush1.msra.mxu0 0.0
    %3136 = vmatprep.subr.mxu0 0.0
    %3137 = vmatpush1.msra.mxu0 0.0
    %3138 = vmatprep.subr.mxu0 0.0
    %3139 = vmatpush1.msra.mxu0 0.0
    %3140 = vmatprep.subr.mxu0 0.0
    %3141 = vmatpush1.msra.mxu0 0.0
    %3142 = vmatprep.subr.mxu0 0.0
    %3143 = vmatpush1.msra.mxu0 0.0
    %3144 = vmatprep.subr.mxu0 0.0
    %3145 = vmatpush1.msra.mxu0 0.0
    %3146 = vmatprep.subr.mxu0 0.0
    %3147 = vmatpush1.msra.mxu0 0.0
    %3148 = vmatprep.subr.mxu0 0.0
    %3149 = vmatpush1.msra.mxu0 0.0
    %3150 = vmatprep.subr.mxu0 0.0
    %3151 = vmatpush1.msra.mxu0 0.0
    %3152 = vmatprep.subr.mxu0 0.0
    %3153 = vmatpush1.msra.mxu0 0.0
    %3154 = vmatprep.subr.mxu0 0.0
    %3155 = vmatpush1.msra.mxu0 0.0
    %3156 = vmatprep.subr.mxu0 0.0
    %3157 = vmatpush1.msra.mxu0 0.0
    %3158 = vmatprep.subr.mxu0 0.0
    %3159 = vmatpush1.msra.mxu0 0.0
    %3160 = vmatprep.subr.mxu0 0.0
    %3161 = vmatpush1.msra.mxu0 0.0
    %3162 = vmatprep.subr.mxu0 0.0
    %3163 = vmatpush1.msra.mxu0 0.0
    %3164 = vmatprep.subr.mxu0 0.0
    %3165 = vmatpush1.msra.mxu0 0.0
    %3166 = vmatprep.subr.mxu0 0.0
    %3167 = vmatpush1.msra.mxu0 0.0
    %3168 = vmatprep.subr.mxu0 0.0
    %3169 = vmatpush1.msra.mxu0 0.0
    %3170 = vmatprep.mubr.f32.mxu0 0.0
    %3171 = vmatmul.mubr.f32.gmra.mrb[0].mxu0 %v3104
    %v3172 = vpop.f32.mrb[0].mxu0
    %v3173 = vadd.f32 0.0, %v3172
    %v3174 = vpop.f32.mrb[0].mxu0
    %3175 = vdwg.mxu0
    %3176 = vmatprep.subr.mxu0 0.0
    %3177 = vmatpush1.msra.mxu0 %v3081
    %3178 = vmatprep.subr.mxu0 0.0
    %3179 = vmatpush1.msra.mxu0 %v3082
    %3180 = vmatprep.subr.mxu0 0.0
    %3181 = vmatpush1.msra.mxu0 %v3083
    %3182 = vmatprep.subr.mxu0 0.0
    %3183 = vmatpush1.msra.mxu0 %v3084
    %3184 = vmatprep.subr.mxu0 0.0
    %3185 = vmatpush1.msra.mxu0 %v3085
    %3186 = vmatprep.subr.mxu0 0.0
    %3187 = vmatpush1.msra.mxu0 %v3086
    %3188 = vmatprep.subr.mxu0 0.0
    %3189 = vmatpush1.msra.mxu0 %v3087
    %3190 = vmatprep.subr.mxu0 0.0
    %3191 = vmatpush1.msra.mxu0 %v3088
    %3192 = vmatprep.subr.mxu0 0.0
    %3193 = vmatpush1.msra.mxu0 %v3089
    %3194 = vmatprep.subr.mxu0 0.0
    %3195 = vmatpush1.msra.mxu0 %v3090
    %3196 = vmatprep.subr.mxu0 0.0
    %3197 = vmatpush1.msra.mxu0 %v3091
    %3198 = vmatprep.subr.mxu0 0.0
    %3199 = vmatpush1.msra.mxu0 %v3092
    %3200 = vmatprep.subr.mxu0 0.0
    %3201 = vmatpush1.msra.mxu0 %v3093
    %3202 = vmatprep.subr.mxu0 0.0
    %3203 = vmatpush1.msra.mxu0 %v3094
    %3204 = vmatprep.subr.mxu0 0.0
    %3205 = vmatpush1.msra.mxu0 %v3095
    %3206 = vmatprep.subr.mxu0 0.0
    %3207 = vmatpush1.msra.mxu0 %v3096
    %3208 = vmatprep.subr.mxu0 0.0
    %3209 = vmatpush1.msra.mxu0 0.0
    %3210 = vmatprep.subr.mxu0 0.0
    %3211 = vmatpush1.msra.mxu0 0.0
    %3212 = vmatprep.subr.mxu0 0.0
    %3213 = vmatpush1.msra.mxu0 0.0
    %3214 = vmatprep.subr.mxu0 0.0
    %3215 = vmatpush1.msra.mxu0 0.0
    %3216 = vmatprep.subr.mxu0 0.0
    %3217 = vmatpush1.msra.mxu0 0.0
    %3218 = vmatprep.subr.mxu0 0.0
    %3219 = vmatpush1.msra.mxu0 0.0
    %3220 = vmatprep.subr.mxu0 0.0
    %3221 = vmatpush1.msra.mxu0 0.0
    %3222 = vmatprep.subr.mxu0 0.0
    %3223 = vmatpush1.msra.mxu0 0.0
    %3224 = vmatprep.subr.mxu0 0.0
    %3225 = vmatpush1.msra.mxu0 0.0
    %3226 = vmatprep.subr.mxu0 0.0
    %3227 = vmatpush1.msra.mxu0 0.0
    %3228 = vmatprep.subr.mxu0 0.0
    %3229 = vmatpush1.msra.mxu0 0.0
    %3230 = vmatprep.subr.mxu0 0.0
    %3231 = vmatpush1.msra.mxu0 0.0
    %3232 = vmatprep.subr.mxu0 0.0
    %3233 = vmatpush1.msra.mxu0 0.0
    %3234 = vmatprep.subr.mxu0 0.0
    %3235 = vmatpush1.msra.mxu0 0.0
    %3236 = vmatprep.subr.mxu0 0.0
    %3237 = vmatpush1.msra.mxu0 0.0
    %3238 = vmatprep.subr.mxu0 0.0
    %3239 = vmatpush1.msra.mxu0 0.0
    %3240 = vmatprep.mubr.f32.mxu0 0.0
    %3241 = vmatmul.mubr.f32.gmra.mrb[0].mxu0 %v2808
    %v3242 = vpop.f32.mrb[0].mxu0
    %v3243 = vadd.f32 %v3173, %v3242
    %v3244 = vpop.f32.mrb[0].mxu0
    %3245 = vdwg.mxu0
    %v3246 = vadd.f32 %v3243, %v2796
    %v3247 = vxor.u32 %v3246, 2147483648
    %v3248 = vmul.f32 %v3247, 1.442695
    %v3249 = vpow.pop %v3248
    %v3250 = vadd.f32 %v3249, 1.0
    %v3251 = vrcp.pop %v3250
    %v3252 = vmul.f32 1.0, %v3251
    %v3253 = vtanh.pop %v3246
    %v3254 = vmul.f32 %v3252, %v2778
    %3256 = vrot.lane.b32.xlu0 %v3253, 64
    %v3257 = vpop.permute.xlu0 %3256
    %v3259 = vmul.f32 %v3252, %v3257
    %3261 = vrot.lane.b32.xlu0 %v3259, 32
    %v3262 = vpop.permute.xlu0 %3261
    %v3264 = vadd.f32 %v3254, %v3262
    %v3265 = vtanh.pop %v3264
    %3267 = vrot.lane.b32.xlu0 %v3265, 64
    %v3268 = vpop.permute.xlu0 %3267
    %v3270 = vmul.f32 %v3252, %v3268
    %v3271 = vld [vmem:[%s4 + $0x20] sm:$0xff]
    %v3272 = vld [vmem:[%s4 + $0x28] sm:$0xff]
    %v3273 = vld [vmem:[%s4 + $0x30] sm:$0xff]
    %v3274 = vld [vmem:[%s4 + $0x38] sm:$0xff]
    %3276 = vrot.lane.b32.xlu0 %v3270, 32
    %v3277 = vpop.permute.xlu0 %3276
    %v3278 = vsel %vm165, %v3277, 0
    %3280 = vmatprep.subr.mxu0 0.0
    %3281 = vmatpush1.msra.mxu0 %v3271
    %3282 = vmatprep.subr.mxu0 0.0
    %3283 = vmatpush1.msra.mxu0 %v3272
    %3284 = vmatprep.subr.mxu0 0.0
    %3285 = vmatpush1.msra.mxu0 %v3273
    %3286 = vmatprep.subr.mxu0 0.0
    %3287 = vmatpush1.msra.mxu0 %v3274
    %3288 = vmatprep.subr.mxu0 0.0
    %3289 = vmatpush1.msra.mxu0 0.0
    %3290 = vmatprep.subr.mxu0 0.0
    %3291 = vmatpush1.msra.mxu0 0.0
    %3292 = vmatprep.subr.mxu0 0.0
    %3293 = vmatpush1.msra.mxu0 0.0
    %3294 = vmatprep.subr.mxu0 0.0
    %3295 = vmatpush1.msra.mxu0 0.0
    %3296 = vmatprep.subr.mxu0 0.0
    %3297 = vmatpush1.msra.mxu0 0.0
    %3298 = vmatprep.subr.mxu0 0.0
    %3299 = vmatpush1.msra.mxu0 0.0
    %3300 = vmatprep.subr.mxu0 0.0
    %3301 = vmatpush1.msra.mxu0 0.0
    %3302 = vmatprep.subr.mxu0 0.0
    %3303 = vmatpush1.msra.mxu0 0.0
    %3304 = vmatprep.subr.mxu0 0.0
    %3305 = vmatpush1.msra.mxu0 0.0
    %3306 = vmatprep.subr.mxu0 0.0
    %3307 = vmatpush1.msra.mxu0 0.0
    %3308 = vmatprep.subr.mxu0 0.0
    %3309 = vmatpush1.msra.mxu0 0.0
    %3310 = vmatprep.subr.mxu0 0.0
    %3311 = vmatpush1.msra.mxu0 0.0
    %3312 = vmatprep.subr.mxu0 0.0
    %3313 = vmatpush1.msra.mxu0 0.0
    %3314 = vmatprep.subr.mxu0 0.0
    %3315 = vmatpush1.msra.mxu0 0.0
    %3316 = vmatprep.subr.mxu0 0.0
    %3317 = vmatpush1.msra.mxu0 0.0
    %3318 = vmatprep.subr.mxu0 0.0
    %3319 = vmatpush1.msra.mxu0 0.0
    %3320 = vmatprep.subr.mxu0 0.0
    %3321 = vmatpush1.msra.mxu0 0.0
    %3322 = vmatprep.subr.mxu0 0.0
    %3323 = vmatpush1.msra.mxu0 0.0
    %3324 = vmatprep.subr.mxu0 0.0
    %3325 = vmatpush1.msra.mxu0 0.0
    %3326 = vmatprep.subr.mxu0 0.0
    %3327 = vmatpush1.msra.mxu0 0.0
    %3328 = vmatprep.subr.mxu0 0.0
    %3329 = vmatpush1.msra.mxu0 0.0
    %3330 = vmatprep.subr.mxu0 0.0
    %3331 = vmatpush1.msra.mxu0 0.0
    %3332 = vmatprep.subr.mxu0 0.0
    %3333 = vmatpush1.msra.mxu0 0.0
    %3334 = vmatprep.subr.mxu0 0.0
    %3335 = vmatpush1.msra.mxu0 0.0
    %3336 = vmatprep.subr.mxu0 0.0
    %3337 = vmatpush1.msra.mxu0 0.0
    %3338 = vmatprep.subr.mxu0 0.0
    %3339 = vmatpush1.msra.mxu0 0.0
    %3340 = vmatprep.subr.mxu0 0.0
    %3341 = vmatpush1.msra.mxu0 0.0
    %3342 = vmatprep.subr.mxu0 0.0
    %3343 = vmatpush1.msra.mxu0 0.0
    %3344 = vmatprep.mubr.f32.mxu0 0.0
    %3345 = vmatmul.mubr.f32.gmra.mrb[0].mxu0 %v3278
    %v3346 = vpop.f32.mrb[0].mxu0
    %v3347 = vadd.f32 %v2806, %v3346
    %v3348 = vpop.f32.mrb[0].mxu0
    %3349 = vdwg.mxu0
    %v3350 = vxor.u32 %v3347, 2147483648
    %v3351 = vmul.f32 %v3350, 1.442695
    %v3352 = vpow.pop %v3351
    %v3353 = vadd.f32 %v3352, 1.0
    %v3354 = vrcp.pop %v3353
    %v3355 = vmul.f32 1.0, %v3354
    %3356 = vst [vmem:[%s6 + $0x10] sm:$0x3] %v3355
    %v3357 = vld [vmem:[#allocation3 + $0x180] sm:$0xff]
    %v3358 = vld [vmem:[#allocation3 + $0x188] sm:$0xff]
    %v3359 = vld [vmem:[#allocation3 + $0x190] sm:$0xff]
    %v3360 = vld [vmem:[#allocation3 + $0x198] sm:$0xff]
    %v3361 = vld [vmem:[#allocation3 + $0x1a0] sm:$0xff]
    %v3362 = vld [vmem:[#allocation3 + $0x1a8] sm:$0xff]
    %v3363 = vld [vmem:[#allocation3 + $0x1b0] sm:$0xff]
    %v3364 = vld [vmem:[#allocation3 + $0x1b8] sm:$0xff]
    %v3365 = vld [vmem:[#allocation3 + $0x1c0] sm:$0xff]
    %v3366 = vld [vmem:[#allocation3 + $0x1c8] sm:$0xff]
    %v3367 = vld [vmem:[#allocation3 + $0x1d0] sm:$0xff]
    %v3368 = vld [vmem:[#allocation3 + $0x1d8] sm:$0xff]
    %v3369 = vld [vmem:[#allocation3 + $0x1e0] sm:$0xff]
    %v3370 = vld [vmem:[#allocation3 + $0x1e8] sm:$0xff]
    %v3371 = vld [vmem:[#allocation3 + $0x1f0] sm:$0xff]
    %v3372 = vld [vmem:[#allocation3 + $0x1f8] sm:$0xff]
    %v3373 = vld [vmem:[%s2 + $0x60] sm:$0xff]
    %v3374 = vld [vmem:[%s2 + $0x68] sm:$0xff]
    %v3375 = vld [vmem:[%s2 + $0x70] sm:$0xff]
    %v3376 = vld [vmem:[%s2 + $0x78] sm:$0xff]
    %3377 = vmatprep.subr.mxu0 0.0
    %3378 = vmatpush1.msra.mxu0 %v3373
    %3379 = vmatprep.subr.mxu0 0.0
    %3380 = vmatpush1.msra.mxu0 %v3374
    %3381 = vmatprep.subr.mxu0 0.0
    %3382 = vmatpush1.msra.mxu0 %v3375
    %3383 = vmatprep.subr.mxu0 0.0
    %3384 = vmatpush1.msra.mxu0 %v3376
    %3385 = vmatprep.subr.mxu0 0.0
    %3386 = vmatpush1.msra.mxu0 0.0
    %3387 = vmatprep.subr.mxu0 0.0
    %3388 = vmatpush1.msra.mxu0 0.0
    %3389 = vmatprep.subr.mxu0 0.0
    %3390 = vmatpush1.msra.mxu0 0.0
    %3391 = vmatprep.subr.mxu0 0.0
    %3392 = vmatpush1.msra.mxu0 0.0
    %3393 = vmatprep.subr.mxu0 0.0
    %3394 = vmatpush1.msra.mxu0 0.0
    %3395 = vmatprep.subr.mxu0 0.0
    %3396 = vmatpush1.msra.mxu0 0.0
    %3397 = vmatprep.subr.mxu0 0.0
    %3398 = vmatpush1.msra.mxu0 0.0
    %3399 = vmatprep.subr.mxu0 0.0
    %3400 = vmatpush1.msra.mxu0 0.0
    %3401 = vmatprep.subr.mxu0 0.0
    %3402 = vmatpush1.msra.mxu0 0.0
    %3403 = vmatprep.subr.mxu0 0.0
    %3404 = vmatpush1.msra.mxu0 0.0
    %3405 = vmatprep.subr.mxu0 0.0
    %3406 = vmatpush1.msra.mxu0 0.0
    %3407 = vmatprep.subr.mxu0 0.0
    %3408 = vmatpush1.msra.mxu0 0.0
    %3409 = vmatprep.subr.mxu0 0.0
    %3410 = vmatpush1.msra.mxu0 0.0
    %3411 = vmatprep.subr.mxu0 0.0
    %3412 = vmatpush1.msra.mxu0 0.0
    %3413 = vmatprep.subr.mxu0 0.0
    %3414 = vmatpush1.msra.mxu0 0.0
    %3415 = vmatprep.subr.mxu0 0.0
    %3416 = vmatpush1.msra.mxu0 0.0
    %3417 = vmatprep.subr.mxu0 0.0
    %3418 = vmatpush1.msra.mxu0 0.0
    %3419 = vmatprep.subr.mxu0 0.0
    %3420 = vmatpush1.msra.mxu0 0.0
    %3421 = vmatprep.subr.mxu0 0.0
    %3422 = vmatpush1.msra.mxu0 0.0
    %3423 = vmatprep.subr.mxu0 0.0
    %3424 = vmatpush1.msra.mxu0 0.0
    %3425 = vmatprep.subr.mxu0 0.0
    %3426 = vmatpush1.msra.mxu0 0.0
    %3427 = vmatprep.subr.mxu0 0.0
    %3428 = vmatpush1.msra.mxu0 0.0
    %3429 = vmatprep.subr.mxu0 0.0
    %3430 = vmatpush1.msra.mxu0 0.0
    %3431 = vmatprep.subr.mxu0 0.0
    %3432 = vmatpush1.msra.mxu0 0.0
    %3433 = vmatprep.subr.mxu0 0.0
    %3434 = vmatpush1.msra.mxu0 0.0
    %3435 = vmatprep.subr.mxu0 0.0
    %3436 = vmatpush1.msra.mxu0 0.0
    %3437 = vmatprep.subr.mxu0 0.0
    %3438 = vmatpush1.msra.mxu0 0.0
    %3439 = vmatprep.subr.mxu0 0.0
    %3440 = vmatpush1.msra.mxu0 0.0
    %3441 = vmatprep.mubr.f32.mxu0 0.0
    %3442 = vmatmul.mubr.f32.gmra.mrb[0].mxu0 %v3006
    %v3443 = vpop.f32.mrb[0].mxu0
    %v3444 = vadd.f32 0.0, %v3443
    %v3445 = vpop.f32.mrb[0].mxu0
    %3446 = vdwg.mxu0
    %3447 = vmatprep.subr.mxu0 0.0
    %3448 = vmatpush1.msra.mxu0 %v3357
    %3449 = vmatprep.subr.mxu0 0.0
    %3450 = vmatpush1.msra.mxu0 %v3358
    %3451 = vmatprep.subr.mxu0 0.0
    %3452 = vmatpush1.msra.mxu0 %v3359
    %3453 = vmatprep.subr.mxu0 0.0
    %3454 = vmatpush1.msra.mxu0 %v3360
    %3455 = vmatprep.subr.mxu0 0.0
    %3456 = vmatpush1.msra.mxu0 %v3361
    %3457 = vmatprep.subr.mxu0 0.0
    %3458 = vmatpush1.msra.mxu0 %v3362
    %3459 = vmatprep.subr.mxu0 0.0
    %3460 = vmatpush1.msra.mxu0 %v3363
    %3461 = vmatprep.subr.mxu0 0.0
    %3462 = vmatpush1.msra.mxu0 %v3364
    %3463 = vmatprep.subr.mxu0 0.0
    %3464 = vmatpush1.msra.mxu0 %v3365
    %3465 = vmatprep.subr.mxu0 0.0
    %3466 = vmatpush1.msra.mxu0 %v3366
    %3467 = vmatprep.subr.mxu0 0.0
    %3468 = vmatpush1.msra.mxu0 %v3367
    %3469 = vmatprep.subr.mxu0 0.0
    %3470 = vmatpush1.msra.mxu0 %v3368
    %3471 = vmatprep.subr.mxu0 0.0
    %3472 = vmatpush1.msra.mxu0 %v3369
    %3473 = vmatprep.subr.mxu0 0.0
    %3474 = vmatpush1.msra.mxu0 %v3370
    %3475 = vmatprep.subr.mxu0 0.0
    %3476 = vmatpush1.msra.mxu0 %v3371
    %3477 = vmatprep.subr.mxu0 0.0
    %3478 = vmatpush1.msra.mxu0 %v3372
    %3479 = vmatprep.subr.mxu0 0.0
    %3480 = vmatpush1.msra.mxu0 0.0
    %3481 = vmatprep.subr.mxu0 0.0
    %3482 = vmatpush1.msra.mxu0 0.0
    %3483 = vmatprep.subr.mxu0 0.0
    %3484 = vmatpush1.msra.mxu0 0.0
    %3485 = vmatprep.subr.mxu0 0.0
    %3486 = vmatpush1.msra.mxu0 0.0
    %3487 = vmatprep.subr.mxu0 0.0
    %3488 = vmatpush1.msra.mxu0 0.0
    %3489 = vmatprep.subr.mxu0 0.0
    %3490 = vmatpush1.msra.mxu0 0.0
    %3491 = vmatprep.subr.mxu0 0.0
    %3492 = vmatpush1.msra.mxu0 0.0
    %3493 = vmatprep.subr.mxu0 0.0
    %3494 = vmatpush1.msra.mxu0 0.0
    %3495 = vmatprep.subr.mxu0 0.0
    %3496 = vmatpush1.msra.mxu0 0.0
    %3497 = vmatprep.subr.mxu0 0.0
    %3498 = vmatpush1.msra.mxu0 0.0
    %3499 = vmatprep.subr.mxu0 0.0
    %3500 = vmatpush1.msra.mxu0 0.0
    %3501 = vmatprep.subr.mxu0 0.0
    %3502 = vmatpush1.msra.mxu0 0.0
    %3503 = vmatprep.subr.mxu0 0.0
    %3504 = vmatpush1.msra.mxu0 0.0
    %3505 = vmatprep.subr.mxu0 0.0
    %3506 = vmatpush1.msra.mxu0 0.0
    %3507 = vmatprep.subr.mxu0 0.0
    %3508 = vmatpush1.msra.mxu0 0.0
    %3509 = vmatprep.subr.mxu0 0.0
    %3510 = vmatpush1.msra.mxu0 0.0
    %3511 = vmatprep.mubr.f32.mxu0 0.0
    %3512 = vmatmul.mubr.f32.gmra.mrb[0].mxu0 %v3079
    %v3513 = vpop.f32.mrb[0].mxu0
    %v3514 = vadd.f32 %v3444, %v3513
    %v3515 = vpop.f32.mrb[0].mxu0
    %3516 = vdwg.mxu0
    %v3517 = vadd.f32 %v3514, %v2791
    %v3518 = vxor.u32 %v3517, 2147483648
    %v3519 = vmul.f32 %v3518, 1.442695
    %v3520 = vpow.pop %v3519
    %v3521 = vadd.f32 %v3520, 1.0
    %v3522 = vrcp.pop %v3521
    %v3523 = vmul.f32 1.0, %v3522
    %v3524 = vtanh.pop %v3517
    %v3525 = vmul.f32 %v3523, %v2992
    %3527 = vrot.lane.b32.xlu0 %v3524, 64
    %v3528 = vpop.permute.xlu0 %3527
    %v3530 = vmul.f32 %v3523, %v3528
    %3532 = vrot.lane.b32.xlu0 %v3530, 32
    %v3533 = vpop.permute.xlu0 %3532
    %v3535 = vadd.f32 %v3525, %v3533
    %v3536 = vtanh.pop %v3535
    %3538 = vrot.lane.b32.xlu0 %v3536, 64
    %v3539 = vpop.permute.xlu0 %3538
    %v3541 = vmul.f32 %v3523, %v3539
    %v3542 = vld [vmem:[%s4] sm:$0xff]
    %v3543 = vld [vmem:[%s4 + $0x8] sm:$0xff]
    %v3544 = vld [vmem:[%s4 + $0x10] sm:$0xff]
    %v3545 = vld [vmem:[%s4 + $0x18] sm:$0xff]
    %3547 = vrot.lane.b32.xlu0 %v3541, 32
    %v3548 = vpop.permute.xlu0 %3547
    %v3549 = vsel %vm165, %v3548, 0
    %3551 = vmatprep.subr.mxu0 0.0
    %3552 = vmatpush1.msra.mxu0 %v3542
    %3553 = vmatprep.subr.mxu0 0.0
    %3554 = vmatpush1.msra.mxu0 %v3543
    %3555 = vmatprep.subr.mxu0 0.0
    %3556 = vmatpush1.msra.mxu0 %v3544
    %3557 = vmatprep.subr.mxu0 0.0
    %3558 = vmatpush1.msra.mxu0 %v3545
    %3559 = vmatprep.subr.mxu0 0.0
    %3560 = vmatpush1.msra.mxu0 0.0
    %3561 = vmatprep.subr.mxu0 0.0
    %3562 = vmatpush1.msra.mxu0 0.0
    %3563 = vmatprep.subr.mxu0 0.0
    %3564 = vmatpush1.msra.mxu0 0.0
    %3565 = vmatprep.subr.mxu0 0.0
    %3566 = vmatpush1.msra.mxu0 0.0
    %3567 = vmatprep.subr.mxu0 0.0
    %3568 = vmatpush1.msra.mxu0 0.0
    %3569 = vmatprep.subr.mxu0 0.0
    %3570 = vmatpush1.msra.mxu0 0.0
    %3571 = vmatprep.subr.mxu0 0.0
    %3572 = vmatpush1.msra.mxu0 0.0
    %3573 = vmatprep.subr.mxu0 0.0
    %3574 = vmatpush1.msra.mxu0 0.0
    %3575 = vmatprep.subr.mxu0 0.0
    %3576 = vmatpush1.msra.mxu0 0.0
    %3577 = vmatprep.subr.mxu0 0.0
    %3578 = vmatpush1.msra.mxu0 0.0
    %3579 = vmatprep.subr.mxu0 0.0
    %3580 = vmatpush1.msra.mxu0 0.0
    %3581 = vmatprep.subr.mxu0 0.0
    %3582 = vmatpush1.msra.mxu0 0.0
    %3583 = vmatprep.subr.mxu0 0.0
    %3584 = vmatpush1.msra.mxu0 0.0
    %3585 = vmatprep.subr.mxu0 0.0
    %3586 = vmatpush1.msra.mxu0 0.0
    %3587 = vmatprep.subr.mxu0 0.0
    %3588 = vmatpush1.msra.mxu0 0.0
    %3589 = vmatprep.subr.mxu0 0.0
    %3590 = vmatpush1.msra.mxu0 0.0
    %3591 = vmatprep.subr.mxu0 0.0
    %3592 = vmatpush1.msra.mxu0 0.0
    %3593 = vmatprep.subr.mxu0 0.0
    %3594 = vmatpush1.msra.mxu0 0.0
    %3595 = vmatprep.subr.mxu0 0.0
    %3596 = vmatpush1.msra.mxu0 0.0
    %3597 = vmatprep.subr.mxu0 0.0
    %3598 = vmatpush1.msra.mxu0 0.0
    %3599 = vmatprep.subr.mxu0 0.0
    %3600 = vmatpush1.msra.mxu0 0.0
    %3601 = vmatprep.subr.mxu0 0.0
    %3602 = vmatpush1.msra.mxu0 0.0
    %3603 = vmatprep.subr.mxu0 0.0
    %3604 = vmatpush1.msra.mxu0 0.0
    %3605 = vmatprep.subr.mxu0 0.0
    %3606 = vmatpush1.msra.mxu0 0.0
    %3607 = vmatprep.subr.mxu0 0.0
    %3608 = vmatpush1.msra.mxu0 0.0
    %3609 = vmatprep.subr.mxu0 0.0
    %3610 = vmatpush1.msra.mxu0 0.0
    %3611 = vmatprep.subr.mxu0 0.0
    %3612 = vmatpush1.msra.mxu0 0.0
    %3613 = vmatprep.subr.mxu0 0.0
    %3614 = vmatpush1.msra.mxu0 0.0
    %3615 = vmatprep.mubr.f32.mxu0 0.0
    %3616 = vmatmul.mubr.f32.gmra.mrb[0].mxu0 %v3549
    %v3617 = vpop.f32.mrb[0].mxu0
    %v3618 = vadd.f32 %v2801, %v3617
    %v3619 = vpop.f32.mrb[0].mxu0
    %3620 = vdwg.mxu0
    %v3621 = vmax.f32 %v3618, -1.0
    %v3622 = vmin.f32 %v3621, 1.0
    %3623 = vst [vmem:[%s6 + $0x2] sm:$0x3] %v3622
    %v3624 = vld [vmem:[#allocation3 + $0x200] sm:$0xff]
    %v3625 = vld [vmem:[#allocation3 + $0x208] sm:$0xff]
    %v3626 = vld [vmem:[#allocation3 + $0x210] sm:$0xff]
    %v3627 = vld [vmem:[#allocation3 + $0x218] sm:$0xff]
    %v3628 = vld [vmem:[#allocation3 + $0x220] sm:$0xff]
    %v3629 = vld [vmem:[#allocation3 + $0x228] sm:$0xff]
    %v3630 = vld [vmem:[#allocation3 + $0x230] sm:$0xff]
    %v3631 = vld [vmem:[#allocation3 + $0x238] sm:$0xff]
    %v3632 = vld [vmem:[#allocation3 + $0x240] sm:$0xff]
    %v3633 = vld [vmem:[#allocation3 + $0x248] sm:$0xff]
    %v3634 = vld [vmem:[#allocation3 + $0x250] sm:$0xff]
    %v3635 = vld [vmem:[#allocation3 + $0x258] sm:$0xff]
    %v3636 = vld [vmem:[#allocation3 + $0x260] sm:$0xff]
    %v3637 = vld [vmem:[#allocation3 + $0x268] sm:$0xff]
    %v3638 = vld [vmem:[#allocation3 + $0x270] sm:$0xff]
    %v3639 = vld [vmem:[#allocation3 + $0x278] sm:$0xff]
    %v3640 = vld [vmem:[%s2 + $0x80] sm:$0xff]
    %v3641 = vld [vmem:[%s2 + $0x88] sm:$0xff]
    %v3642 = vld [vmem:[%s2 + $0x90] sm:$0xff]
    %v3643 = vld [vmem:[%s2 + $0x98] sm:$0xff]
    %3644 = vmatprep.subr.mxu0 0.0
    %3645 = vmatpush1.msra.mxu0 %v3640
    %3646 = vmatprep.subr.mxu0 0.0
    %3647 = vmatpush1.msra.mxu0 %v3641
    %3648 = vmatprep.subr.mxu0 0.0
    %3649 = vmatpush1.msra.mxu0 %v3642
    %3650 = vmatprep.subr.mxu0 0.0
    %3651 = vmatpush1.msra.mxu0 %v3643
    %3652 = vmatprep.subr.mxu0 0.0
    %3653 = vmatpush1.msra.mxu0 0.0
    %3654 = vmatprep.subr.mxu0 0.0
    %3655 = vmatpush1.msra.mxu0 0.0
    %3656 = vmatprep.subr.mxu0 0.0
    %3657 = vmatpush1.msra.mxu0 0.0
    %3658 = vmatprep.subr.mxu0 0.0
    %3659 = vmatpush1.msra.mxu0 0.0
    %3660 = vmatprep.subr.mxu0 0.0
    %3661 = vmatpush1.msra.mxu0 0.0
    %3662 = vmatprep.subr.mxu0 0.0
    %3663 = vmatpush1.msra.mxu0 0.0
    %3664 = vmatprep.subr.mxu0 0.0
    %3665 = vmatpush1.msra.mxu0 0.0
    %3666 = vmatprep.subr.mxu0 0.0
    %3667 = vmatpush1.msra.mxu0 0.0
    %3668 = vmatprep.subr.mxu0 0.0
    %3669 = vmatpush1.msra.mxu0 0.0
    %3670 = vmatprep.subr.mxu0 0.0
    %3671 = vmatpush1.msra.mxu0 0.0
    %3672 = vmatprep.subr.mxu0 0.0
    %3673 = vmatpush1.msra.mxu0 0.0
    %3674 = vmatprep.subr.mxu0 0.0
    %3675 = vmatpush1.msra.mxu0 0.0
    %3676 = vmatprep.subr.mxu0 0.0
    %3677 = vmatpush1.msra.mxu0 0.0
    %3678 = vmatprep.subr.mxu0 0.0
    %3679 = vmatpush1.msra.mxu0 0.0
    %3680 = vmatprep.subr.mxu0 0.0
    %3681 = vmatpush1.msra.mxu0 0.0
    %3682 = vmatprep.subr.mxu0 0.0
    %3683 = vmatpush1.msra.mxu0 0.0
    %3684 = vmatprep.subr.mxu0 0.0
    %3685 = vmatpush1.msra.mxu0 0.0
    %3686 = vmatprep.subr.mxu0 0.0
    %3687 = vmatpush1.msra.mxu0 0.0
    %3688 = vmatprep.subr.mxu0 0.0
    %3689 = vmatpush1.msra.mxu0 0.0
    %3690 = vmatprep.subr.mxu0 0.0
    %3691 = vmatpush1.msra.mxu0 0.0
    %3692 = vmatprep.subr.mxu0 0.0
    %3693 = vmatpush1.msra.mxu0 0.0
    %3694 = vmatprep.subr.mxu0 0.0
    %3695 = vmatpush1.msra.mxu0 0.0
    %3696 = vmatprep.subr.mxu0 0.0
    %3697 = vmatpush1.msra.mxu0 0.0
    %3698 = vmatprep.subr.mxu0 0.0
    %3699 = vmatpush1.msra.mxu0 0.0
    %3700 = vmatprep.subr.mxu0 0.0
    %3701 = vmatpush1.msra.mxu0 0.0
    %3702 = vmatprep.subr.mxu0 0.0
    %3703 = vmatpush1.msra.mxu0 0.0
    %3704 = vmatprep.subr.mxu0 0.0
    %3705 = vmatpush1.msra.mxu0 0.0
    %3706 = vmatprep.subr.mxu0 0.0
    %3707 = vmatpush1.msra.mxu0 0.0
    %3708 = vmatprep.mubr.f32.mxu0 0.0
    %3709 = vmatmul.mubr.f32.gmra.mrb[0].mxu0 %v3278
    %v3710 = vpop.f32.mrb[0].mxu0
    %v3711 = vadd.f32 0.0, %v3710
    %v3712 = vpop.f32.mrb[0].mxu0
    %3713 = vdwg.mxu0
    %3714 = vmatprep.subr.mxu0 0.0
    %3715 = vmatpush1.msra.mxu0 %v3624
    %3716 = vmatprep.subr.mxu0 0.0
    %3717 = vmatpush1.msra.mxu0 %v3625
    %3718 = vmatprep.subr.mxu0 0.0
    %3719 = vmatpush1.msra.mxu0 %v3626
    %3720 = vmatprep.subr.mxu0 0.0
    %3721 = vmatpush1.msra.mxu0 %v3627
    %3722 = vmatprep.subr.mxu0 0.0
    %3723 = vmatpush1.msra.mxu0 %v3628
    %3724 = vmatprep.subr.mxu0 0.0
    %3725 = vmatpush1.msra.mxu0 %v3629
    %3726 = vmatprep.subr.mxu0 0.0
    %3727 = vmatpush1.msra.mxu0 %v3630
    %3728 = vmatprep.subr.mxu0 0.0
    %3729 = vmatpush1.msra.mxu0 %v3631
    %3730 = vmatprep.subr.mxu0 0.0
    %3731 = vmatpush1.msra.mxu0 %v3632
    %3732 = vmatprep.subr.mxu0 0.0
    %3733 = vmatpush1.msra.mxu0 %v3633
    %3734 = vmatprep.subr.mxu0 0.0
    %3735 = vmatpush1.msra.mxu0 %v3634
    %3736 = vmatprep.subr.mxu0 0.0
    %3737 = vmatpush1.msra.mxu0 %v3635
    %3738 = vmatprep.subr.mxu0 0.0
    %3739 = vmatpush1.msra.mxu0 %v3636
    %3740 = vmatprep.subr.mxu0 0.0
    %3741 = vmatpush1.msra.mxu0 %v3637
    %3742 = vmatprep.subr.mxu0 0.0
    %3743 = vmatpush1.msra.mxu0 %v3638
    %3744 = vmatprep.subr.mxu0 0.0
    %3745 = vmatpush1.msra.mxu0 %v3639
    %3746 = vmatprep.subr.mxu0 0.0
    %3747 = vmatpush1.msra.mxu0 0.0
    %3748 = vmatprep.subr.mxu0 0.0
    %3749 = vmatpush1.msra.mxu0 0.0
    %3750 = vmatprep.subr.mxu0 0.0
    %3751 = vmatpush1.msra.mxu0 0.0
    %3752 = vmatprep.subr.mxu0 0.0
    %3753 = vmatpush1.msra.mxu0 0.0
    %3754 = vmatprep.subr.mxu0 0.0
    %3755 = vmatpush1.msra.mxu0 0.0
    %3756 = vmatprep.subr.mxu0 0.0
    %3757 = vmatpush1.msra.mxu0 0.0
    %3758 = vmatprep.subr.mxu0 0.0
    %3759 = vmatpush1.msra.mxu0 0.0
    %3760 = vmatprep.subr.mxu0 0.0
    %3761 = vmatpush1.msra.mxu0 0.0
    %3762 = vmatprep.subr.mxu0 0.0
    %3763 = vmatpush1.msra.mxu0 0.0
    %3764 = vmatprep.subr.mxu0 0.0
    %3765 = vmatpush1.msra.mxu0 0.0
    %3766 = vmatprep.subr.mxu0 0.0
    %3767 = vmatpush1.msra.mxu0 0.0
    %3768 = vmatprep.subr.mxu0 0.0
    %3769 = vmatpush1.msra.mxu0 0.0
    %3770 = vmatprep.subr.mxu0 0.0
    %3771 = vmatpush1.msra.mxu0 0.0
    %3772 = vmatprep.subr.mxu0 0.0
    %3773 = vmatpush1.msra.mxu0 0.0
    %3774 = vmatprep.subr.mxu0 0.0
    %3775 = vmatpush1.msra.mxu0 0.0
    %3776 = vmatprep.subr.mxu0 0.0
    %3777 = vmatpush1.msra.mxu0 0.0
    %3778 = vmatprep.mubr.f32.mxu0 0.0
    %3779 = vmatmul.mubr.f32.gmra.mrb[0].mxu0 %v3355
    %v3780 = vpop.f32.mrb[0].mxu0
    %v3781 = vadd.f32 %v3711, %v3780
    %v3782 = vpop.f32.mrb[0].mxu0
    %3783 = vdwg.mxu0
    %v3784 = vadd.f32 %v3781, %v2796
    %v3785 = vxor.u32 %v3784, 2147483648
    %v3786 = vmul.f32 %v3785, 1.442695
    %v3787 = vpow.pop %v3786
    %v3788 = vadd.f32 %v3787, 1.0
    %v3789 = vrcp.pop %v3788
    %v3790 = vmul.f32 1.0, %v3789
    %v3791 = vtanh.pop %v3784
    %v3792 = vmul.f32 %v3790, %v3264
    %3794 = vrot.lane.b32.xlu0 %v3791, 64
    %v3795 = vpop.permute.xlu0 %3794
    %v3797 = vmul.f32 %v3790, %v3795
    %3799 = vrot.lane.b32.xlu0 %v3797, 32
    %v3800 = vpop.permute.xlu0 %3799
    %v3802 = vadd.f32 %v3792, %v3800
    %v3803 = vtanh.pop %v3802
    %3805 = vrot.lane.b32.xlu0 %v3803, 64
    %v3806 = vpop.permute.xlu0 %3805
    %v3808 = vmul.f32 %v3790, %v3806
    %v3809 = vld [vmem:[%s4 + $0x20] sm:$0xff]
    %v3810 = vld [vmem:[%s4 + $0x28] sm:$0xff]
    %v3811 = vld [vmem:[%s4 + $0x30] sm:$0xff]
    %v3812 = vld [vmem:[%s4 + $0x38] sm:$0xff]
    %3814 = vrot.lane.b32.xlu0 %v3808, 32
    %v3815 = vpop.permute.xlu0 %3814
    %v3816 = vsel %vm165, %v3815, 0
    %3818 = vmatprep.subr.mxu0 0.0
    %3819 = vmatpush1.msra.mxu0 %v3809
    %3820 = vmatprep.subr.mxu0 0.0
    %3821 = vmatpush1.msra.mxu0 %v3810
    %3822 = vmatprep.subr.mxu0 0.0
    %3823 = vmatpush1.msra.mxu0 %v3811
    %3824 = vmatprep.subr.mxu0 0.0
    %3825 = vmatpush1.msra.mxu0 %v3812
    %3826 = vmatprep.subr.mxu0 0.0
    %3827 = vmatpush1.msra.mxu0 0.0
    %3828 = vmatprep.subr.mxu0 0.0
    %3829 = vmatpush1.msra.mxu0 0.0
    %3830 = vmatprep.subr.mxu0 0.0
    %3831 = vmatpush1.msra.mxu0 0.0
    %3832 = vmatprep.subr.mxu0 0.0
    %3833 = vmatpush1.msra.mxu0 0.0
    %3834 = vmatprep.subr.mxu0 0.0
    %3835 = vmatpush1.msra.mxu0 0.0
    %3836 = vmatprep.subr.mxu0 0.0
    %3837 = vmatpush1.msra.mxu0 0.0
    %3838 = vmatprep.subr.mxu0 0.0
    %3839 = vmatpush1.msra.mxu0 0.0
    %3840 = vmatprep.subr.mxu0 0.0
    %3841 = vmatpush1.msra.mxu0 0.0
    %3842 = vmatprep.subr.mxu0 0.0
    %3843 = vmatpush1.msra.mxu0 0.0
    %3844 = vmatprep.subr.mxu0 0.0
    %3845 = vmatpush1.msra.mxu0 0.0
    %3846 = vmatprep.subr.mxu0 0.0
    %3847 = vmatpush1.msra.mxu0 0.0
    %3848 = vmatprep.subr.mxu0 0.0
    %3849 = vmatpush1.msra.mxu0 0.0
    %3850 = vmatprep.subr.mxu0 0.0
    %3851 = vmatpush1.msra.mxu0 0.0
    %3852 = vmatprep.subr.mxu0 0.0
    %3853 = vmatpush1.msra.mxu0 0.0
    %3854 = vmatprep.subr.mxu0 0.0
    %3855 = vmatpush1.msra.mxu0 0.0
    %3856 = vmatprep.subr.mxu0 0.0
    %3857 = vmatpush1.msra.mxu0 0.0
    %3858 = vmatprep.subr.mxu0 0.0
    %3859 = vmatpush1.msra.mxu0 0.0
    %3860 = vmatprep.subr.mxu0 0.0
    %3861 = vmatpush1.msra.mxu0 0.0
    %3862 = vmatprep.subr.mxu0 0.0
    %3863 = vmatpush1.msra.mxu0 0.0
    %3864 = vmatprep.subr.mxu0 0.0
    %3865 = vmatpush1.msra.mxu0 0.0
    %3866 = vmatprep.subr.mxu0 0.0
    %3867 = vmatpush1.msra.mxu0 0.0
    %3868 = vmatprep.subr.mxu0 0.0
    %3869 = vmatpush1.msra.mxu0 0.0
    %3870 = vmatprep.subr.mxu0 0.0
    %3871 = vmatpush1.msra.mxu0 0.0
    %3872 = vmatprep.subr.mxu0 0.0
    %3873 = vmatpush1.msra.mxu0 0.0
    %3874 = vmatprep.subr.mxu0 0.0
    %3875 = vmatpush1.msra.mxu0 0.0
    %3876 = vmatprep.subr.mxu0 0.0
    %3877 = vmatpush1.msra.mxu0 0.0
    %3878 = vmatprep.subr.mxu0 0.0
    %3879 = vmatpush1.msra.mxu0 0.0
    %3880 = vmatprep.subr.mxu0 0.0
    %3881 = vmatpush1.msra.mxu0 0.0
    %3882 = vmatprep.mubr.f32.mxu0 0.0
    %3883 = vmatmul.mubr.f32.gmra.mrb[0].mxu0 %v3816
    %v3884 = vpop.f32.mrb[0].mxu0
    %v3885 = vadd.f32 %v2806, %v3884
    %v3886 = vpop.f32.mrb[0].mxu0
    %3887 = vdwg.mxu0
    %v3888 = vxor.u32 %v3885, 2147483648
    %v3889 = vmul.f32 %v3888, 1.442695
    %v3890 = vpow.pop %v3889
    %v3891 = vadd.f32 %v3890, 1.0
    %v3892 = vrcp.pop %v3891
    %v3893 = vmul.f32 1.0, %v3892
    %3894 = vst [vmem:[%s6 + $0x12] sm:$0x3] %v3893
    %v3895 = vld [vmem:[#allocation3 + $0x180] sm:$0xff]
    %v3896 = vld [vmem:[#allocation3 + $0x188] sm:$0xff]
    %v3897 = vld [vmem:[#allocation3 + $0x190] sm:$0xff]
    %v3898 = vld [vmem:[#allocation3 + $0x198] sm:$0xff]
    %v3899 = vld [vmem:[#allocation3 + $0x1a0] sm:$0xff]
    %v3900 = vld [vmem:[#allocation3 + $0x1a8] sm:$0xff]
    %v3901 = vld [vmem:[#allocation3 + $0x1b0] sm:$0xff]
    %v3902 = vld [vmem:[#allocation3 + $0x1b8] sm:$0xff]
    %v3903 = vld [vmem:[#allocation3 + $0x1c0] sm:$0xff]
    %v3904 = vld [vmem:[#allocation3 + $0x1c8] sm:$0xff]
    %v3905 = vld [vmem:[#allocation3 + $0x1d0] sm:$0xff]
    %v3906 = vld [vmem:[#allocation3 + $0x1d8] sm:$0xff]
    %v3907 = vld [vmem:[#allocation3 + $0x1e0] sm:$0xff]
    %v3908 = vld [vmem:[#allocation3 + $0x1e8] sm:$0xff]
    %v3909 = vld [vmem:[#allocation3 + $0x1f0] sm:$0xff]
    %v3910 = vld [vmem:[#allocation3 + $0x1f8] sm:$0xff]
    %v3911 = vld [vmem:[%s2 + $0x60] sm:$0xff]
    %v3912 = vld [vmem:[%s2 + $0x68] sm:$0xff]
    %v3913 = vld [vmem:[%s2 + $0x70] sm:$0xff]
    %v3914 = vld [vmem:[%s2 + $0x78] sm:$0xff]
    %3915 = vmatprep.subr.mxu0 0.0
    %3916 = vmatpush1.msra.mxu0 %v3911
    %3917 = vmatprep.subr.mxu0 0.0
    %3918 = vmatpush1.msra.mxu0 %v3912
    %3919 = vmatprep.subr.mxu0 0.0
    %3920 = vmatpush1.msra.mxu0 %v3913
    %3921 = vmatprep.subr.mxu0 0.0
    %3922 = vmatpush1.msra.mxu0 %v3914
    %3923 = vmatprep.subr.mxu0 0.0
    %3924 = vmatpush1.msra.mxu0 0.0
    %3925 = vmatprep.subr.mxu0 0.0
    %3926 = vmatpush1.msra.mxu0 0.0
    %3927 = vmatprep.subr.mxu0 0.0
    %3928 = vmatpush1.msra.mxu0 0.0
    %3929 = vmatprep.subr.mxu0 0.0
    %3930 = vmatpush1.msra.mxu0 0.0
    %3931 = vmatprep.subr.mxu0 0.0
    %3932 = vmatpush1.msra.mxu0 0.0
    %3933 = vmatprep.subr.mxu0 0.0
    %3934 = vmatpush1.msra.mxu0 0.0
    %3935 = vmatprep.subr.mxu0 0.0
    %3936 = vmatpush1.msra.mxu0 0.0
    %3937 = vmatprep.subr.mxu0 0.0
    %3938 = vmatpush1.msra.mxu0 0.0
    %3939 = vmatprep.subr.mxu0 0.0
    %3940 = vmatpush1.msra.mxu0 0.0
    %3941 = vmatprep.subr.mxu0 0.0
    %3942 = vmatpush1.msra.mxu0 0.0
    %3943 = vmatprep.subr.mxu0 0.0
    %3944 = vmatpush1.msra.mxu0 0.0
    %3945 = vmatprep.subr.mxu0 0.0
    %3946 = vmatpush1.msra.mxu0 0.0
    %3947 = vmatprep.subr.mxu0 0.0
    %3948 = vmatpush1.msra.mxu0 0.0
    %3949 = vmatprep.subr.mxu0 0.0
    %3950 = vmatpush1.msra.mxu0 0.0
    %3951 = vmatprep.subr.mxu0 0.0
    %3952 = vmatpush1.msra.mxu0 0.0
    %3953 = vmatprep.subr.mxu0 0.0
    %3954 = vmatpush1.msra.mxu0 0.0
    %3955 = vmatprep.subr.mxu0 0.0
    %3956 = vmatpush1.msra.mxu0 0.0
    %3957 = vmatprep.subr.mxu0 0.0
    %3958 = vmatpush1.msra.mxu0 0.0
    %3959 = vmatprep.subr.mxu0 0.0
    %3960 = vmatpush1.msra.mxu0 0.0
    %3961 = vmatprep.subr.mxu0 0.0
    %3962 = vmatpush1.msra.mxu0 0.0
    %3963 = vmatprep.subr.mxu0 0.0
    %3964 = vmatpush1.msra.mxu0 0.0
    %3965 = vmatprep.subr.mxu0 0.0
    %3966 = vmatpush1.msra.mxu0 0.0
    %3967 = vmatprep.subr.mxu0 0.0
    %3968 = vmatpush1.msra.mxu0 0.0
    %3969 = vmatprep.subr.mxu0 0.0
    %3970 = vmatpush1.msra.mxu0 0.0
    %3971 = vmatprep.subr.mxu0 0.0
    %3972 = vmatpush1.msra.mxu0 0.0
    %3973 = vmatprep.subr.mxu0 0.0
    %3974 = vmatpush1.msra.mxu0 0.0
    %3975 = vmatprep.subr.mxu0 0.0
    %3976 = vmatpush1.msra.mxu0 0.0
    %3977 = vmatprep.subr.mxu0 0.0
    %3978 = vmatpush1.msra.mxu0 0.0
    %3979 = vmatprep.mubr.f32.mxu0 0.0
    %3980 = vmatmul.mubr.f32.gmra.mrb[0].mxu0 %v3549
    %v3981 = vpop.f32.mrb[0].mxu0
    %v3982 = vadd.f32 0.0, %v3981
    %v3983 = vpop.f32.mrb[0].mxu0
    %3984 = vdwg.mxu0
    %3985 = vmatprep.subr.mxu0 0.0
    %3986 = vmatpush1.msra.mxu0 %v3895
    %3987 = vmatprep.subr.mxu0 0.0
    %3988 = vmatpush1.msra.mxu0 %v3896
    %3989 = vmatprep.subr.mxu0 0.0
    %3990 = vmatpush1.msra.mxu0 %v3897
    %3991 = vmatprep.subr.mxu0 0.0
    %3992 = vmatpush1.msra.mxu0 %v3898
    %3993 = vmatprep.subr.mxu0 0.0
    %3994 = vmatpush1.msra.mxu0 %v3899
    %3995 = vmatprep.subr.mxu0 0.0
    %3996 = vmatpush1.msra.mxu0 %v3900
    %3997 = vmatprep.subr.mxu0 0.0
    %3998 = vmatpush1.msra.mxu0 %v3901
    %3999 = vmatprep.subr.mxu0 0.0
    %4000 = vmatpush1.msra.mxu0 %v3902
    %4001 = vmatprep.subr.mxu0 0.0
    %4002 = vmatpush1.msra.mxu0 %v3903
    %4003 = vmatprep.subr.mxu0 0.0
    %4004 = vmatpush1.msra.mxu0 %v3904
    %4005 = vmatprep.subr.mxu0 0.0
    %4006 = vmatpush1.msra.mxu0 %v3905
    %4007 = vmatprep.subr.mxu0 0.0
    %4008 = vmatpush1.msra.mxu0 %v3906
    %4009 = vmatprep.subr.mxu0 0.0
    %4010 = vmatpush1.msra.mxu0 %v3907
    %4011 = vmatprep.subr.mxu0 0.0
    %4012 = vmatpush1.msra.mxu0 %v3908
    %4013 = vmatprep.subr.mxu0 0.0
    %4014 = vmatpush1.msra.mxu0 %v3909
    %4015 = vmatprep.subr.mxu0 0.0
    %4016 = vmatpush1.msra.mxu0 %v3910
    %4017 = vmatprep.subr.mxu0 0.0
    %4018 = vmatpush1.msra.mxu0 0.0
    %4019 = vmatprep.subr.mxu0 0.0
    %4020 = vmatpush1.msra.mxu0 0.0
    %4021 = vmatprep.subr.mxu0 0.0
    %4022 = vmatpush1.msra.mxu0 0.0
    %4023 = vmatprep.subr.mxu0 0.0
    %4024 = vmatpush1.msra.mxu0 0.0
    %4025 = vmatprep.subr.mxu0 0.0
    %4026 = vmatpush1.msra.mxu0 0.0
    %4027 = vmatprep.subr.mxu0 0.0
    %4028 = vmatpush1.msra.mxu0 0.0
    %4029 = vmatprep.subr.mxu0 0.0
    %4030 = vmatpush1.msra.mxu0 0.0
    %4031 = vmatprep.subr.mxu0 0.0
    %4032 = vmatpush1.msra.mxu0 0.0
    %4033 = vmatprep.subr.mxu0 0.0
    %4034 = vmatpush1.msra.mxu0 0.0
    %4035 = vmatprep.subr.mxu0 0.0
    %4036 = vmatpush1.msra.mxu0 0.0
    %4037 = vmatprep.subr.mxu0 0.0
    %4038 = vmatpush1.msra.mxu0 0.0
    %4039 = vmatprep.subr.mxu0 0.0
    %4040 = vmatpush1.msra.mxu0 0.0
    %4041 = vmatprep.subr.mxu0 0.0
    %4042 = vmatpush1.msra.mxu0 0.0
    %4043 = vmatprep.subr.mxu0 0.0
    %4044 = vmatpush1.msra.mxu0 0.0
    %4045 = vmatprep.subr.mxu0 0.0
    %4046 = vmatpush1.msra.mxu0 0.0
    %4047 = vmatprep.subr.mxu0 0.0
    %4048 = vmatpush1.msra.mxu0 0.0
    %4049 = vmatprep.mubr.f32.mxu0 0.0
    %4050 = vmatmul.mubr.f32.gmra.mrb[0].mxu0 %v3622
    %v4051 = vpop.f32.mrb[0].mxu0
    %v4052 = vadd.f32 %v3982, %v4051
    %v4053 = vpop.f32.mrb[0].mxu0
    %4054 = vdwg.mxu0
    %v4055 = vadd.f32 %v4052, %v2791
    %v4056 = vxor.u32 %v4055, 2147483648
    %v4057 = vmul.f32 %v4056, 1.442695
    %v4058 = vpow.pop %v4057
    %v4059 = vadd.f32 %v4058, 1.0
    %v4060 = vrcp.pop %v4059
    %v4061 = vmul.f32 1.0, %v4060
    %v4062 = vtanh.pop %v4055
    %v4063 = vmul.f32 %v4061, %v3535
    %4065 = vrot.lane.b32.xlu0 %v4062, 64
    %v4066 = vpop.permute.xlu0 %4065
    %v4068 = vmul.f32 %v4061, %v4066
    %4070 = vrot.lane.b32.xlu0 %v4068, 32
    %v4071 = vpop.permute.xlu0 %4070
    %v4073 = vadd.f32 %v4063, %v4071
    %v4074 = vtanh.pop %v4073
    %4076 = vrot.lane.b32.xlu0 %v4074, 64
    %v4077 = vpop.permute.xlu0 %4076
    %v4079 = vmul.f32 %v4061, %v4077
    %v4080 = vld [vmem:[%s4] sm:$0xff]
    %v4081 = vld [vmem:[%s4 + $0x8] sm:$0xff]
    %v4082 = vld [vmem:[%s4 + $0x10] sm:$0xff]
    %v4083 = vld [vmem:[%s4 + $0x18] sm:$0xff]
    %4085 = vrot.lane.b32.xlu0 %v4079, 32
    %v4086 = vpop.permute.xlu0 %4085
    %v4087 = vsel %vm165, %v4086, 0
    %4089 = vmatprep.subr.mxu0 0.0
    %4090 = vmatpush1.msra.mxu0 %v4080
    %4091 = vmatprep.subr.mxu0 0.0
    %4092 = vmatpush1.msra.mxu0 %v4081
    %4093 = vmatprep.subr.mxu0 0.0
    %4094 = vmatpush1.msra.mxu0 %v4082
    %4095 = vmatprep.subr.mxu0 0.0
    %4096 = vmatpush1.msra.mxu0 %v4083
    %4097 = vmatprep.subr.mxu0 0.0
    %4098 = vmatpush1.msra.mxu0 0.0
    %4099 = vmatprep.subr.mxu0 0.0
    %4100 = vmatpush1.msra.mxu0 0.0
    %4101 = vmatprep.subr.mxu0 0.0
    %4102 = vmatpush1.msra.mxu0 0.0
    %4103 = vmatprep.subr.mxu0 0.0
    %4104 = vmatpush1.msra.mxu0 0.0
    %4105 = vmatprep.subr.mxu0 0.0
    %4106 = vmatpush1.msra.mxu0 0.0
    %4107 = vmatprep.subr.mxu0 0.0
    %4108 = vmatpush1.msra.mxu0 0.0
    %4109 = vmatprep.subr.mxu0 0.0
    %4110 = vmatpush1.msra.mxu0 0.0
    %4111 = vmatprep.subr.mxu0 0.0
    %4112 = vmatpush1.msra.mxu0 0.0
    %4113 = vmatprep.subr.mxu0 0.0
    %4114 = vmatpush1.msra.mxu0 0.0
    %4115 = vmatprep.subr.mxu0 0.0
    %4116 = vmatpush1.msra.mxu0 0.0
    %4117 = vmatprep.subr.mxu0 0.0
    %4118 = vmatpush1.msra.mxu0 0.0
    %4119 = vmatprep.subr.mxu0 0.0
    %4120 = vmatpush1.msra.mxu0 0.0
    %4121 = vmatprep.subr.mxu0 0.0
    %4122 = vmatpush1.msra.mxu0 0.0
    %4123 = vmatprep.subr.mxu0 0.0
    %4124 = vmatpush1.msra.mxu0 0.0
    %4125 = vmatprep.subr.mxu0 0.0
    %4126 = vmatpush1.msra.mxu0 0.0
    %4127 = vmatprep.subr.mxu0 0.0
    %4128 = vmatpush1.msra.mxu0 0.0
    %4129 = vmatprep.subr.mxu0 0.0
    %4130 = vmatpush1.msra.mxu0 0.0
    %4131 = vmatprep.subr.mxu0 0.0
    %4132 = vmatpush1.msra.mxu0 0.0
    %4133 = vmatprep.subr.mxu0 0.0
    %4134 = vmatpush1.msra.mxu0 0.0
    %4135 = vmatprep.subr.mxu0 0.0
    %4136 = vmatpush1.msra.mxu0 0.0
    %4137 = vmatprep.subr.mxu0 0.0
    %4138 = vmatpush1.msra.mxu0 0.0
    %4139 = vmatprep.subr.mxu0 0.0
    %4140 = vmatpush1.msra.mxu0 0.0
    %4141 = vmatprep.subr.mxu0 0.0
    %4142 = vmatpush1.msra.mxu0 0.0
    %4143 = vmatprep.subr.mxu0 0.0
    %4144 = vmatpush1.msra.mxu0 0.0
    %4145 = vmatprep.subr.mxu0 0.0
    %4146 = vmatpush1.msra.mxu0 0.0
    %4147 = vmatprep.subr.mxu0 0.0
    %4148 = vmatpush1.msra.mxu0 0.0
    %4149 = vmatprep.subr.mxu0 0.0
    %4150 = vmatpush1.msra.mxu0 0.0
    %4151 = vmatprep.subr.mxu0 0.0
    %4152 = vmatpush1.msra.mxu0 0.0
    %4153 = vmatprep.mubr.f32.mxu0 0.0
    %4154 = vmatmul.mubr.f32.gmra.mrb[0].mxu0 %v4087
    %v4155 = vpop.f32.mrb[0].mxu0
    %v4156 = vadd.f32 %v2801, %v4155
    %v4157 = vpop.f32.mrb[0].mxu0
    %4158 = vdwg.mxu0
    %v4159 = vmax.f32 %v4156, -1.0
    %v4160 = vmin.f32 %v4159, 1.0
    %4161 = vst [vmem:[%s6 + $0x4] sm:$0x3] %v4160
    %v4162 = vld [vmem:[#allocation3 + $0x200] sm:$0xff]
    %v4163 = vld [vmem:[#allocation3 + $0x208] sm:$0xff]
    %v4164 = vld [vmem:[#allocation3 + $0x210] sm:$0xff]
    %v4165 = vld [vmem:[#allocation3 + $0x218] sm:$0xff]
    %v4166 = vld [vmem:[#allocation3 + $0x220] sm:$0xff]
    %v4167 = vld [vmem:[#allocation3 + $0x228] sm:$0xff]
    %v4168 = vld [vmem:[#allocation3 + $0x230] sm:$0xff]
    %v4169 = vld [vmem:[#allocation3 + $0x238] sm:$0xff]
    %v4170 = vld [vmem:[#allocation3 + $0x240] sm:$0xff]
    %v4171 = vld [vmem:[#allocation3 + $0x248] sm:$0xff]
    %v4172 = vld [vmem:[#allocation3 + $0x250] sm:$0xff]
    %v4173 = vld [vmem:[#allocation3 + $0x258] sm:$0xff]
    %v4174 = vld [vmem:[#allocation3 + $0x260] sm:$0xff]
    %v4175 = vld [vmem:[#allocation3 + $0x268] sm:$0xff]
    %v4176 = vld [vmem:[#allocation3 + $0x270] sm:$0xff]
    %v4177 = vld [vmem:[#allocation3 + $0x278] sm:$0xff]
    %v4178 = vld [vmem:[%s2 + $0x80] sm:$0xff]
    %v4179 = vld [vmem:[%s2 + $0x88] sm:$0xff]
    %v4180 = vld [vmem:[%s2 + $0x90] sm:$0xff]
    %v4181 = vld [vmem:[%s2 + $0x98] sm:$0xff]
    %4182 = vmatprep.subr.mxu0 0.0
    %4183 = vmatpush1.msra.mxu0 %v4178
    %4184 = vmatprep.subr.mxu0 0.0
    %4185 = vmatpush1.msra.mxu0 %v4179
    %4186 = vmatprep.subr.mxu0 0.0
    %4187 = vmatpush1.msra.mxu0 %v4180
    %4188 = vmatprep.subr.mxu0 0.0
    %4189 = vmatpush1.msra.mxu0 %v4181
    %4190 = vmatprep.subr.mxu0 0.0
    %4191 = vmatpush1.msra.mxu0 0.0
    %4192 = vmatprep.subr.mxu0 0.0
    %4193 = vmatpush1.msra.mxu0 0.0
    %4194 = vmatprep.subr.mxu0 0.0
    %4195 = vmatpush1.msra.mxu0 0.0
    %4196 = vmatprep.subr.mxu0 0.0
    %4197 = vmatpush1.msra.mxu0 0.0
    %4198 = vmatprep.subr.mxu0 0.0
    %4199 = vmatpush1.msra.mxu0 0.0
    %4200 = vmatprep.subr.mxu0 0.0
    %4201 = vmatpush1.msra.mxu0 0.0
    %4202 = vmatprep.subr.mxu0 0.0
    %4203 = vmatpush1.msra.mxu0 0.0
    %4204 = vmatprep.subr.mxu0 0.0
    %4205 = vmatpush1.msra.mxu0 0.0
    %4206 = vmatprep.subr.mxu0 0.0
    %4207 = vmatpush1.msra.mxu0 0.0
    %4208 = vmatprep.subr.mxu0 0.0
    %4209 = vmatpush1.msra.mxu0 0.0
    %4210 = vmatprep.subr.mxu0 0.0
    %4211 = vmatpush1.msra.mxu0 0.0
    %4212 = vmatprep.subr.mxu0 0.0
    %4213 = vmatpush1.msra.mxu0 0.0
    %4214 = vmatprep.subr.mxu0 0.0
    %4215 = vmatpush1.msra.mxu0 0.0
    %4216 = vmatprep.subr.mxu0 0.0
    %4217 = vmatpush1.msra.mxu0 0.0
    %4218 = vmatprep.subr.mxu0 0.0
    %4219 = vmatpush1.msra.mxu0 0.0
    %4220 = vmatprep.subr.mxu0 0.0
    %4221 = vmatpush1.msra.mxu0 0.0
    %4222 = vmatprep.subr.mxu0 0.0
    %4223 = vmatpush1.msra.mxu0 0.0
    %4224 = vmatprep.subr.mxu0 0.0
    %4225 = vmatpush1.msra.mxu0 0.0
    %4226 = vmatprep.subr.mxu0 0.0
    %4227 = vmatpush1.msra.mxu0 0.0
    %4228 = vmatprep.subr.mxu0 0.0
    %4229 = vmatpush1.msra.mxu0 0.0
    %4230 = vmatprep.subr.mxu0 0.0
    %4231 = vmatpush1.msra.mxu0 0.0
    %4232 = vmatprep.subr.mxu0 0.0
    %4233 = vmatpush1.msra.mxu0 0.0
    %4234 = vmatprep.subr.mxu0 0.0
    %4235 = vmatpush1.msra.mxu0 0.0
    %4236 = vmatprep.subr.mxu0 0.0
    %4237 = vmatpush1.msra.mxu0 0.0
    %4238 = vmatprep.subr.mxu0 0.0
    %4239 = vmatpush1.msra.mxu0 0.0
    %4240 = vmatprep.subr.mxu0 0.0
    %4241 = vmatpush1.msra.mxu0 0.0
    %4242 = vmatprep.subr.mxu0 0.0
    %4243 = vmatpush1.msra.mxu0 0.0
    %4244 = vmatprep.subr.mxu0 0.0
    %4245 = vmatpush1.msra.mxu0 0.0
    %4246 = vmatprep.mubr.f32.mxu0 0.0
    %4247 = vmatmul.mubr.f32.gmra.mrb[0].mxu0 %v3816
    %v4248 = vpop.f32.mrb[0].mxu0
    %v4249 = vadd.f32 0.0, %v4248
    %v4250 = vpop.f32.mrb[0].mxu0
    %4251 = vdwg.mxu0
    %4252 = vmatprep.subr.mxu0 0.0
    %4253 = vmatpush1.msra.mxu0 %v4162
    %4254 = vmatprep.subr.mxu0 0.0
    %4255 = vmatpush1.msra.mxu0 %v4163
    %4256 = vmatprep.subr.mxu0 0.0
    %4257 = vmatpush1.msra.mxu0 %v4164
    %4258 = vmatprep.subr.mxu0 0.0
    %4259 = vmatpush1.msra.mxu0 %v4165
    %4260 = vmatprep.subr.mxu0 0.0
    %4261 = vmatpush1.msra.mxu0 %v4166
    %4262 = vmatprep.subr.mxu0 0.0
    %4263 = vmatpush1.msra.mxu0 %v4167
    %4264 = vmatprep.subr.mxu0 0.0
    %4265 = vmatpush1.msra.mxu0 %v4168
    %4266 = vmatprep.subr.mxu0 0.0
    %4267 = vmatpush1.msra.mxu0 %v4169
    %4268 = vmatprep.subr.mxu0 0.0
    %4269 = vmatpush1.msra.mxu0 %v4170
    %4270 = vmatprep.subr.mxu0 0.0
    %4271 = vmatpush1.msra.mxu0 %v4171
    %4272 = vmatprep.subr.mxu0 0.0
    %4273 = vmatpush1.msra.mxu0 %v4172
    %4274 = vmatprep.subr.mxu0 0.0
    %4275 = vmatpush1.msra.mxu0 %v4173
    %4276 = vmatprep.subr.mxu0 0.0
    %4277 = vmatpush1.msra.mxu0 %v4174
    %4278 = vmatprep.subr.mxu0 0.0
    %4279 = vmatpush1.msra.mxu0 %v4175
    %4280 = vmatprep.subr.mxu0 0.0
    %4281 = vmatpush1.msra.mxu0 %v4176
    %4282 = vmatprep.subr.mxu0 0.0
    %4283 = vmatpush1.msra.mxu0 %v4177
    %4284 = vmatprep.subr.mxu0 0.0
    %4285 = vmatpush1.msra.mxu0 0.0
    %4286 = vmatprep.subr.mxu0 0.0
    %4287 = vmatpush1.msra.mxu0 0.0
    %4288 = vmatprep.subr.mxu0 0.0
    %4289 = vmatpush1.msra.mxu0 0.0
    %4290 = vmatprep.subr.mxu0 0.0
    %4291 = vmatpush1.msra.mxu0 0.0
    %4292 = vmatprep.subr.mxu0 0.0
    %4293 = vmatpush1.msra.mxu0 0.0
    %4294 = vmatprep.subr.mxu0 0.0
    %4295 = vmatpush1.msra.mxu0 0.0
    %4296 = vmatprep.subr.mxu0 0.0
    %4297 = vmatpush1.msra.mxu0 0.0
    %4298 = vmatprep.subr.mxu0 0.0
    %4299 = vmatpush1.msra.mxu0 0.0
    %4300 = vmatprep.subr.mxu0 0.0
    %4301 = vmatpush1.msra.mxu0 0.0
    %4302 = vmatprep.subr.mxu0 0.0
    %4303 = vmatpush1.msra.mxu0 0.0
    %4304 = vmatprep.subr.mxu0 0.0
    %4305 = vmatpush1.msra.mxu0 0.0
    %4306 = vmatprep.subr.mxu0 0.0
    %4307 = vmatpush1.msra.mxu0 0.0
    %4308 = vmatprep.subr.mxu0 0.0
    %4309 = vmatpush1.msra.mxu0 0.0
    %4310 = vmatprep.subr.mxu0 0.0
    %4311 = vmatpush1.msra.mxu0 0.0
    %4312 = vmatprep.subr.mxu0 0.0
    %4313 = vmatpush1.msra.mxu0 0.0
    %4314 = vmatprep.subr.mxu0 0.0
    %4315 = vmatpush1.msra.mxu0 0.0
    %4316 = vmatprep.mubr.f32.mxu0 0.0
    %4317 = vmatmul.mubr.f32.gmra.mrb[0].mxu0 %v3893
    %v4318 = vpop.f32.mrb[0].mxu0
    %v4319 = vadd.f32 %v4249, %v4318
    %v4320 = vpop.f32.mrb[0].mxu0
    %4321 = vdwg.mxu0
    %v4322 = vadd.f32 %v4319, %v2796
    %v4323 = vxor.u32 %v4322, 2147483648
    %v4324 = vmul.f32 %v4323, 1.442695
    %v4325 = vpow.pop %v4324
    %v4326 = vadd.f32 %v4325, 1.0
    %v4327 = vrcp.pop %v4326
    %v4328 = vmul.f32 1.0, %v4327
    %v4329 = vtanh.pop %v4322
    %v4330 = vmul.f32 %v4328, %v3802
    %4332 = vrot.lane.b32.xlu0 %v4329, 64
    %v4333 = vpop.permute.xlu0 %4332
    %v4335 = vmul.f32 %v4328, %v4333
    %4337 = vrot.lane.b32.xlu0 %v4335, 32
    %v4338 = vpop.permute.xlu0 %4337
    %v4340 = vadd.f32 %v4330, %v4338
    %v4341 = vtanh.pop %v4340
    %4343 = vrot.lane.b32.xlu0 %v4341, 64
    %v4344 = vpop.permute.xlu0 %4343
    %v4346 = vmul.f32 %v4328, %v4344
    %v4347 = vld [vmem:[%s4 + $0x20] sm:$0xff]
    %v4348 = vld [vmem:[%s4 + $0x28] sm:$0xff]
    %v4349 = vld [vmem:[%s4 + $0x30] sm:$0xff]
    %v4350 = vld [vmem:[%s4 + $0x38] sm:$0xff]
    %4352 = vrot.lane.b32.xlu0 %v4346, 32
    %v4353 = vpop.permute.xlu0 %4352
    %v4354 = vsel %vm165, %v4353, 0
    %4356 = vmatprep.subr.mxu0 0.0
    %4357 = vmatpush1.msra.mxu0 %v4347
    %4358 = vmatprep.subr.mxu0 0.0
    %4359 = vmatpush1.msra.mxu0 %v4348
    %4360 = vmatprep.subr.mxu0 0.0
    %4361 = vmatpush1.msra.mxu0 %v4349
    %4362 = vmatprep.subr.mxu0 0.0
    %4363 = vmatpush1.msra.mxu0 %v4350
    %4364 = vmatprep.subr.mxu0 0.0
    %4365 = vmatpush1.msra.mxu0 0.0
    %4366 = vmatprep.subr.mxu0 0.0
    %4367 = vmatpush1.msra.mxu0 0.0
    %4368 = vmatprep.subr.mxu0 0.0
    %4369 = vmatpush1.msra.mxu0 0.0
    %4370 = vmatprep.subr.mxu0 0.0
    %4371 = vmatpush1.msra.mxu0 0.0
    %4372 = vmatprep.subr.mxu0 0.0
    %4373 = vmatpush1.msra.mxu0 0.0
    %4374 = vmatprep.subr.mxu0 0.0
    %4375 = vmatpush1.msra.mxu0 0.0
    %4376 = vmatprep.subr.mxu0 0.0
    %4377 = vmatpush1.msra.mxu0 0.0
    %4378 = vmatprep.subr.mxu0 0.0
    %4379 = vmatpush1.msra.mxu0 0.0
    %4380 = vmatprep.subr.mxu0 0.0
    %4381 = vmatpush1.msra.mxu0 0.0
    %4382 = vmatprep.subr.mxu0 0.0
    %4383 = vmatpush1.msra.mxu0 0.0
    %4384 = vmatprep.subr.mxu0 0.0
    %4385 = vmatpush1.msra.mxu0 0.0
    %4386 = vmatprep.subr.mxu0 0.0
    %4387 = vmatpush1.msra.mxu0 0.0
    %4388 = vmatprep.subr.mxu0 0.0
    %4389 = vmatpush1.msra.mxu0 0.0
    %4390 = vmatprep.subr.mxu0 0.0
    %4391 = vmatpush1.msra.mxu0 0.0
    %4392 = vmatprep.subr.mxu0 0.0
    %4393 = vmatpush1.msra.mxu0 0.0
    %4394 = vmatprep.subr.mxu0 0.0
    %4395 = vmatpush1.msra.mxu0 0.0
    %4396 = vmatprep.subr.mxu0 0.0
    %4397 = vmatpush1.msra.mxu0 0.0
    %4398 = vmatprep.subr.mxu0 0.0
    %4399 = vmatpush1.msra.mxu0 0.0
    %4400 = vmatprep.subr.mxu0 0.0
    %4401 = vmatpush1.msra.mxu0 0.0
    %4402 = vmatprep.subr.mxu0 0.0
    %4403 = vmatpush1.msra.mxu0 0.0
    %4404 = vmatprep.subr.mxu0 0.0
    %4405 = vmatpush1.msra.mxu0 0.0
    %4406 = vmatprep.subr.mxu0 0.0
    %4407 = vmatpush1.msra.mxu0 0.0
    %4408 = vmatprep.subr.mxu0 0.0
    %4409 = vmatpush1.msra.mxu0 0.0
    %4410 = vmatprep.subr.mxu0 0.0
    %4411 = vmatpush1.msra.mxu0 0.0
    %4412 = vmatprep.subr.mxu0 0.0
    %4413 = vmatpush1.msra.mxu0 0.0
    %4414 = vmatprep.subr.mxu0 0.0
    %4415 = vmatpush1.msra.mxu0 0.0
    %4416 = vmatprep.subr.mxu0 0.0
    %4417 = vmatpush1.msra.mxu0 0.0
    %4418 = vmatprep.subr.mxu0 0.0
    %4419 = vmatpush1.msra.mxu0 0.0
    %4420 = vmatprep.mubr.f32.mxu0 0.0
    %4421 = vmatmul.mubr.f32.gmra.mrb[0].mxu0 %v4354
    %v4422 = vpop.f32.mrb[0].mxu0
    %v4423 = vadd.f32 %v2806, %v4422
    %v4424 = vpop.f32.mrb[0].mxu0
    %4425 = vdwg.mxu0
    %v4426 = vxor.u32 %v4423, 2147483648
    %v4427 = vmul.f32 %v4426, 1.442695
    %v4428 = vpow.pop %v4427
    %v4429 = vadd.f32 %v4428, 1.0
    %v4430 = vrcp.pop %v4429
    %v4431 = vmul.f32 1.0, %v4430
    %4432 = vst [vmem:[%s6 + $0x14] sm:$0x3] %v4431
    %v4433 = vld [vmem:[#allocation3 + $0x180] sm:$0xff]
    %v4434 = vld [vmem:[#allocation3 + $0x188] sm:$0xff]
    %v4435 = vld [vmem:[#allocation3 + $0x190] sm:$0xff]
    %v4436 = vld [vmem:[#allocation3 + $0x198] sm:$0xff]
    %v4437 = vld [vmem:[#allocation3 + $0x1a0] sm:$0xff]
    %v4438 = vld [vmem:[#allocation3 + $0x1a8] sm:$0xff]
    %v4439 = vld [vmem:[#allocation3 + $0x1b0] sm:$0xff]
    %v4440 = vld [vmem:[#allocation3 + $0x1b8] sm:$0xff]
    %v4441 = vld [vmem:[#allocation3 + $0x1c0] sm:$0xff]
    %v4442 = vld [vmem:[#allocation3 + $0x1c8] sm:$0xff]
    %v4443 = vld [vmem:[#allocation3 + $0x1d0] sm:$0xff]
    %v4444 = vld [vmem:[#allocation3 + $0x1d8] sm:$0xff]
    %v4445 = vld [vmem:[#allocation3 + $0x1e0] sm:$0xff]
    %v4446 = vld [vmem:[#allocation3 + $0x1e8] sm:$0xff]
    %v4447 = vld [vmem:[#allocation3 + $0x1f0] sm:$0xff]
    %v4448 = vld [vmem:[#allocation3 + $0x1f8] sm:$0xff]
    %v4449 = vld [vmem:[%s2 + $0x60] sm:$0xff]
    %v4450 = vld [vmem:[%s2 + $0x68] sm:$0xff]
    %v4451 = vld [vmem:[%s2 + $0x70] sm:$0xff]
    %v4452 = vld [vmem:[%s2 + $0x78] sm:$0xff]
    %4453 = vmatprep.subr.mxu0 0.0
    %4454 = vmatpush1.msra.mxu0 %v4449
    %4455 = vmatprep.subr.mxu0 0.0
    %4456 = vmatpush1.msra.mxu0 %v4450
    %4457 = vmatprep.subr.mxu0 0.0
    %4458 = vmatpush1.msra.mxu0 %v4451
    %4459 = vmatprep.subr.mxu0 0.0
    %4460 = vmatpush1.msra.mxu0 %v4452
    %4461 = vmatprep.subr.mxu0 0.0
    %4462 = vmatpush1.msra.mxu0 0.0
    %4463 = vmatprep.subr.mxu0 0.0
    %4464 = vmatpush1.msra.mxu0 0.0
    %4465 = vmatprep.subr.mxu0 0.0
    %4466 = vmatpush1.msra.mxu0 0.0
    %4467 = vmatprep.subr.mxu0 0.0
    %4468 = vmatpush1.msra.mxu0 0.0
    %4469 = vmatprep.subr.mxu0 0.0
    %4470 = vmatpush1.msra.mxu0 0.0
    %4471 = vmatprep.subr.mxu0 0.0
    %4472 = vmatpush1.msra.mxu0 0.0
    %4473 = vmatprep.subr.mxu0 0.0
    %4474 = vmatpush1.msra.mxu0 0.0
    %4475 = vmatprep.subr.mxu0 0.0
    %4476 = vmatpush1.msra.mxu0 0.0
    %4477 = vmatprep.subr.mxu0 0.0
    %4478 = vmatpush1.msra.mxu0 0.0
    %4479 = vmatprep.subr.mxu0 0.0
    %4480 = vmatpush1.msra.mxu0 0.0
    %4481 = vmatprep.subr.mxu0 0.0
    %4482 = vmatpush1.msra.mxu0 0.0
    %4483 = vmatprep.subr.mxu0 0.0
    %4484 = vmatpush1.msra.mxu0 0.0
    %4485 = vmatprep.subr.mxu0 0.0
    %4486 = vmatpush1.msra.mxu0 0.0
    %4487 = vmatprep.subr.mxu0 0.0
    %4488 = vmatpush1.msra.mxu0 0.0
    %4489 = vmatprep.subr.mxu0 0.0
    %4490 = vmatpush1.msra.mxu0 0.0
    %4491 = vmatprep.subr.mxu0 0.0
    %4492 = vmatpush1.msra.mxu0 0.0
    %4493 = vmatprep.subr.mxu0 0.0
    %4494 = vmatpush1.msra.mxu0 0.0
    %4495 = vmatprep.subr.mxu0 0.0
    %4496 = vmatpush1.msra.mxu0 0.0
    %4497 = vmatprep.subr.mxu0 0.0
    %4498 = vmatpush1.msra.mxu0 0.0
    %4499 = vmatprep.subr.mxu0 0.0
    %4500 = vmatpush1.msra.mxu0 0.0
    %4501 = vmatprep.subr.mxu0 0.0
    %4502 = vmatpush1.msra.mxu0 0.0
    %4503 = vmatprep.subr.mxu0 0.0
    %4504 = vmatpush1.msra.mxu0 0.0
    %4505 = vmatprep.subr.mxu0 0.0
    %4506 = vmatpush1.msra.mxu0 0.0
    %4507 = vmatprep.subr.mxu0 0.0
    %4508 = vmatpush1.msra.mxu0 0.0
    %4509 = vmatprep.subr.mxu0 0.0
    %4510 = vmatpush1.msra.mxu0 0.0
    %4511 = vmatprep.subr.mxu0 0.0
    %4512 = vmatpush1.msra.mxu0 0.0
    %4513 = vmatprep.subr.mxu0 0.0
    %4514 = vmatpush1.msra.mxu0 0.0
    %4515 = vmatprep.subr.mxu0 0.0
    %4516 = vmatpush1.msra.mxu0 0.0
    %4517 = vmatprep.mubr.f32.mxu0 0.0
    %4518 = vmatmul.mubr.f32.gmra.mrb[0].mxu0 %v4087
    %v4519 = vpop.f32.mrb[0].mxu0
    %v4520 = vadd.f32 0.0, %v4519
    %v4521 = vpop.f32.mrb[0].mxu0
    %4522 = vdwg.mxu0
    %4523 = vmatprep.subr.mxu0 0.0
    %4524 = vmatpush1.msra.mxu0 %v4433
    %4525 = vmatprep.subr.mxu0 0.0
    %4526 = vmatpush1.msra.mxu0 %v4434
    %4527 = vmatprep.subr.mxu0 0.0
    %4528 = vmatpush1.msra.mxu0 %v4435
    %4529 = vmatprep.subr.mxu0 0.0
    %4530 = vmatpush1.msra.mxu0 %v4436
    %4531 = vmatprep.subr.mxu0 0.0
    %4532 = vmatpush1.msra.mxu0 %v4437
    %4533 = vmatprep.subr.mxu0 0.0
    %4534 = vmatpush1.msra.mxu0 %v4438
    %4535 = vmatprep.subr.mxu0 0.0
    %4536 = vmatpush1.msra.mxu0 %v4439
    %4537 = vmatprep.subr.mxu0 0.0
    %4538 = vmatpush1.msra.mxu0 %v4440
    %4539 = vmatprep.subr.mxu0 0.0
    %4540 = vmatpush1.msra.mxu0 %v4441
    %4541 = vmatprep.subr.mxu0 0.0
    %4542 = vmatpush1.msra.mxu0 %v4442
    %4543 = vmatprep.subr.mxu0 0.0
    %4544 = vmatpush1.msra.mxu0 %v4443
    %4545 = vmatprep.subr.mxu0 0.0
    %4546 = vmatpush1.msra.mxu0 %v4444
    %4547 = vmatprep.subr.mxu0 0.0
    %4548 = vmatpush1.msra.mxu0 %v4445
    %4549 = vmatprep.subr.mxu0 0.0
    %4550 = vmatpush1.msra.mxu0 %v4446
    %4551 = vmatprep.subr.mxu0 0.0
    %4552 = vmatpush1.msra.mxu0 %v4447
    %4553 = vmatprep.subr.mxu0 0.0
    %4554 = vmatpush1.msra.mxu0 %v4448
    %4555 = vmatprep.subr.mxu0 0.0
    %4556 = vmatpush1.msra.mxu0 0.0
    %4557 = vmatprep.subr.mxu0 0.0
    %4558 = vmatpush1.msra.mxu0 0.0
    %4559 = vmatprep.subr.mxu0 0.0
    %4560 = vmatpush1.msra.mxu0 0.0
    %4561 = vmatprep.subr.mxu0 0.0
    %4562 = vmatpush1.msra.mxu0 0.0
    %4563 = vmatprep.subr.mxu0 0.0
    %4564 = vmatpush1.msra.mxu0 0.0
    %4565 = vmatprep.subr.mxu0 0.0
    %4566 = vmatpush1.msra.mxu0 0.0
    %4567 = vmatprep.subr.mxu0 0.0
    %4568 = vmatpush1.msra.mxu0 0.0
    %4569 = vmatprep.subr.mxu0 0.0
    %4570 = vmatpush1.msra.mxu0 0.0
    %4571 = vmatprep.subr.mxu0 0.0
    %4572 = vmatpush1.msra.mxu0 0.0
    %4573 = vmatprep.subr.mxu0 0.0
    %4574 = vmatpush1.msra.mxu0 0.0
    %4575 = vmatprep.subr.mxu0 0.0
    %4576 = vmatpush1.msra.mxu0 0.0
    %4577 = vmatprep.subr.mxu0 0.0
    %4578 = vmatpush1.msra.mxu0 0.0
    %4579 = vmatprep.subr.mxu0 0.0
    %4580 = vmatpush1.msra.mxu0 0.0
    %4581 = vmatprep.subr.mxu0 0.0
    %4582 = vmatpush1.msra.mxu0 0.0
    %4583 = vmatprep.subr.mxu0 0.0
    %4584 = vmatpush1.msra.mxu0 0.0
    %4585 = vmatprep.subr.mxu0 0.0
    %4586 = vmatpush1.msra.mxu0 0.0
    %4587 = vmatprep.mubr.f32.mxu0 0.0
    %4588 = vmatmul.mubr.f32.gmra.mrb[0].mxu0 %v4160
    %v4589 = vpop.f32.mrb[0].mxu0
    %v4590 = vadd.f32 %v4520, %v4589
    %v4591 = vpop.f32.mrb[0].mxu0
    %4592 = vdwg.mxu0
    %v4593 = vadd.f32 %v4590, %v2791
    %v4594 = vxor.u32 %v4593, 2147483648
    %v4595 = vmul.f32 %v4594, 1.442695
    %v4596 = vpow.pop %v4595
    %v4597 = vadd.f32 %v4596, 1.0
    %v4598 = vrcp.pop %v4597
    %v4599 = vmul.f32 1.0, %v4598
    %v4600 = vtanh.pop %v4593
    %v4601 = vmul.f32 %v4599, %v4073
    %4603 = vrot.lane.b32.xlu0 %v4600, 64
    %v4604 = vpop.permute.xlu0 %4603
    %v4606 = vmul.f32 %v4599, %v4604
    %4608 = vrot.lane.b32.xlu0 %v4606, 32
    %v4609 = vpop.permute.xlu0 %4608
    %v4611 = vadd.f32 %v4601, %v4609
    %v4612 = vtanh.pop %v4611
    %4614 = vrot.lane.b32.xlu0 %v4612, 64
    %v4615 = vpop.permute.xlu0 %4614
    %v4617 = vmul.f32 %v4599, %v4615
    %v4618 = vld [vmem:[%s4] sm:$0xff]
    %v4619 = vld [vmem:[%s4 + $0x8] sm:$0xff]
    %v4620 = vld [vmem:[%s4 + $0x10] sm:$0xff]
    %v4621 = vld [vmem:[%s4 + $0x18] sm:$0xff]
    %4623 = vrot.lane.b32.xlu0 %v4617, 32
    %v4624 = vpop.permute.xlu0 %4623
    %v4625 = vsel %vm165, %v4624, 0
    %4627 = vmatprep.subr.mxu0 0.0
    %4628 = vmatpush1.msra.mxu0 %v4618
    %4629 = vmatprep.subr.mxu0 0.0
    %4630 = vmatpush1.msra.mxu0 %v4619
    %4631 = vmatprep.subr.mxu0 0.0
    %4632 = vmatpush1.msra.mxu0 %v4620
    %4633 = vmatprep.subr.mxu0 0.0
    %4634 = vmatpush1.msra.mxu0 %v4621
    %4635 = vmatprep.subr.mxu0 0.0
    %4636 = vmatpush1.msra.mxu0 0.0
    %4637 = vmatprep.subr.mxu0 0.0
    %4638 = vmatpush1.msra.mxu0 0.0
    %4639 = vmatprep.subr.mxu0 0.0
    %4640 = vmatpush1.msra.mxu0 0.0
    %4641 = vmatprep.subr.mxu0 0.0
    %4642 = vmatpush1.msra.mxu0 0.0
    %4643 = vmatprep.subr.mxu0 0.0
    %4644 = vmatpush1.msra.mxu0 0.0
    %4645 = vmatprep.subr.mxu0 0.0
    %4646 = vmatpush1.msra.mxu0 0.0
    %4647 = vmatprep.subr.mxu0 0.0
    %4648 = vmatpush1.msra.mxu0 0.0
    %4649 = vmatprep.subr.mxu0 0.0
    %4650 = vmatpush1.msra.mxu0 0.0
    %4651 = vmatprep.subr.mxu0 0.0
    %4652 = vmatpush1.msra.mxu0 0.0
    %4653 = vmatprep.subr.mxu0 0.0
    %4654 = vmatpush1.msra.mxu0 0.0
    %4655 = vmatprep.subr.mxu0 0.0
    %4656 = vmatpush1.msra.mxu0 0.0
    %4657 = vmatprep.subr.mxu0 0.0
    %4658 = vmatpush1.msra.mxu0 0.0
    %4659 = vmatprep.subr.mxu0 0.0
    %4660 = vmatpush1.msra.mxu0 0.0
    %4661 = vmatprep.subr.mxu0 0.0
    %4662 = vmatpush1.msra.mxu0 0.0
    %4663 = vmatprep.subr.mxu0 0.0
    %4664 = vmatpush1.msra.mxu0 0.0
    %4665 = vmatprep.subr.mxu0 0.0
    %4666 = vmatpush1.msra.mxu0 0.0
    %4667 = vmatprep.subr.mxu0 0.0
    %4668 = vmatpush1.msra.mxu0 0.0
    %4669 = vmatprep.subr.mxu0 0.0
    %4670 = vmatpush1.msra.mxu0 0.0
    %4671 = vmatprep.subr.mxu0 0.0
    %4672 = vmatpush1.msra.mxu0 0.0
    %4673 = vmatprep.subr.mxu0 0.0
    %4674 = vmatpush1.msra.mxu0 0.0
    %4675 = vmatprep.subr.mxu0 0.0
    %4676 = vmatpush1.msra.mxu0 0.0
    %4677 = vmatprep.subr.mxu0 0.0
    %4678 = vmatpush1.msra.mxu0 0.0
    %4679 = vmatprep.subr.mxu0 0.0
    %4680 = vmatpush1.msra.mxu0 0.0
    %4681 = vmatprep.subr.mxu0 0.0
    %4682 = vmatpush1.msra.mxu0 0.0
    %4683 = vmatprep.subr.mxu0 0.0
    %4684 = vmatpush1.msra.mxu0 0.0
    %4685 = vmatprep.subr.mxu0 0.0
    %4686 = vmatpush1.msra.mxu0 0.0
    %4687 = vmatprep.subr.mxu0 0.0
    %4688 = vmatpush1.msra.mxu0 0.0
    %4689 = vmatprep.subr.mxu0 0.0
    %4690 = vmatpush1.msra.mxu0 0.0
    %4691 = vmatprep.mubr.f32.mxu0 0.0
    %4692 = vmatmul.mubr.f32.gmra.mrb[0].mxu0 %v4625
    %v4693 = vpop.f32.mrb[0].mxu0
    %v4694 = vadd.f32 %v2801, %v4693
    %v4695 = vpop.f32.mrb[0].mxu0
    %4696 = vdwg.mxu0
    %v4697 = vmax.f32 %v4694, -1.0
    %v4698 = vmin.f32 %v4697, 1.0
    %4699 = vst [vmem:[%s6 + $0x6] sm:$0x3] %v4698
    %v4700 = vld [vmem:[#allocation3 + $0x200] sm:$0xff]
    %v4701 = vld [vmem:[#allocation3 + $0x208] sm:$0xff]
    %v4702 = vld [vmem:[#allocation3 + $0x210] sm:$0xff]
    %v4703 = vld [vmem:[#allocation3 + $0x218] sm:$0xff]
    %v4704 = vld [vmem:[#allocation3 + $0x220] sm:$0xff]
    %v4705 = vld [vmem:[#allocation3 + $0x228] sm:$0xff]
    %v4706 = vld [vmem:[#allocation3 + $0x230] sm:$0xff]
    %v4707 = vld [vmem:[#allocation3 + $0x238] sm:$0xff]
    %v4708 = vld [vmem:[#allocation3 + $0x240] sm:$0xff]
    %v4709 = vld [vmem:[#allocation3 + $0x248] sm:$0xff]
    %v4710 = vld [vmem:[#allocation3 + $0x250] sm:$0xff]
    %v4711 = vld [vmem:[#allocation3 + $0x258] sm:$0xff]
    %v4712 = vld [vmem:[#allocation3 + $0x260] sm:$0xff]
    %v4713 = vld [vmem:[#allocation3 + $0x268] sm:$0xff]
    %v4714 = vld [vmem:[#allocation3 + $0x270] sm:$0xff]
    %v4715 = vld [vmem:[#allocation3 + $0x278] sm:$0xff]
    %v4716 = vld [vmem:[%s2 + $0x80] sm:$0xff]
    %v4717 = vld [vmem:[%s2 + $0x88] sm:$0xff]
    %v4718 = vld [vmem:[%s2 + $0x90] sm:$0xff]
    %v4719 = vld [vmem:[%s2 + $0x98] sm:$0xff]
    %4720 = vmatprep.subr.mxu0 0.0
    %4721 = vmatpush1.msra.mxu0 %v4716
    %4722 = vmatprep.subr.mxu0 0.0
    %4723 = vmatpush1.msra.mxu0 %v4717
    %4724 = vmatprep.subr.mxu0 0.0
    %4725 = vmatpush1.msra.mxu0 %v4718
    %4726 = vmatprep.subr.mxu0 0.0
    %4727 = vmatpush1.msra.mxu0 %v4719
    %4728 = vmatprep.subr.mxu0 0.0
    %4729 = vmatpush1.msra.mxu0 0.0
    %4730 = vmatprep.subr.mxu0 0.0
    %4731 = vmatpush1.msra.mxu0 0.0
    %4732 = vmatprep.subr.mxu0 0.0
    %4733 = vmatpush1.msra.mxu0 0.0
    %4734 = vmatprep.subr.mxu0 0.0
    %4735 = vmatpush1.msra.mxu0 0.0
    %4736 = vmatprep.subr.mxu0 0.0
    %4737 = vmatpush1.msra.mxu0 0.0
    %4738 = vmatprep.subr.mxu0 0.0
    %4739 = vmatpush1.msra.mxu0 0.0
    %4740 = vmatprep.subr.mxu0 0.0
    %4741 = vmatpush1.msra.mxu0 0.0
    %4742 = vmatprep.subr.mxu0 0.0
    %4743 = vmatpush1.msra.mxu0 0.0
    %4744 = vmatprep.subr.mxu0 0.0
    %4745 = vmatpush1.msra.mxu0 0.0
    %4746 = vmatprep.subr.mxu0 0.0
    %4747 = vmatpush1.msra.mxu0 0.0
    %4748 = vmatprep.subr.mxu0 0.0
    %4749 = vmatpush1.msra.mxu0 0.0
    %4750 = vmatprep.subr.mxu0 0.0
    %4751 = vmatpush1.msra.mxu0 0.0
    %4752 = vmatprep.subr.mxu0 0.0
    %4753 = vmatpush1.msra.mxu0 0.0
    %4754 = vmatprep.subr.mxu0 0.0
    %4755 = vmatpush1.msra.mxu0 0.0
    %4756 = vmatprep.subr.mxu0 0.0
    %4757 = vmatpush1.msra.mxu0 0.0
    %4758 = vmatprep.subr.mxu0 0.0
    %4759 = vmatpush1.msra.mxu0 0.0
    %4760 = vmatprep.subr.mxu0 0.0
    %4761 = vmatpush1.msra.mxu0 0.0
    %4762 = vmatprep.subr.mxu0 0.0
    %4763 = vmatpush1.msra.mxu0 0.0
    %4764 = vmatprep.subr.mxu0 0.0
    %4765 = vmatpush1.msra.mxu0 0.0
    %4766 = vmatprep.subr.mxu0 0.0
    %4767 = vmatpush1.msra.mxu0 0.0
    %4768 = vmatprep.subr.mxu0 0.0
    %4769 = vmatpush1.msra.mxu0 0.0
    %4770 = vmatprep.subr.mxu0 0.0
    %4771 = vmatpush1.msra.mxu0 0.0
    %4772 = vmatprep.subr.mxu0 0.0
    %4773 = vmatpush1.msra.mxu0 0.0
    %4774 = vmatprep.subr.mxu0 0.0
    %4775 = vmatpush1.msra.mxu0 0.0
    %4776 = vmatprep.subr.mxu0 0.0
    %4777 = vmatpush1.msra.mxu0 0.0
    %4778 = vmatprep.subr.mxu0 0.0
    %4779 = vmatpush1.msra.mxu0 0.0
    %4780 = vmatprep.subr.mxu0 0.0
    %4781 = vmatpush1.msra.mxu0 0.0
    %4782 = vmatprep.subr.mxu0 0.0
    %4783 = vmatpush1.msra.mxu0 0.0
    %4784 = vmatprep.mubr.f32.mxu0 0.0
    %4785 = vmatmul.mubr.f32.gmra.mrb[0].mxu0 %v4354
    %v4786 = vpop.f32.mrb[0].mxu0
    %v4787 = vadd.f32 0.0, %v4786
    %v4788 = vpop.f32.mrb[0].mxu0
    %4789 = vdwg.mxu0
    %4790 = vmatprep.subr.mxu0 0.0
    %4791 = vmatpush1.msra.mxu0 %v4700
    %4792 = vmatprep.subr.mxu0 0.0
    %4793 = vmatpush1.msra.mxu0 %v4701
    %4794 = vmatprep.subr.mxu0 0.0
    %4795 = vmatpush1.msra.mxu0 %v4702
    %4796 = vmatprep.subr.mxu0 0.0
    %4797 = vmatpush1.msra.mxu0 %v4703
    %4798 = vmatprep.subr.mxu0 0.0
    %4799 = vmatpush1.msra.mxu0 %v4704
    %4800 = vmatprep.subr.mxu0 0.0
    %4801 = vmatpush1.msra.mxu0 %v4705
    %4802 = vmatprep.subr.mxu0 0.0
    %4803 = vmatpush1.msra.mxu0 %v4706
    %4804 = vmatprep.subr.mxu0 0.0
    %4805 = vmatpush1.msra.mxu0 %v4707
    %4806 = vmatprep.subr.mxu0 0.0
    %4807 = vmatpush1.msra.mxu0 %v4708
    %4808 = vmatprep.subr.mxu0 0.0
    %4809 = vmatpush1.msra.mxu0 %v4709
    %4810 = vmatprep.subr.mxu0 0.0
    %4811 = vmatpush1.msra.mxu0 %v4710
    %4812 = vmatprep.subr.mxu0 0.0
    %4813 = vmatpush1.msra.mxu0 %v4711
    %4814 = vmatprep.subr.mxu0 0.0
    %4815 = vmatpush1.msra.mxu0 %v4712
    %4816 = vmatprep.subr.mxu0 0.0
    %4817 = vmatpush1.msra.mxu0 %v4713
    %4818 = vmatprep.subr.mxu0 0.0
    %4819 = vmatpush1.msra.mxu0 %v4714
    %4820 = vmatprep.subr.mxu0 0.0
    %4821 = vmatpush1.msra.mxu0 %v4715
    %4822 = vmatprep.subr.mxu0 0.0
    %4823 = vmatpush1.msra.mxu0 0.0
    %4824 = vmatprep.subr.mxu0 0.0
    %4825 = vmatpush1.msra.mxu0 0.0
    %4826 = vmatprep.subr.mxu0 0.0
    %4827 = vmatpush1.msra.mxu0 0.0
    %4828 = vmatprep.subr.mxu0 0.0
    %4829 = vmatpush1.msra.mxu0 0.0
    %4830 = vmatprep.subr.mxu0 0.0
    %4831 = vmatpush1.msra.mxu0 0.0
    %4832 = vmatprep.subr.mxu0 0.0
    %4833 = vmatpush1.msra.mxu0 0.0
    %4834 = vmatprep.subr.mxu0 0.0
    %4835 = vmatpush1.msra.mxu0 0.0
    %4836 = vmatprep.subr.mxu0 0.0
    %4837 = vmatpush1.msra.mxu0 0.0
    %4838 = vmatprep.subr.mxu0 0.0
    %4839 = vmatpush1.msra.mxu0 0.0
    %4840 = vmatprep.subr.mxu0 0.0
    %4841 = vmatpush1.msra.mxu0 0.0
    %4842 = vmatprep.subr.mxu0 0.0
    %4843 = vmatpush1.msra.mxu0 0.0
    %4844 = vmatprep.subr.mxu0 0.0
    %4845 = vmatpush1.msra.mxu0 0.0
    %4846 = vmatprep.subr.mxu0 0.0
    %4847 = vmatpush1.msra.mxu0 0.0
    %4848 = vmatprep.subr.mxu0 0.0
    %4849 = vmatpush1.msra.mxu0 0.0
    %4850 = vmatprep.subr.mxu0 0.0
    %4851 = vmatpush1.msra.mxu0 0.0
    %4852 = vmatprep.subr.mxu0 0.0
    %4853 = vmatpush1.msra.mxu0 0.0
    %4854 = vmatprep.mubr.f32.mxu0 0.0
    %4855 = vmatmul.mubr.f32.gmra.mrb[0].mxu0 %v4431
    %v4856 = vpop.f32.mrb[0].mxu0
    %v4857 = vadd.f32 %v4787, %v4856
    %v4858 = vpop.f32.mrb[0].mxu0
    %4859 = vdwg.mxu0
    %v4860 = vadd.f32 %v4857, %v2796
    %v4861 = vxor.u32 %v4860, 2147483648
    %v4862 = vmul.f32 %v4861, 1.442695
    %v4863 = vpow.pop %v4862
    %v4864 = vadd.f32 %v4863, 1.0
    %v4865 = vrcp.pop %v4864
    %v4866 = vmul.f32 1.0, %v4865
    %v4867 = vtanh.pop %v4860
    %v4868 = vmul.f32 %v4866, %v4340
    %4870 = vrot.lane.b32.xlu0 %v4867, 64
    %v4871 = vpop.permute.xlu0 %4870
    %v4873 = vmul.f32 %v4866, %v4871
    %4875 = vrot.lane.b32.xlu0 %v4873, 32
    %v4876 = vpop.permute.xlu0 %4875
    %v4878 = vadd.f32 %v4868, %v4876
    %v4879 = vtanh.pop %v4878
    %4881 = vrot.lane.b32.xlu0 %v4879, 64
    %v4882 = vpop.permute.xlu0 %4881
    %v4884 = vmul.f32 %v4866, %v4882
    %v4885 = vld [vmem:[%s4 + $0x20] sm:$0xff]
    %v4886 = vld [vmem:[%s4 + $0x28] sm:$0xff]
    %v4887 = vld [vmem:[%s4 + $0x30] sm:$0xff]
    %v4888 = vld [vmem:[%s4 + $0x38] sm:$0xff]
    %4890 = vrot.lane.b32.xlu0 %v4884, 32
    %v4891 = vpop.permute.xlu0 %4890
    %v4892 = vsel %vm165, %v4891, 0
    %4894 = vmatprep.subr.mxu0 0.0
    %4895 = vmatpush1.msra.mxu0 %v4885
    %4896 = vmatprep.subr.mxu0 0.0
    %4897 = vmatpush1.msra.mxu0 %v4886
    %4898 = vmatprep.subr.mxu0 0.0
    %4899 = vmatpush1.msra.mxu0 %v4887
    %4900 = vmatprep.subr.mxu0 0.0
    %4901 = vmatpush1.msra.mxu0 %v4888
    %4902 = vmatprep.subr.mxu0 0.0
    %4903 = vmatpush1.msra.mxu0 0.0
    %4904 = vmatprep.subr.mxu0 0.0
    %4905 = vmatpush1.msra.mxu0 0.0
    %4906 = vmatprep.subr.mxu0 0.0
    %4907 = vmatpush1.msra.mxu0 0.0
    %4908 = vmatprep.subr.mxu0 0.0
    %4909 = vmatpush1.msra.mxu0 0.0
    %4910 = vmatprep.subr.mxu0 0.0
    %4911 = vmatpush1.msra.mxu0 0.0
    %4912 = vmatprep.subr.mxu0 0.0
    %4913 = vmatpush1.msra.mxu0 0.0
    %4914 = vmatprep.subr.mxu0 0.0
    %4915 = vmatpush1.msra.mxu0 0.0
    %4916 = vmatprep.subr.mxu0 0.0
    %4917 = vmatpush1.msra.mxu0 0.0
    %4918 = vmatprep.subr.mxu0 0.0
    %4919 = vmatpush1.msra.mxu0 0.0
    %4920 = vmatprep.subr.mxu0 0.0
    %4921 = vmatpush1.msra.mxu0 0.0
    %4922 = vmatprep.subr.mxu0 0.0
    %4923 = vmatpush1.msra.mxu0 0.0
    %4924 = vmatprep.subr.mxu0 0.0
    %4925 = vmatpush1.msra.mxu0 0.0
    %4926 = vmatprep.subr.mxu0 0.0
    %4927 = vmatpush1.msra.mxu0 0.0
    %4928 = vmatprep.subr.mxu0 0.0
    %4929 = vmatpush1.msra.mxu0 0.0
    %4930 = vmatprep.subr.mxu0 0.0
    %4931 = vmatpush1.msra.mxu0 0.0
    %4932 = vmatprep.subr.mxu0 0.0
    %4933 = vmatpush1.msra.mxu0 0.0
    %4934 = vmatprep.subr.mxu0 0.0
    %4935 = vmatpush1.msra.mxu0 0.0
    %4936 = vmatprep.subr.mxu0 0.0
    %4937 = vmatpush1.msra.mxu0 0.0
    %4938 = vmatprep.subr.mxu0 0.0
    %4939 = vmatpush1.msra.mxu0 0.0
    %4940 = vmatprep.subr.mxu0 0.0
    %4941 = vmatpush1.msra.mxu0 0.0
    %4942 = vmatprep.subr.mxu0 0.0
    %4943 = vmatpush1.msra.mxu0 0.0
    %4944 = vmatprep.subr.mxu0 0.0
    %4945 = vmatpush1.msra.mxu0 0.0
    %4946 = vmatprep.subr.mxu0 0.0
    %4947 = vmatpush1.msra.mxu0 0.0
    %4948 = vmatprep.subr.mxu0 0.0
    %4949 = vmatpush1.msra.mxu0 0.0
    %4950 = vmatprep.subr.mxu0 0.0
    %4951 = vmatpush1.msra.mxu0 0.0
    %4952 = vmatprep.subr.mxu0 0.0
    %4953 = vmatpush1.msra.mxu0 0.0
    %4954 = vmatprep.subr.mxu0 0.0
    %4955 = vmatpush1.msra.mxu0 0.0
    %4956 = vmatprep.subr.mxu0 0.0
    %4957 = vmatpush1.msra.mxu0 0.0
    %4958 = vmatprep.mubr.f32.mxu0 0.0
    %4959 = vmatmul.mubr.f32.gmra.mrb[0].mxu0 %v4892
    %v4960 = vpop.f32.mrb[0].mxu0
    %v4961 = vadd.f32 %v2806, %v4960
    %v4962 = vpop.f32.mrb[0].mxu0
    %4963 = vdwg.mxu0
    %v4964 = vxor.u32 %v4961, 2147483648
    %v4965 = vmul.f32 %v4964, 1.442695
    %v4966 = vpow.pop %v4965
    %v4967 = vadd.f32 %v4966, 1.0
    %v4968 = vrcp.pop %v4967
    %v4969 = vmul.f32 1.0, %v4968
    %4970 = vst [vmem:[%s6 + $0x16] sm:$0x3] %v4969
    %v4971 = vld [vmem:[#allocation3 + $0x180] sm:$0xff]
    %v4972 = vld [vmem:[#allocation3 + $0x188] sm:$0xff]
    %v4973 = vld [vmem:[#allocation3 + $0x190] sm:$0xff]
    %v4974 = vld [vmem:[#allocation3 + $0x198] sm:$0xff]
    %v4975 = vld [vmem:[#allocation3 + $0x1a0] sm:$0xff]
    %v4976 = vld [vmem:[#allocation3 + $0x1a8] sm:$0xff]
    %v4977 = vld [vmem:[#allocation3 + $0x1b0] sm:$0xff]
    %v4978 = vld [vmem:[#allocation3 + $0x1b8] sm:$0xff]
    %v4979 = vld [vmem:[#allocation3 + $0x1c0] sm:$0xff]
    %v4980 = vld [vmem:[#allocation3 + $0x1c8] sm:$0xff]
    %v4981 = vld [vmem:[#allocation3 + $0x1d0] sm:$0xff]
    %v4982 = vld [vmem:[#allocation3 + $0x1d8] sm:$0xff]
    %v4983 = vld [vmem:[#allocation3 + $0x1e0] sm:$0xff]
    %v4984 = vld [vmem:[#allocation3 + $0x1e8] sm:$0xff]
    %v4985 = vld [vmem:[#allocation3 + $0x1f0] sm:$0xff]
    %v4986 = vld [vmem:[#allocation3 + $0x1f8] sm:$0xff]
    %v4987 = vld [vmem:[%s2 + $0x60] sm:$0xff]
    %v4988 = vld [vmem:[%s2 + $0x68] sm:$0xff]
    %v4989 = vld [vmem:[%s2 + $0x70] sm:$0xff]
    %v4990 = vld [vmem:[%s2 + $0x78] sm:$0xff]
    %4991 = vmatprep.subr.mxu0 0.0
    %4992 = vmatpush1.msra.mxu0 %v4987
    %4993 = vmatprep.subr.mxu0 0.0
    %4994 = vmatpush1.msra.mxu0 %v4988
    %4995 = vmatprep.subr.mxu0 0.0
    %4996 = vmatpush1.msra.mxu0 %v4989
    %4997 = vmatprep.subr.mxu0 0.0
    %4998 = vmatpush1.msra.mxu0 %v4990
    %4999 = vmatprep.subr.mxu0 0.0
    %5000 = vmatpush1.msra.mxu0 0.0
    %5001 = vmatprep.subr.mxu0 0.0
    %5002 = vmatpush1.msra.mxu0 0.0
    %5003 = vmatprep.subr.mxu0 0.0
    %5004 = vmatpush1.msra.mxu0 0.0
    %5005 = vmatprep.subr.mxu0 0.0
    %5006 = vmatpush1.msra.mxu0 0.0
    %5007 = vmatprep.subr.mxu0 0.0
    %5008 = vmatpush1.msra.mxu0 0.0
    %5009 = vmatprep.subr.mxu0 0.0
    %5010 = vmatpush1.msra.mxu0 0.0
    %5011 = vmatprep.subr.mxu0 0.0
    %5012 = vmatpush1.msra.mxu0 0.0
    %5013 = vmatprep.subr.mxu0 0.0
    %5014 = vmatpush1.msra.mxu0 0.0
    %5015 = vmatprep.subr.mxu0 0.0
    %5016 = vmatpush1.msra.mxu0 0.0
    %5017 = vmatprep.subr.mxu0 0.0
    %5018 = vmatpush1.msra.mxu0 0.0
    %5019 = vmatprep.subr.mxu0 0.0
    %5020 = vmatpush1.msra.mxu0 0.0
    %5021 = vmatprep.subr.mxu0 0.0
    %5022 = vmatpush1.msra.mxu0 0.0
    %5023 = vmatprep.subr.mxu0 0.0
    %5024 = vmatpush1.msra.mxu0 0.0
    %5025 = vmatprep.subr.mxu0 0.0
    %5026 = vmatpush1.msra.mxu0 0.0
    %5027 = vmatprep.subr.mxu0 0.0
    %5028 = vmatpush1.msra.mxu0 0.0
    %5029 = vmatprep.subr.mxu0 0.0
    %5030 = vmatpush1.msra.mxu0 0.0
    %5031 = vmatprep.subr.mxu0 0.0
    %5032 = vmatpush1.msra.mxu0 0.0
    %5033 = vmatprep.subr.mxu0 0.0
    %5034 = vmatpush1.msra.mxu0 0.0
    %5035 = vmatprep.subr.mxu0 0.0
    %5036 = vmatpush1.msra.mxu0 0.0
    %5037 = vmatprep.subr.mxu0 0.0
    %5038 = vmatpush1.msra.mxu0 0.0
    %5039 = vmatprep.subr.mxu0 0.0
    %5040 = vmatpush1.msra.mxu0 0.0
    %5041 = vmatprep.subr.mxu0 0.0
    %5042 = vmatpush1.msra.mxu0 0.0
    %5043 = vmatprep.subr.mxu0 0.0
    %5044 = vmatpush1.msra.mxu0 0.0
    %5045 = vmatprep.subr.mxu0 0.0
    %5046 = vmatpush1.msra.mxu0 0.0
    %5047 = vmatprep.subr.mxu0 0.0
    %5048 = vmatpush1.msra.mxu0 0.0
    %5049 = vmatprep.subr.mxu0 0.0
    %5050 = vmatpush1.msra.mxu0 0.0
    %5051 = vmatprep.subr.mxu0 0.0
    %5052 = vmatpush1.msra.mxu0 0.0
    %5053 = vmatprep.subr.mxu0 0.0
    %5054 = vmatpush1.msra.mxu0 0.0
    %5055 = vmatprep.mubr.f32.mxu0 0.0
    %5056 = vmatmul.mubr.f32.gmra.mrb[0].mxu0 %v4625
    %v5057 = vpop.f32.mrb[0].mxu0
    %v5058 = vadd.f32 0.0, %v5057
    %v5059 = vpop.f32.mrb[0].mxu0
    %5060 = vdwg.mxu0
    %5061 = vmatprep.subr.mxu0 0.0
    %5062 = vmatpush1.msra.mxu0 %v4971
    %5063 = vmatprep.subr.mxu0 0.0
    %5064 = vmatpush1.msra.mxu0 %v4972
    %5065 = vmatprep.subr.mxu0 0.0
    %5066 = vmatpush1.msra.mxu0 %v4973
    %5067 = vmatprep.subr.mxu0 0.0
    %5068 = vmatpush1.msra.mxu0 %v4974
    %5069 = vmatprep.subr.mxu0 0.0
    %5070 = vmatpush1.msra.mxu0 %v4975
    %5071 = vmatprep.subr.mxu0 0.0
    %5072 = vmatpush1.msra.mxu0 %v4976
    %5073 = vmatprep.subr.mxu0 0.0
    %5074 = vmatpush1.msra.mxu0 %v4977
    %5075 = vmatprep.subr.mxu0 0.0
    %5076 = vmatpush1.msra.mxu0 %v4978
    %5077 = vmatprep.subr.mxu0 0.0
    %5078 = vmatpush1.msra.mxu0 %v4979
    %5079 = vmatprep.subr.mxu0 0.0
    %5080 = vmatpush1.msra.mxu0 %v4980
    %5081 = vmatprep.subr.mxu0 0.0
    %5082 = vmatpush1.msra.mxu0 %v4981
    %5083 = vmatprep.subr.mxu0 0.0
    %5084 = vmatpush1.msra.mxu0 %v4982
    %5085 = vmatprep.subr.mxu0 0.0
    %5086 = vmatpush1.msra.mxu0 %v4983
    %5087 = vmatprep.subr.mxu0 0.0
    %5088 = vmatpush1.msra.mxu0 %v4984
    %5089 = vmatprep.subr.mxu0 0.0
    %5090 = vmatpush1.msra.mxu0 %v4985
    %5091 = vmatprep.subr.mxu0 0.0
    %5092 = vmatpush1.msra.mxu0 %v4986
    %5093 = vmatprep.subr.mxu0 0.0
    %5094 = vmatpush1.msra.mxu0 0.0
    %5095 = vmatprep.subr.mxu0 0.0
    %5096 = vmatpush1.msra.mxu0 0.0
    %5097 = vmatprep.subr.mxu0 0.0
    %5098 = vmatpush1.msra.mxu0 0.0
    %5099 = vmatprep.subr.mxu0 0.0
    %5100 = vmatpush1.msra.mxu0 0.0
    %5101 = vmatprep.subr.mxu0 0.0
    %5102 = vmatpush1.msra.mxu0 0.0
    %5103 = vmatprep.subr.mxu0 0.0
    %5104 = vmatpush1.msra.mxu0 0.0
    %5105 = vmatprep.subr.mxu0 0.0
    %5106 = vmatpush1.msra.mxu0 0.0
    %5107 = vmatprep.subr.mxu0 0.0
    %5108 = vmatpush1.msra.mxu0 0.0
    %5109 = vmatprep.subr.mxu0 0.0
    %5110 = vmatpush1.msra.mxu0 0.0
    %5111 = vmatprep.subr.mxu0 0.0
    %5112 = vmatpush1.msra.mxu0 0.0
    %5113 = vmatprep.subr.mxu0 0.0
    %5114 = vmatpush1.msra.mxu0 0.0
    %5115 = vmatprep.subr.mxu0 0.0
    %5116 = vmatpush1.msra.mxu0 0.0
    %5117 = vmatprep.subr.mxu0 0.0
    %5118 = vmatpush1.msra.mxu0 0.0
    %5119 = vmatprep.subr.mxu0 0.0
    %5120 = vmatpush1.msra.mxu0 0.0
    %5121 = vmatprep.subr.mxu0 0.0
    %5122 = vmatpush1.msra.mxu0 0.0
    %5123 = vmatprep.subr.mxu0 0.0
    %5124 = vmatpush1.msra.mxu0 0.0
    %5125 = vmatprep.mubr.f32.mxu0 0.0
    %5126 = vmatmul.mubr.f32.gmra.mrb[0].mxu0 %v4698
    %v5127 = vpop.f32.mrb[0].mxu0
    %v5128 = vadd.f32 %v5058, %v5127
    %v5129 = vpop.f32.mrb[0].mxu0
    %5130 = vdwg.mxu0
    %v5131 = vadd.f32 %v5128, %v2791
    %v5132 = vxor.u32 %v5131, 2147483648
    %v5133 = vmul.f32 %v5132, 1.442695
    %v5134 = vpow.pop %v5133
    %v5135 = vadd.f32 %v5134, 1.0
    %v5136 = vrcp.pop %v5135
    %v5137 = vmul.f32 1.0, %v5136
    %v5138 = vtanh.pop %v5131
    %v5139 = vmul.f32 %v5137, %v4611
    %5141 = vrot.lane.b32.xlu0 %v5138, 64
    %v5142 = vpop.permute.xlu0 %5141
    %v5144 = vmul.f32 %v5137, %v5142
    %5146 = vrot.lane.b32.xlu0 %v5144, 32
    %v5147 = vpop.permute.xlu0 %5146
    %v5149 = vadd.f32 %v5139, %v5147
    %v5150 = vtanh.pop %v5149
    %5152 = vrot.lane.b32.xlu0 %v5150, 64
    %v5153 = vpop.permute.xlu0 %5152
    %v5155 = vmul.f32 %v5137, %v5153
    %v5156 = vld [vmem:[%s4] sm:$0xff]
    %v5157 = vld [vmem:[%s4 + $0x8] sm:$0xff]
    %v5158 = vld [vmem:[%s4 + $0x10] sm:$0xff]
    %v5159 = vld [vmem:[%s4 + $0x18] sm:$0xff]
    %5161 = vrot.lane.b32.xlu0 %v5155, 32
    %v5162 = vpop.permute.xlu0 %5161
    %v5163 = vsel %vm165, %v5162, 0
    %5165 = vmatprep.subr.mxu0 0.0
    %5166 = vmatpush1.msra.mxu0 %v5156
    %5167 = vmatprep.subr.mxu0 0.0
    %5168 = vmatpush1.msra.mxu0 %v5157
    %5169 = vmatprep.subr.mxu0 0.0
    %5170 = vmatpush1.msra.mxu0 %v5158
    %5171 = vmatprep.subr.mxu0 0.0
    %5172 = vmatpush1.msra.mxu0 %v5159
    %5173 = vmatprep.subr.mxu0 0.0
    %5174 = vmatpush1.msra.mxu0 0.0
    %5175 = vmatprep.subr.mxu0 0.0
    %5176 = vmatpush1.msra.mxu0 0.0
    %5177 = vmatprep.subr.mxu0 0.0
    %5178 = vmatpush1.msra.mxu0 0.0
    %5179 = vmatprep.subr.mxu0 0.0
    %5180 = vmatpush1.msra.mxu0 0.0
    %5181 = vmatprep.subr.mxu0 0.0
    %5182 = vmatpush1.msra.mxu0 0.0
    %5183 = vmatprep.subr.mxu0 0.0
    %5184 = vmatpush1.msra.mxu0 0.0
    %5185 = vmatprep.subr.mxu0 0.0
    %5186 = vmatpush1.msra.mxu0 0.0
    %5187 = vmatprep.subr.mxu0 0.0
    %5188 = vmatpush1.msra.mxu0 0.0
    %5189 = vmatprep.subr.mxu0 0.0
    %5190 = vmatpush1.msra.mxu0 0.0
    %5191 = vmatprep.subr.mxu0 0.0
    %5192 = vmatpush1.msra.mxu0 0.0
    %5193 = vmatprep.subr.mxu0 0.0
    %5194 = vmatpush1.msra.mxu0 0.0
    %5195 = vmatprep.subr.mxu0 0.0
    %5196 = vmatpush1.msra.mxu0 0.0
    %5197 = vmatprep.subr.mxu0 0.0
    %5198 = vmatpush1.msra.mxu0 0.0
    %5199 = vmatprep.subr.mxu0 0.0
    %5200 = vmatpush1.msra.mxu0 0.0
    %5201 = vmatprep.subr.mxu0 0.0
    %5202 = vmatpush1.msra.mxu0 0.0
    %5203 = vmatprep.subr.mxu0 0.0
    %5204 = vmatpush1.msra.mxu0 0.0
    %5205 = vmatprep.subr.mxu0 0.0
    %5206 = vmatpush1.msra.mxu0 0.0
    %5207 = vmatprep.subr.mxu0 0.0
    %5208 = vmatpush1.msra.mxu0 0.0
    %5209 = vmatprep.subr.mxu0 0.0
    %5210 = vmatpush1.msra.mxu0 0.0
    %5211 = vmatprep.subr.mxu0 0.0
    %5212 = vmatpush1.msra.mxu0 0.0
    %5213 = vmatprep.subr.mxu0 0.0
    %5214 = vmatpush1.msra.mxu0 0.0
    %5215 = vmatprep.subr.mxu0 0.0
    %5216 = vmatpush1.msra.mxu0 0.0
    %5217 = vmatprep.subr.mxu0 0.0
    %5218 = vmatpush1.msra.mxu0 0.0
    %5219 = vmatprep.subr.mxu0 0.0
    %5220 = vmatpush1.msra.mxu0 0.0
    %5221 = vmatprep.subr.mxu0 0.0
    %5222 = vmatpush1.msra.mxu0 0.0
    %5223 = vmatprep.subr.mxu0 0.0
    %5224 = vmatpush1.msra.mxu0 0.0
    %5225 = vmatprep.subr.mxu0 0.0
    %5226 = vmatpush1.msra.mxu0 0.0
    %5227 = vmatprep.subr.mxu0 0.0
    %5228 = vmatpush1.msra.mxu0 0.0
    %5229 = vmatprep.mubr.f32.mxu0 0.0
    %5230 = vmatmul.mubr.f32.gmra.mrb[0].mxu0 %v5163
    %v5231 = vpop.f32.mrb[0].mxu0
    %v5232 = vadd.f32 %v2801, %v5231
    %v5233 = vpop.f32.mrb[0].mxu0
    %5234 = vdwg.mxu0
    %v5235 = vmax.f32 %v5232, -1.0
    %v5236 = vmin.f32 %v5235, 1.0
    %5237 = vst [vmem:[%s6 + $0x8] sm:$0x3] %v5236
    %v5238 = vld [vmem:[#allocation3 + $0x200] sm:$0xff]
    %v5239 = vld [vmem:[#allocation3 + $0x208] sm:$0xff]
    %v5240 = vld [vmem:[#allocation3 + $0x210] sm:$0xff]
    %v5241 = vld [vmem:[#allocation3 + $0x218] sm:$0xff]
    %v5242 = vld [vmem:[#allocation3 + $0x220] sm:$0xff]
    %v5243 = vld [vmem:[#allocation3 + $0x228] sm:$0xff]
    %v5244 = vld [vmem:[#allocation3 + $0x230] sm:$0xff]
    %v5245 = vld [vmem:[#allocation3 + $0x238] sm:$0xff]
    %v5246 = vld [vmem:[#allocation3 + $0x240] sm:$0xff]
    %v5247 = vld [vmem:[#allocation3 + $0x248] sm:$0xff]
    %v5248 = vld [vmem:[#allocation3 + $0x250] sm:$0xff]
    %v5249 = vld [vmem:[#allocation3 + $0x258] sm:$0xff]
    %v5250 = vld [vmem:[#allocation3 + $0x260] sm:$0xff]
    %v5251 = vld [vmem:[#allocation3 + $0x268] sm:$0xff]
    %v5252 = vld [vmem:[#allocation3 + $0x270] sm:$0xff]
    %v5253 = vld [vmem:[#allocation3 + $0x278] sm:$0xff]
    %v5254 = vld [vmem:[%s2 + $0x80] sm:$0xff]
    %v5255 = vld [vmem:[%s2 + $0x88] sm:$0xff]
    %v5256 = vld [vmem:[%s2 + $0x90] sm:$0xff]
    %v5257 = vld [vmem:[%s2 + $0x98] sm:$0xff]
    %5258 = vmatprep.subr.mxu0 0.0
    %5259 = vmatpush1.msra.mxu0 %v5254
    %5260 = vmatprep.subr.mxu0 0.0
    %5261 = vmatpush1.msra.mxu0 %v5255
    %5262 = vmatprep.subr.mxu0 0.0
    %5263 = vmatpush1.msra.mxu0 %v5256
    %5264 = vmatprep.subr.mxu0 0.0
    %5265 = vmatpush1.msra.mxu0 %v5257
    %5266 = vmatprep.subr.mxu0 0.0
    %5267 = vmatpush1.msra.mxu0 0.0
    %5268 = vmatprep.subr.mxu0 0.0
    %5269 = vmatpush1.msra.mxu0 0.0
    %5270 = vmatprep.subr.mxu0 0.0
    %5271 = vmatpush1.msra.mxu0 0.0
    %5272 = vmatprep.subr.mxu0 0.0
    %5273 = vmatpush1.msra.mxu0 0.0
    %5274 = vmatprep.subr.mxu0 0.0
    %5275 = vmatpush1.msra.mxu0 0.0
    %5276 = vmatprep.subr.mxu0 0.0
    %5277 = vmatpush1.msra.mxu0 0.0
    %5278 = vmatprep.subr.mxu0 0.0
    %5279 = vmatpush1.msra.mxu0 0.0
    %5280 = vmatprep.subr.mxu0 0.0
    %5281 = vmatpush1.msra.mxu0 0.0
    %5282 = vmatprep.subr.mxu0 0.0
    %5283 = vmatpush1.msra.mxu0 0.0
    %5284 = vmatprep.subr.mxu0 0.0
    %5285 = vmatpush1.msra.mxu0 0.0
    %5286 = vmatprep.subr.mxu0 0.0
    %5287 = vmatpush1.msra.mxu0 0.0
    %5288 = vmatprep.subr.mxu0 0.0
    %5289 = vmatpush1.msra.mxu0 0.0
    %5290 = vmatprep.subr.mxu0 0.0
    %5291 = vmatpush1.msra.mxu0 0.0
    %5292 = vmatprep.subr.mxu0 0.0
    %5293 = vmatpush1.msra.mxu0 0.0
    %5294 = vmatprep.subr.mxu0 0.0
    %5295 = vmatpush1.msra.mxu0 0.0
    %5296 = vmatprep.subr.mxu0 0.0
    %5297 = vmatpush1.msra.mxu0 0.0
    %5298 = vmatprep.subr.mxu0 0.0
    %5299 = vmatpush1.msra.mxu0 0.0
    %5300 = vmatprep.subr.mxu0 0.0
    %5301 = vmatpush1.msra.mxu0 0.0
    %5302 = vmatprep.subr.mxu0 0.0
    %5303 = vmatpush1.msra.mxu0 0.0
    %5304 = vmatprep.subr.mxu0 0.0
    %5305 = vmatpush1.msra.mxu0 0.0
    %5306 = vmatprep.subr.mxu0 0.0
    %5307 = vmatpush1.msra.mxu0 0.0
    %5308 = vmatprep.subr.mxu0 0.0
    %5309 = vmatpush1.msra.mxu0 0.0
    %5310 = vmatprep.subr.mxu0 0.0
    %5311 = vmatpush1.msra.mxu0 0.0
    %5312 = vmatprep.subr.mxu0 0.0
    %5313 = vmatpush1.msra.mxu0 0.0
    %5314 = vmatprep.subr.mxu0 0.0
    %5315 = vmatpush1.msra.mxu0 0.0
    %5316 = vmatprep.subr.mxu0 0.0
    %5317 = vmatpush1.msra.mxu0 0.0
    %5318 = vmatprep.subr.mxu0 0.0
    %5319 = vmatpush1.msra.mxu0 0.0
    %5320 = vmatprep.subr.mxu0 0.0
    %5321 = vmatpush1.msra.mxu0 0.0
    %5322 = vmatprep.mubr.f32.mxu0 0.0
    %5323 = vmatmul.mubr.f32.gmra.mrb[0].mxu0 %v4892
    %v5324 = vpop.f32.mrb[0].mxu0
    %v5325 = vadd.f32 0.0, %v5324
    %v5326 = vpop.f32.mrb[0].mxu0
    %5327 = vdwg.mxu0
    %5328 = vmatprep.subr.mxu0 0.0
    %5329 = vmatpush1.msra.mxu0 %v5238
    %5330 = vmatprep.subr.mxu0 0.0
    %5331 = vmatpush1.msra.mxu0 %v5239
    %5332 = vmatprep.subr.mxu0 0.0
    %5333 = vmatpush1.msra.mxu0 %v5240
    %5334 = vmatprep.subr.mxu0 0.0
    %5335 = vmatpush1.msra.mxu0 %v5241
    %5336 = vmatprep.subr.mxu0 0.0
    %5337 = vmatpush1.msra.mxu0 %v5242
    %5338 = vmatprep.subr.mxu0 0.0
    %5339 = vmatpush1.msra.mxu0 %v5243
    %5340 = vmatprep.subr.mxu0 0.0
    %5341 = vmatpush1.msra.mxu0 %v5244
    %5342 = vmatprep.subr.mxu0 0.0
    %5343 = vmatpush1.msra.mxu0 %v5245
    %5344 = vmatprep.subr.mxu0 0.0
    %5345 = vmatpush1.msra.mxu0 %v5246
    %5346 = vmatprep.subr.mxu0 0.0
    %5347 = vmatpush1.msra.mxu0 %v5247
    %5348 = vmatprep.subr.mxu0 0.0
    %5349 = vmatpush1.msra.mxu0 %v5248
    %5350 = vmatprep.subr.mxu0 0.0
    %5351 = vmatpush1.msra.mxu0 %v5249
    %5352 = vmatprep.subr.mxu0 0.0
    %5353 = vmatpush1.msra.mxu0 %v5250
    %5354 = vmatprep.subr.mxu0 0.0
    %5355 = vmatpush1.msra.mxu0 %v5251
    %5356 = vmatprep.subr.mxu0 0.0
    %5357 = vmatpush1.msra.mxu0 %v5252
    %5358 = vmatprep.subr.mxu0 0.0
    %5359 = vmatpush1.msra.mxu0 %v5253
    %5360 = vmatprep.subr.mxu0 0.0
    %5361 = vmatpush1.msra.mxu0 0.0
    %5362 = vmatprep.subr.mxu0 0.0
    %5363 = vmatpush1.msra.mxu0 0.0
    %5364 = vmatprep.subr.mxu0 0.0
    %5365 = vmatpush1.msra.mxu0 0.0
    %5366 = vmatprep.subr.mxu0 0.0
    %5367 = vmatpush1.msra.mxu0 0.0
    %5368 = vmatprep.subr.mxu0 0.0
    %5369 = vmatpush1.msra.mxu0 0.0
    %5370 = vmatprep.subr.mxu0 0.0
    %5371 = vmatpush1.msra.mxu0 0.0
    %5372 = vmatprep.subr.mxu0 0.0
    %5373 = vmatpush1.msra.mxu0 0.0
    %5374 = vmatprep.subr.mxu0 0.0
    %5375 = vmatpush1.msra.mxu0 0.0
    %5376 = vmatprep.subr.mxu0 0.0
    %5377 = vmatpush1.msra.mxu0 0.0
    %5378 = vmatprep.subr.mxu0 0.0
    %5379 = vmatpush1.msra.mxu0 0.0
    %5380 = vmatprep.subr.mxu0 0.0
    %5381 = vmatpush1.msra.mxu0 0.0
    %5382 = vmatprep.subr.mxu0 0.0
    %5383 = vmatpush1.msra.mxu0 0.0
    %5384 = vmatprep.subr.mxu0 0.0
    %5385 = vmatpush1.msra.mxu0 0.0
    %5386 = vmatprep.subr.mxu0 0.0
    %5387 = vmatpush1.msra.mxu0 0.0
    %5388 = vmatprep.subr.mxu0 0.0
    %5389 = vmatpush1.msra.mxu0 0.0
    %5390 = vmatprep.subr.mxu0 0.0
    %5391 = vmatpush1.msra.mxu0 0.0
    %5392 = vmatprep.mubr.f32.mxu0 0.0
    %5393 = vmatmul.mubr.f32.gmra.mrb[0].mxu0 %v4969
    %v5394 = vpop.f32.mrb[0].mxu0
    %v5395 = vadd.f32 %v5325, %v5394
    %v5396 = vpop.f32.mrb[0].mxu0
    %5397 = vdwg.mxu0
    %v5398 = vadd.f32 %v5395, %v2796
    %v5399 = vxor.u32 %v5398, 2147483648
    %v5400 = vmul.f32 %v5399, 1.442695
    %v5401 = vpow.pop %v5400
    %v5402 = vadd.f32 %v5401, 1.0
    %v5403 = vrcp.pop %v5402
    %v5404 = vmul.f32 1.0, %v5403
    %v5405 = vtanh.pop %v5398
    %v5406 = vmul.f32 %v5404, %v4878
    %5408 = vrot.lane.b32.xlu0 %v5405, 64
    %v5409 = vpop.permute.xlu0 %5408
    %v5411 = vmul.f32 %v5404, %v5409
    %5413 = vrot.lane.b32.xlu0 %v5411, 32
    %v5414 = vpop.permute.xlu0 %5413
    %v5416 = vadd.f32 %v5406, %v5414
    %v5417 = vtanh.pop %v5416
    %5419 = vrot.lane.b32.xlu0 %v5417, 64
    %v5420 = vpop.permute.xlu0 %5419
    %v5422 = vmul.f32 %v5404, %v5420
    %v5423 = vld [vmem:[%s4 + $0x20] sm:$0xff]
    %v5424 = vld [vmem:[%s4 + $0x28] sm:$0xff]
    %v5425 = vld [vmem:[%s4 + $0x30] sm:$0xff]
    %v5426 = vld [vmem:[%s4 + $0x38] sm:$0xff]
    %5428 = vrot.lane.b32.xlu0 %v5422, 32
    %v5429 = vpop.permute.xlu0 %5428
    %v5430 = vsel %vm165, %v5429, 0
    %5432 = vmatprep.subr.mxu0 0.0
    %5433 = vmatpush1.msra.mxu0 %v5423
    %5434 = vmatprep.subr.mxu0 0.0
    %5435 = vmatpush1.msra.mxu0 %v5424
    %5436 = vmatprep.subr.mxu0 0.0
    %5437 = vmatpush1.msra.mxu0 %v5425
    %5438 = vmatprep.subr.mxu0 0.0
    %5439 = vmatpush1.msra.mxu0 %v5426
    %5440 = vmatprep.subr.mxu0 0.0
    %5441 = vmatpush1.msra.mxu0 0.0
    %5442 = vmatprep.subr.mxu0 0.0
    %5443 = vmatpush1.msra.mxu0 0.0
    %5444 = vmatprep.subr.mxu0 0.0
    %5445 = vmatpush1.msra.mxu0 0.0
    %5446 = vmatprep.subr.mxu0 0.0
    %5447 = vmatpush1.msra.mxu0 0.0
    %5448 = vmatprep.subr.mxu0 0.0
    %5449 = vmatpush1.msra.mxu0 0.0
    %5450 = vmatprep.subr.mxu0 0.0
    %5451 = vmatpush1.msra.mxu0 0.0
    %5452 = vmatprep.subr.mxu0 0.0
    %5453 = vmatpush1.msra.mxu0 0.0
    %5454 = vmatprep.subr.mxu0 0.0
    %5455 = vmatpush1.msra.mxu0 0.0
    %5456 = vmatprep.subr.mxu0 0.0
    %5457 = vmatpush1.msra.mxu0 0.0
    %5458 = vmatprep.subr.mxu0 0.0
    %5459 = vmatpush1.msra.mxu0 0.0
    %5460 = vmatprep.subr.mxu0 0.0
    %5461 = vmatpush1.msra.mxu0 0.0
    %5462 = vmatprep.subr.mxu0 0.0
    %5463 = vmatpush1.msra.mxu0 0.0
    %5464 = vmatprep.subr.mxu0 0.0
    %5465 = vmatpush1.msra.mxu0 0.0
    %5466 = vmatprep.subr.mxu0 0.0
    %5467 = vmatpush1.msra.mxu0 0.0
    %5468 = vmatprep.subr.mxu0 0.0
    %5469 = vmatpush1.msra.mxu0 0.0
    %5470 = vmatprep.subr.mxu0 0.0
    %5471 = vmatpush1.msra.mxu0 0.0
    %5472 = vmatprep.subr.mxu0 0.0
    %5473 = vmatpush1.msra.mxu0 0.0
    %5474 = vmatprep.subr.mxu0 0.0
    %5475 = vmatpush1.msra.mxu0 0.0
    %5476 = vmatprep.subr.mxu0 0.0
    %5477 = vmatpush1.msra.mxu0 0.0
    %5478 = vmatprep.subr.mxu0 0.0
    %5479 = vmatpush1.msra.mxu0 0.0
    %5480 = vmatprep.subr.mxu0 0.0
    %5481 = vmatpush1.msra.mxu0 0.0
    %5482 = vmatprep.subr.mxu0 0.0
    %5483 = vmatpush1.msra.mxu0 0.0
    %5484 = vmatprep.subr.mxu0 0.0
    %5485 = vmatpush1.msra.mxu0 0.0
    %5486 = vmatprep.subr.mxu0 0.0
    %5487 = vmatpush1.msra.mxu0 0.0
    %5488 = vmatprep.subr.mxu0 0.0
    %5489 = vmatpush1.msra.mxu0 0.0
    %5490 = vmatprep.subr.mxu0 0.0
    %5491 = vmatpush1.msra.mxu0 0.0
    %5492 = vmatprep.subr.mxu0 0.0
    %5493 = vmatpush1.msra.mxu0 0.0
    %5494 = vmatprep.subr.mxu0 0.0
    %5495 = vmatpush1.msra.mxu0 0.0
    %5496 = vmatprep.mubr.f32.mxu0 0.0
    %5497 = vmatmul.mubr.f32.gmra.mrb[0].mxu0 %v5430
    %v5498 = vpop.f32.mrb[0].mxu0
    %v5499 = vadd.f32 %v2806, %v5498
    %v5500 = vpop.f32.mrb[0].mxu0
    %5501 = vdwg.mxu0
    %v5502 = vxor.u32 %v5499, 2147483648
    %v5503 = vmul.f32 %v5502, 1.442695
    %v5504 = vpow.pop %v5503
    %v5505 = vadd.f32 %v5504, 1.0
    %v5506 = vrcp.pop %v5505
    %v5507 = vmul.f32 1.0, %v5506
    %5508 = vst [vmem:[%s6 + $0x18] sm:$0x3] %v5507
    %v5509 = vld [vmem:[#allocation3 + $0x180] sm:$0xff]
    %v5510 = vld [vmem:[#allocation3 + $0x188] sm:$0xff]
    %v5511 = vld [vmem:[#allocation3 + $0x190] sm:$0xff]
    %v5512 = vld [vmem:[#allocation3 + $0x198] sm:$0xff]
    %v5513 = vld [vmem:[#allocation3 + $0x1a0] sm:$0xff]
    %v5514 = vld [vmem:[#allocation3 + $0x1a8] sm:$0xff]
    %v5515 = vld [vmem:[#allocation3 + $0x1b0] sm:$0xff]
    %v5516 = vld [vmem:[#allocation3 + $0x1b8] sm:$0xff]
    %v5517 = vld [vmem:[#allocation3 + $0x1c0] sm:$0xff]
    %v5518 = vld [vmem:[#allocation3 + $0x1c8] sm:$0xff]
    %v5519 = vld [vmem:[#allocation3 + $0x1d0] sm:$0xff]
    %v5520 = vld [vmem:[#allocation3 + $0x1d8] sm:$0xff]
    %v5521 = vld [vmem:[#allocation3 + $0x1e0] sm:$0xff]
    %v5522 = vld [vmem:[#allocation3 + $0x1e8] sm:$0xff]
    %v5523 = vld [vmem:[#allocation3 + $0x1f0] sm:$0xff]
    %v5524 = vld [vmem:[#allocation3 + $0x1f8] sm:$0xff]
    %v5525 = vld [vmem:[%s2 + $0x60] sm:$0xff]
    %v5526 = vld [vmem:[%s2 + $0x68] sm:$0xff]
    %v5527 = vld [vmem:[%s2 + $0x70] sm:$0xff]
    %v5528 = vld [vmem:[%s2 + $0x78] sm:$0xff]
    %5529 = vmatprep.subr.mxu0 0.0
    %5530 = vmatpush1.msra.mxu0 %v5525
    %5531 = vmatprep.subr.mxu0 0.0
    %5532 = vmatpush1.msra.mxu0 %v5526
    %5533 = vmatprep.subr.mxu0 0.0
    %5534 = vmatpush1.msra.mxu0 %v5527
    %5535 = vmatprep.subr.mxu0 0.0
    %5536 = vmatpush1.msra.mxu0 %v5528
    %5537 = vmatprep.subr.mxu0 0.0
    %5538 = vmatpush1.msra.mxu0 0.0
    %5539 = vmatprep.subr.mxu0 0.0
    %5540 = vmatpush1.msra.mxu0 0.0
    %5541 = vmatprep.subr.mxu0 0.0
    %5542 = vmatpush1.msra.mxu0 0.0
    %5543 = vmatprep.subr.mxu0 0.0
    %5544 = vmatpush1.msra.mxu0 0.0
    %5545 = vmatprep.subr.mxu0 0.0
    %5546 = vmatpush1.msra.mxu0 0.0
    %5547 = vmatprep.subr.mxu0 0.0
    %5548 = vmatpush1.msra.mxu0 0.0
    %5549 = vmatprep.subr.mxu0 0.0
    %5550 = vmatpush1.msra.mxu0 0.0
    %5551 = vmatprep.subr.mxu0 0.0
    %5552 = vmatpush1.msra.mxu0 0.0
    %5553 = vmatprep.subr.mxu0 0.0
    %5554 = vmatpush1.msra.mxu0 0.0
    %5555 = vmatprep.subr.mxu0 0.0
    %5556 = vmatpush1.msra.mxu0 0.0
    %5557 = vmatprep.subr.mxu0 0.0
    %5558 = vmatpush1.msra.mxu0 0.0
    %5559 = vmatprep.subr.mxu0 0.0
    %5560 = vmatpush1.msra.mxu0 0.0
    %5561 = vmatprep.subr.mxu0 0.0
    %5562 = vmatpush1.msra.mxu0 0.0
    %5563 = vmatprep.subr.mxu0 0.0
    %5564 = vmatpush1.msra.mxu0 0.0
    %5565 = vmatprep.subr.mxu0 0.0
    %5566 = vmatpush1.msra.mxu0 0.0
    %5567 = vmatprep.subr.mxu0 0.0
    %5568 = vmatpush1.msra.mxu0 0.0
    %5569 = vmatprep.subr.mxu0 0.0
    %5570 = vmatpush1.msra.mxu0 0.0
    %5571 = vmatprep.subr.mxu0 0.0
    %5572 = vmatpush1.msra.mxu0 0.0
    %5573 = vmatprep.subr.mxu0 0.0
    %5574 = vmatpush1.msra.mxu0 0.0
    %5575 = vmatprep.subr.mxu0 0.0
    %5576 = vmatpush1.msra.mxu0 0.0
    %5577 = vmatprep.subr.mxu0 0.0
    %5578 = vmatpush1.msra.mxu0 0.0
    %5579 = vmatprep.subr.mxu0 0.0
    %5580 = vmatpush1.msra.mxu0 0.0
    %5581 = vmatprep.subr.mxu0 0.0
    %5582 = vmatpush1.msra.mxu0 0.0
    %5583 = vmatprep.subr.mxu0 0.0
    %5584 = vmatpush1.msra.mxu0 0.0
    %5585 = vmatprep.subr.mxu0 0.0
    %5586 = vmatpush1.msra.mxu0 0.0
    %5587 = vmatprep.subr.mxu0 0.0
    %5588 = vmatpush1.msra.mxu0 0.0
    %5589 = vmatprep.subr.mxu0 0.0
    %5590 = vmatpush1.msra.mxu0 0.0
    %5591 = vmatprep.subr.mxu0 0.0
    %5592 = vmatpush1.msra.mxu0 0.0
    %5593 = vmatprep.mubr.f32.mxu0 0.0
    %5594 = vmatmul.mubr.f32.gmra.mrb[0].mxu0 %v5163
    %v5595 = vpop.f32.mrb[0].mxu0
    %v5596 = vadd.f32 0.0, %v5595
    %v5597 = vpop.f32.mrb[0].mxu0
    %5598 = vdwg.mxu0
    %5599 = vmatprep.subr.mxu0 0.0
    %5600 = vmatpush1.msra.mxu0 %v5509
    %5601 = vmatprep.subr.mxu0 0.0
    %5602 = vmatpush1.msra.mxu0 %v5510
    %5603 = vmatprep.subr.mxu0 0.0
    %5604 = vmatpush1.msra.mxu0 %v5511
    %5605 = vmatprep.subr.mxu0 0.0
    %5606 = vmatpush1.msra.mxu0 %v5512
    %5607 = vmatprep.subr.mxu0 0.0
    %5608 = vmatpush1.msra.mxu0 %v5513
    %5609 = vmatprep.subr.mxu0 0.0
    %5610 = vmatpush1.msra.mxu0 %v5514
    %5611 = vmatprep.subr.mxu0 0.0
    %5612 = vmatpush1.msra.mxu0 %v5515
    %5613 = vmatprep.subr.mxu0 0.0
    %5614 = vmatpush1.msra.mxu0 %v5516
    %5615 = vmatprep.subr.mxu0 0.0
    %5616 = vmatpush1.msra.mxu0 %v5517
    %5617 = vmatprep.subr.mxu0 0.0
    %5618 = vmatpush1.msra.mxu0 %v5518
    %5619 = vmatprep.subr.mxu0 0.0
    %5620 = vmatpush1.msra.mxu0 %v5519
    %5621 = vmatprep.subr.mxu0 0.0
    %5622 = vmatpush1.msra.mxu0 %v5520
    %5623 = vmatprep.subr.mxu0 0.0
    %5624 = vmatpush1.msra.mxu0 %v5521
    %5625 = vmatprep.subr.mxu0 0.0
    %5626 = vmatpush1.msra.mxu0 %v5522
    %5627 = vmatprep.subr.mxu0 0.0
    %5628 = vmatpush1.msra.mxu0 %v5523
    %5629 = vmatprep.subr.mxu0 0.0
    %5630 = vmatpush1.msra.mxu0 %v5524
    %5631 = vmatprep.subr.mxu0 0.0
    %5632 = vmatpush1.msra.mxu0 0.0
    %5633 = vmatprep.subr.mxu0 0.0
    %5634 = vmatpush1.msra.mxu0 0.0
    %5635 = vmatprep.subr.mxu0 0.0
    %5636 = vmatpush1.msra.mxu0 0.0
    %5637 = vmatprep.subr.mxu0 0.0
    %5638 = vmatpush1.msra.mxu0 0.0
    %5639 = vmatprep.subr.mxu0 0.0
    %5640 = vmatpush1.msra.mxu0 0.0
    %5641 = vmatprep.subr.mxu0 0.0
    %5642 = vmatpush1.msra.mxu0 0.0
    %5643 = vmatprep.subr.mxu0 0.0
    %5644 = vmatpush1.msra.mxu0 0.0
    %5645 = vmatprep.subr.mxu0 0.0
    %5646 = vmatpush1.msra.mxu0 0.0
    %5647 = vmatprep.subr.mxu0 0.0
    %5648 = vmatpush1.msra.mxu0 0.0
    %5649 = vmatprep.subr.mxu0 0.0
    %5650 = vmatpush1.msra.mxu0 0.0
    %5651 = vmatprep.subr.mxu0 0.0
    %5652 = vmatpush1.msra.mxu0 0.0
    %5653 = vmatprep.subr.mxu0 0.0
    %5654 = vmatpush1.msra.mxu0 0.0
    %5655 = vmatprep.subr.mxu0 0.0
    %5656 = vmatpush1.msra.mxu0 0.0
    %5657 = vmatprep.subr.mxu0 0.0
    %5658 = vmatpush1.msra.mxu0 0.0
    %5659 = vmatprep.subr.mxu0 0.0
    %5660 = vmatpush1.msra.mxu0 0.0
    %5661 = vmatprep.subr.mxu0 0.0
    %5662 = vmatpush1.msra.mxu0 0.0
    %5663 = vmatprep.mubr.f32.mxu0 0.0
    %5664 = vmatmul.mubr.f32.gmra.mrb[0].mxu0 %v5236
    %v5665 = vpop.f32.mrb[0].mxu0
    %v5666 = vadd.f32 %v5596, %v5665
    %v5667 = vpop.f32.mrb[0].mxu0
    %5668 = vdwg.mxu0
    %v5669 = vadd.f32 %v5666, %v2791
    %v5670 = vxor.u32 %v5669, 2147483648
    %v5671 = vmul.f32 %v5670, 1.442695
    %v5672 = vpow.pop %v5671
    %v5673 = vadd.f32 %v5672, 1.0
    %v5674 = vrcp.pop %v5673
    %v5675 = vmul.f32 1.0, %v5674
    %v5676 = vtanh.pop %v5669
    %v5677 = vmul.f32 %v5675, %v5149
    %5679 = vrot.lane.b32.xlu0 %v5676, 64
    %v5680 = vpop.permute.xlu0 %5679
    %v5682 = vmul.f32 %v5675, %v5680
    %5684 = vrot.lane.b32.xlu0 %v5682, 32
    %v5685 = vpop.permute.xlu0 %5684
    %v5687 = vadd.f32 %v5677, %v5685
    %v5688 = vtanh.pop %v5687
    %5690 = vrot.lane.b32.xlu0 %v5688, 64
    %v5691 = vpop.permute.xlu0 %5690
    %v5693 = vmul.f32 %v5675, %v5691
    %v5694 = vld [vmem:[%s4] sm:$0xff]
    %v5695 = vld [vmem:[%s4 + $0x8] sm:$0xff]
    %v5696 = vld [vmem:[%s4 + $0x10] sm:$0xff]
    %v5697 = vld [vmem:[%s4 + $0x18] sm:$0xff]
    %5699 = vrot.lane.b32.xlu0 %v5693, 32
    %v5700 = vpop.permute.xlu0 %5699
    %v5701 = vsel %vm165, %v5700, 0
    %5703 = vmatprep.subr.mxu0 0.0
    %5704 = vmatpush1.msra.mxu0 %v5694
    %5705 = vmatprep.subr.mxu0 0.0
    %5706 = vmatpush1.msra.mxu0 %v5695
    %5707 = vmatprep.subr.mxu0 0.0
    %5708 = vmatpush1.msra.mxu0 %v5696
    %5709 = vmatprep.subr.mxu0 0.0
    %5710 = vmatpush1.msra.mxu0 %v5697
    %5711 = vmatprep.subr.mxu0 0.0
    %5712 = vmatpush1.msra.mxu0 0.0
    %5713 = vmatprep.subr.mxu0 0.0
    %5714 = vmatpush1.msra.mxu0 0.0
    %5715 = vmatprep.subr.mxu0 0.0
    %5716 = vmatpush1.msra.mxu0 0.0
    %5717 = vmatprep.subr.mxu0 0.0
    %5718 = vmatpush1.msra.mxu0 0.0
    %5719 = vmatprep.subr.mxu0 0.0
    %5720 = vmatpush1.msra.mxu0 0.0
    %5721 = vmatprep.subr.mxu0 0.0
    %5722 = vmatpush1.msra.mxu0 0.0
    %5723 = vmatprep.subr.mxu0 0.0
    %5724 = vmatpush1.msra.mxu0 0.0
    %5725 = vmatprep.subr.mxu0 0.0
    %5726 = vmatpush1.msra.mxu0 0.0
    %5727 = vmatprep.subr.mxu0 0.0
    %5728 = vmatpush1.msra.mxu0 0.0
    %5729 = vmatprep.subr.mxu0 0.0
    %5730 = vmatpush1.msra.mxu0 0.0
    %5731 = vmatprep.subr.mxu0 0.0
    %5732 = vmatpush1.msra.mxu0 0.0
    %5733 = vmatprep.subr.mxu0 0.0
    %5734 = vmatpush1.msra.mxu0 0.0
    %5735 = vmatprep.subr.mxu0 0.0
    %5736 = vmatpush1.msra.mxu0 0.0
    %5737 = vmatprep.subr.mxu0 0.0
    %5738 = vmatpush1.msra.mxu0 0.0
    %5739 = vmatprep.subr.mxu0 0.0
    %5740 = vmatpush1.msra.mxu0 0.0
    %5741 = vmatprep.subr.mxu0 0.0
    %5742 = vmatpush1.msra.mxu0 0.0
    %5743 = vmatprep.subr.mxu0 0.0
    %5744 = vmatpush1.msra.mxu0 0.0
    %5745 = vmatprep.subr.mxu0 0.0
    %5746 = vmatpush1.msra.mxu0 0.0
    %5747 = vmatprep.subr.mxu0 0.0
    %5748 = vmatpush1.msra.mxu0 0.0
    %5749 = vmatprep.subr.mxu0 0.0
    %5750 = vmatpush1.msra.mxu0 0.0
    %5751 = vmatprep.subr.mxu0 0.0
    %5752 = vmatpush1.msra.mxu0 0.0
    %5753 = vmatprep.subr.mxu0 0.0
    %5754 = vmatpush1.msra.mxu0 0.0
    %5755 = vmatprep.subr.mxu0 0.0
    %5756 = vmatpush1.msra.mxu0 0.0
    %5757 = vmatprep.subr.mxu0 0.0
    %5758 = vmatpush1.msra.mxu0 0.0
    %5759 = vmatprep.subr.mxu0 0.0
    %5760 = vmatpush1.msra.mxu0 0.0
    %5761 = vmatprep.subr.mxu0 0.0
    %5762 = vmatpush1.msra.mxu0 0.0
    %5763 = vmatprep.subr.mxu0 0.0
    %5764 = vmatpush1.msra.mxu0 0.0
    %5765 = vmatprep.subr.mxu0 0.0
    %5766 = vmatpush1.msra.mxu0 0.0
    %5767 = vmatprep.mubr.f32.mxu0 0.0
    %5768 = vmatmul.mubr.f32.gmra.mrb[0].mxu0 %v5701
    %v5769 = vpop.f32.mrb[0].mxu0
    %v5770 = vadd.f32 %v2801, %v5769
    %v5771 = vpop.f32.mrb[0].mxu0
    %5772 = vdwg.mxu0
    %v5773 = vmax.f32 %v5770, -1.0
    %v5774 = vmin.f32 %v5773, 1.0
    %5775 = vst [vmem:[%s6 + $0xa] sm:$0x3] %v5774
    %v5776 = vld [vmem:[#allocation3 + $0x200] sm:$0xff]
    %v5777 = vld [vmem:[#allocation3 + $0x208] sm:$0xff]
    %v5778 = vld [vmem:[#allocation3 + $0x210] sm:$0xff]
    %v5779 = vld [vmem:[#allocation3 + $0x218] sm:$0xff]
    %v5780 = vld [vmem:[#allocation3 + $0x220] sm:$0xff]
    %v5781 = vld [vmem:[#allocation3 + $0x228] sm:$0xff]
    %v5782 = vld [vmem:[#allocation3 + $0x230] sm:$0xff]
    %v5783 = vld [vmem:[#allocation3 + $0x238] sm:$0xff]
    %v5784 = vld [vmem:[#allocation3 + $0x240] sm:$0xff]
    %v5785 = vld [vmem:[#allocation3 + $0x248] sm:$0xff]
    %v5786 = vld [vmem:[#allocation3 + $0x250] sm:$0xff]
    %v5787 = vld [vmem:[#allocation3 + $0x258] sm:$0xff]
    %v5788 = vld [vmem:[#allocation3 + $0x260] sm:$0xff]
    %v5789 = vld [vmem:[#allocation3 + $0x268] sm:$0xff]
    %v5790 = vld [vmem:[#allocation3 + $0x270] sm:$0xff]
    %v5791 = vld [vmem:[#allocation3 + $0x278] sm:$0xff]
    %v5792 = vld [vmem:[%s2 + $0x80] sm:$0xff]
    %v5793 = vld [vmem:[%s2 + $0x88] sm:$0xff]
    %v5794 = vld [vmem:[%s2 + $0x90] sm:$0xff]
    %v5795 = vld [vmem:[%s2 + $0x98] sm:$0xff]
    %5796 = vmatprep.subr.mxu0 0.0
    %5797 = vmatpush1.msra.mxu0 %v5792
    %5798 = vmatprep.subr.mxu0 0.0
    %5799 = vmatpush1.msra.mxu0 %v5793
    %5800 = vmatprep.subr.mxu0 0.0
    %5801 = vmatpush1.msra.mxu0 %v5794
    %5802 = vmatprep.subr.mxu0 0.0
    %5803 = vmatpush1.msra.mxu0 %v5795
    %5804 = vmatprep.subr.mxu0 0.0
    %5805 = vmatpush1.msra.mxu0 0.0
    %5806 = vmatprep.subr.mxu0 0.0
    %5807 = vmatpush1.msra.mxu0 0.0
    %5808 = vmatprep.subr.mxu0 0.0
    %5809 = vmatpush1.msra.mxu0 0.0
    %5810 = vmatprep.subr.mxu0 0.0
    %5811 = vmatpush1.msra.mxu0 0.0
    %5812 = vmatprep.subr.mxu0 0.0
    %5813 = vmatpush1.msra.mxu0 0.0
    %5814 = vmatprep.subr.mxu0 0.0
    %5815 = vmatpush1.msra.mxu0 0.0
    %5816 = vmatprep.subr.mxu0 0.0
    %5817 = vmatpush1.msra.mxu0 0.0
    %5818 = vmatprep.subr.mxu0 0.0
    %5819 = vmatpush1.msra.mxu0 0.0
    %5820 = vmatprep.subr.mxu0 0.0
    %5821 = vmatpush1.msra.mxu0 0.0
    %5822 = vmatprep.subr.mxu0 0.0
    %5823 = vmatpush1.msra.mxu0 0.0
    %5824 = vmatprep.subr.mxu0 0.0
    %5825 = vmatpush1.msra.mxu0 0.0
    %5826 = vmatprep.subr.mxu0 0.0
    %5827 = vmatpush1.msra.mxu0 0.0
    %5828 = vmatprep.subr.mxu0 0.0
    %5829 = vmatpush1.msra.mxu0 0.0
    %5830 = vmatprep.subr.mxu0 0.0
    %5831 = vmatpush1.msra.mxu0 0.0
    %5832 = vmatprep.subr.mxu0 0.0
    %5833 = vmatpush1.msra.mxu0 0.0
    %5834 = vmatprep.subr.mxu0 0.0
    %5835 = vmatpush1.msra.mxu0 0.0
    %5836 = vmatprep.subr.mxu0 0.0
    %5837 = vmatpush1.msra.mxu0 0.0
    %5838 = vmatprep.subr.mxu0 0.0
    %5839 = vmatpush1.msra.mxu0 0.0
    %5840 = vmatprep.subr.mxu0 0.0
    %5841 = vmatpush1.msra.mxu0 0.0
    %5842 = vmatprep.subr.mxu0 0.0
    %5843 = vmatpush1.msra.mxu0 0.0
    %5844 = vmatprep.subr.mxu0 0.0
    %5845 = vmatpush1.msra.mxu0 0.0
    %5846 = vmatprep.subr.mxu0 0.0
    %5847 = vmatpush1.msra.mxu0 0.0
    %5848 = vmatprep.subr.mxu0 0.0
    %5849 = vmatpush1.msra.mxu0 0.0
    %5850 = vmatprep.subr.mxu0 0.0
    %5851 = vmatpush1.msra.mxu0 0.0
    %5852 = vmatprep.subr.mxu0 0.0
    %5853 = vmatpush1.msra.mxu0 0.0
    %5854 = vmatprep.subr.mxu0 0.0
    %5855 = vmatpush1.msra.mxu0 0.0
    %5856 = vmatprep.subr.mxu0 0.0
    %5857 = vmatpush1.msra.mxu0 0.0
    %5858 = vmatprep.subr.mxu0 0.0
    %5859 = vmatpush1.msra.mxu0 0.0
    %5860 = vmatprep.mubr.f32.mxu0 0.0
    %5861 = vmatmul.mubr.f32.gmra.mrb[0].mxu0 %v5430
    %v5862 = vpop.f32.mrb[0].mxu0
    %v5863 = vadd.f32 0.0, %v5862
    %v5864 = vpop.f32.mrb[0].mxu0
    %5865 = vdwg.mxu0
    %5866 = vmatprep.subr.mxu0 0.0
    %5867 = vmatpush1.msra.mxu0 %v5776
    %5868 = vmatprep.subr.mxu0 0.0
    %5869 = vmatpush1.msra.mxu0 %v5777
    %5870 = vmatprep.subr.mxu0 0.0
    %5871 = vmatpush1.msra.mxu0 %v5778
    %5872 = vmatprep.subr.mxu0 0.0
    %5873 = vmatpush1.msra.mxu0 %v5779
    %5874 = vmatprep.subr.mxu0 0.0
    %5875 = vmatpush1.msra.mxu0 %v5780
    %5876 = vmatprep.subr.mxu0 0.0
    %5877 = vmatpush1.msra.mxu0 %v5781
    %5878 = vmatprep.subr.mxu0 0.0
    %5879 = vmatpush1.msra.mxu0 %v5782
    %5880 = vmatprep.subr.mxu0 0.0
    %5881 = vmatpush1.msra.mxu0 %v5783
    %5882 = vmatprep.subr.mxu0 0.0
    %5883 = vmatpush1.msra.mxu0 %v5784
    %5884 = vmatprep.subr.mxu0 0.0
    %5885 = vmatpush1.msra.mxu0 %v5785
    %5886 = vmatprep.subr.mxu0 0.0
    %5887 = vmatpush1.msra.mxu0 %v5786
    %5888 = vmatprep.subr.mxu0 0.0
    %5889 = vmatpush1.msra.mxu0 %v5787
    %5890 = vmatprep.subr.mxu0 0.0
    %5891 = vmatpush1.msra.mxu0 %v5788
    %5892 = vmatprep.subr.mxu0 0.0
    %5893 = vmatpush1.msra.mxu0 %v5789
    %5894 = vmatprep.subr.mxu0 0.0
    %5895 = vmatpush1.msra.mxu0 %v5790
    %5896 = vmatprep.subr.mxu0 0.0
    %5897 = vmatpush1.msra.mxu0 %v5791
    %5898 = vmatprep.subr.mxu0 0.0
    %5899 = vmatpush1.msra.mxu0 0.0
    %5900 = vmatprep.subr.mxu0 0.0
    %5901 = vmatpush1.msra.mxu0 0.0
    %5902 = vmatprep.subr.mxu0 0.0
    %5903 = vmatpush1.msra.mxu0 0.0
    %5904 = vmatprep.subr.mxu0 0.0
    %5905 = vmatpush1.msra.mxu0 0.0
    %5906 = vmatprep.subr.mxu0 0.0
    %5907 = vmatpush1.msra.mxu0 0.0
    %5908 = vmatprep.subr.mxu0 0.0
    %5909 = vmatpush1.msra.mxu0 0.0
    %5910 = vmatprep.subr.mxu0 0.0
    %5911 = vmatpush1.msra.mxu0 0.0
    %5912 = vmatprep.subr.mxu0 0.0
    %5913 = vmatpush1.msra.mxu0 0.0
    %5914 = vmatprep.subr.mxu0 0.0
    %5915 = vmatpush1.msra.mxu0 0.0
    %5916 = vmatprep.subr.mxu0 0.0
    %5917 = vmatpush1.msra.mxu0 0.0
    %5918 = vmatprep.subr.mxu0 0.0
    %5919 = vmatpush1.msra.mxu0 0.0
    %5920 = vmatprep.subr.mxu0 0.0
    %5921 = vmatpush1.msra.mxu0 0.0
    %5922 = vmatprep.subr.mxu0 0.0
    %5923 = vmatpush1.msra.mxu0 0.0
    %5924 = vmatprep.subr.mxu0 0.0
    %5925 = vmatpush1.msra.mxu0 0.0
    %5926 = vmatprep.subr.mxu0 0.0
    %5927 = vmatpush1.msra.mxu0 0.0
    %5928 = vmatprep.subr.mxu0 0.0
    %5929 = vmatpush1.msra.mxu0 0.0
    %5930 = vmatprep.mubr.f32.mxu0 0.0
    %5931 = vmatmul.mubr.f32.gmra.mrb[0].mxu0 %v5507
    %v5932 = vpop.f32.mrb[0].mxu0
    %v5933 = vadd.f32 %v5863, %v5932
    %v5934 = vpop.f32.mrb[0].mxu0
    %5935 = vdwg.mxu0
    %v5936 = vadd.f32 %v5933, %v2796
    %v5937 = vxor.u32 %v5936, 2147483648
    %v5938 = vmul.f32 %v5937, 1.442695
    %v5939 = vpow.pop %v5938
    %v5940 = vadd.f32 %v5939, 1.0
    %v5941 = vrcp.pop %v5940
    %v5942 = vmul.f32 1.0, %v5941
    %v5943 = vtanh.pop %v5936
    %v5944 = vmul.f32 %v5942, %v5416
    %5946 = vrot.lane.b32.xlu0 %v5943, 64
    %v5947 = vpop.permute.xlu0 %5946
    %v5949 = vmul.f32 %v5942, %v5947
    %5951 = vrot.lane.b32.xlu0 %v5949, 32
    %v5952 = vpop.permute.xlu0 %5951
    %v5954 = vadd.f32 %v5944, %v5952
    %v5955 = vtanh.pop %v5954
    %5957 = vrot.lane.b32.xlu0 %v5955, 64
    %v5958 = vpop.permute.xlu0 %5957
    %v5960 = vmul.f32 %v5942, %v5958
    %v5961 = vld [vmem:[%s4 + $0x20] sm:$0xff]
    %v5962 = vld [vmem:[%s4 + $0x28] sm:$0xff]
    %v5963 = vld [vmem:[%s4 + $0x30] sm:$0xff]
    %v5964 = vld [vmem:[%s4 + $0x38] sm:$0xff]
    %5966 = vrot.lane.b32.xlu0 %v5960, 32
    %v5967 = vpop.permute.xlu0 %5966
    %v5968 = vsel %vm165, %v5967, 0
    %5970 = vmatprep.subr.mxu0 0.0
    %5971 = vmatpush1.msra.mxu0 %v5961
    %5972 = vmatprep.subr.mxu0 0.0
    %5973 = vmatpush1.msra.mxu0 %v5962
    %5974 = vmatprep.subr.mxu0 0.0
    %5975 = vmatpush1.msra.mxu0 %v5963
    %5976 = vmatprep.subr.mxu0 0.0
    %5977 = vmatpush1.msra.mxu0 %v5964
    %5978 = vmatprep.subr.mxu0 0.0
    %5979 = vmatpush1.msra.mxu0 0.0
    %5980 = vmatprep.subr.mxu0 0.0
    %5981 = vmatpush1.msra.mxu0 0.0
    %5982 = vmatprep.subr.mxu0 0.0
    %5983 = vmatpush1.msra.mxu0 0.0
    %5984 = vmatprep.subr.mxu0 0.0
    %5985 = vmatpush1.msra.mxu0 0.0
    %5986 = vmatprep.subr.mxu0 0.0
    %5987 = vmatpush1.msra.mxu0 0.0
    %5988 = vmatprep.subr.mxu0 0.0
    %5989 = vmatpush1.msra.mxu0 0.0
    %5990 = vmatprep.subr.mxu0 0.0
    %5991 = vmatpush1.msra.mxu0 0.0
    %5992 = vmatprep.subr.mxu0 0.0
    %5993 = vmatpush1.msra.mxu0 0.0
    %5994 = vmatprep.subr.mxu0 0.0
    %5995 = vmatpush1.msra.mxu0 0.0
    %5996 = vmatprep.subr.mxu0 0.0
    %5997 = vmatpush1.msra.mxu0 0.0
    %5998 = vmatprep.subr.mxu0 0.0
    %5999 = vmatpush1.msra.mxu0 0.0
    %6000 = vmatprep.subr.mxu0 0.0
    %6001 = vmatpush1.msra.mxu0 0.0
    %6002 = vmatprep.subr.mxu0 0.0
    %6003 = vmatpush1.msra.mxu0 0.0
    %6004 = vmatprep.subr.mxu0 0.0
    %6005 = vmatpush1.msra.mxu0 0.0
    %6006 = vmatprep.subr.mxu0 0.0
    %6007 = vmatpush1.msra.mxu0 0.0
    %6008 = vmatprep.subr.mxu0 0.0
    %6009 = vmatpush1.msra.mxu0 0.0
    %6010 = vmatprep.subr.mxu0 0.0
    %6011 = vmatpush1.msra.mxu0 0.0
    %6012 = vmatprep.subr.mxu0 0.0
    %6013 = vmatpush1.msra.mxu0 0.0
    %6014 = vmatprep.subr.mxu0 0.0
    %6015 = vmatpush1.msra.mxu0 0.0
    %6016 = vmatprep.subr.mxu0 0.0
    %6017 = vmatpush1.msra.mxu0 0.0
    %6018 = vmatprep.subr.mxu0 0.0
    %6019 = vmatpush1.msra.mxu0 0.0
    %6020 = vmatprep.subr.mxu0 0.0
    %6021 = vmatpush1.msra.mxu0 0.0
    %6022 = vmatprep.subr.mxu0 0.0
    %6023 = vmatpush1.msra.mxu0 0.0
    %6024 = vmatprep.subr.mxu0 0.0
    %6025 = vmatpush1.msra.mxu0 0.0
    %6026 = vmatprep.subr.mxu0 0.0
    %6027 = vmatpush1.msra.mxu0 0.0
    %6028 = vmatprep.subr.mxu0 0.0
    %6029 = vmatpush1.msra.mxu0 0.0
    %6030 = vmatprep.subr.mxu0 0.0
    %6031 = vmatpush1.msra.mxu0 0.0
    %6032 = vmatprep.subr.mxu0 0.0
    %6033 = vmatpush1.msra.mxu0 0.0
    %6034 = vmatprep.mubr.f32.mxu0 0.0
    %6035 = vmatmul.mubr.f32.gmra.mrb[0].mxu0 %v5968
    %v6036 = vpop.f32.mrb[0].mxu0
    %v6037 = vadd.f32 %v2806, %v6036
    %v6038 = vpop.f32.mrb[0].mxu0
    %6039 = vdwg.mxu0
    %v6040 = vxor.u32 %v6037, 2147483648
    %v6041 = vmul.f32 %v6040, 1.442695
    %v6042 = vpow.pop %v6041
    %v6043 = vadd.f32 %v6042, 1.0
    %v6044 = vrcp.pop %v6043
    %v6045 = vmul.f32 1.0, %v6044
    %6046 = vst [vmem:[%s6 + $0x1a] sm:$0x3] %v6045
    %v6047 = vld [vmem:[#allocation3 + $0x180] sm:$0xff]
    %v6048 = vld [vmem:[#allocation3 + $0x188] sm:$0xff]
    %v6049 = vld [vmem:[#allocation3 + $0x190] sm:$0xff]
    %v6050 = vld [vmem:[#allocation3 + $0x198] sm:$0xff]
    %v6051 = vld [vmem:[#allocation3 + $0x1a0] sm:$0xff]
    %v6052 = vld [vmem:[#allocation3 + $0x1a8] sm:$0xff]
    %v6053 = vld [vmem:[#allocation3 + $0x1b0] sm:$0xff]
    %v6054 = vld [vmem:[#allocation3 + $0x1b8] sm:$0xff]
    %v6055 = vld [vmem:[#allocation3 + $0x1c0] sm:$0xff]
    %v6056 = vld [vmem:[#allocation3 + $0x1c8] sm:$0xff]
    %v6057 = vld [vmem:[#allocation3 + $0x1d0] sm:$0xff]
    %v6058 = vld [vmem:[#allocation3 + $0x1d8] sm:$0xff]
    %v6059 = vld [vmem:[#allocation3 + $0x1e0] sm:$0xff]
    %v6060 = vld [vmem:[#allocation3 + $0x1e8] sm:$0xff]
    %v6061 = vld [vmem:[#allocation3 + $0x1f0] sm:$0xff]
    %v6062 = vld [vmem:[#allocation3 + $0x1f8] sm:$0xff]
    %v6063 = vld [vmem:[%s2 + $0x60] sm:$0xff]
    %v6064 = vld [vmem:[%s2 + $0x68] sm:$0xff]
    %v6065 = vld [vmem:[%s2 + $0x70] sm:$0xff]
    %v6066 = vld [vmem:[%s2 + $0x78] sm:$0xff]
    %6067 = vmatprep.subr.mxu0 0.0
    %6068 = vmatpush1.msra.mxu0 %v6063
    %6069 = vmatprep.subr.mxu0 0.0
    %6070 = vmatpush1.msra.mxu0 %v6064
    %6071 = vmatprep.subr.mxu0 0.0
    %6072 = vmatpush1.msra.mxu0 %v6065
    %6073 = vmatprep.subr.mxu0 0.0
    %6074 = vmatpush1.msra.mxu0 %v6066
    %6075 = vmatprep.subr.mxu0 0.0
    %6076 = vmatpush1.msra.mxu0 0.0
    %6077 = vmatprep.subr.mxu0 0.0
    %6078 = vmatpush1.msra.mxu0 0.0
    %6079 = vmatprep.subr.mxu0 0.0
    %6080 = vmatpush1.msra.mxu0 0.0
    %6081 = vmatprep.subr.mxu0 0.0
    %6082 = vmatpush1.msra.mxu0 0.0
    %6083 = vmatprep.subr.mxu0 0.0
    %6084 = vmatpush1.msra.mxu0 0.0
    %6085 = vmatprep.subr.mxu0 0.0
    %6086 = vmatpush1.msra.mxu0 0.0
    %6087 = vmatprep.subr.mxu0 0.0
    %6088 = vmatpush1.msra.mxu0 0.0
    %6089 = vmatprep.subr.mxu0 0.0
    %6090 = vmatpush1.msra.mxu0 0.0
    %6091 = vmatprep.subr.mxu0 0.0
    %6092 = vmatpush1.msra.mxu0 0.0
    %6093 = vmatprep.subr.mxu0 0.0
    %6094 = vmatpush1.msra.mxu0 0.0
    %6095 = vmatprep.subr.mxu0 0.0
    %6096 = vmatpush1.msra.mxu0 0.0
    %6097 = vmatprep.subr.mxu0 0.0
    %6098 = vmatpush1.msra.mxu0 0.0
    %6099 = vmatprep.subr.mxu0 0.0
    %6100 = vmatpush1.msra.mxu0 0.0
    %6101 = vmatprep.subr.mxu0 0.0
    %6102 = vmatpush1.msra.mxu0 0.0
    %6103 = vmatprep.subr.mxu0 0.0
    %6104 = vmatpush1.msra.mxu0 0.0
    %6105 = vmatprep.subr.mxu0 0.0
    %6106 = vmatpush1.msra.mxu0 0.0
    %6107 = vmatprep.subr.mxu0 0.0
    %6108 = vmatpush1.msra.mxu0 0.0
    %6109 = vmatprep.subr.mxu0 0.0
    %6110 = vmatpush1.msra.mxu0 0.0
    %6111 = vmatprep.subr.mxu0 0.0
    %6112 = vmatpush1.msra.mxu0 0.0
    %6113 = vmatprep.subr.mxu0 0.0
    %6114 = vmatpush1.msra.mxu0 0.0
    %6115 = vmatprep.subr.mxu0 0.0
    %6116 = vmatpush1.msra.mxu0 0.0
    %6117 = vmatprep.subr.mxu0 0.0
    %6118 = vmatpush1.msra.mxu0 0.0
    %6119 = vmatprep.subr.mxu0 0.0
    %6120 = vmatpush1.msra.mxu0 0.0
    %6121 = vmatprep.subr.mxu0 0.0
    %6122 = vmatpush1.msra.mxu0 0.0
    %6123 = vmatprep.subr.mxu0 0.0
    %6124 = vmatpush1.msra.mxu0 0.0
    %6125 = vmatprep.subr.mxu0 0.0
    %6126 = vmatpush1.msra.mxu0 0.0
    %6127 = vmatprep.subr.mxu0 0.0
    %6128 = vmatpush1.msra.mxu0 0.0
    %6129 = vmatprep.subr.mxu0 0.0
    %6130 = vmatpush1.msra.mxu0 0.0
    %6131 = vmatprep.mubr.f32.mxu0 0.0
    %6132 = vmatmul.mubr.f32.gmra.mrb[0].mxu0 %v5701
    %v6133 = vpop.f32.mrb[0].mxu0
    %v6134 = vadd.f32 0.0, %v6133
    %v6135 = vpop.f32.mrb[0].mxu0
    %6136 = vdwg.mxu0
    %6137 = vmatprep.subr.mxu0 0.0
    %6138 = vmatpush1.msra.mxu0 %v6047
    %6139 = vmatprep.subr.mxu0 0.0
    %6140 = vmatpush1.msra.mxu0 %v6048
    %6141 = vmatprep.subr.mxu0 0.0
    %6142 = vmatpush1.msra.mxu0 %v6049
    %6143 = vmatprep.subr.mxu0 0.0
    %6144 = vmatpush1.msra.mxu0 %v6050
    %6145 = vmatprep.subr.mxu0 0.0
    %6146 = vmatpush1.msra.mxu0 %v6051
    %6147 = vmatprep.subr.mxu0 0.0
    %6148 = vmatpush1.msra.mxu0 %v6052
    %6149 = vmatprep.subr.mxu0 0.0
    %6150 = vmatpush1.msra.mxu0 %v6053
    %6151 = vmatprep.subr.mxu0 0.0
    %6152 = vmatpush1.msra.mxu0 %v6054
    %6153 = vmatprep.subr.mxu0 0.0
    %6154 = vmatpush1.msra.mxu0 %v6055
    %6155 = vmatprep.subr.mxu0 0.0
    %6156 = vmatpush1.msra.mxu0 %v6056
    %6157 = vmatprep.subr.mxu0 0.0
    %6158 = vmatpush1.msra.mxu0 %v6057
    %6159 = vmatprep.subr.mxu0 0.0
    %6160 = vmatpush1.msra.mxu0 %v6058
    %6161 = vmatprep.subr.mxu0 0.0
    %6162 = vmatpush1.msra.mxu0 %v6059
    %6163 = vmatprep.subr.mxu0 0.0
    %6164 = vmatpush1.msra.mxu0 %v6060
    %6165 = vmatprep.subr.mxu0 0.0
    %6166 = vmatpush1.msra.mxu0 %v6061
    %6167 = vmatprep.subr.mxu0 0.0
    %6168 = vmatpush1.msra.mxu0 %v6062
    %6169 = vmatprep.subr.mxu0 0.0
    %6170 = vmatpush1.msra.mxu0 0.0
    %6171 = vmatprep.subr.mxu0 0.0
    %6172 = vmatpush1.msra.mxu0 0.0
    %6173 = vmatprep.subr.mxu0 0.0
    %6174 = vmatpush1.msra.mxu0 0.0
    %6175 = vmatprep.subr.mxu0 0.0
    %6176 = vmatpush1.msra.mxu0 0.0
    %6177 = vmatprep.subr.mxu0 0.0
    %6178 = vmatpush1.msra.mxu0 0.0
    %6179 = vmatprep.subr.mxu0 0.0
    %6180 = vmatpush1.msra.mxu0 0.0
    %6181 = vmatprep.subr.mxu0 0.0
    %6182 = vmatpush1.msra.mxu0 0.0
    %6183 = vmatprep.subr.mxu0 0.0
    %6184 = vmatpush1.msra.mxu0 0.0
    %6185 = vmatprep.subr.mxu0 0.0
    %6186 = vmatpush1.msra.mxu0 0.0
    %6187 = vmatprep.subr.mxu0 0.0
    %6188 = vmatpush1.msra.mxu0 0.0
    %6189 = vmatprep.subr.mxu0 0.0
    %6190 = vmatpush1.msra.mxu0 0.0
    %6191 = vmatprep.subr.mxu0 0.0
    %6192 = vmatpush1.msra.mxu0 0.0
    %6193 = vmatprep.subr.mxu0 0.0
    %6194 = vmatpush1.msra.mxu0 0.0
    %6195 = vmatprep.subr.mxu0 0.0
    %6196 = vmatpush1.msra.mxu0 0.0
    %6197 = vmatprep.subr.mxu0 0.0
    %6198 = vmatpush1.msra.mxu0 0.0
    %6199 = vmatprep.subr.mxu0 0.0
    %6200 = vmatpush1.msra.mxu0 0.0
    %6201 = vmatprep.mubr.f32.mxu0 0.0
    %6202 = vmatmul.mubr.f32.gmra.mrb[0].mxu0 %v5774
    %v6203 = vpop.f32.mrb[0].mxu0
    %v6204 = vadd.f32 %v6134, %v6203
    %v6205 = vpop.f32.mrb[0].mxu0
    %6206 = vdwg.mxu0
    %v6207 = vadd.f32 %v6204, %v2791
    %v6208 = vxor.u32 %v6207, 2147483648
    %v6209 = vmul.f32 %v6208, 1.442695
    %v6210 = vpow.pop %v6209
    %v6211 = vadd.f32 %v6210, 1.0
    %v6212 = vrcp.pop %v6211
    %v6213 = vmul.f32 1.0, %v6212
    %v6214 = vtanh.pop %v6207
    %v6215 = vmul.f32 %v6213, %v5687
    %6217 = vrot.lane.b32.xlu0 %v6214, 64
    %v6218 = vpop.permute.xlu0 %6217
    %v6220 = vmul.f32 %v6213, %v6218
    %6222 = vrot.lane.b32.xlu0 %v6220, 32
    %v6223 = vpop.permute.xlu0 %6222
    %v6225 = vadd.f32 %v6215, %v6223
    %v6226 = vtanh.pop %v6225
    %6228 = vrot.lane.b32.xlu0 %v6226, 64
    %v6229 = vpop.permute.xlu0 %6228
    %v6231 = vmul.f32 %v6213, %v6229
    %v6232 = vld [vmem:[%s4] sm:$0xff]
    %v6233 = vld [vmem:[%s4 + $0x8] sm:$0xff]
    %v6234 = vld [vmem:[%s4 + $0x10] sm:$0xff]
    %v6235 = vld [vmem:[%s4 + $0x18] sm:$0xff]
    %6237 = vrot.lane.b32.xlu0 %v6231, 32
    %v6238 = vpop.permute.xlu0 %6237
    %v6239 = vsel %vm165, %v6238, 0
    %6241 = vmatprep.subr.mxu0 0.0
    %6242 = vmatpush1.msra.mxu0 %v6232
    %6243 = vmatprep.subr.mxu0 0.0
    %6244 = vmatpush1.msra.mxu0 %v6233
    %6245 = vmatprep.subr.mxu0 0.0
    %6246 = vmatpush1.msra.mxu0 %v6234
    %6247 = vmatprep.subr.mxu0 0.0
    %6248 = vmatpush1.msra.mxu0 %v6235
    %6249 = vmatprep.subr.mxu0 0.0
    %6250 = vmatpush1.msra.mxu0 0.0
    %6251 = vmatprep.subr.mxu0 0.0
    %6252 = vmatpush1.msra.mxu0 0.0
    %6253 = vmatprep.subr.mxu0 0.0
    %6254 = vmatpush1.msra.mxu0 0.0
    %6255 = vmatprep.subr.mxu0 0.0
    %6256 = vmatpush1.msra.mxu0 0.0
    %6257 = vmatprep.subr.mxu0 0.0
    %6258 = vmatpush1.msra.mxu0 0.0
    %6259 = vmatprep.subr.mxu0 0.0
    %6260 = vmatpush1.msra.mxu0 0.0
    %6261 = vmatprep.subr.mxu0 0.0
    %6262 = vmatpush1.msra.mxu0 0.0
    %6263 = vmatprep.subr.mxu0 0.0
    %6264 = vmatpush1.msra.mxu0 0.0
    %6265 = vmatprep.subr.mxu0 0.0
    %6266 = vmatpush1.msra.mxu0 0.0
    %6267 = vmatprep.subr.mxu0 0.0
    %6268 = vmatpush1.msra.mxu0 0.0
    %6269 = vmatprep.subr.mxu0 0.0
    %6270 = vmatpush1.msra.mxu0 0.0
    %6271 = vmatprep.subr.mxu0 0.0
    %6272 = vmatpush1.msra.mxu0 0.0
    %6273 = vmatprep.subr.mxu0 0.0
    %6274 = vmatpush1.msra.mxu0 0.0
    %6275 = vmatprep.subr.mxu0 0.0
    %6276 = vmatpush1.msra.mxu0 0.0
    %6277 = vmatprep.subr.mxu0 0.0
    %6278 = vmatpush1.msra.mxu0 0.0
    %6279 = vmatprep.subr.mxu0 0.0
    %6280 = vmatpush1.msra.mxu0 0.0
    %6281 = vmatprep.subr.mxu0 0.0
    %6282 = vmatpush1.msra.mxu0 0.0
    %6283 = vmatprep.subr.mxu0 0.0
    %6284 = vmatpush1.msra.mxu0 0.0
    %6285 = vmatprep.subr.mxu0 0.0
    %6286 = vmatpush1.msra.mxu0 0.0
    %6287 = vmatprep.subr.mxu0 0.0
    %6288 = vmatpush1.msra.mxu0 0.0
    %6289 = vmatprep.subr.mxu0 0.0
    %6290 = vmatpush1.msra.mxu0 0.0
    %6291 = vmatprep.subr.mxu0 0.0
    %6292 = vmatpush1.msra.mxu0 0.0
    %6293 = vmatprep.subr.mxu0 0.0
    %6294 = vmatpush1.msra.mxu0 0.0
    %6295 = vmatprep.subr.mxu0 0.0
    %6296 = vmatpush1.msra.mxu0 0.0
    %6297 = vmatprep.subr.mxu0 0.0
    %6298 = vmatpush1.msra.mxu0 0.0
    %6299 = vmatprep.subr.mxu0 0.0
    %6300 = vmatpush1.msra.mxu0 0.0
    %6301 = vmatprep.subr.mxu0 0.0
    %6302 = vmatpush1.msra.mxu0 0.0
    %6303 = vmatprep.subr.mxu0 0.0
    %6304 = vmatpush1.msra.mxu0 0.0
    %6305 = vmatprep.mubr.f32.mxu0 0.0
    %6306 = vmatmul.mubr.f32.gmra.mrb[0].mxu0 %v6239
    %v6307 = vpop.f32.mrb[0].mxu0
    %v6308 = vadd.f32 %v2801, %v6307
    %v6309 = vpop.f32.mrb[0].mxu0
    %6310 = vdwg.mxu0
    %v6311 = vmax.f32 %v6308, -1.0
    %v6312 = vmin.f32 %v6311, 1.0
    %6313 = vst [vmem:[%s6 + $0xc] sm:$0x3] %v6312
    %v6314 = vld [vmem:[#allocation3 + $0x200] sm:$0xff]
    %v6315 = vld [vmem:[#allocation3 + $0x208] sm:$0xff]
    %v6316 = vld [vmem:[#allocation3 + $0x210] sm:$0xff]
    %v6317 = vld [vmem:[#allocation3 + $0x218] sm:$0xff]
    %v6318 = vld [vmem:[#allocation3 + $0x220] sm:$0xff]
    %v6319 = vld [vmem:[#allocation3 + $0x228] sm:$0xff]
    %v6320 = vld [vmem:[#allocation3 + $0x230] sm:$0xff]
    %v6321 = vld [vmem:[#allocation3 + $0x238] sm:$0xff]
    %v6322 = vld [vmem:[#allocation3 + $0x240] sm:$0xff]
    %v6323 = vld [vmem:[#allocation3 + $0x248] sm:$0xff]
    %v6324 = vld [vmem:[#allocation3 + $0x250] sm:$0xff]
    %v6325 = vld [vmem:[#allocation3 + $0x258] sm:$0xff]
    %v6326 = vld [vmem:[#allocation3 + $0x260] sm:$0xff]
    %v6327 = vld [vmem:[#allocation3 + $0x268] sm:$0xff]
    %v6328 = vld [vmem:[#allocation3 + $0x270] sm:$0xff]
    %v6329 = vld [vmem:[#allocation3 + $0x278] sm:$0xff]
    %v6330 = vld [vmem:[%s2 + $0x80] sm:$0xff]
    %v6331 = vld [vmem:[%s2 + $0x88] sm:$0xff]
    %v6332 = vld [vmem:[%s2 + $0x90] sm:$0xff]
    %v6333 = vld [vmem:[%s2 + $0x98] sm:$0xff]
    %6334 = vmatprep.subr.mxu0 0.0
    %6335 = vmatpush1.msra.mxu0 %v6330
    %6336 = vmatprep.subr.mxu0 0.0
    %6337 = vmatpush1.msra.mxu0 %v6331
    %6338 = vmatprep.subr.mxu0 0.0
    %6339 = vmatpush1.msra.mxu0 %v6332
    %6340 = vmatprep.subr.mxu0 0.0
    %6341 = vmatpush1.msra.mxu0 %v6333
    %6342 = vmatprep.subr.mxu0 0.0
    %6343 = vmatpush1.msra.mxu0 0.0
    %6344 = vmatprep.subr.mxu0 0.0
    %6345 = vmatpush1.msra.mxu0 0.0
    %6346 = vmatprep.subr.mxu0 0.0
    %6347 = vmatpush1.msra.mxu0 0.0
    %6348 = vmatprep.subr.mxu0 0.0
    %6349 = vmatpush1.msra.mxu0 0.0
    %6350 = vmatprep.subr.mxu0 0.0
    %6351 = vmatpush1.msra.mxu0 0.0
    %6352 = vmatprep.subr.mxu0 0.0
    %6353 = vmatpush1.msra.mxu0 0.0
    %6354 = vmatprep.subr.mxu0 0.0
    %6355 = vmatpush1.msra.mxu0 0.0
    %6356 = vmatprep.subr.mxu0 0.0
    %6357 = vmatpush1.msra.mxu0 0.0
    %6358 = vmatprep.subr.mxu0 0.0
    %6359 = vmatpush1.msra.mxu0 0.0
    %6360 = vmatprep.subr.mxu0 0.0
    %6361 = vmatpush1.msra.mxu0 0.0
    %6362 = vmatprep.subr.mxu0 0.0
    %6363 = vmatpush1.msra.mxu0 0.0
    %6364 = vmatprep.subr.mxu0 0.0
    %6365 = vmatpush1.msra.mxu0 0.0
    %6366 = vmatprep.subr.mxu0 0.0
    %6367 = vmatpush1.msra.mxu0 0.0
    %6368 = vmatprep.subr.mxu0 0.0
    %6369 = vmatpush1.msra.mxu0 0.0
    %6370 = vmatprep.subr.mxu0 0.0
    %6371 = vmatpush1.msra.mxu0 0.0
    %6372 = vmatprep.subr.mxu0 0.0
    %6373 = vmatpush1.msra.mxu0 0.0
    %6374 = vmatprep.subr.mxu0 0.0
    %6375 = vmatpush1.msra.mxu0 0.0
    %6376 = vmatprep.subr.mxu0 0.0
    %6377 = vmatpush1.msra.mxu0 0.0
    %6378 = vmatprep.subr.mxu0 0.0
    %6379 = vmatpush1.msra.mxu0 0.0
    %6380 = vmatprep.subr.mxu0 0.0
    %6381 = vmatpush1.msra.mxu0 0.0
    %6382 = vmatprep.subr.mxu0 0.0
    %6383 = vmatpush1.msra.mxu0 0.0
    %6384 = vmatprep.subr.mxu0 0.0
    %6385 = vmatpush1.msra.mxu0 0.0
    %6386 = vmatprep.subr.mxu0 0.0
    %6387 = vmatpush1.msra.mxu0 0.0
    %6388 = vmatprep.subr.mxu0 0.0
    %6389 = vmatpush1.msra.mxu0 0.0
    %6390 = vmatprep.subr.mxu0 0.0
    %6391 = vmatpush1.msra.mxu0 0.0
    %6392 = vmatprep.subr.mxu0 0.0
    %6393 = vmatpush1.msra.mxu0 0.0
    %6394 = vmatprep.subr.mxu0 0.0
    %6395 = vmatpush1.msra.mxu0 0.0
    %6396 = vmatprep.subr.mxu0 0.0
    %6397 = vmatpush1.msra.mxu0 0.0
    %6398 = vmatprep.mubr.f32.mxu0 0.0
    %6399 = vmatmul.mubr.f32.gmra.mrb[0].mxu0 %v5968
    %v6400 = vpop.f32.mrb[0].mxu0
    %v6401 = vadd.f32 0.0, %v6400
    %v6402 = vpop.f32.mrb[0].mxu0
    %6403 = vdwg.mxu0
    %6404 = vmatprep.subr.mxu0 0.0
    %6405 = vmatpush1.msra.mxu0 %v6314
    %6406 = vmatprep.subr.mxu0 0.0
    %6407 = vmatpush1.msra.mxu0 %v6315
    %6408 = vmatprep.subr.mxu0 0.0
    %6409 = vmatpush1.msra.mxu0 %v6316
    %6410 = vmatprep.subr.mxu0 0.0
    %6411 = vmatpush1.msra.mxu0 %v6317
    %6412 = vmatprep.subr.mxu0 0.0
    %6413 = vmatpush1.msra.mxu0 %v6318
    %6414 = vmatprep.subr.mxu0 0.0
    %6415 = vmatpush1.msra.mxu0 %v6319
    %6416 = vmatprep.subr.mxu0 0.0
    %6417 = vmatpush1.msra.mxu0 %v6320
    %6418 = vmatprep.subr.mxu0 0.0
    %6419 = vmatpush1.msra.mxu0 %v6321
    %6420 = vmatprep.subr.mxu0 0.0
    %6421 = vmatpush1.msra.mxu0 %v6322
    %6422 = vmatprep.subr.mxu0 0.0
    %6423 = vmatpush1.msra.mxu0 %v6323
    %6424 = vmatprep.subr.mxu0 0.0
    %6425 = vmatpush1.msra.mxu0 %v6324
    %6426 = vmatprep.subr.mxu0 0.0
    %6427 = vmatpush1.msra.mxu0 %v6325
    %6428 = vmatprep.subr.mxu0 0.0
    %6429 = vmatpush1.msra.mxu0 %v6326
    %6430 = vmatprep.subr.mxu0 0.0
    %6431 = vmatpush1.msra.mxu0 %v6327
    %6432 = vmatprep.subr.mxu0 0.0
    %6433 = vmatpush1.msra.mxu0 %v6328
    %6434 = vmatprep.subr.mxu0 0.0
    %6435 = vmatpush1.msra.mxu0 %v6329
    %6436 = vmatprep.subr.mxu0 0.0
    %6437 = vmatpush1.msra.mxu0 0.0
    %6438 = vmatprep.subr.mxu0 0.0
    %6439 = vmatpush1.msra.mxu0 0.0
    %6440 = vmatprep.subr.mxu0 0.0
    %6441 = vmatpush1.msra.mxu0 0.0
    %6442 = vmatprep.subr.mxu0 0.0
    %6443 = vmatpush1.msra.mxu0 0.0
    %6444 = vmatprep.subr.mxu0 0.0
    %6445 = vmatpush1.msra.mxu0 0.0
    %6446 = vmatprep.subr.mxu0 0.0
    %6447 = vmatpush1.msra.mxu0 0.0
    %6448 = vmatprep.subr.mxu0 0.0
    %6449 = vmatpush1.msra.mxu0 0.0
    %6450 = vmatprep.subr.mxu0 0.0
    %6451 = vmatpush1.msra.mxu0 0.0
    %6452 = vmatprep.subr.mxu0 0.0
    %6453 = vmatpush1.msra.mxu0 0.0
    %6454 = vmatprep.subr.mxu0 0.0
    %6455 = vmatpush1.msra.mxu0 0.0
    %6456 = vmatprep.subr.mxu0 0.0
    %6457 = vmatpush1.msra.mxu0 0.0
    %6458 = vmatprep.subr.mxu0 0.0
    %6459 = vmatpush1.msra.mxu0 0.0
    %6460 = vmatprep.subr.mxu0 0.0
    %6461 = vmatpush1.msra.mxu0 0.0
    %6462 = vmatprep.subr.mxu0 0.0
    %6463 = vmatpush1.msra.mxu0 0.0
    %6464 = vmatprep.subr.mxu0 0.0
    %6465 = vmatpush1.msra.mxu0 0.0
    %6466 = vmatprep.subr.mxu0 0.0
    %6467 = vmatpush1.msra.mxu0 0.0
    %6468 = vmatprep.mubr.f32.mxu0 0.0
    %6469 = vmatmul.mubr.f32.gmra.mrb[0].mxu0 %v6045
    %v6470 = vpop.f32.mrb[0].mxu0
    %v6471 = vadd.f32 %v6401, %v6470
    %v6472 = vpop.f32.mrb[0].mxu0
    %6473 = vdwg.mxu0
    %v6474 = vadd.f32 %v6471, %v2796
    %v6475 = vxor.u32 %v6474, 2147483648
    %v6476 = vmul.f32 %v6475, 1.442695
    %v6477 = vpow.pop %v6476
    %v6478 = vadd.f32 %v6477, 1.0
    %v6479 = vrcp.pop %v6478
    %v6480 = vmul.f32 1.0, %v6479
    %v6481 = vtanh.pop %v6474
    %v6482 = vmul.f32 %v6480, %v5954
    %6484 = vrot.lane.b32.xlu0 %v6481, 64
    %v6485 = vpop.permute.xlu0 %6484
    %v6487 = vmul.f32 %v6480, %v6485
    %6489 = vrot.lane.b32.xlu0 %v6487, 32
    %v6490 = vpop.permute.xlu0 %6489
    %v6492 = vadd.f32 %v6482, %v6490
    %v6493 = vtanh.pop %v6492
    %6495 = vrot.lane.b32.xlu0 %v6493, 64
    %v6496 = vpop.permute.xlu0 %6495
    %v6498 = vmul.f32 %v6480, %v6496
    %v6499 = vld [vmem:[%s4 + $0x20] sm:$0xff]
    %v6500 = vld [vmem:[%s4 + $0x28] sm:$0xff]
    %v6501 = vld [vmem:[%s4 + $0x30] sm:$0xff]
    %v6502 = vld [vmem:[%s4 + $0x38] sm:$0xff]
    %6504 = vrot.lane.b32.xlu0 %v6498, 32
    %v6505 = vpop.permute.xlu0 %6504
    %v6506 = vsel %vm165, %v6505, 0
    %6508 = vmatprep.subr.mxu0 0.0
    %6509 = vmatpush1.msra.mxu0 %v6499
    %6510 = vmatprep.subr.mxu0 0.0
    %6511 = vmatpush1.msra.mxu0 %v6500
    %6512 = vmatprep.subr.mxu0 0.0
    %6513 = vmatpush1.msra.mxu0 %v6501
    %6514 = vmatprep.subr.mxu0 0.0
    %6515 = vmatpush1.msra.mxu0 %v6502
    %6516 = vmatprep.subr.mxu0 0.0
    %6517 = vmatpush1.msra.mxu0 0.0
    %6518 = vmatprep.subr.mxu0 0.0
    %6519 = vmatpush1.msra.mxu0 0.0
    %6520 = vmatprep.subr.mxu0 0.0
    %6521 = vmatpush1.msra.mxu0 0.0
    %6522 = vmatprep.subr.mxu0 0.0
    %6523 = vmatpush1.msra.mxu0 0.0
    %6524 = vmatprep.subr.mxu0 0.0
    %6525 = vmatpush1.msra.mxu0 0.0
    %6526 = vmatprep.subr.mxu0 0.0
    %6527 = vmatpush1.msra.mxu0 0.0
    %6528 = vmatprep.subr.mxu0 0.0
    %6529 = vmatpush1.msra.mxu0 0.0
    %6530 = vmatprep.subr.mxu0 0.0
    %6531 = vmatpush1.msra.mxu0 0.0
    %6532 = vmatprep.subr.mxu0 0.0
    %6533 = vmatpush1.msra.mxu0 0.0
    %6534 = vmatprep.subr.mxu0 0.0
    %6535 = vmatpush1.msra.mxu0 0.0
    %6536 = vmatprep.subr.mxu0 0.0
    %6537 = vmatpush1.msra.mxu0 0.0
    %6538 = vmatprep.subr.mxu0 0.0
    %6539 = vmatpush1.msra.mxu0 0.0
    %6540 = vmatprep.subr.mxu0 0.0
    %6541 = vmatpush1.msra.mxu0 0.0
    %6542 = vmatprep.subr.mxu0 0.0
    %6543 = vmatpush1.msra.mxu0 0.0
    %6544 = vmatprep.subr.mxu0 0.0
    %6545 = vmatpush1.msra.mxu0 0.0
    %6546 = vmatprep.subr.mxu0 0.0
    %6547 = vmatpush1.msra.mxu0 0.0
    %6548 = vmatprep.subr.mxu0 0.0
    %6549 = vmatpush1.msra.mxu0 0.0
    %6550 = vmatprep.subr.mxu0 0.0
    %6551 = vmatpush1.msra.mxu0 0.0
    %6552 = vmatprep.subr.mxu0 0.0
    %6553 = vmatpush1.msra.mxu0 0.0
    %6554 = vmatprep.subr.mxu0 0.0
    %6555 = vmatpush1.msra.mxu0 0.0
    %6556 = vmatprep.subr.mxu0 0.0
    %6557 = vmatpush1.msra.mxu0 0.0
    %6558 = vmatprep.subr.mxu0 0.0
    %6559 = vmatpush1.msra.mxu0 0.0
    %6560 = vmatprep.subr.mxu0 0.0
    %6561 = vmatpush1.msra.mxu0 0.0
    %6562 = vmatprep.subr.mxu0 0.0
    %6563 = vmatpush1.msra.mxu0 0.0
    %6564 = vmatprep.subr.mxu0 0.0
    %6565 = vmatpush1.msra.mxu0 0.0
    %6566 = vmatprep.subr.mxu0 0.0
    %6567 = vmatpush1.msra.mxu0 0.0
    %6568 = vmatprep.subr.mxu0 0.0
    %6569 = vmatpush1.msra.mxu0 0.0
    %6570 = vmatprep.subr.mxu0 0.0
    %6571 = vmatpush1.msra.mxu0 0.0
    %6572 = vmatprep.mubr.f32.mxu0 0.0
    %6573 = vmatmul.mubr.f32.gmra.mrb[0].mxu0 %v6506
    %v6574 = vpop.f32.mrb[0].mxu0
    %v6575 = vadd.f32 %v2806, %v6574
    %v6576 = vpop.f32.mrb[0].mxu0
    %6577 = vdwg.mxu0
    %v6578 = vxor.u32 %v6575, 2147483648
    %v6579 = vmul.f32 %v6578, 1.442695
    %v6580 = vpow.pop %v6579
    %v6581 = vadd.f32 %v6580, 1.0
    %v6582 = vrcp.pop %v6581
    %v6583 = vmul.f32 1.0, %v6582
    %6584 = vst [vmem:[%s6 + $0x1c] sm:$0x3] %v6583
    %v6585 = vld [vmem:[#allocation3 + $0x180] sm:$0xff]
    %v6586 = vld [vmem:[#allocation3 + $0x188] sm:$0xff]
    %v6587 = vld [vmem:[#allocation3 + $0x190] sm:$0xff]
    %v6588 = vld [vmem:[#allocation3 + $0x198] sm:$0xff]
    %v6589 = vld [vmem:[#allocation3 + $0x1a0] sm:$0xff]
    %v6590 = vld [vmem:[#allocation3 + $0x1a8] sm:$0xff]
    %v6591 = vld [vmem:[#allocation3 + $0x1b0] sm:$0xff]
    %v6592 = vld [vmem:[#allocation3 + $0x1b8] sm:$0xff]
    %v6593 = vld [vmem:[#allocation3 + $0x1c0] sm:$0xff]
    %v6594 = vld [vmem:[#allocation3 + $0x1c8] sm:$0xff]
    %v6595 = vld [vmem:[#allocation3 + $0x1d0] sm:$0xff]
    %v6596 = vld [vmem:[#allocation3 + $0x1d8] sm:$0xff]
    %v6597 = vld [vmem:[#allocation3 + $0x1e0] sm:$0xff]
    %v6598 = vld [vmem:[#allocation3 + $0x1e8] sm:$0xff]
    %v6599 = vld [vmem:[#allocation3 + $0x1f0] sm:$0xff]
    %v6600 = vld [vmem:[#allocation3 + $0x1f8] sm:$0xff]
    %v6601 = vld [vmem:[%s2 + $0x60] sm:$0xff]
    %v6602 = vld [vmem:[%s2 + $0x68] sm:$0xff]
    %v6603 = vld [vmem:[%s2 + $0x70] sm:$0xff]
    %v6604 = vld [vmem:[%s2 + $0x78] sm:$0xff]
    %6605 = vmatprep.subr.mxu0 0.0
    %6606 = vmatpush1.msra.mxu0 %v6601
    %6607 = vmatprep.subr.mxu0 0.0
    %6608 = vmatpush1.msra.mxu0 %v6602
    %6609 = vmatprep.subr.mxu0 0.0
    %6610 = vmatpush1.msra.mxu0 %v6603
    %6611 = vmatprep.subr.mxu0 0.0
    %6612 = vmatpush1.msra.mxu0 %v6604
    %6613 = vmatprep.subr.mxu0 0.0
    %6614 = vmatpush1.msra.mxu0 0.0
    %6615 = vmatprep.subr.mxu0 0.0
    %6616 = vmatpush1.msra.mxu0 0.0
    %6617 = vmatprep.subr.mxu0 0.0
    %6618 = vmatpush1.msra.mxu0 0.0
    %6619 = vmatprep.subr.mxu0 0.0
    %6620 = vmatpush1.msra.mxu0 0.0
    %6621 = vmatprep.subr.mxu0 0.0
    %6622 = vmatpush1.msra.mxu0 0.0
    %6623 = vmatprep.subr.mxu0 0.0
    %6624 = vmatpush1.msra.mxu0 0.0
    %6625 = vmatprep.subr.mxu0 0.0
    %6626 = vmatpush1.msra.mxu0 0.0
    %6627 = vmatprep.subr.mxu0 0.0
    %6628 = vmatpush1.msra.mxu0 0.0
    %6629 = vmatprep.subr.mxu0 0.0
    %6630 = vmatpush1.msra.mxu0 0.0
    %6631 = vmatprep.subr.mxu0 0.0
    %6632 = vmatpush1.msra.mxu0 0.0
    %6633 = vmatprep.subr.mxu0 0.0
    %6634 = vmatpush1.msra.mxu0 0.0
    %6635 = vmatprep.subr.mxu0 0.0
    %6636 = vmatpush1.msra.mxu0 0.0
    %6637 = vmatprep.subr.mxu0 0.0
    %6638 = vmatpush1.msra.mxu0 0.0
    %6639 = vmatprep.subr.mxu0 0.0
    %6640 = vmatpush1.msra.mxu0 0.0
    %6641 = vmatprep.subr.mxu0 0.0
    %6642 = vmatpush1.msra.mxu0 0.0
    %6643 = vmatprep.subr.mxu0 0.0
    %6644 = vmatpush1.msra.mxu0 0.0
    %6645 = vmatprep.subr.mxu0 0.0
    %6646 = vmatpush1.msra.mxu0 0.0
    %6647 = vmatprep.subr.mxu0 0.0
    %6648 = vmatpush1.msra.mxu0 0.0
    %6649 = vmatprep.subr.mxu0 0.0
    %6650 = vmatpush1.msra.mxu0 0.0
    %6651 = vmatprep.subr.mxu0 0.0
    %6652 = vmatpush1.msra.mxu0 0.0
    %6653 = vmatprep.subr.mxu0 0.0
    %6654 = vmatpush1.msra.mxu0 0.0
    %6655 = vmatprep.subr.mxu0 0.0
    %6656 = vmatpush1.msra.mxu0 0.0
    %6657 = vmatprep.subr.mxu0 0.0
    %6658 = vmatpush1.msra.mxu0 0.0
    %6659 = vmatprep.subr.mxu0 0.0
    %6660 = vmatpush1.msra.mxu0 0.0
    %6661 = vmatprep.subr.mxu0 0.0
    %6662 = vmatpush1.msra.mxu0 0.0
    %6663 = vmatprep.subr.mxu0 0.0
    %6664 = vmatpush1.msra.mxu0 0.0
    %6665 = vmatprep.subr.mxu0 0.0
    %6666 = vmatpush1.msra.mxu0 0.0
    %6667 = vmatprep.subr.mxu0 0.0
    %6668 = vmatpush1.msra.mxu0 0.0
    %6669 = vmatprep.mubr.f32.mxu0 0.0
    %6670 = vmatmul.mubr.f32.gmra.mrb[0].mxu0 %v6239
    %v6671 = vpop.f32.mrb[0].mxu0
    %v6672 = vadd.f32 0.0, %v6671
    %v6673 = vpop.f32.mrb[0].mxu0
    %6674 = vdwg.mxu0
    %6675 = vmatprep.subr.mxu0 0.0
    %6676 = vmatpush1.msra.mxu0 %v6585
    %6677 = vmatprep.subr.mxu0 0.0
    %6678 = vmatpush1.msra.mxu0 %v6586
    %6679 = vmatprep.subr.mxu0 0.0
    %6680 = vmatpush1.msra.mxu0 %v6587
    %6681 = vmatprep.subr.mxu0 0.0
    %6682 = vmatpush1.msra.mxu0 %v6588
    %6683 = vmatprep.subr.mxu0 0.0
    %6684 = vmatpush1.msra.mxu0 %v6589
    %6685 = vmatprep.subr.mxu0 0.0
    %6686 = vmatpush1.msra.mxu0 %v6590
    %6687 = vmatprep.subr.mxu0 0.0
    %6688 = vmatpush1.msra.mxu0 %v6591
    %6689 = vmatprep.subr.mxu0 0.0
    %6690 = vmatpush1.msra.mxu0 %v6592
    %6691 = vmatprep.subr.mxu0 0.0
    %6692 = vmatpush1.msra.mxu0 %v6593
    %6693 = vmatprep.subr.mxu0 0.0
    %6694 = vmatpush1.msra.mxu0 %v6594
    %6695 = vmatprep.subr.mxu0 0.0
    %6696 = vmatpush1.msra.mxu0 %v6595
    %6697 = vmatprep.subr.mxu0 0.0
    %6698 = vmatpush1.msra.mxu0 %v6596
    %6699 = vmatprep.subr.mxu0 0.0
    %6700 = vmatpush1.msra.mxu0 %v6597
    %6701 = vmatprep.subr.mxu0 0.0
    %6702 = vmatpush1.msra.mxu0 %v6598
    %6703 = vmatprep.subr.mxu0 0.0
    %6704 = vmatpush1.msra.mxu0 %v6599
    %6705 = vmatprep.subr.mxu0 0.0
    %6706 = vmatpush1.msra.mxu0 %v6600
    %6707 = vmatprep.subr.mxu0 0.0
    %6708 = vmatpush1.msra.mxu0 0.0
    %6709 = vmatprep.subr.mxu0 0.0
    %6710 = vmatpush1.msra.mxu0 0.0
    %6711 = vmatprep.subr.mxu0 0.0
    %6712 = vmatpush1.msra.mxu0 0.0
    %6713 = vmatprep.subr.mxu0 0.0
    %6714 = vmatpush1.msra.mxu0 0.0
    %6715 = vmatprep.subr.mxu0 0.0
    %6716 = vmatpush1.msra.mxu0 0.0
    %6717 = vmatprep.subr.mxu0 0.0
    %6718 = vmatpush1.msra.mxu0 0.0
    %6719 = vmatprep.subr.mxu0 0.0
    %6720 = vmatpush1.msra.mxu0 0.0
    %6721 = vmatprep.subr.mxu0 0.0
    %6722 = vmatpush1.msra.mxu0 0.0
    %6723 = vmatprep.subr.mxu0 0.0
    %6724 = vmatpush1.msra.mxu0 0.0
    %6725 = vmatprep.subr.mxu0 0.0
    %6726 = vmatpush1.msra.mxu0 0.0
    %6727 = vmatprep.subr.mxu0 0.0
    %6728 = vmatpush1.msra.mxu0 0.0
    %6729 = vmatprep.subr.mxu0 0.0
    %6730 = vmatpush1.msra.mxu0 0.0
    %6731 = vmatprep.subr.mxu0 0.0
    %6732 = vmatpush1.msra.mxu0 0.0
    %6733 = vmatprep.subr.mxu0 0.0
    %6734 = vmatpush1.msra.mxu0 0.0
    %6735 = vmatprep.subr.mxu0 0.0
    %6736 = vmatpush1.msra.mxu0 0.0
    %6737 = vmatprep.subr.mxu0 0.0
    %6738 = vmatpush1.msra.mxu0 0.0
    %6739 = vmatprep.mubr.f32.mxu0 0.0
    %6740 = vmatmul.mubr.f32.gmra.mrb[0].mxu0 %v6312
    %v6741 = vpop.f32.mrb[0].mxu0
    %v6742 = vadd.f32 %v6672, %v6741
    %v6743 = vpop.f32.mrb[0].mxu0
    %6744 = vdwg.mxu0
    %v6745 = vadd.f32 %v6742, %v2791
    %v6746 = vxor.u32 %v6745, 2147483648
    %v6747 = vmul.f32 %v6746, 1.442695
    %v6748 = vpow.pop %v6747
    %v6749 = vadd.f32 %v6748, 1.0
    %v6750 = vrcp.pop %v6749
    %v6751 = vmul.f32 1.0, %v6750
    %v6752 = vtanh.pop %v6745
    %v6753 = vmul.f32 %v6751, %v6225
    %6755 = vrot.lane.b32.xlu0 %v6752, 64
    %v6756 = vpop.permute.xlu0 %6755
    %v6758 = vmul.f32 %v6751, %v6756
    %6760 = vrot.lane.b32.xlu0 %v6758, 32
    %v6761 = vpop.permute.xlu0 %6760
    %v6763 = vadd.f32 %v6753, %v6761
    %v6764 = vtanh.pop %v6763
    %6766 = vrot.lane.b32.xlu0 %v6764, 64
    %v6767 = vpop.permute.xlu0 %6766
    %v6769 = vmul.f32 %v6751, %v6767
    %v6770 = vld [vmem:[%s4] sm:$0xff]
    %v6771 = vld [vmem:[%s4 + $0x8] sm:$0xff]
    %v6772 = vld [vmem:[%s4 + $0x10] sm:$0xff]
    %v6773 = vld [vmem:[%s4 + $0x18] sm:$0xff]
    %6775 = vrot.lane.b32.xlu0 %v6769, 32
    %v6776 = vpop.permute.xlu0 %6775
    %v6777 = vsel %vm165, %v6776, 0
    %6779 = vmatprep.subr.mxu0 0.0
    %6780 = vmatpush1.msra.mxu0 %v6770
    %6781 = vmatprep.subr.mxu0 0.0
    %6782 = vmatpush1.msra.mxu0 %v6771
    %6783 = vmatprep.subr.mxu0 0.0
    %6784 = vmatpush1.msra.mxu0 %v6772
    %6785 = vmatprep.subr.mxu0 0.0
    %6786 = vmatpush1.msra.mxu0 %v6773
    %6787 = vmatprep.subr.mxu0 0.0
    %6788 = vmatpush1.msra.mxu0 0.0
    %6789 = vmatprep.subr.mxu0 0.0
    %6790 = vmatpush1.msra.mxu0 0.0
    %6791 = vmatprep.subr.mxu0 0.0
    %6792 = vmatpush1.msra.mxu0 0.0
    %6793 = vmatprep.subr.mxu0 0.0
    %6794 = vmatpush1.msra.mxu0 0.0
    %6795 = vmatprep.subr.mxu0 0.0
    %6796 = vmatpush1.msra.mxu0 0.0
    %6797 = vmatprep.subr.mxu0 0.0
    %6798 = vmatpush1.msra.mxu0 0.0
    %6799 = vmatprep.subr.mxu0 0.0
    %6800 = vmatpush1.msra.mxu0 0.0
    %6801 = vmatprep.subr.mxu0 0.0
    %6802 = vmatpush1.msra.mxu0 0.0
    %6803 = vmatprep.subr.mxu0 0.0
    %6804 = vmatpush1.msra.mxu0 0.0
    %6805 = vmatprep.subr.mxu0 0.0
    %6806 = vmatpush1.msra.mxu0 0.0
    %6807 = vmatprep.subr.mxu0 0.0
    %6808 = vmatpush1.msra.mxu0 0.0
    %6809 = vmatprep.subr.mxu0 0.0
    %6810 = vmatpush1.msra.mxu0 0.0
    %6811 = vmatprep.subr.mxu0 0.0
    %6812 = vmatpush1.msra.mxu0 0.0
    %6813 = vmatprep.subr.mxu0 0.0
    %6814 = vmatpush1.msra.mxu0 0.0
    %6815 = vmatprep.subr.mxu0 0.0
    %6816 = vmatpush1.msra.mxu0 0.0
    %6817 = vmatprep.subr.mxu0 0.0
    %6818 = vmatpush1.msra.mxu0 0.0
    %6819 = vmatprep.subr.mxu0 0.0
    %6820 = vmatpush1.msra.mxu0 0.0
    %6821 = vmatprep.subr.mxu0 0.0
    %6822 = vmatpush1.msra.mxu0 0.0
    %6823 = vmatprep.subr.mxu0 0.0
    %6824 = vmatpush1.msra.mxu0 0.0
    %6825 = vmatprep.subr.mxu0 0.0
    %6826 = vmatpush1.msra.mxu0 0.0
    %6827 = vmatprep.subr.mxu0 0.0
    %6828 = vmatpush1.msra.mxu0 0.0
    %6829 = vmatprep.subr.mxu0 0.0
    %6830 = vmatpush1.msra.mxu0 0.0
    %6831 = vmatprep.subr.mxu0 0.0
    %6832 = vmatpush1.msra.mxu0 0.0
    %6833 = vmatprep.subr.mxu0 0.0
    %6834 = vmatpush1.msra.mxu0 0.0
    %6835 = vmatprep.subr.mxu0 0.0
    %6836 = vmatpush1.msra.mxu0 0.0
    %6837 = vmatprep.subr.mxu0 0.0
    %6838 = vmatpush1.msra.mxu0 0.0
    %6839 = vmatprep.subr.mxu0 0.0
    %6840 = vmatpush1.msra.mxu0 0.0
    %6841 = vmatprep.subr.mxu0 0.0
    %6842 = vmatpush1.msra.mxu0 0.0
    %6843 = vmatprep.mubr.f32.mxu0 0.0
    %6844 = vmatmul.mubr.f32.gmra.mrb[0].mxu0 %v6777
    %v6845 = vpop.f32.mrb[0].mxu0
    %v6846 = vadd.f32 %v2801, %v6845
    %v6847 = vpop.f32.mrb[0].mxu0
    %6848 = vdwg.mxu0
    %v6849 = vmax.f32 %v6846, -1.0
    %v6850 = vmin.f32 %v6849, 1.0
    %6851 = vst [vmem:[%s6 + $0xe] sm:$0x3] %v6850
    %v6852 = vld [vmem:[#allocation3 + $0x200] sm:$0xff]
    %v6853 = vld [vmem:[#allocation3 + $0x208] sm:$0xff]
    %v6854 = vld [vmem:[#allocation3 + $0x210] sm:$0xff]
    %v6855 = vld [vmem:[#allocation3 + $0x218] sm:$0xff]
    %v6856 = vld [vmem:[#allocation3 + $0x220] sm:$0xff]
    %v6857 = vld [vmem:[#allocation3 + $0x228] sm:$0xff]
    %v6858 = vld [vmem:[#allocation3 + $0x230] sm:$0xff]
    %v6859 = vld [vmem:[#allocation3 + $0x238] sm:$0xff]
    %v6860 = vld [vmem:[#allocation3 + $0x240] sm:$0xff]
    %v6861 = vld [vmem:[#allocation3 + $0x248] sm:$0xff]
    %v6862 = vld [vmem:[#allocation3 + $0x250] sm:$0xff]
    %v6863 = vld [vmem:[#allocation3 + $0x258] sm:$0xff]
    %v6864 = vld [vmem:[#allocation3 + $0x260] sm:$0xff]
    %v6865 = vld [vmem:[#allocation3 + $0x268] sm:$0xff]
    %v6866 = vld [vmem:[#allocation3 + $0x270] sm:$0xff]
    %v6867 = vld [vmem:[#allocation3 + $0x278] sm:$0xff]
    %v6868 = vld [vmem:[%s2 + $0x80] sm:$0xff]
    %v6869 = vld [vmem:[%s2 + $0x88] sm:$0xff]
    %v6870 = vld [vmem:[%s2 + $0x90] sm:$0xff]
    %v6871 = vld [vmem:[%s2 + $0x98] sm:$0xff]
    %6872 = vmatprep.subr.mxu0 0.0
    %6873 = vmatpush1.msra.mxu0 %v6868
    %6874 = vmatprep.subr.mxu0 0.0
    %6875 = vmatpush1.msra.mxu0 %v6869
    %6876 = vmatprep.subr.mxu0 0.0
    %6877 = vmatpush1.msra.mxu0 %v6870
    %6878 = vmatprep.subr.mxu0 0.0
    %6879 = vmatpush1.msra.mxu0 %v6871
    %6880 = vmatprep.subr.mxu0 0.0
    %6881 = vmatpush1.msra.mxu0 0.0
    %6882 = vmatprep.subr.mxu0 0.0
    %6883 = vmatpush1.msra.mxu0 0.0
    %6884 = vmatprep.subr.mxu0 0.0
    %6885 = vmatpush1.msra.mxu0 0.0
    %6886 = vmatprep.subr.mxu0 0.0
    %6887 = vmatpush1.msra.mxu0 0.0
    %6888 = vmatprep.subr.mxu0 0.0
    %6889 = vmatpush1.msra.mxu0 0.0
    %6890 = vmatprep.subr.mxu0 0.0
    %6891 = vmatpush1.msra.mxu0 0.0
    %6892 = vmatprep.subr.mxu0 0.0
    %6893 = vmatpush1.msra.mxu0 0.0
    %6894 = vmatprep.subr.mxu0 0.0
    %6895 = vmatpush1.msra.mxu0 0.0
    %6896 = vmatprep.subr.mxu0 0.0
    %6897 = vmatpush1.msra.mxu0 0.0
    %6898 = vmatprep.subr.mxu0 0.0
    %6899 = vmatpush1.msra.mxu0 0.0
    %6900 = vmatprep.subr.mxu0 0.0
    %6901 = vmatpush1.msra.mxu0 0.0
    %6902 = vmatprep.subr.mxu0 0.0
    %6903 = vmatpush1.msra.mxu0 0.0
    %6904 = vmatprep.subr.mxu0 0.0
    %6905 = vmatpush1.msra.mxu0 0.0
    %6906 = vmatprep.subr.mxu0 0.0
    %6907 = vmatpush1.msra.mxu0 0.0
    %6908 = vmatprep.subr.mxu0 0.0
    %6909 = vmatpush1.msra.mxu0 0.0
    %6910 = vmatprep.subr.mxu0 0.0
    %6911 = vmatpush1.msra.mxu0 0.0
    %6912 = vmatprep.subr.mxu0 0.0
    %6913 = vmatpush1.msra.mxu0 0.0
    %6914 = vmatprep.subr.mxu0 0.0
    %6915 = vmatpush1.msra.mxu0 0.0
    %6916 = vmatprep.subr.mxu0 0.0
    %6917 = vmatpush1.msra.mxu0 0.0
    %6918 = vmatprep.subr.mxu0 0.0
    %6919 = vmatpush1.msra.mxu0 0.0
    %6920 = vmatprep.subr.mxu0 0.0
    %6921 = vmatpush1.msra.mxu0 0.0
    %6922 = vmatprep.subr.mxu0 0.0
    %6923 = vmatpush1.msra.mxu0 0.0
    %6924 = vmatprep.subr.mxu0 0.0
    %6925 = vmatpush1.msra.mxu0 0.0
    %6926 = vmatprep.subr.mxu0 0.0
    %6927 = vmatpush1.msra.mxu0 0.0
    %6928 = vmatprep.subr.mxu0 0.0
    %6929 = vmatpush1.msra.mxu0 0.0
    %6930 = vmatprep.subr.mxu0 0.0
    %6931 = vmatpush1.msra.mxu0 0.0
    %6932 = vmatprep.subr.mxu0 0.0
    %6933 = vmatpush1.msra.mxu0 0.0
    %6934 = vmatprep.subr.mxu0 0.0
    %6935 = vmatpush1.msra.mxu0 0.0
    %6936 = vmatprep.mubr.f32.mxu0 0.0
    %6937 = vmatmul.mubr.f32.gmra.mrb[0].mxu0 %v6506
    %v6938 = vpop.f32.mrb[0].mxu0
    %v6939 = vadd.f32 0.0, %v6938
    %v6940 = vpop.f32.mrb[0].mxu0
    %6941 = vdwg.mxu0
    %6942 = vmatprep.subr.mxu0 0.0
    %6943 = vmatpush1.msra.mxu0 %v6852
    %6944 = vmatprep.subr.mxu0 0.0
    %6945 = vmatpush1.msra.mxu0 %v6853
    %6946 = vmatprep.subr.mxu0 0.0
    %6947 = vmatpush1.msra.mxu0 %v6854
    %6948 = vmatprep.subr.mxu0 0.0
    %6949 = vmatpush1.msra.mxu0 %v6855
    %6950 = vmatprep.subr.mxu0 0.0
    %6951 = vmatpush1.msra.mxu0 %v6856
    %6952 = vmatprep.subr.mxu0 0.0
    %6953 = vmatpush1.msra.mxu0 %v6857
    %6954 = vmatprep.subr.mxu0 0.0
    %6955 = vmatpush1.msra.mxu0 %v6858
    %6956 = vmatprep.subr.mxu0 0.0
    %6957 = vmatpush1.msra.mxu0 %v6859
    %6958 = vmatprep.subr.mxu0 0.0
    %6959 = vmatpush1.msra.mxu0 %v6860
    %6960 = vmatprep.subr.mxu0 0.0
    %6961 = vmatpush1.msra.mxu0 %v6861
    %6962 = vmatprep.subr.mxu0 0.0
    %6963 = vmatpush1.msra.mxu0 %v6862
    %6964 = vmatprep.subr.mxu0 0.0
    %6965 = vmatpush1.msra.mxu0 %v6863
    %6966 = vmatprep.subr.mxu0 0.0
    %6967 = vmatpush1.msra.mxu0 %v6864
    %6968 = vmatprep.subr.mxu0 0.0
    %6969 = vmatpush1.msra.mxu0 %v6865
    %6970 = vmatprep.subr.mxu0 0.0
    %6971 = vmatpush1.msra.mxu0 %v6866
    %6972 = vmatprep.subr.mxu0 0.0
    %6973 = vmatpush1.msra.mxu0 %v6867
    %6974 = vmatprep.subr.mxu0 0.0
    %6975 = vmatpush1.msra.mxu0 0.0
    %6976 = vmatprep.subr.mxu0 0.0
    %6977 = vmatpush1.msra.mxu0 0.0
    %6978 = vmatprep.subr.mxu0 0.0
    %6979 = vmatpush1.msra.mxu0 0.0
    %6980 = vmatprep.subr.mxu0 0.0
    %6981 = vmatpush1.msra.mxu0 0.0
    %6982 = vmatprep.subr.mxu0 0.0
    %6983 = vmatpush1.msra.mxu0 0.0
    %6984 = vmatprep.subr.mxu0 0.0
    %6985 = vmatpush1.msra.mxu0 0.0
    %6986 = vmatprep.subr.mxu0 0.0
    %6987 = vmatpush1.msra.mxu0 0.0
    %6988 = vmatprep.subr.mxu0 0.0
    %6989 = vmatpush1.msra.mxu0 0.0
    %6990 = vmatprep.subr.mxu0 0.0
    %6991 = vmatpush1.msra.mxu0 0.0
    %6992 = vmatprep.subr.mxu0 0.0
    %6993 = vmatpush1.msra.mxu0 0.0
    %6994 = vmatprep.subr.mxu0 0.0
    %6995 = vmatpush1.msra.mxu0 0.0
    %6996 = vmatprep.subr.mxu0 0.0
    %6997 = vmatpush1.msra.mxu0 0.0
    %6998 = vmatprep.subr.mxu0 0.0
    %6999 = vmatpush1.msra.mxu0 0.0
    %7000 = vmatprep.subr.mxu0 0.0
    %7001 = vmatpush1.msra.mxu0 0.0
    %7002 = vmatprep.subr.mxu0 0.0
    %7003 = vmatpush1.msra.mxu0 0.0
    %7004 = vmatprep.subr.mxu0 0.0
    %7005 = vmatpush1.msra.mxu0 0.0
    %7006 = vmatprep.mubr.f32.mxu0 0.0
    %7007 = vmatmul.mubr.f32.gmra.mrb[0].mxu0 %v6583
    %v7008 = vpop.f32.mrb[0].mxu0
    %v7009 = vadd.f32 %v6939, %v7008
    %v7010 = vpop.f32.mrb[0].mxu0
    %7011 = vdwg.mxu0
    %v7012 = vadd.f32 %v7009, %v2796
    %v7013 = vxor.u32 %v7012, 2147483648
    %v7014 = vmul.f32 %v7013, 1.442695
    %v7015 = vpow.pop %v7014
    %v7016 = vadd.f32 %v7015, 1.0
    %v7017 = vrcp.pop %v7016
    %v7018 = vmul.f32 1.0, %v7017
    %v7019 = vtanh.pop %v7012
    %v7020 = vmul.f32 %v7018, %v6492
    %7022 = vrot.lane.b32.xlu0 %v7019, 64
    %v7023 = vpop.permute.xlu0 %7022
    %v7025 = vmul.f32 %v7018, %v7023
    %7027 = vrot.lane.b32.xlu0 %v7025, 32
    %v7028 = vpop.permute.xlu0 %7027
    %v7030 = vadd.f32 %v7020, %v7028
    %v7031 = vtanh.pop %v7030
    %7033 = vrot.lane.b32.xlu0 %v7031, 64
    %v7034 = vpop.permute.xlu0 %7033
    %v7036 = vmul.f32 %v7018, %v7034
    %v7037 = vld [vmem:[%s4 + $0x20] sm:$0xff]
    %v7038 = vld [vmem:[%s4 + $0x28] sm:$0xff]
    %v7039 = vld [vmem:[%s4 + $0x30] sm:$0xff]
    %v7040 = vld [vmem:[%s4 + $0x38] sm:$0xff]
    %7042 = vrot.lane.b32.xlu0 %v7036, 32
    %v7043 = vpop.permute.xlu0 %7042
    %v7044 = vsel %vm165, %v7043, 0
    %7046 = vmatprep.subr.mxu0 0.0
    %7047 = vmatpush1.msra.mxu0 %v7037
    %7048 = vmatprep.subr.mxu0 0.0
    %7049 = vmatpush1.msra.mxu0 %v7038
    %7050 = vmatprep.subr.mxu0 0.0
    %7051 = vmatpush1.msra.mxu0 %v7039
    %7052 = vmatprep.subr.mxu0 0.0
    %7053 = vmatpush1.msra.mxu0 %v7040
    %7054 = vmatprep.subr.mxu0 0.0
    %7055 = vmatpush1.msra.mxu0 0.0
    %7056 = vmatprep.subr.mxu0 0.0
    %7057 = vmatpush1.msra.mxu0 0.0
    %7058 = vmatprep.subr.mxu0 0.0
    %7059 = vmatpush1.msra.mxu0 0.0
    %7060 = vmatprep.subr.mxu0 0.0
    %7061 = vmatpush1.msra.mxu0 0.0
    %7062 = vmatprep.subr.mxu0 0.0
    %7063 = vmatpush1.msra.mxu0 0.0
    %7064 = vmatprep.subr.mxu0 0.0
    %7065 = vmatpush1.msra.mxu0 0.0
    %7066 = vmatprep.subr.mxu0 0.0
    %7067 = vmatpush1.msra.mxu0 0.0
    %7068 = vmatprep.subr.mxu0 0.0
    %7069 = vmatpush1.msra.mxu0 0.0
    %7070 = vmatprep.subr.mxu0 0.0
    %7071 = vmatpush1.msra.mxu0 0.0
    %7072 = vmatprep.subr.mxu0 0.0
    %7073 = vmatpush1.msra.mxu0 0.0
    %7074 = vmatprep.subr.mxu0 0.0
    %7075 = vmatpush1.msra.mxu0 0.0
    %7076 = vmatprep.subr.mxu0 0.0
    %7077 = vmatpush1.msra.mxu0 0.0
    %7078 = vmatprep.subr.mxu0 0.0
    %7079 = vmatpush1.msra.mxu0 0.0
    %7080 = vmatprep.subr.mxu0 0.0
    %7081 = vmatpush1.msra.mxu0 0.0
    %7082 = vmatprep.subr.mxu0 0.0
    %7083 = vmatpush1.msra.mxu0 0.0
    %7084 = vmatprep.subr.mxu0 0.0
    %7085 = vmatpush1.msra.mxu0 0.0
    %7086 = vmatprep.subr.mxu0 0.0
    %7087 = vmatpush1.msra.mxu0 0.0
    %7088 = vmatprep.subr.mxu0 0.0
    %7089 = vmatpush1.msra.mxu0 0.0
    %7090 = vmatprep.subr.mxu0 0.0
    %7091 = vmatpush1.msra.mxu0 0.0
    %7092 = vmatprep.subr.mxu0 0.0
    %7093 = vmatpush1.msra.mxu0 0.0
    %7094 = vmatprep.subr.mxu0 0.0
    %7095 = vmatpush1.msra.mxu0 0.0
    %7096 = vmatprep.subr.mxu0 0.0
    %7097 = vmatpush1.msra.mxu0 0.0
    %7098 = vmatprep.subr.mxu0 0.0
    %7099 = vmatpush1.msra.mxu0 0.0
    %7100 = vmatprep.subr.mxu0 0.0
    %7101 = vmatpush1.msra.mxu0 0.0
    %7102 = vmatprep.subr.mxu0 0.0
    %7103 = vmatpush1.msra.mxu0 0.0
    %7104 = vmatprep.subr.mxu0 0.0
    %7105 = vmatpush1.msra.mxu0 0.0
    %7106 = vmatprep.subr.mxu0 0.0
    %7107 = vmatpush1.msra.mxu0 0.0
    %7108 = vmatprep.subr.mxu0 0.0
    %7109 = vmatpush1.msra.mxu0 0.0
    %7110 = vmatprep.mubr.f32.mxu0 0.0
    %7111 = vmatmul.mubr.f32.gmra.mrb[0].mxu0 %v7044
    %v7112 = vpop.f32.mrb[0].mxu0
    %v7113 = vadd.f32 %v2806, %v7112
    %v7114 = vpop.f32.mrb[0].mxu0
    %7115 = vdwg.mxu0
    %v7116 = vxor.u32 %v7113, 2147483648
    %v7117 = vmul.f32 %v7116, 1.442695
    %v7118 = vpow.pop %v7117
    %v7119 = vadd.f32 %v7118, 1.0
    %v7120 = vrcp.pop %v7119
    %v7121 = vmul.f32 1.0, %v7120
    %7122 = vst [vmem:[%s6 + $0x1e] sm:$0x3] %v7121
    // Predicated region
    $region38: #{lstm_posetrack_forward.1} parent=1 // pred_check
      _
    $region39: #{lstm_posetrack_forward.1} parent=1 // pred_check_branch
      %7124 = sbr.rel (0) target = $region41
    $region40: #{lstm_posetrack_forward.1} parent=1 // pred_region
      _
    $region41: #{lstm_posetrack_forward.1} parent=1 // pred_fallthru
      _
    // Predicated region
    $region42: #{lstm_posetrack_forward.1} parent=1 // pred_check
      _
    $region43: #{lstm_posetrack_forward.1} parent=1 // pred_check_branch
      %7126 = sbr.rel (0) target = $region45
    $region44: #{lstm_posetrack_forward.1} parent=1 // pred_region
      _
    $region45: #{lstm_posetrack_forward.1} parent=1 // pred_fallthru
      _
    %7127 = vsyncpa [#allocation4], 1
    %7128 = vsyncpa [#allocation6], 1

</llo_original>
